<compile_context>
chip_gen: v6e
topology: v6e:2x2x1
jax: 0.10.0
libtpu: 0.0.40
codegen_flags: <defaults>
</compile_context>

<pallas_src>
import functools
import math

import jax
import jax.numpy as jnp
from jax.experimental import pallas as pl
from jax.experimental.pallas import tpu as pltpu


# ---------------------------------------------------------------------------
# Pallas kernel
# ---------------------------------------------------------------------------
def _conv_rnn_kernel(
    x_all_ref,          # [(Th+Tp)*Bp, D]  time-major-flat hist ++ pred inputs
    y_hist_ref,         # [Th*Bp, 1]       time-major-flat y history
    wenc_ref, benc_ref,                      # [D, C], [1, C]
    we0x_ref, we0y_ref, we0h_ref, be0_ref,   # encoder L0: [C,4H],[1,4H],[H,4H],[1,4H]
    we1x_ref, we1h_ref, be1_ref,             # encoder L1: [H,4H],[H,4H],[1,4H]
    wd0x_ref, wd0h_ref, bd0_ref,             # decoder L0 (fwd/bwd stacked): [2,C,4H],[2,H,4H],[2,1,4H]
    wd1x_ref, wd1h_ref, bd1_ref,             # decoder L1 (fwd/bwd stacked): [2,2H,4H],[2,H,4H],[2,1,4H]
    wfin_ref, bfin_ref,                      # final_classifier (Q padded to Qp): [2H,Qp],[1,Qp]
    wint_ref, bint_ref,                      # inter_classifier (Q padded to Qp): [H,Qp],[1,Qp]
    result_ref,         # [Tp*Bp, Qp]
    yhp_ref,            # [(Th-1)*Bp, Qp]
    h1_buf,             # VMEM scratch [(Th-1)*Bp, H]  encoder layer-1 outputs (steps 0..Th-2)
    d0f_buf, d0b_buf,   # VMEM scratch [Tp*Bp, H]      decoder layer-0 fwd / bwd outputs
    d1f_buf, d1b_buf,   # VMEM scratch [Tp*Bp, H]      decoder layer-1 fwd / bwd outputs
    *, Bp, Th, Tp, H):
    f32 = jnp.float32
    G3 = 3 * H

    def cell(gates, c):
        # Gate order pre-permuted in the wrapper: [i, f, o, g]
        # -> one sigmoid over the contiguous [:, :3H] slab, one tanh on [:, 3H:].
        sg = jax.nn.sigmoid(gates[:, :G3])
        i = sg[:, 0 * H:1 * H]
        f = sg[:, 1 * H:2 * H]
        o = sg[:, 2 * H:3 * H]
        g = jnp.tanh(gates[:, G3:])
        c_new = f * c + i * g
        h_new = o * jnp.tanh(c_new)
        return h_new, c_new

    zeros_h = jnp.zeros((Bp, H), dtype=f32)

    # ---- shared linear_encoder + tanh for hist and pred in ONE matmul ----
    xfeat = jnp.tanh(
        jnp.dot(x_all_ref[...], wenc_ref[...], preferred_element_type=f32)
        + benc_ref[...])                                   # [(Th+Tp)*Bp, C]
    xfeat_h = xfeat[:Th * Bp, :]                           # [Th*Bp, C]
    xfeat_p = xfeat[Th * Bp:, :]                           # [Tp*Bp, C]

    # ---- encoder LSTM (2 layers, unidirectional), wavefront-pipelined ----
    # torch cat([x_feat, y], dim=2) @ W_ih  ==  x_feat @ Wx + y * Wy  (no concat)
    ge0 = (jnp.dot(xfeat_h, we0x_ref[...], preferred_element_type=f32)
           + y_hist_ref[...] * we0y_ref[...]
           + be0_ref[...])                                 # [Th*Bp, 4H]

    we0h = we0h_ref[...]
    we1x = we1x_ref[...]
    we1h = we1h_ref[...]
    be1 = be1_ref[...]

    h0, c0 = zeros_h, zeros_h        # encoder layer-0 state
    h1, c1 = zeros_h, zeros_h        # encoder layer-1 state
    # Round r: layer-1 consumes layer-0's step r-1 output while layer-0 runs
    # step r -> two independent [Bp,H]@[H,4H] recurrent matmuls per round.
    for r in range(Th + 1):          # static -> fully unrolled
        if r >= 1:
            g1 = (jnp.dot(h0, we1x, preferred_element_type=f32)
                  + jnp.dot(h1, we1h, preferred_element_type=f32)
                  + be1)
            h1, c1 = cell(g1, c1)
            if r - 1 < Th - 1:       # only steps 0..Th-2 feed inter_classifier
                h1_buf[pl.ds((r - 1) * Bp, Bp), :] = h1
        if r < Th:
            g0 = ge0[r * Bp:(r + 1) * Bp, :] + jnp.dot(
                h0, we0h, preferred_element_type=f32)
            h0, c0 = cell(g0, c0)
    # h0,c0 = encoder layer-0 final state; h1,c1 = encoder layer-1 final state.

    # inter_classifier(hiddens[:, :-1, :]) -> one matmul + one lane-dense store
    yhp_ref[...] = (jnp.dot(h1_buf[...], wint_ref[...], preferred_element_type=f32)
                    + bint_ref[...])

    # ---- bidirectional decoder LSTM (2 layers) ----
    wd0x = wd0x_ref[...]; wd0h = wd0h_ref[...]; bd0 = bd0_ref[...]
    wd1x = wd1x_ref[...]; wd1h = wd1h_ref[...]; bd1 = bd1_ref[...]

    # layer 0 whole-sequence input projections
    gd0f = jnp.dot(xfeat_p, wd0x[0], preferred_element_type=f32) + bd0[0]
    gd0b = jnp.dot(xfeat_p, wd0x[1], preferred_element_type=f32) + bd0[1]

    # layer 0: fwd seeded with encoder ht[0]/c[0], bwd seeded with encoder ht[1]/c[1]
    # fwd and bwd chains are interleaved -> 2 independent recurrent matmuls/step.
    hf, cf = h0, c0
    hb, cb = h1, c1
    w0hf, w0hb = wd0h[0], wd0h[1]
    for s in range(Tp):
        tb = Tp - 1 - s
        gf = gd0f[s * Bp:(s + 1) * Bp, :] + jnp.dot(hf, w0hf, preferred_element_type=f32)
        gb = gd0b[tb * Bp:(tb + 1) * Bp, :] + jnp.dot(hb, w0hb, preferred_element_type=f32)
        hf, cf = cell(gf, cf)
        hb, cb = cell(gb, cb)
        d0f_buf[pl.ds(s * Bp, Bp), :] = hf
        d0b_buf[pl.ds(tb * Bp, Bp), :] = hb

    # layer 1 input = cat([h_fwd, h_bwd]); replaced by row-split weights reading
    # the aligned VMEM scratch (no concat, two whole-sequence matmuls each).
    d0f_all = d0f_buf[...]
    d0b_all = d0b_buf[...]
    gd1f = (jnp.dot(d0f_all, wd1x[0, :H, :], preferred_element_type=f32)
            + jnp.dot(d0b_all, wd1x[0, H:, :], preferred_element_type=f32)
            + bd1[0])
    gd1b = (jnp.dot(d0f_all, wd1x[1, :H, :], preferred_element_type=f32)
            + jnp.dot(d0b_all, wd1x[1, H:, :], preferred_element_type=f32)
            + bd1[1])

    hf, cf = zeros_h, zeros_h
    hb, cb = zeros_h, zeros_h
    w1hf, w1hb = wd1h[0], wd1h[1]
    for s in range(Tp):
        tb = Tp - 1 - s
        gf = gd1f[s * Bp:(s + 1) * Bp, :] + jnp.dot(hf, w1hf, preferred_element_type=f32)
        gb = gd1b[tb * Bp:(tb + 1) * Bp, :] + jnp.dot(hb, w1hb, preferred_element_type=f32)
        hf, cf = cell(gf, cf)
        hb, cb = cell(gb, cb)
        d1f_buf[pl.ds(s * Bp, Bp), :] = hf
        d1b_buf[pl.ds(tb * Bp, Bp), :] = hb

    # final_classifier(cat([h_fwd, h_bwd])) via row-split weights; one lane-dense store
    wfin = wfin_ref[...]
    result_ref[...] = (jnp.dot(d1f_buf[...], wfin[:H, :], preferred_element_type=f32)
                       + jnp.dot(d1b_buf[...], wfin[H:, :], preferred_element_type=f32)
                       + bfin_ref[...])


# ---------------------------------------------------------------------------
# Wrapper (layout plumbing only: batch/lane padding, gate permutation)
# ---------------------------------------------------------------------------
def conv_rnn_forward(x_seq_hist, y_seq_hist, x_seq_pred, y_seq_pred, params, *,
                     hidden_size):
    B, Th, D = x_seq_hist.shape
    Tp = x_seq_pred.shape[1]
    H = hidden_size
    Q = params["w_fin"].shape[1]

    # --- sublane alignment: zero-pad batch to a multiple of 8 ---
    Bp = max(8, ((B + 7) // 8) * 8)
    pad_b = Bp - B
    xh = jnp.pad(x_seq_hist, ((0, pad_b), (0, 0), (0, 0)))
    xp = jnp.pad(x_seq_pred, ((0, pad_b), (0, 0), (0, 0)))
    yh = jnp.pad(y_seq_hist, ((0, pad_b), (0, 0)))

    # time-major flattened layouts so the kernel can do whole-sequence matmuls
    xh_tm = jnp.transpose(xh, (1, 0, 2)).reshape(Th * Bp, D)
    xp_tm = jnp.transpose(xp, (1, 0, 2)).reshape(Tp * Bp, D)
    x_all = jnp.concatenate([xh_tm, xp_tm], axis=0)        # ship x once, one matmul
    y_tm = jnp.transpose(yh, (1, 0)).reshape(Th * Bp, 1)

    # --- gate-axis permutation: PyTorch [i,f,g,o] -> [i,f,o,g] (one sigmoid slab) ---
    def perm(w):
        return jnp.concatenate(
            [w[..., :2 * H], w[..., 3 * H:], w[..., 2 * H:3 * H]], axis=-1)

    # --- lane-dense outputs: pad classifier output dim Q up to a multiple of 128 ---
    Qp = ((Q + 127) // 128) * 128
    def padq(w):
        return jnp.pad(w, [(0, 0)] * (w.ndim - 1) + [(0, Qp - w.shape[-1])])

    kernel = functools.partial(_conv_rnn_kernel, Bp=Bp, Th=Th, Tp=Tp, H=H)

    inputs = (
        x_all, y_tm,
        params["w_enc"], params["b_enc"],
        perm(params["we_ih0_x"]), perm(params["we_ih0_y"]),
        perm(params["we_hh0"]), perm(params["be0"]),
        perm(params["we_ih1"]), perm(params["we_hh1"]), perm(params["be1"]),
        perm(params["wd_ih0"]), perm(params["wd_hh0"]), perm(params["bd0"]),
        perm(params["wd_ih1"]), perm(params["wd_hh1"]), perm(params["bd1"]),
        padq(params["w_fin"]), padq(params["b_fin"]),
        padq(params["w_int"]), padq(params["b_int"]),
    )

    result_flat, yhp_flat = pl.pallas_call(
        kernel,
        out_shape=(jax.ShapeDtypeStruct((Tp * Bp, Qp), jnp.float32),
                   jax.ShapeDtypeStruct(((Th - 1) * Bp, Qp), jnp.float32)),
        in_specs=[pl.BlockSpec(memory_space=pltpu.MemorySpace.VMEM)] * len(inputs),
        out_specs=(pl.BlockSpec(memory_space=pltpu.MemorySpace.VMEM),
                   pl.BlockSpec(memory_space=pltpu.MemorySpace.VMEM)),
        scratch_shapes=[
            pltpu.VMEM(((Th - 1) * Bp, H), jnp.float32),   # encoder layer-1 outputs
            pltpu.VMEM((Tp * Bp, H), jnp.float32),         # decoder layer-0 fwd
            pltpu.VMEM((Tp * Bp, H), jnp.float32),         # decoder layer-0 bwd
            pltpu.VMEM((Tp * Bp, H), jnp.float32),         # decoder layer-1 fwd
            pltpu.VMEM((Tp * Bp, H), jnp.float32),         # decoder layer-1 bwd
        ],
    )(*inputs)

    # back to batch-first, drop the batch and lane padding
    result = jnp.transpose(result_flat.reshape(Tp, Bp, Qp), (1, 0, 2))[:B, :, :Q]
    y_seq_hist_pred = jnp.transpose(
        yhp_flat.reshape(Th - 1, Bp, Qp), (1, 0, 2))[:B, :, :Q]
    y_seq_hist_gt = y_seq_hist[:, 1:]
    return result, y_seq_pred, y_seq_hist_pred, y_seq_hist_gt


# ---------------------------------------------------------------------------
# Pure-JAX reference (mirrors the PyTorch forward, incl. the concats,
# with the ORIGINAL [i,f,g,o] gate order and unpadded shapes)
# ---------------------------------------------------------------------------
def _lstm_layer_ref(x_tm, w_ih, w_hh, b, h0, c0, reverse=False):
    T = x_tm.shape[0]
    H = h0.shape[1]
    h, c = h0, c0
    outs = [None] * T
    order = range(T - 1, -1, -1) if reverse else range(T)
    for t in order:
        g = x_tm[t] @ w_ih + h @ w_hh + b
        i = jax.nn.sigmoid(g[:, :H]); f = jax.nn.sigmoid(g[:, H:2 * H])
        gg = jnp.tanh(g[:, 2 * H:3 * H]); o = jax.nn.sigmoid(g[:, 3 * H:])
        c = f * c + i * gg
        h = o * jnp.tanh(c)
        outs[t] = h
    return jnp.stack(outs, axis=0), h, c


def conv_rnn_reference(x_seq_hist, y_seq_hist, x_seq_pred, y_seq_pred, params, *,
                       hidden_size):
    B, Th, _ = x_seq_hist.shape
    Tp = x_seq_pred.shape[1]
    H = hidden_size
    xfh = jnp.tanh(x_seq_hist @ params["w_enc"] + params["b_enc"])
    xfp = jnp.tanh(x_seq_pred @ params["w_enc"] + params["b_enc"])
    x_total_hist = jnp.concatenate([xfh, y_seq_hist[:, :, None]], axis=2)
    xth = jnp.transpose(x_total_hist, (1, 0, 2))
    xtp = jnp.transpose(xfp, (1, 0, 2))
    z = jnp.zeros((B, H), jnp.float32)

    we_ih0 = jnp.concatenate([params["we_ih0_x"], params["we_ih0_y"]], axis=0)
    out0, he0, ce0 = _lstm_layer_ref(xth, we_ih0, params["we_hh0"], params["be0"], z, z)
    out1, he1, ce1 = _lstm_layer_ref(out0, params["we_ih1"], params["we_hh1"], params["be1"], z, z)
    hiddens = jnp.transpose(out1, (1, 0, 2))               # [B, Th, H]

    d0f, _, _ = _lstm_layer_ref(xtp, params["wd_ih0"][0], params["wd_hh0"][0], params["bd0"][0], he0, ce0)
    d0b, _, _ = _lstm_layer_ref(xtp, params["wd_ih0"][1], params["wd_hh0"][1], params["bd0"][1], he1, ce1, reverse=True)
    d0 = jnp.concatenate([d0f, d0b], axis=2)               # [Tp, B, 2H]
    d1f, _, _ = _lstm_layer_ref(d0, params["wd_ih1"][0], params["wd_hh1"][0], params["bd1"][0], z, z)
    d1b, _, _ = _lstm_layer_ref(d0, params["wd_ih1"][1], params["wd_hh1"][1], params["bd1"][1], z, z, reverse=True)
    hiddens_out = jnp.transpose(jnp.concatenate([d1f, d1b], axis=2), (1, 0, 2))

    result = hiddens_out @ params["w_fin"] + params["b_fin"]
    y_hist_pred = hiddens[:, :-1, :] @ params["w_int"] + params["b_int"]
    return result, y_seq_pred, y_hist_pred, y_seq_hist[:, 1:]


# ---------------------------------------------------------------------------
# Deterministic params (linear/classifier: normal(0,0.02) + zero bias, as in
# init_weights(); LSTM weights: small values ~ 1/sqrt(H)). Gate order [i,f,g,o].
# ---------------------------------------------------------------------------
def init_params(key, input_dim, hidden_size, context_size, num_quantiles):
    D, H, C, Q = input_dim, hidden_size, context_size, num_quantiles
    G = 4 * H
    keys = iter(jax.random.split(key, 20))

    def nrm(shape, scale):
        return scale * jax.random.normal(next(keys), shape, dtype=jnp.float32)

    s = 1.0 / math.sqrt(H)
    return {
        "w_enc": nrm((D, C), 0.02), "b_enc": jnp.zeros((1, C), jnp.float32),
        "w_fin": nrm((2 * H, Q), 0.02), "b_fin": jnp.zeros((1, Q), jnp.float32),
        "w_int": nrm((H, Q), 0.02), "b_int": jnp.zeros((1, Q), jnp.float32),
        # encoder LSTM, layer 0 (input = context_size + 1; W_ih split x / y parts)
        "we_ih0_x": nrm((C, G), s), "we_ih0_y": nrm((1, G), s),
        "we_hh0": nrm((H, G), s), "be0": nrm((1, G), s),
        # encoder LSTM, layer 1
        "we_ih1": nrm((H, G), s), "we_hh1": nrm((H, G), s), "be1": nrm((1, G), s),
        # bidirectional decoder LSTM, layer 0 / layer 1  ([fwd, bwd] stacked)
        "wd_ih0": nrm((2, C, G), s), "wd_hh0": nrm((2, H, G), s), "bd0": nrm((2, 1, G), s),
        "wd_ih1": nrm((2, 2 * H, G), s), "wd_hh1": nrm((2, H, G), s), "bd1": nrm((2, 1, G), s),
    }


if __name__ == "__main__":
    B = 2
    input_dim = 4
    hidden_size = 32
    context_size = 16
    num_quantiles = 8
    pred_long = 8
    hist_long = 8

    key = jax.random.PRNGKey(0)
    kp, k1, k2, k3, k4 = jax.random.split(key, 5)
    params = init_params(kp, input_dim, hidden_size, context_size, num_quantiles)

    x_seq_hist = jax.random.normal(k1, (B, hist_long, input_dim), dtype=jnp.float32)
    y_seq_hist = jax.random.normal(k2, (B, hist_long), dtype=jnp.float32)
    x_seq_pred = jax.random.normal(k3, (B, pred_long, input_dim), dtype=jnp.float32)
    y_seq_pred = jax.random.normal(k4, (B, pred_long), dtype=jnp.float32)

    result, ysp, yhp, yhg = conv_rnn_forward(
        x_seq_hist, y_seq_hist, x_seq_pred, y_seq_pred, params,
        hidden_size=hidden_size)
    result = jax.block_until_ready(result)
    yhp = jax.block_until_ready(yhp)

    r_ref, ysp_ref, yhp_ref, yhg_ref = conv_rnn_reference(
        x_seq_hist, y_seq_hist, x_seq_pred, y_seq_pred, params,
        hidden_size=hidden_size)

    assert result.shape == (B, pred_long, num_quantiles)
    assert yhp.shape == (B, hist_long - 1, num_quantiles)
    assert yhg.shape == (B, hist_long - 1)
    assert jnp.allclose(result, r_ref, rtol=1e-4, atol=1e-4), "result mismatch"
    assert jnp.allclose(yhp, yhp_ref, rtol=1e-4, atol=1e-4), "y_hist_pred mismatch"
    assert jnp.allclose(yhg, yhg_ref), "y_hist_gt mismatch"
    assert jnp.allclose(ysp, ysp_ref), "y_seq_pred passthrough mismatch"

    print("KERNEL_OK")
</pallas_src>

<mosaic_0001>
module attributes {stable_mosaic.version = 11 : i64} {
  func.func @_conv_rnn_kernel(%arg0: memref<128x4xf32, #tpu.memory_space<vmem>>, %arg1: memref<64x1xf32, #tpu.memory_space<vmem>>, %arg2: memref<4x16xf32, #tpu.memory_space<vmem>>, %arg3: memref<1x16xf32, #tpu.memory_space<vmem>>, %arg4: memref<16x128xf32, #tpu.memory_space<vmem>>, %arg5: memref<1x128xf32, #tpu.memory_space<vmem>>, %arg6: memref<32x128xf32, #tpu.memory_space<vmem>>, %arg7: memref<1x128xf32, #tpu.memory_space<vmem>>, %arg8: memref<32x128xf32, #tpu.memory_space<vmem>>, %arg9: memref<32x128xf32, #tpu.memory_space<vmem>>, %arg10: memref<1x128xf32, #tpu.memory_space<vmem>>, %arg11: memref<2x16x128xf32, #tpu.memory_space<vmem>>, %arg12: memref<2x32x128xf32, #tpu.memory_space<vmem>>, %arg13: memref<2x1x128xf32, #tpu.memory_space<vmem>>, %arg14: memref<2x64x128xf32, #tpu.memory_space<vmem>>, %arg15: memref<2x32x128xf32, #tpu.memory_space<vmem>>, %arg16: memref<2x1x128xf32, #tpu.memory_space<vmem>>, %arg17: memref<64x128xf32, #tpu.memory_space<vmem>>, %arg18: memref<1x128xf32, #tpu.memory_space<vmem>>, %arg19: memref<32x128xf32, #tpu.memory_space<vmem>>, %arg20: memref<1x128xf32, #tpu.memory_space<vmem>>, %arg21: memref<64x128xf32, #tpu.memory_space<vmem>>, %arg22: memref<56x128xf32, #tpu.memory_space<vmem>>, %arg23: memref<56x32xf32, #tpu.memory_space<vmem>>, %arg24: memref<64x32xf32, #tpu.memory_space<vmem>>, %arg25: memref<64x32xf32, #tpu.memory_space<vmem>>, %arg26: memref<64x32xf32, #tpu.memory_space<vmem>>, %arg27: memref<64x32xf32, #tpu.memory_space<vmem>>) attributes {dimension_semantics = [], scalar_prefetch = 0 : i64, scratch_operands = 5 : i64, tpu.core_type = #tpu.core_type<tc>} {
    %cst = arith.constant 0.000000e+00 : f32
    %0 = vector.broadcast %cst : f32 to vector<8x32xf32>
    %c0 = arith.constant 0 : index
    %c0_0 = arith.constant 0 : index
    %1 = vector.load %arg0[%c0, %c0_0] : memref<128x4xf32, #tpu.memory_space<vmem>>, vector<128x4xf32>
    %c0_1 = arith.constant 0 : index
    %c0_2 = arith.constant 0 : index
    %2 = vector.load %arg2[%c0_1, %c0_2] : memref<4x16xf32, #tpu.memory_space<vmem>>, vector<4x16xf32>
    %cst_3 = arith.constant dense<0.000000e+00> : vector<128x16xf32>
    %3 = tpu.matmul %1, %2, %cst_3 {dimension_numbers = #tpu.dot_dimension_numbers<[1], [0], [0], [1], [0, 0, 1, 1], [], []>} : vector<128x4xf32>, vector<4x16xf32>, vector<128x16xf32> -> vector<128x16xf32>
    %c0_4 = arith.constant 0 : index
    %c0_5 = arith.constant 0 : index
    %4 = vector.load %arg3[%c0_4, %c0_5] : memref<1x16xf32, #tpu.memory_space<vmem>>, vector<1x16xf32>
    %5 = vector.broadcast %4 : vector<1x16xf32> to vector<128x16xf32>
    %6 = arith.addf %3, %5 : vector<128x16xf32>
    %7 = math.tanh %6 : vector<128x16xf32>
    %8 = vector.extract_strided_slice %7 {offsets = [0, 0], sizes = [64, 16], strides = [1, 1]} : vector<128x16xf32> to vector<64x16xf32>
    %9 = vector.extract_strided_slice %7 {offsets = [64, 0], sizes = [64, 16], strides = [1, 1]} : vector<128x16xf32> to vector<64x16xf32>
    %c0_6 = arith.constant 0 : index
    %c0_7 = arith.constant 0 : index
    %10 = vector.load %arg4[%c0_6, %c0_7] : memref<16x128xf32, #tpu.memory_space<vmem>>, vector<16x128xf32>
    %cst_8 = arith.constant dense<0.000000e+00> : vector<64x128xf32>
    %11 = tpu.matmul %8, %10, %cst_8 {dimension_numbers = #tpu.dot_dimension_numbers<[1], [0], [0], [1], [0, 0, 1, 1], [], []>} : vector<64x16xf32>, vector<16x128xf32>, vector<64x128xf32> -> vector<64x128xf32>
    %c0_9 = arith.constant 0 : index
    %c0_10 = arith.constant 0 : index
    %12 = vector.load %arg1[%c0_9, %c0_10] : memref<64x1xf32, #tpu.memory_space<vmem>>, vector<64x1xf32>
    %c0_11 = arith.constant 0 : index
    %c0_12 = arith.constant 0 : index
    %13 = vector.load %arg5[%c0_11, %c0_12] : memref<1x128xf32, #tpu.memory_space<vmem>>, vector<1x128xf32>
    %14 = vector.broadcast %12 : vector<64x1xf32> to vector<64x128xf32>
    %15 = vector.broadcast %13 : vector<1x128xf32> to vector<64x128xf32>
    %16 = arith.mulf %14, %15 : vector<64x128xf32>
    %17 = arith.addf %11, %16 : vector<64x128xf32>
    %c0_13 = arith.constant 0 : index
    %c0_14 = arith.constant 0 : index
    %18 = vector.load %arg7[%c0_13, %c0_14] : memref<1x128xf32, #tpu.memory_space<vmem>>, vector<1x128xf32>
    %19 = vector.broadcast %18 : vector<1x128xf32> to vector<64x128xf32>
    %20 = arith.addf %17, %19 : vector<64x128xf32>
    %c0_15 = arith.constant 0 : index
    %c0_16 = arith.constant 0 : index
    %21 = vector.load %arg6[%c0_15, %c0_16] : memref<32x128xf32, #tpu.memory_space<vmem>>, vector<32x128xf32>
    %c0_17 = arith.constant 0 : index
    %c0_18 = arith.constant 0 : index
    %22 = vector.load %arg8[%c0_17, %c0_18] : memref<32x128xf32, #tpu.memory_space<vmem>>, vector<32x128xf32>
    %c0_19 = arith.constant 0 : index
    %c0_20 = arith.constant 0 : index
    %23 = vector.load %arg9[%c0_19, %c0_20] : memref<32x128xf32, #tpu.memory_space<vmem>>, vector<32x128xf32>
    %c0_21 = arith.constant 0 : index
    %c0_22 = arith.constant 0 : index
    %24 = vector.load %arg10[%c0_21, %c0_22] : memref<1x128xf32, #tpu.memory_space<vmem>>, vector<1x128xf32>
    %25 = vector.extract_strided_slice %20 {offsets = [0, 0], sizes = [8, 128], strides = [1, 1]} : vector<64x128xf32> to vector<8x128xf32>
    %cst_23 = arith.constant dense<0.000000e+00> : vector<8x128xf32>
    %26 = tpu.matmul %0, %21, %cst_23 {dimension_numbers = #tpu.dot_dimension_numbers<[1], [0], [0], [1], [0, 0, 1, 1], [], []>} : vector<8x32xf32>, vector<32x128xf32>, vector<8x128xf32> -> vector<8x128xf32>
    %27 = arith.addf %25, %26 : vector<8x128xf32>
    %28 = vector.extract_strided_slice %27 {offsets = [0, 0], sizes = [8, 96], strides = [1, 1]} : vector<8x128xf32> to vector<8x96xf32>
    %29 = arith.negf %28 : vector<8x96xf32>
    %30 = math.exp %29 : vector<8x96xf32>
    %cst_24 = arith.constant 1.000000e+00 : f32
    %31 = vector.broadcast %cst_24 : f32 to vector<8x96xf32>
    %32 = arith.addf %31, %30 : vector<8x96xf32>
    %33 = arith.divf %31, %32 : vector<8x96xf32>
    %34 = vector.extract_strided_slice %33 {offsets = [0, 0], sizes = [8, 32], strides = [1, 1]} : vector<8x96xf32> to vector<8x32xf32>
    %35 = vector.extract_strided_slice %33 {offsets = [0, 32], sizes = [8, 32], strides = [1, 1]} : vector<8x96xf32> to vector<8x32xf32>
    %36 = vector.extract_strided_slice %33 {offsets = [0, 64], sizes = [8, 32], strides = [1, 1]} : vector<8x96xf32> to vector<8x32xf32>
    %37 = vector.extract_strided_slice %27 {offsets = [0, 96], sizes = [8, 32], strides = [1, 1]} : vector<8x128xf32> to vector<8x32xf32>
    %38 = math.tanh %37 : vector<8x32xf32>
    %39 = arith.mulf %35, %0 : vector<8x32xf32>
    %40 = arith.mulf %34, %38 : vector<8x32xf32>
    %41 = arith.addf %39, %40 : vector<8x32xf32>
    %42 = math.tanh %41 : vector<8x32xf32>
    %43 = arith.mulf %36, %42 : vector<8x32xf32>
    %cst_25 = arith.constant dense<0.000000e+00> : vector<8x128xf32>
    %44 = tpu.matmul %43, %22, %cst_25 {dimension_numbers = #tpu.dot_dimension_numbers<[1], [0], [0], [1], [0, 0, 1, 1], [], []>} : vector<8x32xf32>, vector<32x128xf32>, vector<8x128xf32> -> vector<8x128xf32>
    %cst_26 = arith.constant dense<0.000000e+00> : vector<8x128xf32>
    %45 = tpu.matmul %0, %23, %cst_26 {dimension_numbers = #tpu.dot_dimension_numbers<[1], [0], [0], [1], [0, 0, 1, 1], [], []>} : vector<8x32xf32>, vector<32x128xf32>, vector<8x128xf32> -> vector<8x128xf32>
    %46 = arith.addf %44, %45 : vector<8x128xf32>
    %47 = vector.broadcast %24 : vector<1x128xf32> to vector<8x128xf32>
    %48 = arith.addf %46, %47 : vector<8x128xf32>
    %49 = vector.extract_strided_slice %48 {offsets = [0, 0], sizes = [8, 96], strides = [1, 1]} : vector<8x128xf32> to vector<8x96xf32>
    %50 = arith.negf %49 : vector<8x96xf32>
    %51 = math.exp %50 : vector<8x96xf32>
    %cst_27 = arith.constant 1.000000e+00 : f32
    %52 = vector.broadcast %cst_27 : f32 to vector<8x96xf32>
    %53 = arith.addf %52, %51 : vector<8x96xf32>
    %54 = arith.divf %52, %53 : vector<8x96xf32>
    %55 = vector.extract_strided_slice %54 {offsets = [0, 0], sizes = [8, 32], strides = [1, 1]} : vector<8x96xf32> to vector<8x32xf32>
    %56 = vector.extract_strided_slice %54 {offsets = [0, 32], sizes = [8, 32], strides = [1, 1]} : vector<8x96xf32> to vector<8x32xf32>
    %57 = vector.extract_strided_slice %54 {offsets = [0, 64], sizes = [8, 32], strides = [1, 1]} : vector<8x96xf32> to vector<8x32xf32>
    %58 = vector.extract_strided_slice %48 {offsets = [0, 96], sizes = [8, 32], strides = [1, 1]} : vector<8x128xf32> to vector<8x32xf32>
    %59 = math.tanh %58 : vector<8x32xf32>
    %60 = arith.mulf %56, %0 : vector<8x32xf32>
    %61 = arith.mulf %55, %59 : vector<8x32xf32>
    %62 = arith.addf %60, %61 : vector<8x32xf32>
    %63 = math.tanh %62 : vector<8x32xf32>
    %64 = arith.mulf %57, %63 : vector<8x32xf32>
    %c0_28 = arith.constant 0 : index
    %c0_29 = arith.constant 0 : index
    %65 = vector.load %arg23[%c0_28, %c0_29] : memref<56x32xf32, #tpu.memory_space<vmem>>, vector<8x32xf32>
    tpu.vector_store %arg23[%c0_28, %c0_29], %64 {strides = array<i32>} : memref<56x32xf32, #tpu.memory_space<vmem>>, vector<8x32xf32>,
    %66 = vector.extract_strided_slice %20 {offsets = [8, 0], sizes = [8, 128], strides = [1, 1]} : vector<64x128xf32> to vector<8x128xf32>
    %cst_30 = arith.constant dense<0.000000e+00> : vector<8x128xf32>
    %67 = tpu.matmul %43, %21, %cst_30 {dimension_numbers = #tpu.dot_dimension_numbers<[1], [0], [0], [1], [0, 0, 1, 1], [], []>} : vector<8x32xf32>, vector<32x128xf32>, vector<8x128xf32> -> vector<8x128xf32>
    %68 = arith.addf %66, %67 : vector<8x128xf32>
    %69 = vector.extract_strided_slice %68 {offsets = [0, 0], sizes = [8, 96], strides = [1, 1]} : vector<8x128xf32> to vector<8x96xf32>
    %70 = arith.negf %69 : vector<8x96xf32>
    %71 = math.exp %70 : vector<8x96xf32>
    %cst_31 = arith.constant 1.000000e+00 : f32
    %72 = vector.broadcast %cst_31 : f32 to vector<8x96xf32>
    %73 = arith.addf %72, %71 : vector<8x96xf32>
    %74 = arith.divf %72, %73 : vector<8x96xf32>
    %75 = vector.extract_strided_slice %74 {offsets = [0, 0], sizes = [8, 32], strides = [1, 1]} : vector<8x96xf32> to vector<8x32xf32>
    %76 = vector.extract_strided_slice %74 {offsets = [0, 32], sizes = [8, 32], strides = [1, 1]} : vector<8x96xf32> to vector<8x32xf32>
    %77 = vector.extract_strided_slice %74 {offsets = [0, 64], sizes = [8, 32], strides = [1, 1]} : vector<8x96xf32> to vector<8x32xf32>
    %78 = vector.extract_strided_slice %68 {offsets = [0, 96], sizes = [8, 32], strides = [1, 1]} : vector<8x128xf32> to vector<8x32xf32>
    %79 = math.tanh %78 : vector<8x32xf32>
    %80 = arith.mulf %76, %41 : vector<8x32xf32>
    %81 = arith.mulf %75, %79 : vector<8x32xf32>
    %82 = arith.addf %80, %81 : vector<8x32xf32>
    %83 = math.tanh %82 : vector<8x32xf32>
    %84 = arith.mulf %77, %83 : vector<8x32xf32>
    %cst_32 = arith.constant dense<0.000000e+00> : vector<8x128xf32>
    %85 = tpu.matmul %84, %22, %cst_32 {dimension_numbers = #tpu.dot_dimension_numbers<[1], [0], [0], [1], [0, 0, 1, 1], [], []>} : vector<8x32xf32>, vector<32x128xf32>, vector<8x128xf32> -> vector<8x128xf32>
    %cst_33 = arith.constant dense<0.000000e+00> : vector<8x128xf32>
    %86 = tpu.matmul %64, %23, %cst_33 {dimension_numbers = #tpu.dot_dimension_numbers<[1], [0], [0], [1], [0, 0, 1, 1], [], []>} : vector<8x32xf32>, vector<32x128xf32>, vector<8x128xf32> -> vector<8x128xf32>
    %87 = arith.addf %85, %86 : vector<8x128xf32>
    %88 = vector.broadcast %24 : vector<1x128xf32> to vector<8x128xf32>
    %89 = arith.addf %87, %88 : vector<8x128xf32>
    %90 = vector.extract_strided_slice %89 {offsets = [0, 0], sizes = [8, 96], strides = [1, 1]} : vector<8x128xf32> to vector<8x96xf32>
    %91 = arith.negf %90 : vector<8x96xf32>
    %92 = math.exp %91 : vector<8x96xf32>
    %cst_34 = arith.constant 1.000000e+00 : f32
    %93 = vector.broadcast %cst_34 : f32 to vector<8x96xf32>
    %94 = arith.addf %93, %92 : vector<8x96xf32>
    %95 = arith.divf %93, %94 : vector<8x96xf32>
    %96 = vector.extract_strided_slice %95 {offsets = [0, 0], sizes = [8, 32], strides = [1, 1]} : vector<8x96xf32> to vector<8x32xf32>
    %97 = vector.extract_strided_slice %95 {offsets = [0, 32], sizes = [8, 32], strides = [1, 1]} : vector<8x96xf32> to vector<8x32xf32>
    %98 = vector.extract_strided_slice %95 {offsets = [0, 64], sizes = [8, 32], strides = [1, 1]} : vector<8x96xf32> to vector<8x32xf32>
    %99 = vector.extract_strided_slice %89 {offsets = [0, 96], sizes = [8, 32], strides = [1, 1]} : vector<8x128xf32> to vector<8x32xf32>
    %100 = math.tanh %99 : vector<8x32xf32>
    %101 = arith.mulf %97, %62 : vector<8x32xf32>
    %102 = arith.mulf %96, %100 : vector<8x32xf32>
    %103 = arith.addf %101, %102 : vector<8x32xf32>
    %104 = math.tanh %103 : vector<8x32xf32>
    %105 = arith.mulf %98, %104 : vector<8x32xf32>
    %c8 = arith.constant 8 : index
    %c0_35 = arith.constant 0 : index
    %106 = vector.load %arg23[%c8, %c0_35] : memref<56x32xf32, #tpu.memory_space<vmem>>, vector<8x32xf32>
    tpu.vector_store %arg23[%c8, %c0_35], %105 {strides = array<i32>} : memref<56x32xf32, #tpu.memory_space<vmem>>, vector<8x32xf32>,
    %107 = vector.extract_strided_slice %20 {offsets = [16, 0], sizes = [8, 128], strides = [1, 1]} : vector<64x128xf32> to vector<8x128xf32>
    %cst_36 = arith.constant dense<0.000000e+00> : vector<8x128xf32>
    %108 = tpu.matmul %84, %21, %cst_36 {dimension_numbers = #tpu.dot_dimension_numbers<[1], [0], [0], [1], [0, 0, 1, 1], [], []>} : vector<8x32xf32>, vector<32x128xf32>, vector<8x128xf32> -> vector<8x128xf32>
    %109 = arith.addf %107, %108 : vector<8x128xf32>
    %110 = vector.extract_strided_slice %109 {offsets = [0, 0], sizes = [8, 96], strides = [1, 1]} : vector<8x128xf32> to vector<8x96xf32>
    %111 = arith.negf %110 : vector<8x96xf32>
    %112 = math.exp %111 : vector<8x96xf32>
    %cst_37 = arith.constant 1.000000e+00 : f32
    %113 = vector.broadcast %cst_37 : f32 to vector<8x96xf32>
    %114 = arith.addf %113, %112 : vector<8x96xf32>
    %115 = arith.divf %113, %114 : vector<8x96xf32>
    %116 = vector.extract_strided_slice %115 {offsets = [0, 0], sizes = [8, 32], strides = [1, 1]} : vector<8x96xf32> to vector<8x32xf32>
    %117 = vector.extract_strided_slice %115 {offsets = [0, 32], sizes = [8, 32], strides = [1, 1]} : vector<8x96xf32> to vector<8x32xf32>
    %118 = vector.extract_strided_slice %115 {offsets = [0, 64], sizes = [8, 32], strides = [1, 1]} : vector<8x96xf32> to vector<8x32xf32>
    %119 = vector.extract_strided_slice %109 {offsets = [0, 96], sizes = [8, 32], strides = [1, 1]} : vector<8x128xf32> to vector<8x32xf32>
    %120 = math.tanh %119 : vector<8x32xf32>
    %121 = arith.mulf %117, %82 : vector<8x32xf32>
    %122 = arith.mulf %116, %120 : vector<8x32xf32>
    %123 = arith.addf %121, %122 : vector<8x32xf32>
    %124 = math.tanh %123 : vector<8x32xf32>
    %125 = arith.mulf %118, %124 : vector<8x32xf32>
    %cst_38 = arith.constant dense<0.000000e+00> : vector<8x128xf32>
    %126 = tpu.matmul %125, %22, %cst_38 {dimension_numbers = #tpu.dot_dimension_numbers<[1], [0], [0], [1], [0, 0, 1, 1], [], []>} : vector<8x32xf32>, vector<32x128xf32>, vector<8x128xf32> -> vector<8x128xf32>
    %cst_39 = arith.constant dense<0.000000e+00> : vector<8x128xf32>
    %127 = tpu.matmul %105, %23, %cst_39 {dimension_numbers = #tpu.dot_dimension_numbers<[1], [0], [0], [1], [0, 0, 1, 1], [], []>} : vector<8x32xf32>, vector<32x128xf32>, vector<8x128xf32> -> vector<8x128xf32>
    %128 = arith.addf %126, %127 : vector<8x128xf32>
    %129 = vector.broadcast %24 : vector<1x128xf32> to vector<8x128xf32>
    %130 = arith.addf %128, %129 : vector<8x128xf32>
    %131 = vector.extract_strided_slice %130 {offsets = [0, 0], sizes = [8, 96], strides = [1, 1]} : vector<8x128xf32> to vector<8x96xf32>
    %132 = arith.negf %131 : vector<8x96xf32>
    %133 = math.exp %132 : vector<8x96xf32>
    %cst_40 = arith.constant 1.000000e+00 : f32
    %134 = vector.broadcast %cst_40 : f32 to vector<8x96xf32>
    %135 = arith.addf %134, %133 : vector<8x96xf32>
    %136 = arith.divf %134, %135 : vector<8x96xf32>
    %137 = vector.extract_strided_slice %136 {offsets = [0, 0], sizes = [8, 32], strides = [1, 1]} : vector<8x96xf32> to vector<8x32xf32>
    %138 = vector.extract_strided_slice %136 {offsets = [0, 32], sizes = [8, 32], strides = [1, 1]} : vector<8x96xf32> to vector<8x32xf32>
    %139 = vector.extract_strided_slice %136 {offsets = [0, 64], sizes = [8, 32], strides = [1, 1]} : vector<8x96xf32> to vector<8x32xf32>
    %140 = vector.extract_strided_slice %130 {offsets = [0, 96], sizes = [8, 32], strides = [1, 1]} : vector<8x128xf32> to vector<8x32xf32>
    %141 = math.tanh %140 : vector<8x32xf32>
    %142 = arith.mulf %138, %103 : vector<8x32xf32>
    %143 = arith.mulf %137, %141 : vector<8x32xf32>
    %144 = arith.addf %142, %143 : vector<8x32xf32>
    %145 = math.tanh %144 : vector<8x32xf32>
    %146 = arith.mulf %139, %145 : vector<8x32xf32>
    %c16 = arith.constant 16 : index
    %c0_41 = arith.constant 0 : index
    %147 = vector.load %arg23[%c16, %c0_41] : memref<56x32xf32, #tpu.memory_space<vmem>>, vector<8x32xf32>
    tpu.vector_store %arg23[%c16, %c0_41], %146 {strides = array<i32>} : memref<56x32xf32, #tpu.memory_space<vmem>>, vector<8x32xf32>,
    %148 = vector.extract_strided_slice %20 {offsets = [24, 0], sizes = [8, 128], strides = [1, 1]} : vector<64x128xf32> to vector<8x128xf32>
    %cst_42 = arith.constant dense<0.000000e+00> : vector<8x128xf32>
    %149 = tpu.matmul %125, %21, %cst_42 {dimension_numbers = #tpu.dot_dimension_numbers<[1], [0], [0], [1], [0, 0, 1, 1], [], []>} : vector<8x32xf32>, vector<32x128xf32>, vector<8x128xf32> -> vector<8x128xf32>
    %150 = arith.addf %148, %149 : vector<8x128xf32>
    %151 = vector.extract_strided_slice %150 {offsets = [0, 0], sizes = [8, 96], strides = [1, 1]} : vector<8x128xf32> to vector<8x96xf32>
    %152 = arith.negf %151 : vector<8x96xf32>
    %153 = math.exp %152 : vector<8x96xf32>
    %cst_43 = arith.constant 1.000000e+00 : f32
    %154 = vector.broadcast %cst_43 : f32 to vector<8x96xf32>
    %155 = arith.addf %154, %153 : vector<8x96xf32>
    %156 = arith.divf %154, %155 : vector<8x96xf32>
    %157 = vector.extract_strided_slice %156 {offsets = [0, 0], sizes = [8, 32], strides = [1, 1]} : vector<8x96xf32> to vector<8x32xf32>
    %158 = vector.extract_strided_slice %156 {offsets = [0, 32], sizes = [8, 32], strides = [1, 1]} : vector<8x96xf32> to vector<8x32xf32>
    %159 = vector.extract_strided_slice %156 {offsets = [0, 64], sizes = [8, 32], strides = [1, 1]} : vector<8x96xf32> to vector<8x32xf32>
    %160 = vector.extract_strided_slice %150 {offsets = [0, 96], sizes = [8, 32], strides = [1, 1]} : vector<8x128xf32> to vector<8x32xf32>
    %161 = math.tanh %160 : vector<8x32xf32>
    %162 = arith.mulf %158, %123 : vector<8x32xf32>
    %163 = arith.mulf %157, %161 : vector<8x32xf32>
    %164 = arith.addf %162, %163 : vector<8x32xf32>
    %165 = math.tanh %164 : vector<8x32xf32>
    %166 = arith.mulf %159, %165 : vector<8x32xf32>
    %cst_44 = arith.constant dense<0.000000e+00> : vector<8x128xf32>
    %167 = tpu.matmul %166, %22, %cst_44 {dimension_numbers = #tpu.dot_dimension_numbers<[1], [0], [0], [1], [0, 0, 1, 1], [], []>} : vector<8x32xf32>, vector<32x128xf32>, vector<8x128xf32> -> vector<8x128xf32>
    %cst_45 = arith.constant dense<0.000000e+00> : vector<8x128xf32>
    %168 = tpu.matmul %146, %23, %cst_45 {dimension_numbers = #tpu.dot_dimension_numbers<[1], [0], [0], [1], [0, 0, 1, 1], [], []>} : vector<8x32xf32>, vector<32x128xf32>, vector<8x128xf32> -> vector<8x128xf32>
    %169 = arith.addf %167, %168 : vector<8x128xf32>
    %170 = vector.broadcast %24 : vector<1x128xf32> to vector<8x128xf32>
    %171 = arith.addf %169, %170 : vector<8x128xf32>
    %172 = vector.extract_strided_slice %171 {offsets = [0, 0], sizes = [8, 96], strides = [1, 1]} : vector<8x128xf32> to vector<8x96xf32>
    %173 = arith.negf %172 : vector<8x96xf32>
    %174 = math.exp %173 : vector<8x96xf32>
    %cst_46 = arith.constant 1.000000e+00 : f32
    %175 = vector.broadcast %cst_46 : f32 to vector<8x96xf32>
    %176 = arith.addf %175, %174 : vector<8x96xf32>
    %177 = arith.divf %175, %176 : vector<8x96xf32>
    %178 = vector.extract_strided_slice %177 {offsets = [0, 0], sizes = [8, 32], strides = [1, 1]} : vector<8x96xf32> to vector<8x32xf32>
    %179 = vector.extract_strided_slice %177 {offsets = [0, 32], sizes = [8, 32], strides = [1, 1]} : vector<8x96xf32> to vector<8x32xf32>
    %180 = vector.extract_strided_slice %177 {offsets = [0, 64], sizes = [8, 32], strides = [1, 1]} : vector<8x96xf32> to vector<8x32xf32>
    %181 = vector.extract_strided_slice %171 {offsets = [0, 96], sizes = [8, 32], strides = [1, 1]} : vector<8x128xf32> to vector<8x32xf32>
    %182 = math.tanh %181 : vector<8x32xf32>
    %183 = arith.mulf %179, %144 : vector<8x32xf32>
    %184 = arith.mulf %178, %182 : vector<8x32xf32>
    %185 = arith.addf %183, %184 : vector<8x32xf32>
    %186 = math.tanh %185 : vector<8x32xf32>
    %187 = arith.mulf %180, %186 : vector<8x32xf32>
    %c24 = arith.constant 24 : index
    %c0_47 = arith.constant 0 : index
    %188 = vector.load %arg23[%c24, %c0_47] : memref<56x32xf32, #tpu.memory_space<vmem>>, vector<8x32xf32>
    tpu.vector_store %arg23[%c24, %c0_47], %187 {strides = array<i32>} : memref<56x32xf32, #tpu.memory_space<vmem>>, vector<8x32xf32>,
    %189 = vector.extract_strided_slice %20 {offsets = [32, 0], sizes = [8, 128], strides = [1, 1]} : vector<64x128xf32> to vector<8x128xf32>
    %cst_48 = arith.constant dense<0.000000e+00> : vector<8x128xf32>
    %190 = tpu.matmul %166, %21, %cst_48 {dimension_numbers = #tpu.dot_dimension_numbers<[1], [0], [0], [1], [0, 0, 1, 1], [], []>} : vector<8x32xf32>, vector<32x128xf32>, vector<8x128xf32> -> vector<8x128xf32>
    %191 = arith.addf %189, %190 : vector<8x128xf32>
    %192 = vector.extract_strided_slice %191 {offsets = [0, 0], sizes = [8, 96], strides = [1, 1]} : vector<8x128xf32> to vector<8x96xf32>
    %193 = arith.negf %192 : vector<8x96xf32>
    %194 = math.exp %193 : vector<8x96xf32>
    %cst_49 = arith.constant 1.000000e+00 : f32
    %195 = vector.broadcast %cst_49 : f32 to vector<8x96xf32>
    %196 = arith.addf %195, %194 : vector<8x96xf32>
    %197 = arith.divf %195, %196 : vector<8x96xf32>
    %198 = vector.extract_strided_slice %197 {offsets = [0, 0], sizes = [8, 32], strides = [1, 1]} : vector<8x96xf32> to vector<8x32xf32>
    %199 = vector.extract_strided_slice %197 {offsets = [0, 32], sizes = [8, 32], strides = [1, 1]} : vector<8x96xf32> to vector<8x32xf32>
    %200 = vector.extract_strided_slice %197 {offsets = [0, 64], sizes = [8, 32], strides = [1, 1]} : vector<8x96xf32> to vector<8x32xf32>
    %201 = vector.extract_strided_slice %191 {offsets = [0, 96], sizes = [8, 32], strides = [1, 1]} : vector<8x128xf32> to vector<8x32xf32>
    %202 = math.tanh %201 : vector<8x32xf32>
    %203 = arith.mulf %199, %164 : vector<8x32xf32>
    %204 = arith.mulf %198, %202 : vector<8x32xf32>
    %205 = arith.addf %203, %204 : vector<8x32xf32>
    %206 = math.tanh %205 : vector<8x32xf32>
    %207 = arith.mulf %200, %206 : vector<8x32xf32>
    %cst_50 = arith.constant dense<0.000000e+00> : vector<8x128xf32>
    %208 = tpu.matmul %207, %22, %cst_50 {dimension_numbers = #tpu.dot_dimension_numbers<[1], [0], [0], [1], [0, 0, 1, 1], [], []>} : vector<8x32xf32>, vector<32x128xf32>, vector<8x128xf32> -> vector<8x128xf32>
    %cst_51 = arith.constant dense<0.000000e+00> : vector<8x128xf32>
    %209 = tpu.matmul %187, %23, %cst_51 {dimension_numbers = #tpu.dot_dimension_numbers<[1], [0], [0], [1], [0, 0, 1, 1], [], []>} : vector<8x32xf32>, vector<32x128xf32>, vector<8x128xf32> -> vector<8x128xf32>
    %210 = arith.addf %208, %209 : vector<8x128xf32>
    %211 = vector.broadcast %24 : vector<1x128xf32> to vector<8x128xf32>
    %212 = arith.addf %210, %211 : vector<8x128xf32>
    %213 = vector.extract_strided_slice %212 {offsets = [0, 0], sizes = [8, 96], strides = [1, 1]} : vector<8x128xf32> to vector<8x96xf32>
    %214 = arith.negf %213 : vector<8x96xf32>
    %215 = math.exp %214 : vector<8x96xf32>
    %cst_52 = arith.constant 1.000000e+00 : f32
    %216 = vector.broadcast %cst_52 : f32 to vector<8x96xf32>
    %217 = arith.addf %216, %215 : vector<8x96xf32>
    %218 = arith.divf %216, %217 : vector<8x96xf32>
    %219 = vector.extract_strided_slice %218 {offsets = [0, 0], sizes = [8, 32], strides = [1, 1]} : vector<8x96xf32> to vector<8x32xf32>
    %220 = vector.extract_strided_slice %218 {offsets = [0, 32], sizes = [8, 32], strides = [1, 1]} : vector<8x96xf32> to vector<8x32xf32>
    %221 = vector.extract_strided_slice %218 {offsets = [0, 64], sizes = [8, 32], strides = [1, 1]} : vector<8x96xf32> to vector<8x32xf32>
    %222 = vector.extract_strided_slice %212 {offsets = [0, 96], sizes = [8, 32], strides = [1, 1]} : vector<8x128xf32> to vector<8x32xf32>
    %223 = math.tanh %222 : vector<8x32xf32>
    %224 = arith.mulf %220, %185 : vector<8x32xf32>
    %225 = arith.mulf %219, %223 : vector<8x32xf32>
    %226 = arith.addf %224, %225 : vector<8x32xf32>
    %227 = math.tanh %226 : vector<8x32xf32>
    %228 = arith.mulf %221, %227 : vector<8x32xf32>
    %c32 = arith.constant 32 : index
    %c0_53 = arith.constant 0 : index
    %229 = vector.load %arg23[%c32, %c0_53] : memref<56x32xf32, #tpu.memory_space<vmem>>, vector<8x32xf32>
    tpu.vector_store %arg23[%c32, %c0_53], %228 {strides = array<i32>} : memref<56x32xf32, #tpu.memory_space<vmem>>, vector<8x32xf32>,
    %230 = vector.extract_strided_slice %20 {offsets = [40, 0], sizes = [8, 128], strides = [1, 1]} : vector<64x128xf32> to vector<8x128xf32>
    %cst_54 = arith.constant dense<0.000000e+00> : vector<8x128xf32>
    %231 = tpu.matmul %207, %21, %cst_54 {dimension_numbers = #tpu.dot_dimension_numbers<[1], [0], [0], [1], [0, 0, 1, 1], [], []>} : vector<8x32xf32>, vector<32x128xf32>, vector<8x128xf32> -> vector<8x128xf32>
    %232 = arith.addf %230, %231 : vector<8x128xf32>
    %233 = vector.extract_strided_slice %232 {offsets = [0, 0], sizes = [8, 96], strides = [1, 1]} : vector<8x128xf32> to vector<8x96xf32>
    %234 = arith.negf %233 : vector<8x96xf32>
    %235 = math.exp %234 : vector<8x96xf32>
    %cst_55 = arith.constant 1.000000e+00 : f32
    %236 = vector.broadcast %cst_55 : f32 to vector<8x96xf32>
    %237 = arith.addf %236, %235 : vector<8x96xf32>
    %238 = arith.divf %236, %237 : vector<8x96xf32>
    %239 = vector.extract_strided_slice %238 {offsets = [0, 0], sizes = [8, 32], strides = [1, 1]} : vector<8x96xf32> to vector<8x32xf32>
    %240 = vector.extract_strided_slice %238 {offsets = [0, 32], sizes = [8, 32], strides = [1, 1]} : vector<8x96xf32> to vector<8x32xf32>
    %241 = vector.extract_strided_slice %238 {offsets = [0, 64], sizes = [8, 32], strides = [1, 1]} : vector<8x96xf32> to vector<8x32xf32>
    %242 = vector.extract_strided_slice %232 {offsets = [0, 96], sizes = [8, 32], strides = [1, 1]} : vector<8x128xf32> to vector<8x32xf32>
    %243 = math.tanh %242 : vector<8x32xf32>
    %244 = arith.mulf %240, %205 : vector<8x32xf32>
    %245 = arith.mulf %239, %243 : vector<8x32xf32>
    %246 = arith.addf %244, %245 : vector<8x32xf32>
    %247 = math.tanh %246 : vector<8x32xf32>
    %248 = arith.mulf %241, %247 : vector<8x32xf32>
    %cst_56 = arith.constant dense<0.000000e+00> : vector<8x128xf32>
    %249 = tpu.matmul %248, %22, %cst_56 {dimension_numbers = #tpu.dot_dimension_numbers<[1], [0], [0], [1], [0, 0, 1, 1], [], []>} : vector<8x32xf32>, vector<32x128xf32>, vector<8x128xf32> -> vector<8x128xf32>
    %cst_57 = arith.constant dense<0.000000e+00> : vector<8x128xf32>
    %250 = tpu.matmul %228, %23, %cst_57 {dimension_numbers = #tpu.dot_dimension_numbers<[1], [0], [0], [1], [0, 0, 1, 1], [], []>} : vector<8x32xf32>, vector<32x128xf32>, vector<8x128xf32> -> vector<8x128xf32>
    %251 = arith.addf %249, %250 : vector<8x128xf32>
    %252 = vector.broadcast %24 : vector<1x128xf32> to vector<8x128xf32>
    %253 = arith.addf %251, %252 : vector<8x128xf32>
    %254 = vector.extract_strided_slice %253 {offsets = [0, 0], sizes = [8, 96], strides = [1, 1]} : vector<8x128xf32> to vector<8x96xf32>
    %255 = arith.negf %254 : vector<8x96xf32>
    %256 = math.exp %255 : vector<8x96xf32>
    %cst_58 = arith.constant 1.000000e+00 : f32
    %257 = vector.broadcast %cst_58 : f32 to vector<8x96xf32>
    %258 = arith.addf %257, %256 : vector<8x96xf32>
    %259 = arith.divf %257, %258 : vector<8x96xf32>
    %260 = vector.extract_strided_slice %259 {offsets = [0, 0], sizes = [8, 32], strides = [1, 1]} : vector<8x96xf32> to vector<8x32xf32>
    %261 = vector.extract_strided_slice %259 {offsets = [0, 32], sizes = [8, 32], strides = [1, 1]} : vector<8x96xf32> to vector<8x32xf32>
    %262 = vector.extract_strided_slice %259 {offsets = [0, 64], sizes = [8, 32], strides = [1, 1]} : vector<8x96xf32> to vector<8x32xf32>
    %263 = vector.extract_strided_slice %253 {offsets = [0, 96], sizes = [8, 32], strides = [1, 1]} : vector<8x128xf32> to vector<8x32xf32>
    %264 = math.tanh %263 : vector<8x32xf32>
    %265 = arith.mulf %261, %226 : vector<8x32xf32>
    %266 = arith.mulf %260, %264 : vector<8x32xf32>
    %267 = arith.addf %265, %266 : vector<8x32xf32>
    %268 = math.tanh %267 : vector<8x32xf32>
    %269 = arith.mulf %262, %268 : vector<8x32xf32>
    %c40 = arith.constant 40 : index
    %c0_59 = arith.constant 0 : index
    %270 = vector.load %arg23[%c40, %c0_59] : memref<56x32xf32, #tpu.memory_space<vmem>>, vector<8x32xf32>
    tpu.vector_store %arg23[%c40, %c0_59], %269 {strides = array<i32>} : memref<56x32xf32, #tpu.memory_space<vmem>>, vector<8x32xf32>,
    %271 = vector.extract_strided_slice %20 {offsets = [48, 0], sizes = [8, 128], strides = [1, 1]} : vector<64x128xf32> to vector<8x128xf32>
    %cst_60 = arith.constant dense<0.000000e+00> : vector<8x128xf32>
    %272 = tpu.matmul %248, %21, %cst_60 {dimension_numbers = #tpu.dot_dimension_numbers<[1], [0], [0], [1], [0, 0, 1, 1], [], []>} : vector<8x32xf32>, vector<32x128xf32>, vector<8x128xf32> -> vector<8x128xf32>
    %273 = arith.addf %271, %272 : vector<8x128xf32>
    %274 = vector.extract_strided_slice %273 {offsets = [0, 0], sizes = [8, 96], strides = [1, 1]} : vector<8x128xf32> to vector<8x96xf32>
    %275 = arith.negf %274 : vector<8x96xf32>
    %276 = math.exp %275 : vector<8x96xf32>
    %cst_61 = arith.constant 1.000000e+00 : f32
    %277 = vector.broadcast %cst_61 : f32 to vector<8x96xf32>
    %278 = arith.addf %277, %276 : vector<8x96xf32>
    %279 = arith.divf %277, %278 : vector<8x96xf32>
    %280 = vector.extract_strided_slice %279 {offsets = [0, 0], sizes = [8, 32], strides = [1, 1]} : vector<8x96xf32> to vector<8x32xf32>
    %281 = vector.extract_strided_slice %279 {offsets = [0, 32], sizes = [8, 32], strides = [1, 1]} : vector<8x96xf32> to vector<8x32xf32>
    %282 = vector.extract_strided_slice %279 {offsets = [0, 64], sizes = [8, 32], strides = [1, 1]} : vector<8x96xf32> to vector<8x32xf32>
    %283 = vector.extract_strided_slice %273 {offsets = [0, 96], sizes = [8, 32], strides = [1, 1]} : vector<8x128xf32> to vector<8x32xf32>
    %284 = math.tanh %283 : vector<8x32xf32>
    %285 = arith.mulf %281, %246 : vector<8x32xf32>
    %286 = arith.mulf %280, %284 : vector<8x32xf32>
    %287 = arith.addf %285, %286 : vector<8x32xf32>
    %288 = math.tanh %287 : vector<8x32xf32>
    %289 = arith.mulf %282, %288 : vector<8x32xf32>
    %cst_62 = arith.constant dense<0.000000e+00> : vector<8x128xf32>
    %290 = tpu.matmul %289, %22, %cst_62 {dimension_numbers = #tpu.dot_dimension_numbers<[1], [0], [0], [1], [0, 0, 1, 1], [], []>} : vector<8x32xf32>, vector<32x128xf32>, vector<8x128xf32> -> vector<8x128xf32>
    %cst_63 = arith.constant dense<0.000000e+00> : vector<8x128xf32>
    %291 = tpu.matmul %269, %23, %cst_63 {dimension_numbers = #tpu.dot_dimension_numbers<[1], [0], [0], [1], [0, 0, 1, 1], [], []>} : vector<8x32xf32>, vector<32x128xf32>, vector<8x128xf32> -> vector<8x128xf32>
    %292 = arith.addf %290, %291 : vector<8x128xf32>
    %293 = vector.broadcast %24 : vector<1x128xf32> to vector<8x128xf32>
    %294 = arith.addf %292, %293 : vector<8x128xf32>
    %295 = vector.extract_strided_slice %294 {offsets = [0, 0], sizes = [8, 96], strides = [1, 1]} : vector<8x128xf32> to vector<8x96xf32>
    %296 = arith.negf %295 : vector<8x96xf32>
    %297 = math.exp %296 : vector<8x96xf32>
    %cst_64 = arith.constant 1.000000e+00 : f32
    %298 = vector.broadcast %cst_64 : f32 to vector<8x96xf32>
    %299 = arith.addf %298, %297 : vector<8x96xf32>
    %300 = arith.divf %298, %299 : vector<8x96xf32>
    %301 = vector.extract_strided_slice %300 {offsets = [0, 0], sizes = [8, 32], strides = [1, 1]} : vector<8x96xf32> to vector<8x32xf32>
    %302 = vector.extract_strided_slice %300 {offsets = [0, 32], sizes = [8, 32], strides = [1, 1]} : vector<8x96xf32> to vector<8x32xf32>
    %303 = vector.extract_strided_slice %300 {offsets = [0, 64], sizes = [8, 32], strides = [1, 1]} : vector<8x96xf32> to vector<8x32xf32>
    %304 = vector.extract_strided_slice %294 {offsets = [0, 96], sizes = [8, 32], strides = [1, 1]} : vector<8x128xf32> to vector<8x32xf32>
    %305 = math.tanh %304 : vector<8x32xf32>
    %306 = arith.mulf %302, %267 : vector<8x32xf32>
    %307 = arith.mulf %301, %305 : vector<8x32xf32>
    %308 = arith.addf %306, %307 : vector<8x32xf32>
    %309 = math.tanh %308 : vector<8x32xf32>
    %310 = arith.mulf %303, %309 : vector<8x32xf32>
    %c48 = arith.constant 48 : index
    %c0_65 = arith.constant 0 : index
    %311 = vector.load %arg23[%c48, %c0_65] : memref<56x32xf32, #tpu.memory_space<vmem>>, vector<8x32xf32>
    tpu.vector_store %arg23[%c48, %c0_65], %310 {strides = array<i32>} : memref<56x32xf32, #tpu.memory_space<vmem>>, vector<8x32xf32>,
    %312 = vector.extract_strided_slice %20 {offsets = [56, 0], sizes = [8, 128], strides = [1, 1]} : vector<64x128xf32> to vector<8x128xf32>
    %cst_66 = arith.constant dense<0.000000e+00> : vector<8x128xf32>
    %313 = tpu.matmul %289, %21, %cst_66 {dimension_numbers = #tpu.dot_dimension_numbers<[1], [0], [0], [1], [0, 0, 1, 1], [], []>} : vector<8x32xf32>, vector<32x128xf32>, vector<8x128xf32> -> vector<8x128xf32>
    %314 = arith.addf %312, %313 : vector<8x128xf32>
    %315 = vector.extract_strided_slice %314 {offsets = [0, 0], sizes = [8, 96], strides = [1, 1]} : vector<8x128xf32> to vector<8x96xf32>
    %316 = arith.negf %315 : vector<8x96xf32>
    %317 = math.exp %316 : vector<8x96xf32>
    %cst_67 = arith.constant 1.000000e+00 : f32
    %318 = vector.broadcast %cst_67 : f32 to vector<8x96xf32>
    %319 = arith.addf %318, %317 : vector<8x96xf32>
    %320 = arith.divf %318, %319 : vector<8x96xf32>
    %321 = vector.extract_strided_slice %320 {offsets = [0, 0], sizes = [8, 32], strides = [1, 1]} : vector<8x96xf32> to vector<8x32xf32>
    %322 = vector.extract_strided_slice %320 {offsets = [0, 32], sizes = [8, 32], strides = [1, 1]} : vector<8x96xf32> to vector<8x32xf32>
    %323 = vector.extract_strided_slice %320 {offsets = [0, 64], sizes = [8, 32], strides = [1, 1]} : vector<8x96xf32> to vector<8x32xf32>
    %324 = vector.extract_strided_slice %314 {offsets = [0, 96], sizes = [8, 32], strides = [1, 1]} : vector<8x128xf32> to vector<8x32xf32>
    %325 = math.tanh %324 : vector<8x32xf32>
    %326 = arith.mulf %322, %287 : vector<8x32xf32>
    %327 = arith.mulf %321, %325 : vector<8x32xf32>
    %328 = arith.addf %326, %327 : vector<8x32xf32>
    %329 = math.tanh %328 : vector<8x32xf32>
    %330 = arith.mulf %323, %329 : vector<8x32xf32>
    %cst_68 = arith.constant dense<0.000000e+00> : vector<8x128xf32>
    %331 = tpu.matmul %330, %22, %cst_68 {dimension_numbers = #tpu.dot_dimension_numbers<[1], [0], [0], [1], [0, 0, 1, 1], [], []>} : vector<8x32xf32>, vector<32x128xf32>, vector<8x128xf32> -> vector<8x128xf32>
    %cst_69 = arith.constant dense<0.000000e+00> : vector<8x128xf32>
    %332 = tpu.matmul %310, %23, %cst_69 {dimension_numbers = #tpu.dot_dimension_numbers<[1], [0], [0], [1], [0, 0, 1, 1], [], []>} : vector<8x32xf32>, vector<32x128xf32>, vector<8x128xf32> -> vector<8x128xf32>
    %333 = arith.addf %331, %332 : vector<8x128xf32>
    %334 = vector.broadcast %24 : vector<1x128xf32> to vector<8x128xf32>
    %335 = arith.addf %333, %334 : vector<8x128xf32>
    %336 = vector.extract_strided_slice %335 {offsets = [0, 0], sizes = [8, 96], strides = [1, 1]} : vector<8x128xf32> to vector<8x96xf32>
    %337 = arith.negf %336 : vector<8x96xf32>
    %338 = math.exp %337 : vector<8x96xf32>
    %cst_70 = arith.constant 1.000000e+00 : f32
    %339 = vector.broadcast %cst_70 : f32 to vector<8x96xf32>
    %340 = arith.addf %339, %338 : vector<8x96xf32>
    %341 = arith.divf %339, %340 : vector<8x96xf32>
    %342 = vector.extract_strided_slice %341 {offsets = [0, 0], sizes = [8, 32], strides = [1, 1]} : vector<8x96xf32> to vector<8x32xf32>
    %343 = vector.extract_strided_slice %341 {offsets = [0, 32], sizes = [8, 32], strides = [1, 1]} : vector<8x96xf32> to vector<8x32xf32>
    %344 = vector.extract_strided_slice %341 {offsets = [0, 64], sizes = [8, 32], strides = [1, 1]} : vector<8x96xf32> to vector<8x32xf32>
    %345 = vector.extract_strided_slice %335 {offsets = [0, 96], sizes = [8, 32], strides = [1, 1]} : vector<8x128xf32> to vector<8x32xf32>
    %346 = math.tanh %345 : vector<8x32xf32>
    %347 = arith.mulf %343, %308 : vector<8x32xf32>
    %348 = arith.mulf %342, %346 : vector<8x32xf32>
    %349 = arith.addf %347, %348 : vector<8x32xf32>
    %350 = math.tanh %349 : vector<8x32xf32>
    %351 = arith.mulf %344, %350 : vector<8x32xf32>
    %c0_71 = arith.constant 0 : index
    %c0_72 = arith.constant 0 : index
    %352 = vector.load %arg23[%c0_71, %c0_72] : memref<56x32xf32, #tpu.memory_space<vmem>>, vector<56x32xf32>
    %c0_73 = arith.constant 0 : index
    %c0_74 = arith.constant 0 : index
    %353 = vector.load %arg19[%c0_73, %c0_74] : memref<32x128xf32, #tpu.memory_space<vmem>>, vector<32x128xf32>
    %cst_75 = arith.constant dense<0.000000e+00> : vector<56x128xf32>
    %354 = tpu.matmul %352, %353, %cst_75 {dimension_numbers = #tpu.dot_dimension_numbers<[1], [0], [0], [1], [0, 0, 1, 1], [], []>} : vector<56x32xf32>, vector<32x128xf32>, vector<56x128xf32> -> vector<56x128xf32>
    %c0_76 = arith.constant 0 : index
    %c0_77 = arith.constant 0 : index
    %355 = vector.load %arg20[%c0_76, %c0_77] : memref<1x128xf32, #tpu.memory_space<vmem>>, vector<1x128xf32>
    %356 = vector.broadcast %355 : vector<1x128xf32> to vector<56x128xf32>
    %357 = arith.addf %354, %356 : vector<56x128xf32>
    %c0_78 = arith.constant 0 : index
    %c0_79 = arith.constant 0 : index
    %358 = vector.load %arg22[%c0_78, %c0_79] : memref<56x128xf32, #tpu.memory_space<vmem>>, vector<56x128xf32>
    tpu.vector_store %arg22[%c0_78, %c0_79], %357 {strides = array<i32>} : memref<56x128xf32, #tpu.memory_space<vmem>>, vector<56x128xf32>,
    %c0_80 = arith.constant 0 : index
    %c0_81 = arith.constant 0 : index
    %c0_82 = arith.constant 0 : index
    %359 = vector.load %arg11[%c0_80, %c0_81, %c0_82] : memref<2x16x128xf32, #tpu.memory_space<vmem>>, vector<2x16x128xf32>
    %c0_83 = arith.constant 0 : index
    %c0_84 = arith.constant 0 : index
    %c0_85 = arith.constant 0 : index
    %360 = vector.load %arg12[%c0_83, %c0_84, %c0_85] : memref<2x32x128xf32, #tpu.memory_space<vmem>>, vector<2x32x128xf32>
    %c0_86 = arith.constant 0 : index
    %c0_87 = arith.constant 0 : index
    %c0_88 = arith.constant 0 : index
    %361 = vector.load %arg13[%c0_86, %c0_87, %c0_88] : memref<2x1x128xf32, #tpu.memory_space<vmem>>, vector<2x1x128xf32>
    %c0_89 = arith.constant 0 : index
    %c0_90 = arith.constant 0 : index
    %c0_91 = arith.constant 0 : index
    %362 = vector.load %arg14[%c0_89, %c0_90, %c0_91] : memref<2x64x128xf32, #tpu.memory_space<vmem>>, vector<2x64x128xf32>
    %c0_92 = arith.constant 0 : index
    %c0_93 = arith.constant 0 : index
    %c0_94 = arith.constant 0 : index
    %363 = vector.load %arg15[%c0_92, %c0_93, %c0_94] : memref<2x32x128xf32, #tpu.memory_space<vmem>>, vector<2x32x128xf32>
    %c0_95 = arith.constant 0 : index
    %c0_96 = arith.constant 0 : index
    %c0_97 = arith.constant 0 : index
    %364 = vector.load %arg16[%c0_95, %c0_96, %c0_97] : memref<2x1x128xf32, #tpu.memory_space<vmem>>, vector<2x1x128xf32>
    %365 = vector.extract_strided_slice %359 {offsets = [0, 0, 0], sizes = [1, 16, 128], strides = [1, 1, 1]} : vector<2x16x128xf32> to vector<1x16x128xf32>
    %366 = vector.shape_cast %365 : vector<1x16x128xf32> to vector<16x128xf32>
    %cst_98 = arith.constant dense<0.000000e+00> : vector<64x128xf32>
    %367 = tpu.matmul %9, %366, %cst_98 {dimension_numbers = #tpu.dot_dimension_numbers<[1], [0], [0], [1], [0, 0, 1, 1], [], []>} : vector<64x16xf32>, vector<16x128xf32>, vector<64x128xf32> -> vector<64x128xf32>
    %368 = vector.extract_strided_slice %361 {offsets = [0, 0, 0], sizes = [1, 1, 128], strides = [1, 1, 1]} : vector<2x1x128xf32> to vector<1x1x128xf32>
    %369 = vector.shape_cast %368 : vector<1x1x128xf32> to vector<1x128xf32>
    %370 = vector.broadcast %369 : vector<1x128xf32> to vector<64x128xf32>
    %371 = arith.addf %367, %370 : vector<64x128xf32>
    %372 = vector.extract_strided_slice %359 {offsets = [1, 0, 0], sizes = [1, 16, 128], strides = [1, 1, 1]} : vector<2x16x128xf32> to vector<1x16x128xf32>
    %373 = vector.shape_cast %372 : vector<1x16x128xf32> to vector<16x128xf32>
    %cst_99 = arith.constant dense<0.000000e+00> : vector<64x128xf32>
    %374 = tpu.matmul %9, %373, %cst_99 {dimension_numbers = #tpu.dot_dimension_numbers<[1], [0], [0], [1], [0, 0, 1, 1], [], []>} : vector<64x16xf32>, vector<16x128xf32>, vector<64x128xf32> -> vector<64x128xf32>
    %375 = vector.extract_strided_slice %361 {offsets = [1, 0, 0], sizes = [1, 1, 128], strides = [1, 1, 1]} : vector<2x1x128xf32> to vector<1x1x128xf32>
    %376 = vector.shape_cast %375 : vector<1x1x128xf32> to vector<1x128xf32>
    %377 = vector.broadcast %376 : vector<1x128xf32> to vector<64x128xf32>
    %378 = arith.addf %374, %377 : vector<64x128xf32>
    %379 = vector.extract_strided_slice %360 {offsets = [0, 0, 0], sizes = [1, 32, 128], strides = [1, 1, 1]} : vector<2x32x128xf32> to vector<1x32x128xf32>
    %380 = vector.shape_cast %379 : vector<1x32x128xf32> to vector<32x128xf32>
    %381 = vector.extract_strided_slice %360 {offsets = [1, 0, 0], sizes = [1, 32, 128], strides = [1, 1, 1]} : vector<2x32x128xf32> to vector<1x32x128xf32>
    %382 = vector.shape_cast %381 : vector<1x32x128xf32> to vector<32x128xf32>
    %383 = vector.extract_strided_slice %371 {offsets = [0, 0], sizes = [8, 128], strides = [1, 1]} : vector<64x128xf32> to vector<8x128xf32>
    %cst_100 = arith.constant dense<0.000000e+00> : vector<8x128xf32>
    %384 = tpu.matmul %330, %380, %cst_100 {dimension_numbers = #tpu.dot_dimension_numbers<[1], [0], [0], [1], [0, 0, 1, 1], [], []>} : vector<8x32xf32>, vector<32x128xf32>, vector<8x128xf32> -> vector<8x128xf32>
    %385 = arith.addf %383, %384 : vector<8x128xf32>
    %386 = vector.extract_strided_slice %378 {offsets = [56, 0], sizes = [8, 128], strides = [1, 1]} : vector<64x128xf32> to vector<8x128xf32>
    %cst_101 = arith.constant dense<0.000000e+00> : vector<8x128xf32>
    %387 = tpu.matmul %351, %382, %cst_101 {dimension_numbers = #tpu.dot_dimension_numbers<[1], [0], [0], [1], [0, 0, 1, 1], [], []>} : vector<8x32xf32>, vector<32x128xf32>, vector<8x128xf32> -> vector<8x128xf32>
    %388 = arith.addf %386, %387 : vector<8x128xf32>
    %389 = vector.extract_strided_slice %385 {offsets = [0, 0], sizes = [8, 96], strides = [1, 1]} : vector<8x128xf32> to vector<8x96xf32>
    %390 = arith.negf %389 : vector<8x96xf32>
    %391 = math.exp %390 : vector<8x96xf32>
    %cst_102 = arith.constant 1.000000e+00 : f32
    %392 = vector.broadcast %cst_102 : f32 to vector<8x96xf32>
    %393 = arith.addf %392, %391 : vector<8x96xf32>
    %394 = arith.divf %392, %393 : vector<8x96xf32>
    %395 = vector.extract_strided_slice %394 {offsets = [0, 0], sizes = [8, 32], strides = [1, 1]} : vector<8x96xf32> to vector<8x32xf32>
    %396 = vector.extract_strided_slice %394 {offsets = [0, 32], sizes = [8, 32], strides = [1, 1]} : vector<8x96xf32> to vector<8x32xf32>
    %397 = vector.extract_strided_slice %394 {offsets = [0, 64], sizes = [8, 32], strides = [1, 1]} : vector<8x96xf32> to vector<8x32xf32>
    %398 = vector.extract_strided_slice %385 {offsets = [0, 96], sizes = [8, 32], strides = [1, 1]} : vector<8x128xf32> to vector<8x32xf32>
    %399 = math.tanh %398 : vector<8x32xf32>
    %400 = arith.mulf %396, %328 : vector<8x32xf32>
    %401 = arith.mulf %395, %399 : vector<8x32xf32>
    %402 = arith.addf %400, %401 : vector<8x32xf32>
    %403 = math.tanh %402 : vector<8x32xf32>
    %404 = arith.mulf %397, %403 : vector<8x32xf32>
    %405 = vector.extract_strided_slice %388 {offsets = [0, 0], sizes = [8, 96], strides = [1, 1]} : vector<8x128xf32> to vector<8x96xf32>
    %406 = arith.negf %405 : vector<8x96xf32>
    %407 = math.exp %406 : vector<8x96xf32>
    %cst_103 = arith.constant 1.000000e+00 : f32
    %408 = vector.broadcast %cst_103 : f32 to vector<8x96xf32>
    %409 = arith.addf %408, %407 : vector<8x96xf32>
    %410 = arith.divf %408, %409 : vector<8x96xf32>
    %411 = vector.extract_strided_slice %410 {offsets = [0, 0], sizes = [8, 32], strides = [1, 1]} : vector<8x96xf32> to vector<8x32xf32>
    %412 = vector.extract_strided_slice %410 {offsets = [0, 32], sizes = [8, 32], strides = [1, 1]} : vector<8x96xf32> to vector<8x32xf32>
    %413 = vector.extract_strided_slice %410 {offsets = [0, 64], sizes = [8, 32], strides = [1, 1]} : vector<8x96xf32> to vector<8x32xf32>
    %414 = vector.extract_strided_slice %388 {offsets = [0, 96], sizes = [8, 32], strides = [1, 1]} : vector<8x128xf32> to vector<8x32xf32>
    %415 = math.tanh %414 : vector<8x32xf32>
    %416 = arith.mulf %412, %349 : vector<8x32xf32>
    %417 = arith.mulf %411, %415 : vector<8x32xf32>
    %418 = arith.addf %416, %417 : vector<8x32xf32>
    %419 = math.tanh %418 : vector<8x32xf32>
    %420 = arith.mulf %413, %419 : vector<8x32xf32>
    %c0_104 = arith.constant 0 : index
    %c0_105 = arith.constant 0 : index
    %421 = vector.load %arg24[%c0_104, %c0_105] : memref<64x32xf32, #tpu.memory_space<vmem>>, vector<8x32xf32>
    tpu.vector_store %arg24[%c0_104, %c0_105], %404 {strides = array<i32>} : memref<64x32xf32, #tpu.memory_space<vmem>>, vector<8x32xf32>,
    %c56 = arith.constant 56 : index
    %c0_106 = arith.constant 0 : index
    %422 = vector.load %arg25[%c56, %c0_106] : memref<64x32xf32, #tpu.memory_space<vmem>>, vector<8x32xf32>
    tpu.vector_store %arg25[%c56, %c0_106], %420 {strides = array<i32>} : memref<64x32xf32, #tpu.memory_space<vmem>>, vector<8x32xf32>,
    %423 = vector.extract_strided_slice %371 {offsets = [8, 0], sizes = [8, 128], strides = [1, 1]} : vector<64x128xf32> to vector<8x128xf32>
    %cst_107 = arith.constant dense<0.000000e+00> : vector<8x128xf32>
    %424 = tpu.matmul %404, %380, %cst_107 {dimension_numbers = #tpu.dot_dimension_numbers<[1], [0], [0], [1], [0, 0, 1, 1], [], []>} : vector<8x32xf32>, vector<32x128xf32>, vector<8x128xf32> -> vector<8x128xf32>
    %425 = arith.addf %423, %424 : vector<8x128xf32>
    %426 = vector.extract_strided_slice %378 {offsets = [48, 0], sizes = [8, 128], strides = [1, 1]} : vector<64x128xf32> to vector<8x128xf32>
    %cst_108 = arith.constant dense<0.000000e+00> : vector<8x128xf32>
    %427 = tpu.matmul %420, %382, %cst_108 {dimension_numbers = #tpu.dot_dimension_numbers<[1], [0], [0], [1], [0, 0, 1, 1], [], []>} : vector<8x32xf32>, vector<32x128xf32>, vector<8x128xf32> -> vector<8x128xf32>
    %428 = arith.addf %426, %427 : vector<8x128xf32>
    %429 = vector.extract_strided_slice %425 {offsets = [0, 0], sizes = [8, 96], strides = [1, 1]} : vector<8x128xf32> to vector<8x96xf32>
    %430 = arith.negf %429 : vector<8x96xf32>
    %431 = math.exp %430 : vector<8x96xf32>
    %cst_109 = arith.constant 1.000000e+00 : f32
    %432 = vector.broadcast %cst_109 : f32 to vector<8x96xf32>
    %433 = arith.addf %432, %431 : vector<8x96xf32>
    %434 = arith.divf %432, %433 : vector<8x96xf32>
    %435 = vector.extract_strided_slice %434 {offsets = [0, 0], sizes = [8, 32], strides = [1, 1]} : vector<8x96xf32> to vector<8x32xf32>
    %436 = vector.extract_strided_slice %434 {offsets = [0, 32], sizes = [8, 32], strides = [1, 1]} : vector<8x96xf32> to vector<8x32xf32>
    %437 = vector.extract_strided_slice %434 {offsets = [0, 64], sizes = [8, 32], strides = [1, 1]} : vector<8x96xf32> to vector<8x32xf32>
    %438 = vector.extract_strided_slice %425 {offsets = [0, 96], sizes = [8, 32], strides = [1, 1]} : vector<8x128xf32> to vector<8x32xf32>
    %439 = math.tanh %438 : vector<8x32xf32>
    %440 = arith.mulf %436, %402 : vector<8x32xf32>
    %441 = arith.mulf %435, %439 : vector<8x32xf32>
    %442 = arith.addf %440, %441 : vector<8x32xf32>
    %443 = math.tanh %442 : vector<8x32xf32>
    %444 = arith.mulf %437, %443 : vector<8x32xf32>
    %445 = vector.extract_strided_slice %428 {offsets = [0, 0], sizes = [8, 96], strides = [1, 1]} : vector<8x128xf32> to vector<8x96xf32>
    %446 = arith.negf %445 : vector<8x96xf32>
    %447 = math.exp %446 : vector<8x96xf32>
    %cst_110 = arith.constant 1.000000e+00 : f32
    %448 = vector.broadcast %cst_110 : f32 to vector<8x96xf32>
    %449 = arith.addf %448, %447 : vector<8x96xf32>
    %450 = arith.divf %448, %449 : vector<8x96xf32>
    %451 = vector.extract_strided_slice %450 {offsets = [0, 0], sizes = [8, 32], strides = [1, 1]} : vector<8x96xf32> to vector<8x32xf32>
    %452 = vector.extract_strided_slice %450 {offsets = [0, 32], sizes = [8, 32], strides = [1, 1]} : vector<8x96xf32> to vector<8x32xf32>
    %453 = vector.extract_strided_slice %450 {offsets = [0, 64], sizes = [8, 32], strides = [1, 1]} : vector<8x96xf32> to vector<8x32xf32>
    %454 = vector.extract_strided_slice %428 {offsets = [0, 96], sizes = [8, 32], strides = [1, 1]} : vector<8x128xf32> to vector<8x32xf32>
    %455 = math.tanh %454 : vector<8x32xf32>
    %456 = arith.mulf %452, %418 : vector<8x32xf32>
    %457 = arith.mulf %451, %455 : vector<8x32xf32>
    %458 = arith.addf %456, %457 : vector<8x32xf32>
    %459 = math.tanh %458 : vector<8x32xf32>
    %460 = arith.mulf %453, %459 : vector<8x32xf32>
    %c8_111 = arith.constant 8 : index
    %c0_112 = arith.constant 0 : index
    %461 = vector.load %arg24[%c8_111, %c0_112] : memref<64x32xf32, #tpu.memory_space<vmem>>, vector<8x32xf32>
    tpu.vector_store %arg24[%c8_111, %c0_112], %444 {strides = array<i32>} : memref<64x32xf32, #tpu.memory_space<vmem>>, vector<8x32xf32>,
    %c48_113 = arith.constant 48 : index
    %c0_114 = arith.constant 0 : index
    %462 = vector.load %arg25[%c48_113, %c0_114] : memref<64x32xf32, #tpu.memory_space<vmem>>, vector<8x32xf32>
    tpu.vector_store %arg25[%c48_113, %c0_114], %460 {strides = array<i32>} : memref<64x32xf32, #tpu.memory_space<vmem>>, vector<8x32xf32>,
    %463 = vector.extract_strided_slice %371 {offsets = [16, 0], sizes = [8, 128], strides = [1, 1]} : vector<64x128xf32> to vector<8x128xf32>
    %cst_115 = arith.constant dense<0.000000e+00> : vector<8x128xf32>
    %464 = tpu.matmul %444, %380, %cst_115 {dimension_numbers = #tpu.dot_dimension_numbers<[1], [0], [0], [1], [0, 0, 1, 1], [], []>} : vector<8x32xf32>, vector<32x128xf32>, vector<8x128xf32> -> vector<8x128xf32>
    %465 = arith.addf %463, %464 : vector<8x128xf32>
    %466 = vector.extract_strided_slice %378 {offsets = [40, 0], sizes = [8, 128], strides = [1, 1]} : vector<64x128xf32> to vector<8x128xf32>
    %cst_116 = arith.constant dense<0.000000e+00> : vector<8x128xf32>
    %467 = tpu.matmul %460, %382, %cst_116 {dimension_numbers = #tpu.dot_dimension_numbers<[1], [0], [0], [1], [0, 0, 1, 1], [], []>} : vector<8x32xf32>, vector<32x128xf32>, vector<8x128xf32> -> vector<8x128xf32>
    %468 = arith.addf %466, %467 : vector<8x128xf32>
    %469 = vector.extract_strided_slice %465 {offsets = [0, 0], sizes = [8, 96], strides = [1, 1]} : vector<8x128xf32> to vector<8x96xf32>
    %470 = arith.negf %469 : vector<8x96xf32>
    %471 = math.exp %470 : vector<8x96xf32>
    %cst_117 = arith.constant 1.000000e+00 : f32
    %472 = vector.broadcast %cst_117 : f32 to vector<8x96xf32>
    %473 = arith.addf %472, %471 : vector<8x96xf32>
    %474 = arith.divf %472, %473 : vector<8x96xf32>
    %475 = vector.extract_strided_slice %474 {offsets = [0, 0], sizes = [8, 32], strides = [1, 1]} : vector<8x96xf32> to vector<8x32xf32>
    %476 = vector.extract_strided_slice %474 {offsets = [0, 32], sizes = [8, 32], strides = [1, 1]} : vector<8x96xf32> to vector<8x32xf32>
    %477 = vector.extract_strided_slice %474 {offsets = [0, 64], sizes = [8, 32], strides = [1, 1]} : vector<8x96xf32> to vector<8x32xf32>
    %478 = vector.extract_strided_slice %465 {offsets = [0, 96], sizes = [8, 32], strides = [1, 1]} : vector<8x128xf32> to vector<8x32xf32>
    %479 = math.tanh %478 : vector<8x32xf32>
    %480 = arith.mulf %476, %442 : vector<8x32xf32>
    %481 = arith.mulf %475, %479 : vector<8x32xf32>
    %482 = arith.addf %480, %481 : vector<8x32xf32>
    %483 = math.tanh %482 : vector<8x32xf32>
    %484 = arith.mulf %477, %483 : vector<8x32xf32>
    %485 = vector.extract_strided_slice %468 {offsets = [0, 0], sizes = [8, 96], strides = [1, 1]} : vector<8x128xf32> to vector<8x96xf32>
    %486 = arith.negf %485 : vector<8x96xf32>
    %487 = math.exp %486 : vector<8x96xf32>
    %cst_118 = arith.constant 1.000000e+00 : f32
    %488 = vector.broadcast %cst_118 : f32 to vector<8x96xf32>
    %489 = arith.addf %488, %487 : vector<8x96xf32>
    %490 = arith.divf %488, %489 : vector<8x96xf32>
    %491 = vector.extract_strided_slice %490 {offsets = [0, 0], sizes = [8, 32], strides = [1, 1]} : vector<8x96xf32> to vector<8x32xf32>
    %492 = vector.extract_strided_slice %490 {offsets = [0, 32], sizes = [8, 32], strides = [1, 1]} : vector<8x96xf32> to vector<8x32xf32>
    %493 = vector.extract_strided_slice %490 {offsets = [0, 64], sizes = [8, 32], strides = [1, 1]} : vector<8x96xf32> to vector<8x32xf32>
    %494 = vector.extract_strided_slice %468 {offsets = [0, 96], sizes = [8, 32], strides = [1, 1]} : vector<8x128xf32> to vector<8x32xf32>
    %495 = math.tanh %494 : vector<8x32xf32>
    %496 = arith.mulf %492, %458 : vector<8x32xf32>
    %497 = arith.mulf %491, %495 : vector<8x32xf32>
    %498 = arith.addf %496, %497 : vector<8x32xf32>
    %499 = math.tanh %498 : vector<8x32xf32>
    %500 = arith.mulf %493, %499 : vector<8x32xf32>
    %c16_119 = arith.constant 16 : index
    %c0_120 = arith.constant 0 : index
    %501 = vector.load %arg24[%c16_119, %c0_120] : memref<64x32xf32, #tpu.memory_space<vmem>>, vector<8x32xf32>
    tpu.vector_store %arg24[%c16_119, %c0_120], %484 {strides = array<i32>} : memref<64x32xf32, #tpu.memory_space<vmem>>, vector<8x32xf32>,
    %c40_121 = arith.constant 40 : index
    %c0_122 = arith.constant 0 : index
    %502 = vector.load %arg25[%c40_121, %c0_122] : memref<64x32xf32, #tpu.memory_space<vmem>>, vector<8x32xf32>
    tpu.vector_store %arg25[%c40_121, %c0_122], %500 {strides = array<i32>} : memref<64x32xf32, #tpu.memory_space<vmem>>, vector<8x32xf32>,
    %503 = vector.extract_strided_slice %371 {offsets = [24, 0], sizes = [8, 128], strides = [1, 1]} : vector<64x128xf32> to vector<8x128xf32>
    %cst_123 = arith.constant dense<0.000000e+00> : vector<8x128xf32>
    %504 = tpu.matmul %484, %380, %cst_123 {dimension_numbers = #tpu.dot_dimension_numbers<[1], [0], [0], [1], [0, 0, 1, 1], [], []>} : vector<8x32xf32>, vector<32x128xf32>, vector<8x128xf32> -> vector<8x128xf32>
    %505 = arith.addf %503, %504 : vector<8x128xf32>
    %506 = vector.extract_strided_slice %378 {offsets = [32, 0], sizes = [8, 128], strides = [1, 1]} : vector<64x128xf32> to vector<8x128xf32>
    %cst_124 = arith.constant dense<0.000000e+00> : vector<8x128xf32>
    %507 = tpu.matmul %500, %382, %cst_124 {dimension_numbers = #tpu.dot_dimension_numbers<[1], [0], [0], [1], [0, 0, 1, 1], [], []>} : vector<8x32xf32>, vector<32x128xf32>, vector<8x128xf32> -> vector<8x128xf32>
    %508 = arith.addf %506, %507 : vector<8x128xf32>
    %509 = vector.extract_strided_slice %505 {offsets = [0, 0], sizes = [8, 96], strides = [1, 1]} : vector<8x128xf32> to vector<8x96xf32>
    %510 = arith.negf %509 : vector<8x96xf32>
    %511 = math.exp %510 : vector<8x96xf32>
    %cst_125 = arith.constant 1.000000e+00 : f32
    %512 = vector.broadcast %cst_125 : f32 to vector<8x96xf32>
    %513 = arith.addf %512, %511 : vector<8x96xf32>
    %514 = arith.divf %512, %513 : vector<8x96xf32>
    %515 = vector.extract_strided_slice %514 {offsets = [0, 0], sizes = [8, 32], strides = [1, 1]} : vector<8x96xf32> to vector<8x32xf32>
    %516 = vector.extract_strided_slice %514 {offsets = [0, 32], sizes = [8, 32], strides = [1, 1]} : vector<8x96xf32> to vector<8x32xf32>
    %517 = vector.extract_strided_slice %514 {offsets = [0, 64], sizes = [8, 32], strides = [1, 1]} : vector<8x96xf32> to vector<8x32xf32>
    %518 = vector.extract_strided_slice %505 {offsets = [0, 96], sizes = [8, 32], strides = [1, 1]} : vector<8x128xf32> to vector<8x32xf32>
    %519 = math.tanh %518 : vector<8x32xf32>
    %520 = arith.mulf %516, %482 : vector<8x32xf32>
    %521 = arith.mulf %515, %519 : vector<8x32xf32>
    %522 = arith.addf %520, %521 : vector<8x32xf32>
    %523 = math.tanh %522 : vector<8x32xf32>
    %524 = arith.mulf %517, %523 : vector<8x32xf32>
    %525 = vector.extract_strided_slice %508 {offsets = [0, 0], sizes = [8, 96], strides = [1, 1]} : vector<8x128xf32> to vector<8x96xf32>
    %526 = arith.negf %525 : vector<8x96xf32>
    %527 = math.exp %526 : vector<8x96xf32>
    %cst_126 = arith.constant 1.000000e+00 : f32
    %528 = vector.broadcast %cst_126 : f32 to vector<8x96xf32>
    %529 = arith.addf %528, %527 : vector<8x96xf32>
    %530 = arith.divf %528, %529 : vector<8x96xf32>
    %531 = vector.extract_strided_slice %530 {offsets = [0, 0], sizes = [8, 32], strides = [1, 1]} : vector<8x96xf32> to vector<8x32xf32>
    %532 = vector.extract_strided_slice %530 {offsets = [0, 32], sizes = [8, 32], strides = [1, 1]} : vector<8x96xf32> to vector<8x32xf32>
    %533 = vector.extract_strided_slice %530 {offsets = [0, 64], sizes = [8, 32], strides = [1, 1]} : vector<8x96xf32> to vector<8x32xf32>
    %534 = vector.extract_strided_slice %508 {offsets = [0, 96], sizes = [8, 32], strides = [1, 1]} : vector<8x128xf32> to vector<8x32xf32>
    %535 = math.tanh %534 : vector<8x32xf32>
    %536 = arith.mulf %532, %498 : vector<8x32xf32>
    %537 = arith.mulf %531, %535 : vector<8x32xf32>
    %538 = arith.addf %536, %537 : vector<8x32xf32>
    %539 = math.tanh %538 : vector<8x32xf32>
    %540 = arith.mulf %533, %539 : vector<8x32xf32>
    %c24_127 = arith.constant 24 : index
    %c0_128 = arith.constant 0 : index
    %541 = vector.load %arg24[%c24_127, %c0_128] : memref<64x32xf32, #tpu.memory_space<vmem>>, vector<8x32xf32>
    tpu.vector_store %arg24[%c24_127, %c0_128], %524 {strides = array<i32>} : memref<64x32xf32, #tpu.memory_space<vmem>>, vector<8x32xf32>,
    %c32_129 = arith.constant 32 : index
    %c0_130 = arith.constant 0 : index
    %542 = vector.load %arg25[%c32_129, %c0_130] : memref<64x32xf32, #tpu.memory_space<vmem>>, vector<8x32xf32>
    tpu.vector_store %arg25[%c32_129, %c0_130], %540 {strides = array<i32>} : memref<64x32xf32, #tpu.memory_space<vmem>>, vector<8x32xf32>,
    %543 = vector.extract_strided_slice %371 {offsets = [32, 0], sizes = [8, 128], strides = [1, 1]} : vector<64x128xf32> to vector<8x128xf32>
    %cst_131 = arith.constant dense<0.000000e+00> : vector<8x128xf32>
    %544 = tpu.matmul %524, %380, %cst_131 {dimension_numbers = #tpu.dot_dimension_numbers<[1], [0], [0], [1], [0, 0, 1, 1], [], []>} : vector<8x32xf32>, vector<32x128xf32>, vector<8x128xf32> -> vector<8x128xf32>
    %545 = arith.addf %543, %544 : vector<8x128xf32>
    %546 = vector.extract_strided_slice %378 {offsets = [24, 0], sizes = [8, 128], strides = [1, 1]} : vector<64x128xf32> to vector<8x128xf32>
    %cst_132 = arith.constant dense<0.000000e+00> : vector<8x128xf32>
    %547 = tpu.matmul %540, %382, %cst_132 {dimension_numbers = #tpu.dot_dimension_numbers<[1], [0], [0], [1], [0, 0, 1, 1], [], []>} : vector<8x32xf32>, vector<32x128xf32>, vector<8x128xf32> -> vector<8x128xf32>
    %548 = arith.addf %546, %547 : vector<8x128xf32>
    %549 = vector.extract_strided_slice %545 {offsets = [0, 0], sizes = [8, 96], strides = [1, 1]} : vector<8x128xf32> to vector<8x96xf32>
    %550 = arith.negf %549 : vector<8x96xf32>
    %551 = math.exp %550 : vector<8x96xf32>
    %cst_133 = arith.constant 1.000000e+00 : f32
    %552 = vector.broadcast %cst_133 : f32 to vector<8x96xf32>
    %553 = arith.addf %552, %551 : vector<8x96xf32>
    %554 = arith.divf %552, %553 : vector<8x96xf32>
    %555 = vector.extract_strided_slice %554 {offsets = [0, 0], sizes = [8, 32], strides = [1, 1]} : vector<8x96xf32> to vector<8x32xf32>
    %556 = vector.extract_strided_slice %554 {offsets = [0, 32], sizes = [8, 32], strides = [1, 1]} : vector<8x96xf32> to vector<8x32xf32>
    %557 = vector.extract_strided_slice %554 {offsets = [0, 64], sizes = [8, 32], strides = [1, 1]} : vector<8x96xf32> to vector<8x32xf32>
    %558 = vector.extract_strided_slice %545 {offsets = [0, 96], sizes = [8, 32], strides = [1, 1]} : vector<8x128xf32> to vector<8x32xf32>
    %559 = math.tanh %558 : vector<8x32xf32>
    %560 = arith.mulf %556, %522 : vector<8x32xf32>
    %561 = arith.mulf %555, %559 : vector<8x32xf32>
    %562 = arith.addf %560, %561 : vector<8x32xf32>
    %563 = math.tanh %562 : vector<8x32xf32>
    %564 = arith.mulf %557, %563 : vector<8x32xf32>
    %565 = vector.extract_strided_slice %548 {offsets = [0, 0], sizes = [8, 96], strides = [1, 1]} : vector<8x128xf32> to vector<8x96xf32>
    %566 = arith.negf %565 : vector<8x96xf32>
    %567 = math.exp %566 : vector<8x96xf32>
    %cst_134 = arith.constant 1.000000e+00 : f32
    %568 = vector.broadcast %cst_134 : f32 to vector<8x96xf32>
    %569 = arith.addf %568, %567 : vector<8x96xf32>
    %570 = arith.divf %568, %569 : vector<8x96xf32>
    %571 = vector.extract_strided_slice %570 {offsets = [0, 0], sizes = [8, 32], strides = [1, 1]} : vector<8x96xf32> to vector<8x32xf32>
    %572 = vector.extract_strided_slice %570 {offsets = [0, 32], sizes = [8, 32], strides = [1, 1]} : vector<8x96xf32> to vector<8x32xf32>
    %573 = vector.extract_strided_slice %570 {offsets = [0, 64], sizes = [8, 32], strides = [1, 1]} : vector<8x96xf32> to vector<8x32xf32>
    %574 = vector.extract_strided_slice %548 {offsets = [0, 96], sizes = [8, 32], strides = [1, 1]} : vector<8x128xf32> to vector<8x32xf32>
    %575 = math.tanh %574 : vector<8x32xf32>
    %576 = arith.mulf %572, %538 : vector<8x32xf32>
    %577 = arith.mulf %571, %575 : vector<8x32xf32>
    %578 = arith.addf %576, %577 : vector<8x32xf32>
    %579 = math.tanh %578 : vector<8x32xf32>
    %580 = arith.mulf %573, %579 : vector<8x32xf32>
    %c32_135 = arith.constant 32 : index
    %c0_136 = arith.constant 0 : index
    %581 = vector.load %arg24[%c32_135, %c0_136] : memref<64x32xf32, #tpu.memory_space<vmem>>, vector<8x32xf32>
    tpu.vector_store %arg24[%c32_135, %c0_136], %564 {strides = array<i32>} : memref<64x32xf32, #tpu.memory_space<vmem>>, vector<8x32xf32>,
    %c24_137 = arith.constant 24 : index
    %c0_138 = arith.constant 0 : index
    %582 = vector.load %arg25[%c24_137, %c0_138] : memref<64x32xf32, #tpu.memory_space<vmem>>, vector<8x32xf32>
    tpu.vector_store %arg25[%c24_137, %c0_138], %580 {strides = array<i32>} : memref<64x32xf32, #tpu.memory_space<vmem>>, vector<8x32xf32>,
    %583 = vector.extract_strided_slice %371 {offsets = [40, 0], sizes = [8, 128], strides = [1, 1]} : vector<64x128xf32> to vector<8x128xf32>
    %cst_139 = arith.constant dense<0.000000e+00> : vector<8x128xf32>
    %584 = tpu.matmul %564, %380, %cst_139 {dimension_numbers = #tpu.dot_dimension_numbers<[1], [0], [0], [1], [0, 0, 1, 1], [], []>} : vector<8x32xf32>, vector<32x128xf32>, vector<8x128xf32> -> vector<8x128xf32>
    %585 = arith.addf %583, %584 : vector<8x128xf32>
    %586 = vector.extract_strided_slice %378 {offsets = [16, 0], sizes = [8, 128], strides = [1, 1]} : vector<64x128xf32> to vector<8x128xf32>
    %cst_140 = arith.constant dense<0.000000e+00> : vector<8x128xf32>
    %587 = tpu.matmul %580, %382, %cst_140 {dimension_numbers = #tpu.dot_dimension_numbers<[1], [0], [0], [1], [0, 0, 1, 1], [], []>} : vector<8x32xf32>, vector<32x128xf32>, vector<8x128xf32> -> vector<8x128xf32>
    %588 = arith.addf %586, %587 : vector<8x128xf32>
    %589 = vector.extract_strided_slice %585 {offsets = [0, 0], sizes = [8, 96], strides = [1, 1]} : vector<8x128xf32> to vector<8x96xf32>
    %590 = arith.negf %589 : vector<8x96xf32>
    %591 = math.exp %590 : vector<8x96xf32>
    %cst_141 = arith.constant 1.000000e+00 : f32
    %592 = vector.broadcast %cst_141 : f32 to vector<8x96xf32>
    %593 = arith.addf %592, %591 : vector<8x96xf32>
    %594 = arith.divf %592, %593 : vector<8x96xf32>
    %595 = vector.extract_strided_slice %594 {offsets = [0, 0], sizes = [8, 32], strides = [1, 1]} : vector<8x96xf32> to vector<8x32xf32>
    %596 = vector.extract_strided_slice %594 {offsets = [0, 32], sizes = [8, 32], strides = [1, 1]} : vector<8x96xf32> to vector<8x32xf32>
    %597 = vector.extract_strided_slice %594 {offsets = [0, 64], sizes = [8, 32], strides = [1, 1]} : vector<8x96xf32> to vector<8x32xf32>
    %598 = vector.extract_strided_slice %585 {offsets = [0, 96], sizes = [8, 32], strides = [1, 1]} : vector<8x128xf32> to vector<8x32xf32>
    %599 = math.tanh %598 : vector<8x32xf32>
    %600 = arith.mulf %596, %562 : vector<8x32xf32>
    %601 = arith.mulf %595, %599 : vector<8x32xf32>
    %602 = arith.addf %600, %601 : vector<8x32xf32>
    %603 = math.tanh %602 : vector<8x32xf32>
    %604 = arith.mulf %597, %603 : vector<8x32xf32>
    %605 = vector.extract_strided_slice %588 {offsets = [0, 0], sizes = [8, 96], strides = [1, 1]} : vector<8x128xf32> to vector<8x96xf32>
    %606 = arith.negf %605 : vector<8x96xf32>
    %607 = math.exp %606 : vector<8x96xf32>
    %cst_142 = arith.constant 1.000000e+00 : f32
    %608 = vector.broadcast %cst_142 : f32 to vector<8x96xf32>
    %609 = arith.addf %608, %607 : vector<8x96xf32>
    %610 = arith.divf %608, %609 : vector<8x96xf32>
    %611 = vector.extract_strided_slice %610 {offsets = [0, 0], sizes = [8, 32], strides = [1, 1]} : vector<8x96xf32> to vector<8x32xf32>
    %612 = vector.extract_strided_slice %610 {offsets = [0, 32], sizes = [8, 32], strides = [1, 1]} : vector<8x96xf32> to vector<8x32xf32>
    %613 = vector.extract_strided_slice %610 {offsets = [0, 64], sizes = [8, 32], strides = [1, 1]} : vector<8x96xf32> to vector<8x32xf32>
    %614 = vector.extract_strided_slice %588 {offsets = [0, 96], sizes = [8, 32], strides = [1, 1]} : vector<8x128xf32> to vector<8x32xf32>
    %615 = math.tanh %614 : vector<8x32xf32>
    %616 = arith.mulf %612, %578 : vector<8x32xf32>
    %617 = arith.mulf %611, %615 : vector<8x32xf32>
    %618 = arith.addf %616, %617 : vector<8x32xf32>
    %619 = math.tanh %618 : vector<8x32xf32>
    %620 = arith.mulf %613, %619 : vector<8x32xf32>
    %c40_143 = arith.constant 40 : index
    %c0_144 = arith.constant 0 : index
    %621 = vector.load %arg24[%c40_143, %c0_144] : memref<64x32xf32, #tpu.memory_space<vmem>>, vector<8x32xf32>
    tpu.vector_store %arg24[%c40_143, %c0_144], %604 {strides = array<i32>} : memref<64x32xf32, #tpu.memory_space<vmem>>, vector<8x32xf32>,
    %c16_145 = arith.constant 16 : index
    %c0_146 = arith.constant 0 : index
    %622 = vector.load %arg25[%c16_145, %c0_146] : memref<64x32xf32, #tpu.memory_space<vmem>>, vector<8x32xf32>
    tpu.vector_store %arg25[%c16_145, %c0_146], %620 {strides = array<i32>} : memref<64x32xf32, #tpu.memory_space<vmem>>, vector<8x32xf32>,
    %623 = vector.extract_strided_slice %371 {offsets = [48, 0], sizes = [8, 128], strides = [1, 1]} : vector<64x128xf32> to vector<8x128xf32>
    %cst_147 = arith.constant dense<0.000000e+00> : vector<8x128xf32>
    %624 = tpu.matmul %604, %380, %cst_147 {dimension_numbers = #tpu.dot_dimension_numbers<[1], [0], [0], [1], [0, 0, 1, 1], [], []>} : vector<8x32xf32>, vector<32x128xf32>, vector<8x128xf32> -> vector<8x128xf32>
    %625 = arith.addf %623, %624 : vector<8x128xf32>
    %626 = vector.extract_strided_slice %378 {offsets = [8, 0], sizes = [8, 128], strides = [1, 1]} : vector<64x128xf32> to vector<8x128xf32>
    %cst_148 = arith.constant dense<0.000000e+00> : vector<8x128xf32>
    %627 = tpu.matmul %620, %382, %cst_148 {dimension_numbers = #tpu.dot_dimension_numbers<[1], [0], [0], [1], [0, 0, 1, 1], [], []>} : vector<8x32xf32>, vector<32x128xf32>, vector<8x128xf32> -> vector<8x128xf32>
    %628 = arith.addf %626, %627 : vector<8x128xf32>
    %629 = vector.extract_strided_slice %625 {offsets = [0, 0], sizes = [8, 96], strides = [1, 1]} : vector<8x128xf32> to vector<8x96xf32>
    %630 = arith.negf %629 : vector<8x96xf32>
    %631 = math.exp %630 : vector<8x96xf32>
    %cst_149 = arith.constant 1.000000e+00 : f32
    %632 = vector.broadcast %cst_149 : f32 to vector<8x96xf32>
    %633 = arith.addf %632, %631 : vector<8x96xf32>
    %634 = arith.divf %632, %633 : vector<8x96xf32>
    %635 = vector.extract_strided_slice %634 {offsets = [0, 0], sizes = [8, 32], strides = [1, 1]} : vector<8x96xf32> to vector<8x32xf32>
    %636 = vector.extract_strided_slice %634 {offsets = [0, 32], sizes = [8, 32], strides = [1, 1]} : vector<8x96xf32> to vector<8x32xf32>
    %637 = vector.extract_strided_slice %634 {offsets = [0, 64], sizes = [8, 32], strides = [1, 1]} : vector<8x96xf32> to vector<8x32xf32>
    %638 = vector.extract_strided_slice %625 {offsets = [0, 96], sizes = [8, 32], strides = [1, 1]} : vector<8x128xf32> to vector<8x32xf32>
    %639 = math.tanh %638 : vector<8x32xf32>
    %640 = arith.mulf %636, %602 : vector<8x32xf32>
    %641 = arith.mulf %635, %639 : vector<8x32xf32>
    %642 = arith.addf %640, %641 : vector<8x32xf32>
    %643 = math.tanh %642 : vector<8x32xf32>
    %644 = arith.mulf %637, %643 : vector<8x32xf32>
    %645 = vector.extract_strided_slice %628 {offsets = [0, 0], sizes = [8, 96], strides = [1, 1]} : vector<8x128xf32> to vector<8x96xf32>
    %646 = arith.negf %645 : vector<8x96xf32>
    %647 = math.exp %646 : vector<8x96xf32>
    %cst_150 = arith.constant 1.000000e+00 : f32
    %648 = vector.broadcast %cst_150 : f32 to vector<8x96xf32>
    %649 = arith.addf %648, %647 : vector<8x96xf32>
    %650 = arith.divf %648, %649 : vector<8x96xf32>
    %651 = vector.extract_strided_slice %650 {offsets = [0, 0], sizes = [8, 32], strides = [1, 1]} : vector<8x96xf32> to vector<8x32xf32>
    %652 = vector.extract_strided_slice %650 {offsets = [0, 32], sizes = [8, 32], strides = [1, 1]} : vector<8x96xf32> to vector<8x32xf32>
    %653 = vector.extract_strided_slice %650 {offsets = [0, 64], sizes = [8, 32], strides = [1, 1]} : vector<8x96xf32> to vector<8x32xf32>
    %654 = vector.extract_strided_slice %628 {offsets = [0, 96], sizes = [8, 32], strides = [1, 1]} : vector<8x128xf32> to vector<8x32xf32>
    %655 = math.tanh %654 : vector<8x32xf32>
    %656 = arith.mulf %652, %618 : vector<8x32xf32>
    %657 = arith.mulf %651, %655 : vector<8x32xf32>
    %658 = arith.addf %656, %657 : vector<8x32xf32>
    %659 = math.tanh %658 : vector<8x32xf32>
    %660 = arith.mulf %653, %659 : vector<8x32xf32>
    %c48_151 = arith.constant 48 : index
    %c0_152 = arith.constant 0 : index
    %661 = vector.load %arg24[%c48_151, %c0_152] : memref<64x32xf32, #tpu.memory_space<vmem>>, vector<8x32xf32>
    tpu.vector_store %arg24[%c48_151, %c0_152], %644 {strides = array<i32>} : memref<64x32xf32, #tpu.memory_space<vmem>>, vector<8x32xf32>,
    %c8_153 = arith.constant 8 : index
    %c0_154 = arith.constant 0 : index
    %662 = vector.load %arg25[%c8_153, %c0_154] : memref<64x32xf32, #tpu.memory_space<vmem>>, vector<8x32xf32>
    tpu.vector_store %arg25[%c8_153, %c0_154], %660 {strides = array<i32>} : memref<64x32xf32, #tpu.memory_space<vmem>>, vector<8x32xf32>,
    %663 = vector.extract_strided_slice %371 {offsets = [56, 0], sizes = [8, 128], strides = [1, 1]} : vector<64x128xf32> to vector<8x128xf32>
    %cst_155 = arith.constant dense<0.000000e+00> : vector<8x128xf32>
    %664 = tpu.matmul %644, %380, %cst_155 {dimension_numbers = #tpu.dot_dimension_numbers<[1], [0], [0], [1], [0, 0, 1, 1], [], []>} : vector<8x32xf32>, vector<32x128xf32>, vector<8x128xf32> -> vector<8x128xf32>
    %665 = arith.addf %663, %664 : vector<8x128xf32>
    %666 = vector.extract_strided_slice %378 {offsets = [0, 0], sizes = [8, 128], strides = [1, 1]} : vector<64x128xf32> to vector<8x128xf32>
    %cst_156 = arith.constant dense<0.000000e+00> : vector<8x128xf32>
    %667 = tpu.matmul %660, %382, %cst_156 {dimension_numbers = #tpu.dot_dimension_numbers<[1], [0], [0], [1], [0, 0, 1, 1], [], []>} : vector<8x32xf32>, vector<32x128xf32>, vector<8x128xf32> -> vector<8x128xf32>
    %668 = arith.addf %666, %667 : vector<8x128xf32>
    %669 = vector.extract_strided_slice %665 {offsets = [0, 0], sizes = [8, 96], strides = [1, 1]} : vector<8x128xf32> to vector<8x96xf32>
    %670 = arith.negf %669 : vector<8x96xf32>
    %671 = math.exp %670 : vector<8x96xf32>
    %cst_157 = arith.constant 1.000000e+00 : f32
    %672 = vector.broadcast %cst_157 : f32 to vector<8x96xf32>
    %673 = arith.addf %672, %671 : vector<8x96xf32>
    %674 = arith.divf %672, %673 : vector<8x96xf32>
    %675 = vector.extract_strided_slice %674 {offsets = [0, 0], sizes = [8, 32], strides = [1, 1]} : vector<8x96xf32> to vector<8x32xf32>
    %676 = vector.extract_strided_slice %674 {offsets = [0, 32], sizes = [8, 32], strides = [1, 1]} : vector<8x96xf32> to vector<8x32xf32>
    %677 = vector.extract_strided_slice %674 {offsets = [0, 64], sizes = [8, 32], strides = [1, 1]} : vector<8x96xf32> to vector<8x32xf32>
    %678 = vector.extract_strided_slice %665 {offsets = [0, 96], sizes = [8, 32], strides = [1, 1]} : vector<8x128xf32> to vector<8x32xf32>
    %679 = math.tanh %678 : vector<8x32xf32>
    %680 = arith.mulf %676, %642 : vector<8x32xf32>
    %681 = arith.mulf %675, %679 : vector<8x32xf32>
    %682 = arith.addf %680, %681 : vector<8x32xf32>
    %683 = math.tanh %682 : vector<8x32xf32>
    %684 = arith.mulf %677, %683 : vector<8x32xf32>
    %685 = vector.extract_strided_slice %668 {offsets = [0, 0], sizes = [8, 96], strides = [1, 1]} : vector<8x128xf32> to vector<8x96xf32>
    %686 = arith.negf %685 : vector<8x96xf32>
    %687 = math.exp %686 : vector<8x96xf32>
    %cst_158 = arith.constant 1.000000e+00 : f32
    %688 = vector.broadcast %cst_158 : f32 to vector<8x96xf32>
    %689 = arith.addf %688, %687 : vector<8x96xf32>
    %690 = arith.divf %688, %689 : vector<8x96xf32>
    %691 = vector.extract_strided_slice %690 {offsets = [0, 0], sizes = [8, 32], strides = [1, 1]} : vector<8x96xf32> to vector<8x32xf32>
    %692 = vector.extract_strided_slice %690 {offsets = [0, 32], sizes = [8, 32], strides = [1, 1]} : vector<8x96xf32> to vector<8x32xf32>
    %693 = vector.extract_strided_slice %690 {offsets = [0, 64], sizes = [8, 32], strides = [1, 1]} : vector<8x96xf32> to vector<8x32xf32>
    %694 = vector.extract_strided_slice %668 {offsets = [0, 96], sizes = [8, 32], strides = [1, 1]} : vector<8x128xf32> to vector<8x32xf32>
    %695 = math.tanh %694 : vector<8x32xf32>
    %696 = arith.mulf %692, %658 : vector<8x32xf32>
    %697 = arith.mulf %691, %695 : vector<8x32xf32>
    %698 = arith.addf %696, %697 : vector<8x32xf32>
    %699 = math.tanh %698 : vector<8x32xf32>
    %700 = arith.mulf %693, %699 : vector<8x32xf32>
    %c56_159 = arith.constant 56 : index
    %c0_160 = arith.constant 0 : index
    %701 = vector.load %arg24[%c56_159, %c0_160] : memref<64x32xf32, #tpu.memory_space<vmem>>, vector<8x32xf32>
    tpu.vector_store %arg24[%c56_159, %c0_160], %684 {strides = array<i32>} : memref<64x32xf32, #tpu.memory_space<vmem>>, vector<8x32xf32>,
    %c0_161 = arith.constant 0 : index
    %c0_162 = arith.constant 0 : index
    %702 = vector.load %arg25[%c0_161, %c0_162] : memref<64x32xf32, #tpu.memory_space<vmem>>, vector<8x32xf32>
    tpu.vector_store %arg25[%c0_161, %c0_162], %700 {strides = array<i32>} : memref<64x32xf32, #tpu.memory_space<vmem>>, vector<8x32xf32>,
    %c0_163 = arith.constant 0 : index
    %c0_164 = arith.constant 0 : index
    %703 = vector.load %arg24[%c0_163, %c0_164] : memref<64x32xf32, #tpu.memory_space<vmem>>, vector<64x32xf32>
    %c0_165 = arith.constant 0 : index
    %c0_166 = arith.constant 0 : index
    %704 = vector.load %arg25[%c0_165, %c0_166] : memref<64x32xf32, #tpu.memory_space<vmem>>, vector<64x32xf32>
    %705 = vector.extract_strided_slice %362 {offsets = [0, 0, 0], sizes = [1, 32, 128], strides = [1, 1, 1]} : vector<2x64x128xf32> to vector<1x32x128xf32>
    %706 = vector.shape_cast %705 : vector<1x32x128xf32> to vector<32x128xf32>
    %cst_167 = arith.constant dense<0.000000e+00> : vector<64x128xf32>
    %707 = tpu.matmul %703, %706, %cst_167 {dimension_numbers = #tpu.dot_dimension_numbers<[1], [0], [0], [1], [0, 0, 1, 1], [], []>} : vector<64x32xf32>, vector<32x128xf32>, vector<64x128xf32> -> vector<64x128xf32>
    %708 = vector.extract_strided_slice %362 {offsets = [0, 32, 0], sizes = [1, 32, 128], strides = [1, 1, 1]} : vector<2x64x128xf32> to vector<1x32x128xf32>
    %709 = vector.shape_cast %708 : vector<1x32x128xf32> to vector<32x128xf32>
    %cst_168 = arith.constant dense<0.000000e+00> : vector<64x128xf32>
    %710 = tpu.matmul %704, %709, %cst_168 {dimension_numbers = #tpu.dot_dimension_numbers<[1], [0], [0], [1], [0, 0, 1, 1], [], []>} : vector<64x32xf32>, vector<32x128xf32>, vector<64x128xf32> -> vector<64x128xf32>
    %711 = arith.addf %707, %710 : vector<64x128xf32>
    %712 = vector.extract_strided_slice %364 {offsets = [0, 0, 0], sizes = [1, 1, 128], strides = [1, 1, 1]} : vector<2x1x128xf32> to vector<1x1x128xf32>
    %713 = vector.shape_cast %712 : vector<1x1x128xf32> to vector<1x128xf32>
    %714 = vector.broadcast %713 : vector<1x128xf32> to vector<64x128xf32>
    %715 = arith.addf %711, %714 : vector<64x128xf32>
    %716 = vector.extract_strided_slice %362 {offsets = [1, 0, 0], sizes = [1, 32, 128], strides = [1, 1, 1]} : vector<2x64x128xf32> to vector<1x32x128xf32>
    %717 = vector.shape_cast %716 : vector<1x32x128xf32> to vector<32x128xf32>
    %cst_169 = arith.constant dense<0.000000e+00> : vector<64x128xf32>
    %718 = tpu.matmul %703, %717, %cst_169 {dimension_numbers = #tpu.dot_dimension_numbers<[1], [0], [0], [1], [0, 0, 1, 1], [], []>} : vector<64x32xf32>, vector<32x128xf32>, vector<64x128xf32> -> vector<64x128xf32>
    %719 = vector.extract_strided_slice %362 {offsets = [1, 32, 0], sizes = [1, 32, 128], strides = [1, 1, 1]} : vector<2x64x128xf32> to vector<1x32x128xf32>
    %720 = vector.shape_cast %719 : vector<1x32x128xf32> to vector<32x128xf32>
    %cst_170 = arith.constant dense<0.000000e+00> : vector<64x128xf32>
    %721 = tpu.matmul %704, %720, %cst_170 {dimension_numbers = #tpu.dot_dimension_numbers<[1], [0], [0], [1], [0, 0, 1, 1], [], []>} : vector<64x32xf32>, vector<32x128xf32>, vector<64x128xf32> -> vector<64x128xf32>
    %722 = arith.addf %718, %721 : vector<64x128xf32>
    %723 = vector.extract_strided_slice %364 {offsets = [1, 0, 0], sizes = [1, 1, 128], strides = [1, 1, 1]} : vector<2x1x128xf32> to vector<1x1x128xf32>
    %724 = vector.shape_cast %723 : vector<1x1x128xf32> to vector<1x128xf32>
    %725 = vector.broadcast %724 : vector<1x128xf32> to vector<64x128xf32>
    %726 = arith.addf %722, %725 : vector<64x128xf32>
    %727 = vector.extract_strided_slice %363 {offsets = [0, 0, 0], sizes = [1, 32, 128], strides = [1, 1, 1]} : vector<2x32x128xf32> to vector<1x32x128xf32>
    %728 = vector.shape_cast %727 : vector<1x32x128xf32> to vector<32x128xf32>
    %729 = vector.extract_strided_slice %363 {offsets = [1, 0, 0], sizes = [1, 32, 128], strides = [1, 1, 1]} : vector<2x32x128xf32> to vector<1x32x128xf32>
    %730 = vector.shape_cast %729 : vector<1x32x128xf32> to vector<32x128xf32>
    %731 = vector.extract_strided_slice %715 {offsets = [0, 0], sizes = [8, 128], strides = [1, 1]} : vector<64x128xf32> to vector<8x128xf32>
    %cst_171 = arith.constant dense<0.000000e+00> : vector<8x128xf32>
    %732 = tpu.matmul %0, %728, %cst_171 {dimension_numbers = #tpu.dot_dimension_numbers<[1], [0], [0], [1], [0, 0, 1, 1], [], []>} : vector<8x32xf32>, vector<32x128xf32>, vector<8x128xf32> -> vector<8x128xf32>
    %733 = arith.addf %731, %732 : vector<8x128xf32>
    %734 = vector.extract_strided_slice %726 {offsets = [56, 0], sizes = [8, 128], strides = [1, 1]} : vector<64x128xf32> to vector<8x128xf32>
    %cst_172 = arith.constant dense<0.000000e+00> : vector<8x128xf32>
    %735 = tpu.matmul %0, %730, %cst_172 {dimension_numbers = #tpu.dot_dimension_numbers<[1], [0], [0], [1], [0, 0, 1, 1], [], []>} : vector<8x32xf32>, vector<32x128xf32>, vector<8x128xf32> -> vector<8x128xf32>
    %736 = arith.addf %734, %735 : vector<8x128xf32>
    %737 = vector.extract_strided_slice %733 {offsets = [0, 0], sizes = [8, 96], strides = [1, 1]} : vector<8x128xf32> to vector<8x96xf32>
    %738 = arith.negf %737 : vector<8x96xf32>
    %739 = math.exp %738 : vector<8x96xf32>
    %cst_173 = arith.constant 1.000000e+00 : f32
    %740 = vector.broadcast %cst_173 : f32 to vector<8x96xf32>
    %741 = arith.addf %740, %739 : vector<8x96xf32>
    %742 = arith.divf %740, %741 : vector<8x96xf32>
    %743 = vector.extract_strided_slice %742 {offsets = [0, 0], sizes = [8, 32], strides = [1, 1]} : vector<8x96xf32> to vector<8x32xf32>
    %744 = vector.extract_strided_slice %742 {offsets = [0, 32], sizes = [8, 32], strides = [1, 1]} : vector<8x96xf32> to vector<8x32xf32>
    %745 = vector.extract_strided_slice %742 {offsets = [0, 64], sizes = [8, 32], strides = [1, 1]} : vector<8x96xf32> to vector<8x32xf32>
    %746 = vector.extract_strided_slice %733 {offsets = [0, 96], sizes = [8, 32], strides = [1, 1]} : vector<8x128xf32> to vector<8x32xf32>
    %747 = math.tanh %746 : vector<8x32xf32>
    %748 = arith.mulf %744, %0 : vector<8x32xf32>
    %749 = arith.mulf %743, %747 : vector<8x32xf32>
    %750 = arith.addf %748, %749 : vector<8x32xf32>
    %751 = math.tanh %750 : vector<8x32xf32>
    %752 = arith.mulf %745, %751 : vector<8x32xf32>
    %753 = vector.extract_strided_slice %736 {offsets = [0, 0], sizes = [8, 96], strides = [1, 1]} : vector<8x128xf32> to vector<8x96xf32>
    %754 = arith.negf %753 : vector<8x96xf32>
    %755 = math.exp %754 : vector<8x96xf32>
    %cst_174 = arith.constant 1.000000e+00 : f32
    %756 = vector.broadcast %cst_174 : f32 to vector<8x96xf32>
    %757 = arith.addf %756, %755 : vector<8x96xf32>
    %758 = arith.divf %756, %757 : vector<8x96xf32>
    %759 = vector.extract_strided_slice %758 {offsets = [0, 0], sizes = [8, 32], strides = [1, 1]} : vector<8x96xf32> to vector<8x32xf32>
    %760 = vector.extract_strided_slice %758 {offsets = [0, 32], sizes = [8, 32], strides = [1, 1]} : vector<8x96xf32> to vector<8x32xf32>
    %761 = vector.extract_strided_slice %758 {offsets = [0, 64], sizes = [8, 32], strides = [1, 1]} : vector<8x96xf32> to vector<8x32xf32>
    %762 = vector.extract_strided_slice %736 {offsets = [0, 96], sizes = [8, 32], strides = [1, 1]} : vector<8x128xf32> to vector<8x32xf32>
    %763 = math.tanh %762 : vector<8x32xf32>
    %764 = arith.mulf %760, %0 : vector<8x32xf32>
    %765 = arith.mulf %759, %763 : vector<8x32xf32>
    %766 = arith.addf %764, %765 : vector<8x32xf32>
    %767 = math.tanh %766 : vector<8x32xf32>
    %768 = arith.mulf %761, %767 : vector<8x32xf32>
    %c0_175 = arith.constant 0 : index
    %c0_176 = arith.constant 0 : index
    %769 = vector.load %arg26[%c0_175, %c0_176] : memref<64x32xf32, #tpu.memory_space<vmem>>, vector<8x32xf32>
    tpu.vector_store %arg26[%c0_175, %c0_176], %752 {strides = array<i32>} : memref<64x32xf32, #tpu.memory_space<vmem>>, vector<8x32xf32>,
    %c56_177 = arith.constant 56 : index
    %c0_178 = arith.constant 0 : index
    %770 = vector.load %arg27[%c56_177, %c0_178] : memref<64x32xf32, #tpu.memory_space<vmem>>, vector<8x32xf32>
    tpu.vector_store %arg27[%c56_177, %c0_178], %768 {strides = array<i32>} : memref<64x32xf32, #tpu.memory_space<vmem>>, vector<8x32xf32>,
    %771 = vector.extract_strided_slice %715 {offsets = [8, 0], sizes = [8, 128], strides = [1, 1]} : vector<64x128xf32> to vector<8x128xf32>
    %cst_179 = arith.constant dense<0.000000e+00> : vector<8x128xf32>
    %772 = tpu.matmul %752, %728, %cst_179 {dimension_numbers = #tpu.dot_dimension_numbers<[1], [0], [0], [1], [0, 0, 1, 1], [], []>} : vector<8x32xf32>, vector<32x128xf32>, vector<8x128xf32> -> vector<8x128xf32>
    %773 = arith.addf %771, %772 : vector<8x128xf32>
    %774 = vector.extract_strided_slice %726 {offsets = [48, 0], sizes = [8, 128], strides = [1, 1]} : vector<64x128xf32> to vector<8x128xf32>
    %cst_180 = arith.constant dense<0.000000e+00> : vector<8x128xf32>
    %775 = tpu.matmul %768, %730, %cst_180 {dimension_numbers = #tpu.dot_dimension_numbers<[1], [0], [0], [1], [0, 0, 1, 1], [], []>} : vector<8x32xf32>, vector<32x128xf32>, vector<8x128xf32> -> vector<8x128xf32>
    %776 = arith.addf %774, %775 : vector<8x128xf32>
    %777 = vector.extract_strided_slice %773 {offsets = [0, 0], sizes = [8, 96], strides = [1, 1]} : vector<8x128xf32> to vector<8x96xf32>
    %778 = arith.negf %777 : vector<8x96xf32>
    %779 = math.exp %778 : vector<8x96xf32>
    %cst_181 = arith.constant 1.000000e+00 : f32
    %780 = vector.broadcast %cst_181 : f32 to vector<8x96xf32>
    %781 = arith.addf %780, %779 : vector<8x96xf32>
    %782 = arith.divf %780, %781 : vector<8x96xf32>
    %783 = vector.extract_strided_slice %782 {offsets = [0, 0], sizes = [8, 32], strides = [1, 1]} : vector<8x96xf32> to vector<8x32xf32>
    %784 = vector.extract_strided_slice %782 {offsets = [0, 32], sizes = [8, 32], strides = [1, 1]} : vector<8x96xf32> to vector<8x32xf32>
    %785 = vector.extract_strided_slice %782 {offsets = [0, 64], sizes = [8, 32], strides = [1, 1]} : vector<8x96xf32> to vector<8x32xf32>
    %786 = vector.extract_strided_slice %773 {offsets = [0, 96], sizes = [8, 32], strides = [1, 1]} : vector<8x128xf32> to vector<8x32xf32>
    %787 = math.tanh %786 : vector<8x32xf32>
    %788 = arith.mulf %784, %750 : vector<8x32xf32>
    %789 = arith.mulf %783, %787 : vector<8x32xf32>
    %790 = arith.addf %788, %789 : vector<8x32xf32>
    %791 = math.tanh %790 : vector<8x32xf32>
    %792 = arith.mulf %785, %791 : vector<8x32xf32>
    %793 = vector.extract_strided_slice %776 {offsets = [0, 0], sizes = [8, 96], strides = [1, 1]} : vector<8x128xf32> to vector<8x96xf32>
    %794 = arith.negf %793 : vector<8x96xf32>
    %795 = math.exp %794 : vector<8x96xf32>
    %cst_182 = arith.constant 1.000000e+00 : f32
    %796 = vector.broadcast %cst_182 : f32 to vector<8x96xf32>
    %797 = arith.addf %796, %795 : vector<8x96xf32>
    %798 = arith.divf %796, %797 : vector<8x96xf32>
    %799 = vector.extract_strided_slice %798 {offsets = [0, 0], sizes = [8, 32], strides = [1, 1]} : vector<8x96xf32> to vector<8x32xf32>
    %800 = vector.extract_strided_slice %798 {offsets = [0, 32], sizes = [8, 32], strides = [1, 1]} : vector<8x96xf32> to vector<8x32xf32>
    %801 = vector.extract_strided_slice %798 {offsets = [0, 64], sizes = [8, 32], strides = [1, 1]} : vector<8x96xf32> to vector<8x32xf32>
    %802 = vector.extract_strided_slice %776 {offsets = [0, 96], sizes = [8, 32], strides = [1, 1]} : vector<8x128xf32> to vector<8x32xf32>
    %803 = math.tanh %802 : vector<8x32xf32>
    %804 = arith.mulf %800, %766 : vector<8x32xf32>
    %805 = arith.mulf %799, %803 : vector<8x32xf32>
    %806 = arith.addf %804, %805 : vector<8x32xf32>
    %807 = math.tanh %806 : vector<8x32xf32>
    %808 = arith.mulf %801, %807 : vector<8x32xf32>
    %c8_183 = arith.constant 8 : index
    %c0_184 = arith.constant 0 : index
    %809 = vector.load %arg26[%c8_183, %c0_184] : memref<64x32xf32, #tpu.memory_space<vmem>>, vector<8x32xf32>
    tpu.vector_store %arg26[%c8_183, %c0_184], %792 {strides = array<i32>} : memref<64x32xf32, #tpu.memory_space<vmem>>, vector<8x32xf32>,
    %c48_185 = arith.constant 48 : index
    %c0_186 = arith.constant 0 : index
    %810 = vector.load %arg27[%c48_185, %c0_186] : memref<64x32xf32, #tpu.memory_space<vmem>>, vector<8x32xf32>
    tpu.vector_store %arg27[%c48_185, %c0_186], %808 {strides = array<i32>} : memref<64x32xf32, #tpu.memory_space<vmem>>, vector<8x32xf32>,
    %811 = vector.extract_strided_slice %715 {offsets = [16, 0], sizes = [8, 128], strides = [1, 1]} : vector<64x128xf32> to vector<8x128xf32>
    %cst_187 = arith.constant dense<0.000000e+00> : vector<8x128xf32>
    %812 = tpu.matmul %792, %728, %cst_187 {dimension_numbers = #tpu.dot_dimension_numbers<[1], [0], [0], [1], [0, 0, 1, 1], [], []>} : vector<8x32xf32>, vector<32x128xf32>, vector<8x128xf32> -> vector<8x128xf32>
    %813 = arith.addf %811, %812 : vector<8x128xf32>
    %814 = vector.extract_strided_slice %726 {offsets = [40, 0], sizes = [8, 128], strides = [1, 1]} : vector<64x128xf32> to vector<8x128xf32>
    %cst_188 = arith.constant dense<0.000000e+00> : vector<8x128xf32>
    %815 = tpu.matmul %808, %730, %cst_188 {dimension_numbers = #tpu.dot_dimension_numbers<[1], [0], [0], [1], [0, 0, 1, 1], [], []>} : vector<8x32xf32>, vector<32x128xf32>, vector<8x128xf32> -> vector<8x128xf32>
    %816 = arith.addf %814, %815 : vector<8x128xf32>
    %817 = vector.extract_strided_slice %813 {offsets = [0, 0], sizes = [8, 96], strides = [1, 1]} : vector<8x128xf32> to vector<8x96xf32>
    %818 = arith.negf %817 : vector<8x96xf32>
    %819 = math.exp %818 : vector<8x96xf32>
    %cst_189 = arith.constant 1.000000e+00 : f32
    %820 = vector.broadcast %cst_189 : f32 to vector<8x96xf32>
    %821 = arith.addf %820, %819 : vector<8x96xf32>
    %822 = arith.divf %820, %821 : vector<8x96xf32>
    %823 = vector.extract_strided_slice %822 {offsets = [0, 0], sizes = [8, 32], strides = [1, 1]} : vector<8x96xf32> to vector<8x32xf32>
    %824 = vector.extract_strided_slice %822 {offsets = [0, 32], sizes = [8, 32], strides = [1, 1]} : vector<8x96xf32> to vector<8x32xf32>
    %825 = vector.extract_strided_slice %822 {offsets = [0, 64], sizes = [8, 32], strides = [1, 1]} : vector<8x96xf32> to vector<8x32xf32>
    %826 = vector.extract_strided_slice %813 {offsets = [0, 96], sizes = [8, 32], strides = [1, 1]} : vector<8x128xf32> to vector<8x32xf32>
    %827 = math.tanh %826 : vector<8x32xf32>
    %828 = arith.mulf %824, %790 : vector<8x32xf32>
    %829 = arith.mulf %823, %827 : vector<8x32xf32>
    %830 = arith.addf %828, %829 : vector<8x32xf32>
    %831 = math.tanh %830 : vector<8x32xf32>
    %832 = arith.mulf %825, %831 : vector<8x32xf32>
    %833 = vector.extract_strided_slice %816 {offsets = [0, 0], sizes = [8, 96], strides = [1, 1]} : vector<8x128xf32> to vector<8x96xf32>
    %834 = arith.negf %833 : vector<8x96xf32>
    %835 = math.exp %834 : vector<8x96xf32>
    %cst_190 = arith.constant 1.000000e+00 : f32
    %836 = vector.broadcast %cst_190 : f32 to vector<8x96xf32>
    %837 = arith.addf %836, %835 : vector<8x96xf32>
    %838 = arith.divf %836, %837 : vector<8x96xf32>
    %839 = vector.extract_strided_slice %838 {offsets = [0, 0], sizes = [8, 32], strides = [1, 1]} : vector<8x96xf32> to vector<8x32xf32>
    %840 = vector.extract_strided_slice %838 {offsets = [0, 32], sizes = [8, 32], strides = [1, 1]} : vector<8x96xf32> to vector<8x32xf32>
    %841 = vector.extract_strided_slice %838 {offsets = [0, 64], sizes = [8, 32], strides = [1, 1]} : vector<8x96xf32> to vector<8x32xf32>
    %842 = vector.extract_strided_slice %816 {offsets = [0, 96], sizes = [8, 32], strides = [1, 1]} : vector<8x128xf32> to vector<8x32xf32>
    %843 = math.tanh %842 : vector<8x32xf32>
    %844 = arith.mulf %840, %806 : vector<8x32xf32>
    %845 = arith.mulf %839, %843 : vector<8x32xf32>
    %846 = arith.addf %844, %845 : vector<8x32xf32>
    %847 = math.tanh %846 : vector<8x32xf32>
    %848 = arith.mulf %841, %847 : vector<8x32xf32>
    %c16_191 = arith.constant 16 : index
    %c0_192 = arith.constant 0 : index
    %849 = vector.load %arg26[%c16_191, %c0_192] : memref<64x32xf32, #tpu.memory_space<vmem>>, vector<8x32xf32>
    tpu.vector_store %arg26[%c16_191, %c0_192], %832 {strides = array<i32>} : memref<64x32xf32, #tpu.memory_space<vmem>>, vector<8x32xf32>,
    %c40_193 = arith.constant 40 : index
    %c0_194 = arith.constant 0 : index
    %850 = vector.load %arg27[%c40_193, %c0_194] : memref<64x32xf32, #tpu.memory_space<vmem>>, vector<8x32xf32>
    tpu.vector_store %arg27[%c40_193, %c0_194], %848 {strides = array<i32>} : memref<64x32xf32, #tpu.memory_space<vmem>>, vector<8x32xf32>,
    %851 = vector.extract_strided_slice %715 {offsets = [24, 0], sizes = [8, 128], strides = [1, 1]} : vector<64x128xf32> to vector<8x128xf32>
    %cst_195 = arith.constant dense<0.000000e+00> : vector<8x128xf32>
    %852 = tpu.matmul %832, %728, %cst_195 {dimension_numbers = #tpu.dot_dimension_numbers<[1], [0], [0], [1], [0, 0, 1, 1], [], []>} : vector<8x32xf32>, vector<32x128xf32>, vector<8x128xf32> -> vector<8x128xf32>
    %853 = arith.addf %851, %852 : vector<8x128xf32>
    %854 = vector.extract_strided_slice %726 {offsets = [32, 0], sizes = [8, 128], strides = [1, 1]} : vector<64x128xf32> to vector<8x128xf32>
    %cst_196 = arith.constant dense<0.000000e+00> : vector<8x128xf32>
    %855 = tpu.matmul %848, %730, %cst_196 {dimension_numbers = #tpu.dot_dimension_numbers<[1], [0], [0], [1], [0, 0, 1, 1], [], []>} : vector<8x32xf32>, vector<32x128xf32>, vector<8x128xf32> -> vector<8x128xf32>
    %856 = arith.addf %854, %855 : vector<8x128xf32>
    %857 = vector.extract_strided_slice %853 {offsets = [0, 0], sizes = [8, 96], strides = [1, 1]} : vector<8x128xf32> to vector<8x96xf32>
    %858 = arith.negf %857 : vector<8x96xf32>
    %859 = math.exp %858 : vector<8x96xf32>
    %cst_197 = arith.constant 1.000000e+00 : f32
    %860 = vector.broadcast %cst_197 : f32 to vector<8x96xf32>
    %861 = arith.addf %860, %859 : vector<8x96xf32>
    %862 = arith.divf %860, %861 : vector<8x96xf32>
    %863 = vector.extract_strided_slice %862 {offsets = [0, 0], sizes = [8, 32], strides = [1, 1]} : vector<8x96xf32> to vector<8x32xf32>
    %864 = vector.extract_strided_slice %862 {offsets = [0, 32], sizes = [8, 32], strides = [1, 1]} : vector<8x96xf32> to vector<8x32xf32>
    %865 = vector.extract_strided_slice %862 {offsets = [0, 64], sizes = [8, 32], strides = [1, 1]} : vector<8x96xf32> to vector<8x32xf32>
    %866 = vector.extract_strided_slice %853 {offsets = [0, 96], sizes = [8, 32], strides = [1, 1]} : vector<8x128xf32> to vector<8x32xf32>
    %867 = math.tanh %866 : vector<8x32xf32>
    %868 = arith.mulf %864, %830 : vector<8x32xf32>
    %869 = arith.mulf %863, %867 : vector<8x32xf32>
    %870 = arith.addf %868, %869 : vector<8x32xf32>
    %871 = math.tanh %870 : vector<8x32xf32>
    %872 = arith.mulf %865, %871 : vector<8x32xf32>
    %873 = vector.extract_strided_slice %856 {offsets = [0, 0], sizes = [8, 96], strides = [1, 1]} : vector<8x128xf32> to vector<8x96xf32>
    %874 = arith.negf %873 : vector<8x96xf32>
    %875 = math.exp %874 : vector<8x96xf32>
    %cst_198 = arith.constant 1.000000e+00 : f32
    %876 = vector.broadcast %cst_198 : f32 to vector<8x96xf32>
    %877 = arith.addf %876, %875 : vector<8x96xf32>
    %878 = arith.divf %876, %877 : vector<8x96xf32>
    %879 = vector.extract_strided_slice %878 {offsets = [0, 0], sizes = [8, 32], strides = [1, 1]} : vector<8x96xf32> to vector<8x32xf32>
    %880 = vector.extract_strided_slice %878 {offsets = [0, 32], sizes = [8, 32], strides = [1, 1]} : vector<8x96xf32> to vector<8x32xf32>
    %881 = vector.extract_strided_slice %878 {offsets = [0, 64], sizes = [8, 32], strides = [1, 1]} : vector<8x96xf32> to vector<8x32xf32>
    %882 = vector.extract_strided_slice %856 {offsets = [0, 96], sizes = [8, 32], strides = [1, 1]} : vector<8x128xf32> to vector<8x32xf32>
    %883 = math.tanh %882 : vector<8x32xf32>
    %884 = arith.mulf %880, %846 : vector<8x32xf32>
    %885 = arith.mulf %879, %883 : vector<8x32xf32>
    %886 = arith.addf %884, %885 : vector<8x32xf32>
    %887 = math.tanh %886 : vector<8x32xf32>
    %888 = arith.mulf %881, %887 : vector<8x32xf32>
    %c24_199 = arith.constant 24 : index
    %c0_200 = arith.constant 0 : index
    %889 = vector.load %arg26[%c24_199, %c0_200] : memref<64x32xf32, #tpu.memory_space<vmem>>, vector<8x32xf32>
    tpu.vector_store %arg26[%c24_199, %c0_200], %872 {strides = array<i32>} : memref<64x32xf32, #tpu.memory_space<vmem>>, vector<8x32xf32>,
    %c32_201 = arith.constant 32 : index
    %c0_202 = arith.constant 0 : index
    %890 = vector.load %arg27[%c32_201, %c0_202] : memref<64x32xf32, #tpu.memory_space<vmem>>, vector<8x32xf32>
    tpu.vector_store %arg27[%c32_201, %c0_202], %888 {strides = array<i32>} : memref<64x32xf32, #tpu.memory_space<vmem>>, vector<8x32xf32>,
    %891 = vector.extract_strided_slice %715 {offsets = [32, 0], sizes = [8, 128], strides = [1, 1]} : vector<64x128xf32> to vector<8x128xf32>
    %cst_203 = arith.constant dense<0.000000e+00> : vector<8x128xf32>
    %892 = tpu.matmul %872, %728, %cst_203 {dimension_numbers = #tpu.dot_dimension_numbers<[1], [0], [0], [1], [0, 0, 1, 1], [], []>} : vector<8x32xf32>, vector<32x128xf32>, vector<8x128xf32> -> vector<8x128xf32>
    %893 = arith.addf %891, %892 : vector<8x128xf32>
    %894 = vector.extract_strided_slice %726 {offsets = [24, 0], sizes = [8, 128], strides = [1, 1]} : vector<64x128xf32> to vector<8x128xf32>
    %cst_204 = arith.constant dense<0.000000e+00> : vector<8x128xf32>
    %895 = tpu.matmul %888, %730, %cst_204 {dimension_numbers = #tpu.dot_dimension_numbers<[1], [0], [0], [1], [0, 0, 1, 1], [], []>} : vector<8x32xf32>, vector<32x128xf32>, vector<8x128xf32> -> vector<8x128xf32>
    %896 = arith.addf %894, %895 : vector<8x128xf32>
    %897 = vector.extract_strided_slice %893 {offsets = [0, 0], sizes = [8, 96], strides = [1, 1]} : vector<8x128xf32> to vector<8x96xf32>
    %898 = arith.negf %897 : vector<8x96xf32>
    %899 = math.exp %898 : vector<8x96xf32>
    %cst_205 = arith.constant 1.000000e+00 : f32
    %900 = vector.broadcast %cst_205 : f32 to vector<8x96xf32>
    %901 = arith.addf %900, %899 : vector<8x96xf32>
    %902 = arith.divf %900, %901 : vector<8x96xf32>
    %903 = vector.extract_strided_slice %902 {offsets = [0, 0], sizes = [8, 32], strides = [1, 1]} : vector<8x96xf32> to vector<8x32xf32>
    %904 = vector.extract_strided_slice %902 {offsets = [0, 32], sizes = [8, 32], strides = [1, 1]} : vector<8x96xf32> to vector<8x32xf32>
    %905 = vector.extract_strided_slice %902 {offsets = [0, 64], sizes = [8, 32], strides = [1, 1]} : vector<8x96xf32> to vector<8x32xf32>
    %906 = vector.extract_strided_slice %893 {offsets = [0, 96], sizes = [8, 32], strides = [1, 1]} : vector<8x128xf32> to vector<8x32xf32>
    %907 = math.tanh %906 : vector<8x32xf32>
    %908 = arith.mulf %904, %870 : vector<8x32xf32>
    %909 = arith.mulf %903, %907 : vector<8x32xf32>
    %910 = arith.addf %908, %909 : vector<8x32xf32>
    %911 = math.tanh %910 : vector<8x32xf32>
    %912 = arith.mulf %905, %911 : vector<8x32xf32>
    %913 = vector.extract_strided_slice %896 {offsets = [0, 0], sizes = [8, 96], strides = [1, 1]} : vector<8x128xf32> to vector<8x96xf32>
    %914 = arith.negf %913 : vector<8x96xf32>
    %915 = math.exp %914 : vector<8x96xf32>
    %cst_206 = arith.constant 1.000000e+00 : f32
    %916 = vector.broadcast %cst_206 : f32 to vector<8x96xf32>
    %917 = arith.addf %916, %915 : vector<8x96xf32>
    %918 = arith.divf %916, %917 : vector<8x96xf32>
    %919 = vector.extract_strided_slice %918 {offsets = [0, 0], sizes = [8, 32], strides = [1, 1]} : vector<8x96xf32> to vector<8x32xf32>
    %920 = vector.extract_strided_slice %918 {offsets = [0, 32], sizes = [8, 32], strides = [1, 1]} : vector<8x96xf32> to vector<8x32xf32>
    %921 = vector.extract_strided_slice %918 {offsets = [0, 64], sizes = [8, 32], strides = [1, 1]} : vector<8x96xf32> to vector<8x32xf32>
    %922 = vector.extract_strided_slice %896 {offsets = [0, 96], sizes = [8, 32], strides = [1, 1]} : vector<8x128xf32> to vector<8x32xf32>
    %923 = math.tanh %922 : vector<8x32xf32>
    %924 = arith.mulf %920, %886 : vector<8x32xf32>
    %925 = arith.mulf %919, %923 : vector<8x32xf32>
    %926 = arith.addf %924, %925 : vector<8x32xf32>
    %927 = math.tanh %926 : vector<8x32xf32>
    %928 = arith.mulf %921, %927 : vector<8x32xf32>
    %c32_207 = arith.constant 32 : index
    %c0_208 = arith.constant 0 : index
    %929 = vector.load %arg26[%c32_207, %c0_208] : memref<64x32xf32, #tpu.memory_space<vmem>>, vector<8x32xf32>
    tpu.vector_store %arg26[%c32_207, %c0_208], %912 {strides = array<i32>} : memref<64x32xf32, #tpu.memory_space<vmem>>, vector<8x32xf32>,
    %c24_209 = arith.constant 24 : index
    %c0_210 = arith.constant 0 : index
    %930 = vector.load %arg27[%c24_209, %c0_210] : memref<64x32xf32, #tpu.memory_space<vmem>>, vector<8x32xf32>
    tpu.vector_store %arg27[%c24_209, %c0_210], %928 {strides = array<i32>} : memref<64x32xf32, #tpu.memory_space<vmem>>, vector<8x32xf32>,
    %931 = vector.extract_strided_slice %715 {offsets = [40, 0], sizes = [8, 128], strides = [1, 1]} : vector<64x128xf32> to vector<8x128xf32>
    %cst_211 = arith.constant dense<0.000000e+00> : vector<8x128xf32>
    %932 = tpu.matmul %912, %728, %cst_211 {dimension_numbers = #tpu.dot_dimension_numbers<[1], [0], [0], [1], [0, 0, 1, 1], [], []>} : vector<8x32xf32>, vector<32x128xf32>, vector<8x128xf32> -> vector<8x128xf32>
    %933 = arith.addf %931, %932 : vector<8x128xf32>
    %934 = vector.extract_strided_slice %726 {offsets = [16, 0], sizes = [8, 128], strides = [1, 1]} : vector<64x128xf32> to vector<8x128xf32>
    %cst_212 = arith.constant dense<0.000000e+00> : vector<8x128xf32>
    %935 = tpu.matmul %928, %730, %cst_212 {dimension_numbers = #tpu.dot_dimension_numbers<[1], [0], [0], [1], [0, 0, 1, 1], [], []>} : vector<8x32xf32>, vector<32x128xf32>, vector<8x128xf32> -> vector<8x128xf32>
    %936 = arith.addf %934, %935 : vector<8x128xf32>
    %937 = vector.extract_strided_slice %933 {offsets = [0, 0], sizes = [8, 96], strides = [1, 1]} : vector<8x128xf32> to vector<8x96xf32>
    %938 = arith.negf %937 : vector<8x96xf32>
    %939 = math.exp %938 : vector<8x96xf32>
    %cst_213 = arith.constant 1.000000e+00 : f32
    %940 = vector.broadcast %cst_213 : f32 to vector<8x96xf32>
    %941 = arith.addf %940, %939 : vector<8x96xf32>
    %942 = arith.divf %940, %941 : vector<8x96xf32>
    %943 = vector.extract_strided_slice %942 {offsets = [0, 0], sizes = [8, 32], strides = [1, 1]} : vector<8x96xf32> to vector<8x32xf32>
    %944 = vector.extract_strided_slice %942 {offsets = [0, 32], sizes = [8, 32], strides = [1, 1]} : vector<8x96xf32> to vector<8x32xf32>
    %945 = vector.extract_strided_slice %942 {offsets = [0, 64], sizes = [8, 32], strides = [1, 1]} : vector<8x96xf32> to vector<8x32xf32>
    %946 = vector.extract_strided_slice %933 {offsets = [0, 96], sizes = [8, 32], strides = [1, 1]} : vector<8x128xf32> to vector<8x32xf32>
    %947 = math.tanh %946 : vector<8x32xf32>
    %948 = arith.mulf %944, %910 : vector<8x32xf32>
    %949 = arith.mulf %943, %947 : vector<8x32xf32>
    %950 = arith.addf %948, %949 : vector<8x32xf32>
    %951 = math.tanh %950 : vector<8x32xf32>
    %952 = arith.mulf %945, %951 : vector<8x32xf32>
    %953 = vector.extract_strided_slice %936 {offsets = [0, 0], sizes = [8, 96], strides = [1, 1]} : vector<8x128xf32> to vector<8x96xf32>
    %954 = arith.negf %953 : vector<8x96xf32>
    %955 = math.exp %954 : vector<8x96xf32>
    %cst_214 = arith.constant 1.000000e+00 : f32
    %956 = vector.broadcast %cst_214 : f32 to vector<8x96xf32>
    %957 = arith.addf %956, %955 : vector<8x96xf32>
    %958 = arith.divf %956, %957 : vector<8x96xf32>
    %959 = vector.extract_strided_slice %958 {offsets = [0, 0], sizes = [8, 32], strides = [1, 1]} : vector<8x96xf32> to vector<8x32xf32>
    %960 = vector.extract_strided_slice %958 {offsets = [0, 32], sizes = [8, 32], strides = [1, 1]} : vector<8x96xf32> to vector<8x32xf32>
    %961 = vector.extract_strided_slice %958 {offsets = [0, 64], sizes = [8, 32], strides = [1, 1]} : vector<8x96xf32> to vector<8x32xf32>
    %962 = vector.extract_strided_slice %936 {offsets = [0, 96], sizes = [8, 32], strides = [1, 1]} : vector<8x128xf32> to vector<8x32xf32>
    %963 = math.tanh %962 : vector<8x32xf32>
    %964 = arith.mulf %960, %926 : vector<8x32xf32>
    %965 = arith.mulf %959, %963 : vector<8x32xf32>
    %966 = arith.addf %964, %965 : vector<8x32xf32>
    %967 = math.tanh %966 : vector<8x32xf32>
    %968 = arith.mulf %961, %967 : vector<8x32xf32>
    %c40_215 = arith.constant 40 : index
    %c0_216 = arith.constant 0 : index
    %969 = vector.load %arg26[%c40_215, %c0_216] : memref<64x32xf32, #tpu.memory_space<vmem>>, vector<8x32xf32>
    tpu.vector_store %arg26[%c40_215, %c0_216], %952 {strides = array<i32>} : memref<64x32xf32, #tpu.memory_space<vmem>>, vector<8x32xf32>,
    %c16_217 = arith.constant 16 : index
    %c0_218 = arith.constant 0 : index
    %970 = vector.load %arg27[%c16_217, %c0_218] : memref<64x32xf32, #tpu.memory_space<vmem>>, vector<8x32xf32>
    tpu.vector_store %arg27[%c16_217, %c0_218], %968 {strides = array<i32>} : memref<64x32xf32, #tpu.memory_space<vmem>>, vector<8x32xf32>,
    %971 = vector.extract_strided_slice %715 {offsets = [48, 0], sizes = [8, 128], strides = [1, 1]} : vector<64x128xf32> to vector<8x128xf32>
    %cst_219 = arith.constant dense<0.000000e+00> : vector<8x128xf32>
    %972 = tpu.matmul %952, %728, %cst_219 {dimension_numbers = #tpu.dot_dimension_numbers<[1], [0], [0], [1], [0, 0, 1, 1], [], []>} : vector<8x32xf32>, vector<32x128xf32>, vector<8x128xf32> -> vector<8x128xf32>
    %973 = arith.addf %971, %972 : vector<8x128xf32>
    %974 = vector.extract_strided_slice %726 {offsets = [8, 0], sizes = [8, 128], strides = [1, 1]} : vector<64x128xf32> to vector<8x128xf32>
    %cst_220 = arith.constant dense<0.000000e+00> : vector<8x128xf32>
    %975 = tpu.matmul %968, %730, %cst_220 {dimension_numbers = #tpu.dot_dimension_numbers<[1], [0], [0], [1], [0, 0, 1, 1], [], []>} : vector<8x32xf32>, vector<32x128xf32>, vector<8x128xf32> -> vector<8x128xf32>
    %976 = arith.addf %974, %975 : vector<8x128xf32>
    %977 = vector.extract_strided_slice %973 {offsets = [0, 0], sizes = [8, 96], strides = [1, 1]} : vector<8x128xf32> to vector<8x96xf32>
    %978 = arith.negf %977 : vector<8x96xf32>
    %979 = math.exp %978 : vector<8x96xf32>
    %cst_221 = arith.constant 1.000000e+00 : f32
    %980 = vector.broadcast %cst_221 : f32 to vector<8x96xf32>
    %981 = arith.addf %980, %979 : vector<8x96xf32>
    %982 = arith.divf %980, %981 : vector<8x96xf32>
    %983 = vector.extract_strided_slice %982 {offsets = [0, 0], sizes = [8, 32], strides = [1, 1]} : vector<8x96xf32> to vector<8x32xf32>
    %984 = vector.extract_strided_slice %982 {offsets = [0, 32], sizes = [8, 32], strides = [1, 1]} : vector<8x96xf32> to vector<8x32xf32>
    %985 = vector.extract_strided_slice %982 {offsets = [0, 64], sizes = [8, 32], strides = [1, 1]} : vector<8x96xf32> to vector<8x32xf32>
    %986 = vector.extract_strided_slice %973 {offsets = [0, 96], sizes = [8, 32], strides = [1, 1]} : vector<8x128xf32> to vector<8x32xf32>
    %987 = math.tanh %986 : vector<8x32xf32>
    %988 = arith.mulf %984, %950 : vector<8x32xf32>
    %989 = arith.mulf %983, %987 : vector<8x32xf32>
    %990 = arith.addf %988, %989 : vector<8x32xf32>
    %991 = math.tanh %990 : vector<8x32xf32>
    %992 = arith.mulf %985, %991 : vector<8x32xf32>
    %993 = vector.extract_strided_slice %976 {offsets = [0, 0], sizes = [8, 96], strides = [1, 1]} : vector<8x128xf32> to vector<8x96xf32>
    %994 = arith.negf %993 : vector<8x96xf32>
    %995 = math.exp %994 : vector<8x96xf32>
    %cst_222 = arith.constant 1.000000e+00 : f32
    %996 = vector.broadcast %cst_222 : f32 to vector<8x96xf32>
    %997 = arith.addf %996, %995 : vector<8x96xf32>
    %998 = arith.divf %996, %997 : vector<8x96xf32>
    %999 = vector.extract_strided_slice %998 {offsets = [0, 0], sizes = [8, 32], strides = [1, 1]} : vector<8x96xf32> to vector<8x32xf32>
    %1000 = vector.extract_strided_slice %998 {offsets = [0, 32], sizes = [8, 32], strides = [1, 1]} : vector<8x96xf32> to vector<8x32xf32>
    %1001 = vector.extract_strided_slice %998 {offsets = [0, 64], sizes = [8, 32], strides = [1, 1]} : vector<8x96xf32> to vector<8x32xf32>
    %1002 = vector.extract_strided_slice %976 {offsets = [0, 96], sizes = [8, 32], strides = [1, 1]} : vector<8x128xf32> to vector<8x32xf32>
    %1003 = math.tanh %1002 : vector<8x32xf32>
    %1004 = arith.mulf %1000, %966 : vector<8x32xf32>
    %1005 = arith.mulf %999, %1003 : vector<8x32xf32>
    %1006 = arith.addf %1004, %1005 : vector<8x32xf32>
    %1007 = math.tanh %1006 : vector<8x32xf32>
    %1008 = arith.mulf %1001, %1007 : vector<8x32xf32>
    %c48_223 = arith.constant 48 : index
    %c0_224 = arith.constant 0 : index
    %1009 = vector.load %arg26[%c48_223, %c0_224] : memref<64x32xf32, #tpu.memory_space<vmem>>, vector<8x32xf32>
    tpu.vector_store %arg26[%c48_223, %c0_224], %992 {strides = array<i32>} : memref<64x32xf32, #tpu.memory_space<vmem>>, vector<8x32xf32>,
    %c8_225 = arith.constant 8 : index
    %c0_226 = arith.constant 0 : index
    %1010 = vector.load %arg27[%c8_225, %c0_226] : memref<64x32xf32, #tpu.memory_space<vmem>>, vector<8x32xf32>
    tpu.vector_store %arg27[%c8_225, %c0_226], %1008 {strides = array<i32>} : memref<64x32xf32, #tpu.memory_space<vmem>>, vector<8x32xf32>,
    %1011 = vector.extract_strided_slice %715 {offsets = [56, 0], sizes = [8, 128], strides = [1, 1]} : vector<64x128xf32> to vector<8x128xf32>
    %cst_227 = arith.constant dense<0.000000e+00> : vector<8x128xf32>
    %1012 = tpu.matmul %992, %728, %cst_227 {dimension_numbers = #tpu.dot_dimension_numbers<[1], [0], [0], [1], [0, 0, 1, 1], [], []>} : vector<8x32xf32>, vector<32x128xf32>, vector<8x128xf32> -> vector<8x128xf32>
    %1013 = arith.addf %1011, %1012 : vector<8x128xf32>
    %1014 = vector.extract_strided_slice %726 {offsets = [0, 0], sizes = [8, 128], strides = [1, 1]} : vector<64x128xf32> to vector<8x128xf32>
    %cst_228 = arith.constant dense<0.000000e+00> : vector<8x128xf32>
    %1015 = tpu.matmul %1008, %730, %cst_228 {dimension_numbers = #tpu.dot_dimension_numbers<[1], [0], [0], [1], [0, 0, 1, 1], [], []>} : vector<8x32xf32>, vector<32x128xf32>, vector<8x128xf32> -> vector<8x128xf32>
    %1016 = arith.addf %1014, %1015 : vector<8x128xf32>
    %1017 = vector.extract_strided_slice %1013 {offsets = [0, 0], sizes = [8, 96], strides = [1, 1]} : vector<8x128xf32> to vector<8x96xf32>
    %1018 = arith.negf %1017 : vector<8x96xf32>
    %1019 = math.exp %1018 : vector<8x96xf32>
    %cst_229 = arith.constant 1.000000e+00 : f32
    %1020 = vector.broadcast %cst_229 : f32 to vector<8x96xf32>
    %1021 = arith.addf %1020, %1019 : vector<8x96xf32>
    %1022 = arith.divf %1020, %1021 : vector<8x96xf32>
    %1023 = vector.extract_strided_slice %1022 {offsets = [0, 0], sizes = [8, 32], strides = [1, 1]} : vector<8x96xf32> to vector<8x32xf32>
    %1024 = vector.extract_strided_slice %1022 {offsets = [0, 32], sizes = [8, 32], strides = [1, 1]} : vector<8x96xf32> to vector<8x32xf32>
    %1025 = vector.extract_strided_slice %1022 {offsets = [0, 64], sizes = [8, 32], strides = [1, 1]} : vector<8x96xf32> to vector<8x32xf32>
    %1026 = vector.extract_strided_slice %1013 {offsets = [0, 96], sizes = [8, 32], strides = [1, 1]} : vector<8x128xf32> to vector<8x32xf32>
    %1027 = math.tanh %1026 : vector<8x32xf32>
    %1028 = arith.mulf %1024, %990 : vector<8x32xf32>
    %1029 = arith.mulf %1023, %1027 : vector<8x32xf32>
    %1030 = arith.addf %1028, %1029 : vector<8x32xf32>
    %1031 = math.tanh %1030 : vector<8x32xf32>
    %1032 = arith.mulf %1025, %1031 : vector<8x32xf32>
    %1033 = vector.extract_strided_slice %1016 {offsets = [0, 0], sizes = [8, 96], strides = [1, 1]} : vector<8x128xf32> to vector<8x96xf32>
    %1034 = arith.negf %1033 : vector<8x96xf32>
    %1035 = math.exp %1034 : vector<8x96xf32>
    %cst_230 = arith.constant 1.000000e+00 : f32
    %1036 = vector.broadcast %cst_230 : f32 to vector<8x96xf32>
    %1037 = arith.addf %1036, %1035 : vector<8x96xf32>
    %1038 = arith.divf %1036, %1037 : vector<8x96xf32>
    %1039 = vector.extract_strided_slice %1038 {offsets = [0, 0], sizes = [8, 32], strides = [1, 1]} : vector<8x96xf32> to vector<8x32xf32>
    %1040 = vector.extract_strided_slice %1038 {offsets = [0, 32], sizes = [8, 32], strides = [1, 1]} : vector<8x96xf32> to vector<8x32xf32>
    %1041 = vector.extract_strided_slice %1038 {offsets = [0, 64], sizes = [8, 32], strides = [1, 1]} : vector<8x96xf32> to vector<8x32xf32>
    %1042 = vector.extract_strided_slice %1016 {offsets = [0, 96], sizes = [8, 32], strides = [1, 1]} : vector<8x128xf32> to vector<8x32xf32>
    %1043 = math.tanh %1042 : vector<8x32xf32>
    %1044 = arith.mulf %1040, %1006 : vector<8x32xf32>
    %1045 = arith.mulf %1039, %1043 : vector<8x32xf32>
    %1046 = arith.addf %1044, %1045 : vector<8x32xf32>
    %1047 = math.tanh %1046 : vector<8x32xf32>
    %1048 = arith.mulf %1041, %1047 : vector<8x32xf32>
    %c56_231 = arith.constant 56 : index
    %c0_232 = arith.constant 0 : index
    %1049 = vector.load %arg26[%c56_231, %c0_232] : memref<64x32xf32, #tpu.memory_space<vmem>>, vector<8x32xf32>
    tpu.vector_store %arg26[%c56_231, %c0_232], %1032 {strides = array<i32>} : memref<64x32xf32, #tpu.memory_space<vmem>>, vector<8x32xf32>,
    %c0_233 = arith.constant 0 : index
    %c0_234 = arith.constant 0 : index
    %1050 = vector.load %arg27[%c0_233, %c0_234] : memref<64x32xf32, #tpu.memory_space<vmem>>, vector<8x32xf32>
    tpu.vector_store %arg27[%c0_233, %c0_234], %1048 {strides = array<i32>} : memref<64x32xf32, #tpu.memory_space<vmem>>, vector<8x32xf32>,
    %c0_235 = arith.constant 0 : index
    %c0_236 = arith.constant 0 : index
    %1051 = vector.load %arg17[%c0_235, %c0_236] : memref<64x128xf32, #tpu.memory_space<vmem>>, vector<64x128xf32>
    %c0_237 = arith.constant 0 : index
    %c0_238 = arith.constant 0 : index
    %1052 = vector.load %arg26[%c0_237, %c0_238] : memref<64x32xf32, #tpu.memory_space<vmem>>, vector<64x32xf32>
    %1053 = vector.extract_strided_slice %1051 {offsets = [0, 0], sizes = [32, 128], strides = [1, 1]} : vector<64x128xf32> to vector<32x128xf32>
    %cst_239 = arith.constant dense<0.000000e+00> : vector<64x128xf32>
    %1054 = tpu.matmul %1052, %1053, %cst_239 {dimension_numbers = #tpu.dot_dimension_numbers<[1], [0], [0], [1], [0, 0, 1, 1], [], []>} : vector<64x32xf32>, vector<32x128xf32>, vector<64x128xf32> -> vector<64x128xf32>
    %c0_240 = arith.constant 0 : index
    %c0_241 = arith.constant 0 : index
    %1055 = vector.load %arg27[%c0_240, %c0_241] : memref<64x32xf32, #tpu.memory_space<vmem>>, vector<64x32xf32>
    %1056 = vector.extract_strided_slice %1051 {offsets = [32, 0], sizes = [32, 128], strides = [1, 1]} : vector<64x128xf32> to vector<32x128xf32>
    %cst_242 = arith.constant dense<0.000000e+00> : vector<64x128xf32>
    %1057 = tpu.matmul %1055, %1056, %cst_242 {dimension_numbers = #tpu.dot_dimension_numbers<[1], [0], [0], [1], [0, 0, 1, 1], [], []>} : vector<64x32xf32>, vector<32x128xf32>, vector<64x128xf32> -> vector<64x128xf32>
    %1058 = arith.addf %1054, %1057 : vector<64x128xf32>
    %c0_243 = arith.constant 0 : index
    %c0_244 = arith.constant 0 : index
    %1059 = vector.load %arg18[%c0_243, %c0_244] : memref<1x128xf32, #tpu.memory_space<vmem>>, vector<1x128xf32>
    %1060 = vector.broadcast %1059 : vector<1x128xf32> to vector<64x128xf32>
    %1061 = arith.addf %1058, %1060 : vector<64x128xf32>
    %c0_245 = arith.constant 0 : index
    %c0_246 = arith.constant 0 : index
    %1062 = vector.load %arg21[%c0_245, %c0_246] : memref<64x128xf32, #tpu.memory_space<vmem>>, vector<64x128xf32>
    tpu.vector_store %arg21[%c0_245, %c0_246], %1061 {strides = array<i32>} : memref<64x128xf32, #tpu.memory_space<vmem>>, vector<64x128xf32>,
    return
  }
}

</mosaic_0001>

<llo_original>
// kernel: tpu_custom_call.1
$region0: #{tpu_custom_call.1}
  #allocation0 [shape = 'u32[]', space=smem, size = 0x4, offset = 0x4, fixed_abs, tag = 'smem constant byte address 0x4 - core index']
  #allocation1 [shape = 'u32[144,128]{1,0:T(1,128)}', space=vmem, size = 0x12000, scoped, tag = 'internal scratch']
  #allocation2 [shape = 'f32[56,32]{1,0:T(8,128)}', space=vmem, size = 0x7000, scoped, tag = 'scratch operand']
  #allocation3 [shape = 'f32[64,32]{1,0:T(8,128)}', space=vmem, size = 0x8000, scoped, tag = 'scratch operand']
  #allocation4 [shape = 'f32[64,32]{1,0:T(8,128)}', space=vmem, size = 0x8000, scoped, tag = 'scratch operand']
  #allocation5 [shape = 'f32[64,32]{1,0:T(8,128)}', space=vmem, size = 0x8000, scoped, tag = 'scratch operand']
  #allocation6 [shape = 'f32[64,32]{1,0:T(8,128)}', space=vmem, size = 0x8000, scoped, tag = 'scratch operand']
  %s0 = inlined_call_operand.vmem [shape: f32[128,4], index: 0, kind: input, shape index: {}]
  %s1 = inlined_call_operand.vmem [shape: f32[64,1], index: 1, kind: input, shape index: {}]
  %s2 = inlined_call_operand.hbm [shape: f32[4,16], index: 2, kind: input, shape index: {}]
  %s3 = inlined_call_operand.hbm [shape: f32[1,16], index: 3, kind: input, shape index: {}]
  %s4 = inlined_call_operand.hbm [shape: f32[16,128], index: 4, kind: input, shape index: {}]
  %s5 = inlined_call_operand.hbm [shape: f32[1,128], index: 5, kind: input, shape index: {}]
  %s6 = inlined_call_operand.hbm [shape: f32[32,128], index: 6, kind: input, shape index: {}]
  %s7 = inlined_call_operand.hbm [shape: f32[1,128], index: 7, kind: input, shape index: {}]
  %s8 = inlined_call_operand.hbm [shape: f32[32,128], index: 8, kind: input, shape index: {}]
  %s9 = inlined_call_operand.hbm [shape: f32[32,128], index: 9, kind: input, shape index: {}]
  %s10 = inlined_call_operand.hbm [shape: f32[1,128], index: 10, kind: input, shape index: {}]
  %s11 = inlined_call_operand.hbm [shape: f32[2,16,128], index: 11, kind: input, shape index: {}]
  %s12 = inlined_call_operand.vmem [shape: f32[2,32,128], index: 12, kind: input, shape index: {}]
  %s13 = inlined_call_operand.vmem [shape: f32[2,1,128], index: 13, kind: input, shape index: {}]
  %s14 = inlined_call_operand.vmem [shape: f32[2,64,128], index: 14, kind: input, shape index: {}]
  %s15 = inlined_call_operand.hbm [shape: f32[2,32,128], index: 15, kind: input, shape index: {}]
  %s16 = inlined_call_operand.hbm [shape: f32[2,1,128], index: 16, kind: input, shape index: {}]
  %s17 = inlined_call_operand.hbm [shape: f32[64,128], index: 17, kind: input, shape index: {}]
  %s18 = inlined_call_operand.vmem [shape: f32[1,128], index: 18, kind: input, shape index: {}]
  %s19 = inlined_call_operand.vmem [shape: f32[32,128], index: 19, kind: input, shape index: {}]
  %s20 = inlined_call_operand.vmem [shape: f32[1,128], index: 20, kind: input, shape index: {}]
  %s21 = inlined_call_operand.hbm [shape: f32[64,128], index: 21, kind: output, shape index: {0}]
  %s22 = inlined_call_operand.hbm [shape: f32[56,128], index: 22, kind: output, shape index: {1}]
  %23 = xla_tuple %s21, %s22
  %s24 = sld [smem:[#allocation0]]
  $region154: #{tpu_custom_call.1} parent=0
    _
  %s26 = ssub.s32 1, %s24
  %s27 = scalar_select 0, %s26, %s24
  $region1: #{tpu_custom_call.1} parent=0
    #allocation7 [shape = 'u8[2048]{0}', space=vmem, size = 0x800, scoped, tag = 'input window, operand 2, single buffered']
    #allocation8 [shape = 's32[1]{0}', space=sflag, size = 0x4, scoped, tag = 'scoped memory for tpu_custom_call.1']
    #allocation9 [shape = 's32[1]{0}', space=sflag, size = 0x4, scoped, tag = 'scoped memory for tpu_custom_call.1']
    #allocation10 [shape = 'u8[512]{0}', space=vmem, size = 0x400, scoped, tag = 'input window, operand 3, single buffered']
    #allocation11 [shape = 's32[1]{0}', space=sflag, size = 0x4, scoped, tag = 'scoped memory for tpu_custom_call.1']
    #allocation12 [shape = 'u8[8192]{0}', space=vmem, size = 0x2000, scoped, tag = 'input window, operand 4, single buffered']
    #allocation13 [shape = 'u8[512]{0}', space=vmem, size = 0x400, scoped, tag = 'input window, operand 5, single buffered']
    #allocation14 [shape = 's32[1]{0}', space=sflag, size = 0x4, scoped, tag = 'scoped memory for tpu_custom_call.1']
    #allocation15 [shape = 'u8[16384]{0}', space=vmem, size = 0x4000, scoped, tag = 'input window, operand 6, single buffered']
    #allocation16 [shape = 'u8[512]{0}', space=vmem, size = 0x400, scoped, tag = 'input window, operand 7, single buffered']
    #allocation17 [shape = 's32[1]{0}', space=sflag, size = 0x4, scoped, tag = 'scoped memory for tpu_custom_call.1']
    #allocation18 [shape = 'u8[16384]{0}', space=vmem, size = 0x4000, scoped, tag = 'input window, operand 8, single buffered']
    #allocation19 [shape = 'u8[16384]{0}', space=vmem, size = 0x4000, scoped, tag = 'input window, operand 9, single buffered']
    #allocation20 [shape = 's32[1]{0}', space=sflag, size = 0x4, scoped, tag = 'scoped memory for tpu_custom_call.1']
    #allocation21 [shape = 'u8[512]{0}', space=vmem, size = 0x400, scoped, tag = 'input window, operand 10, single buffered']
    #allocation22 [shape = 'u8[16384]{0}', space=vmem, size = 0x4000, scoped, tag = 'input window, operand 11, single buffered']
    #allocation23 [shape = 's32[1]{0}', space=sflag, size = 0x4, scoped, tag = 'scoped memory for tpu_custom_call.1']
    #allocation24 [shape = 'u8[32768]{0}', space=vmem, size = 0x8000, scoped, tag = 'input window, operand 15, single buffered']
    #allocation25 [shape = 'u8[1024]{0}', space=vmem, size = 0x400, scoped, tag = 'input window, operand 16, single buffered']
    #allocation26 [shape = 's32[1]{0}', space=sflag, size = 0x4, scoped, tag = 'scoped memory for tpu_custom_call.1']
    #allocation27 [shape = 'u8[32768]{0}', space=vmem, size = 0x8000, scoped, tag = 'input window, operand 17, single buffered']
    #allocation28 [shape = 'u8[32768]{0}', space=vmem, size = 0x8000, scoped, tag = 'output window, operand 0, single buffered']
    #allocation29 [shape = 'u8[28672]{0}', space=vmem, size = 0x7000, scoped, tag = 'output window, operand 1, single buffered']
    #allocation30 [shape = 's32[1]{0}', space=sflag, size = 0x4, scoped, tag = 'scoped memory for tpu_custom_call.1']
    %28 = vsyncpa [#allocation8], 0
    %29 = vsyncpa [#allocation11], 0
    %30 = vsyncpa [#allocation14], 0
    %31 = vsyncpa [#allocation17], 0
    %32 = vsyncpa [#allocation20], 0
    %33 = vsyncpa [#allocation23], 0
    %34 = vsyncpa [#allocation26], 0
    %35 = vsyncpa [#allocation9], 0
    %36 = vsyncpa [#allocation30], 0
    // Predicated region
    $region2: #{tpu_custom_call.1} parent=1 // pred_check
      _
    $region3: #{tpu_custom_call.1} parent=1 // pred_check_branch
      %38 = sbr.rel (0) target = $region5
    $region4: #{tpu_custom_call.1} parent=1 // pred_region
      _
    $region5: #{tpu_custom_call.1} parent=1 // pred_fallthru
      _
    // Predicated region
    $region6: #{tpu_custom_call.1} parent=1 // pred_check
      _
    $region7: #{tpu_custom_call.1} parent=1 // pred_check_branch
      %40 = sbr.rel (0) target = $region9
    $region8: #{tpu_custom_call.1} parent=1 // pred_region
      _
    $region9: #{tpu_custom_call.1} parent=1 // pred_fallthru
      _
    // Predicated region
    $region10: #{tpu_custom_call.1} parent=1 // pred_check
      _
    $region11: #{tpu_custom_call.1} parent=1 // pred_check_branch
      %42 = sbr.rel (0) target = $region13
    $region12: #{tpu_custom_call.1} parent=1 // pred_region
      %s44 = ssub.s32 64, 64
      %45 = vsyncadd [#allocation8], %s44
      %s47 = sshll.u32 [#allocation7], 4
      %s48 = int_to_ptr.vmem [resolvable:$true] %s47
      %50 = dma.hbm_to_vmem [thread:$0]  %s2, 64, %s48, [#allocation8]
    $region13: #{tpu_custom_call.1} parent=1 // pred_fallthru
      _
    // Predicated region
    $region14: #{tpu_custom_call.1} parent=1 // pred_check
      _
    $region15: #{tpu_custom_call.1} parent=1 // pred_check_branch
      %52 = sbr.rel (0) target = $region17
    $region16: #{tpu_custom_call.1} parent=1 // pred_region
      %s54 = ssub.s32 16, 16
      %55 = vsyncadd [#allocation11], %s54
      %s57 = sshll.u32 [#allocation10], 4
      %s58 = int_to_ptr.vmem [resolvable:$true] %s57
      %60 = dma.hbm_to_vmem [thread:$0]  %s3, 16, %s58, [#allocation11]
    $region17: #{tpu_custom_call.1} parent=1 // pred_fallthru
      _
    // Predicated region
    $region18: #{tpu_custom_call.1} parent=1 // pred_check
      _
    $region19: #{tpu_custom_call.1} parent=1 // pred_check_branch
      %62 = sbr.rel (0) target = $region21
    $region20: #{tpu_custom_call.1} parent=1 // pred_region
      %s64 = ssub.s32 256, 256
      %65 = vsyncadd [#allocation11], %s64
      %s66 = sshll.u32 [#allocation12], 4
      %s67 = int_to_ptr.vmem [resolvable:$true] %s66
      %72 = dma.hbm_to_vmem [thread:$0]  %s4, 256, %s67, [#allocation11], 128, 128, 8
    $region21: #{tpu_custom_call.1} parent=1 // pred_fallthru
      _
    // Predicated region
    $region22: #{tpu_custom_call.1} parent=1 // pred_check
      _
    $region23: #{tpu_custom_call.1} parent=1 // pred_check_branch
      %74 = sbr.rel (0) target = $region25
    $region24: #{tpu_custom_call.1} parent=1 // pred_region
      %s76 = ssub.s32 16, 16
      %77 = vsyncadd [#allocation14], %s76
      %s79 = sshll.u32 [#allocation13], 4
      %s80 = int_to_ptr.vmem [resolvable:$true] %s79
      %82 = dma.hbm_to_vmem [thread:$0]  %s5, 16, %s80, [#allocation14]
    $region25: #{tpu_custom_call.1} parent=1 // pred_fallthru
      _
    // Predicated region
    $region26: #{tpu_custom_call.1} parent=1 // pred_check
      _
    $region27: #{tpu_custom_call.1} parent=1 // pred_check_branch
      %84 = sbr.rel (0) target = $region29
    $region28: #{tpu_custom_call.1} parent=1 // pred_region
      %s86 = ssub.s32 512, 512
      %87 = vsyncadd [#allocation14], %s86
      %s88 = sshll.u32 [#allocation15], 4
      %s89 = int_to_ptr.vmem [resolvable:$true] %s88
      %94 = dma.hbm_to_vmem [thread:$0]  %s6, 512, %s89, [#allocation14], 128, 128, 8
    $region29: #{tpu_custom_call.1} parent=1 // pred_fallthru
      _
    // Predicated region
    $region30: #{tpu_custom_call.1} parent=1 // pred_check
      _
    $region31: #{tpu_custom_call.1} parent=1 // pred_check_branch
      %96 = sbr.rel (0) target = $region33
    $region32: #{tpu_custom_call.1} parent=1 // pred_region
      %s98 = ssub.s32 16, 16
      %99 = vsyncadd [#allocation17], %s98
      %s101 = sshll.u32 [#allocation16], 4
      %s102 = int_to_ptr.vmem [resolvable:$true] %s101
      %104 = dma.hbm_to_vmem [thread:$0]  %s7, 16, %s102, [#allocation17]
    $region33: #{tpu_custom_call.1} parent=1 // pred_fallthru
      _
    // Predicated region
    $region34: #{tpu_custom_call.1} parent=1 // pred_check
      _
    $region35: #{tpu_custom_call.1} parent=1 // pred_check_branch
      %106 = sbr.rel (0) target = $region37
    $region36: #{tpu_custom_call.1} parent=1 // pred_region
      %s108 = ssub.s32 512, 512
      %109 = vsyncadd [#allocation17], %s108
      %s110 = sshll.u32 [#allocation18], 4
      %s111 = int_to_ptr.vmem [resolvable:$true] %s110
      %116 = dma.hbm_to_vmem [thread:$0]  %s8, 512, %s111, [#allocation17], 128, 128, 8
    $region37: #{tpu_custom_call.1} parent=1 // pred_fallthru
      _
    // Predicated region
    $region38: #{tpu_custom_call.1} parent=1 // pred_check
      _
    $region39: #{tpu_custom_call.1} parent=1 // pred_check_branch
      %118 = sbr.rel (0) target = $region41
    $region40: #{tpu_custom_call.1} parent=1 // pred_region
      %s120 = ssub.s32 512, 512
      %121 = vsyncadd [#allocation20], %s120
      %s122 = sshll.u32 [#allocation19], 4
      %s123 = int_to_ptr.vmem [resolvable:$true] %s122
      %128 = dma.hbm_to_vmem [thread:$0]  %s9, 512, %s123, [#allocation20], 128, 128, 8
    $region41: #{tpu_custom_call.1} parent=1 // pred_fallthru
      _
    // Predicated region
    $region42: #{tpu_custom_call.1} parent=1 // pred_check
      _
    $region43: #{tpu_custom_call.1} parent=1 // pred_check_branch
      %130 = sbr.rel (0) target = $region45
    $region44: #{tpu_custom_call.1} parent=1 // pred_region
      %s132 = ssub.s32 16, 16
      %133 = vsyncadd [#allocation20], %s132
      %s135 = sshll.u32 [#allocation21], 4
      %s136 = int_to_ptr.vmem [resolvable:$true] %s135
      %138 = dma.hbm_to_vmem [thread:$0]  %s10, 16, %s136, [#allocation20]
    $region45: #{tpu_custom_call.1} parent=1 // pred_fallthru
      _
    // Predicated region
    $region46: #{tpu_custom_call.1} parent=1 // pred_check
      _
    $region47: #{tpu_custom_call.1} parent=1 // pred_check_branch
      %140 = sbr.rel (0) target = $region49
    $region48: #{tpu_custom_call.1} parent=1 // pred_region
      %s142 = ssub.s32 512, 512
      %143 = vsyncadd [#allocation23], %s142
      %s144 = sshll.u32 [#allocation22], 4
      %s145 = int_to_ptr.vmem [resolvable:$true] %s144
      %150 = dma.hbm_to_vmem [thread:$0]  %s11, 512, %s145, [#allocation23], 128, 128, 8
    $region49: #{tpu_custom_call.1} parent=1 // pred_fallthru
      _
    // Predicated region
    $region50: #{tpu_custom_call.1} parent=1 // pred_check
      _
    $region51: #{tpu_custom_call.1} parent=1 // pred_check_branch
      %152 = sbr.rel (0) target = $region53
    $region52: #{tpu_custom_call.1} parent=1 // pred_region
      _
    $region53: #{tpu_custom_call.1} parent=1 // pred_fallthru
      _
    // Predicated region
    $region54: #{tpu_custom_call.1} parent=1 // pred_check
      _
    $region55: #{tpu_custom_call.1} parent=1 // pred_check_branch
      %154 = sbr.rel (0) target = $region57
    $region56: #{tpu_custom_call.1} parent=1 // pred_region
      _
    $region57: #{tpu_custom_call.1} parent=1 // pred_fallthru
      _
    // Predicated region
    $region58: #{tpu_custom_call.1} parent=1 // pred_check
      _
    $region59: #{tpu_custom_call.1} parent=1 // pred_check_branch
      %156 = sbr.rel (0) target = $region61
    $region60: #{tpu_custom_call.1} parent=1 // pred_region
      _
    $region61: #{tpu_custom_call.1} parent=1 // pred_fallthru
      _
    // Predicated region
    $region62: #{tpu_custom_call.1} parent=1 // pred_check
      _
    $region63: #{tpu_custom_call.1} parent=1 // pred_check_branch
      %158 = sbr.rel (0) target = $region65
    $region64: #{tpu_custom_call.1} parent=1 // pred_region
      %s160 = ssub.s32 1024, 1024
      %161 = vsyncadd [#allocation23], %s160
      %s162 = sshll.u32 [#allocation24], 4
      %s163 = int_to_ptr.vmem [resolvable:$true] %s162
      %168 = dma.hbm_to_vmem [thread:$0]  %s15, 1024, %s163, [#allocation23], 128, 128, 8
    $region65: #{tpu_custom_call.1} parent=1 // pred_fallthru
      _
    // Predicated region
    $region66: #{tpu_custom_call.1} parent=1 // pred_check
      _
    $region67: #{tpu_custom_call.1} parent=1 // pred_check_branch
      %170 = sbr.rel (0) target = $region69
    $region68: #{tpu_custom_call.1} parent=1 // pred_region
      %s172 = ssub.s32 32, 32
      %173 = vsyncadd [#allocation26], %s172
      %s174 = sshll.u32 [#allocation25], 4
      %s175 = int_to_ptr.vmem [resolvable:$true] %s174
      %180 = dma.hbm_to_vmem [thread:$0]  %s16, 32, %s175, [#allocation26], 16, 16, 1
    $region69: #{tpu_custom_call.1} parent=1 // pred_fallthru
      _
    // Predicated region
    $region70: #{tpu_custom_call.1} parent=1 // pred_check
      _
    $region71: #{tpu_custom_call.1} parent=1 // pred_check_branch
      %182 = sbr.rel (0) target = $region73
    $region72: #{tpu_custom_call.1} parent=1 // pred_region
      %s184 = ssub.s32 1024, 1024
      %185 = vsyncadd [#allocation26], %s184
      %s186 = sshll.u32 [#allocation27], 4
      %s187 = int_to_ptr.vmem [resolvable:$true] %s186
      %192 = dma.hbm_to_vmem [thread:$0]  %s17, 1024, %s187, [#allocation26], 128, 128, 8
    $region73: #{tpu_custom_call.1} parent=1 // pred_fallthru
      _
    // Predicated region
    $region74: #{tpu_custom_call.1} parent=1 // pred_check
      _
    $region75: #{tpu_custom_call.1} parent=1 // pred_check_branch
      %194 = sbr.rel (0) target = $region77
    $region76: #{tpu_custom_call.1} parent=1 // pred_region
      _
    $region77: #{tpu_custom_call.1} parent=1 // pred_fallthru
      _
    // Predicated region
    $region78: #{tpu_custom_call.1} parent=1 // pred_check
      _
    $region79: #{tpu_custom_call.1} parent=1 // pred_check_branch
      %196 = sbr.rel (0) target = $region81
    $region80: #{tpu_custom_call.1} parent=1 // pred_region
      _
    $region81: #{tpu_custom_call.1} parent=1 // pred_fallthru
      _
    // Predicated region
    $region82: #{tpu_custom_call.1} parent=1 // pred_check
      _
    $region83: #{tpu_custom_call.1} parent=1 // pred_check_branch
      %198 = sbr.rel (0) target = $region85
    $region84: #{tpu_custom_call.1} parent=1 // pred_region
      _
    $region85: #{tpu_custom_call.1} parent=1 // pred_fallthru
      _
    // Predicated region
    $region86: #{tpu_custom_call.1} parent=1 // pred_check
      _
    $region87: #{tpu_custom_call.1} parent=1 // pred_check_branch
      %200 = sbr.rel (0) target = $region89
    $region88: #{tpu_custom_call.1} parent=1 // pred_region
      %201 = dma.done [#allocation8], 64
    $region89: #{tpu_custom_call.1} parent=1 // pred_fallthru
      _
    // Predicated region
    $region90: #{tpu_custom_call.1} parent=1 // pred_check
      _
    $region91: #{tpu_custom_call.1} parent=1 // pred_check_branch
      %203 = sbr.rel (0) target = $region93
    $region92: #{tpu_custom_call.1} parent=1 // pred_region
      %204 = dma.done [#allocation11], 16
    $region93: #{tpu_custom_call.1} parent=1 // pred_fallthru
      _
    // Predicated region
    $region94: #{tpu_custom_call.1} parent=1 // pred_check
      _
    $region95: #{tpu_custom_call.1} parent=1 // pred_check_branch
      %206 = sbr.rel (0) target = $region97
    $region96: #{tpu_custom_call.1} parent=1 // pred_region
      %207 = dma.done [#allocation11], 256
    $region97: #{tpu_custom_call.1} parent=1 // pred_fallthru
      _
    // Predicated region
    $region98: #{tpu_custom_call.1} parent=1 // pred_check
      _
    $region99: #{tpu_custom_call.1} parent=1 // pred_check_branch
      %209 = sbr.rel (0) target = $region101
    $region100: #{tpu_custom_call.1} parent=1 // pred_region
      %210 = dma.done [#allocation14], 16
    $region101: #{tpu_custom_call.1} parent=1 // pred_fallthru
      _
    // Predicated region
    $region102: #{tpu_custom_call.1} parent=1 // pred_check
      _
    $region103: #{tpu_custom_call.1} parent=1 // pred_check_branch
      %212 = sbr.rel (0) target = $region105
    $region104: #{tpu_custom_call.1} parent=1 // pred_region
      %213 = dma.done [#allocation14], 512
    $region105: #{tpu_custom_call.1} parent=1 // pred_fallthru
      _
    // Predicated region
    $region106: #{tpu_custom_call.1} parent=1 // pred_check
      _
    $region107: #{tpu_custom_call.1} parent=1 // pred_check_branch
      %215 = sbr.rel (0) target = $region109
    $region108: #{tpu_custom_call.1} parent=1 // pred_region
      %216 = dma.done [#allocation17], 16
    $region109: #{tpu_custom_call.1} parent=1 // pred_fallthru
      _
    // Predicated region
    $region110: #{tpu_custom_call.1} parent=1 // pred_check
      _
    $region111: #{tpu_custom_call.1} parent=1 // pred_check_branch
      %218 = sbr.rel (0) target = $region113
    $region112: #{tpu_custom_call.1} parent=1 // pred_region
      %219 = dma.done [#allocation17], 512
    $region113: #{tpu_custom_call.1} parent=1 // pred_fallthru
      _
    // Predicated region
    $region114: #{tpu_custom_call.1} parent=1 // pred_check
      _
    $region115: #{tpu_custom_call.1} parent=1 // pred_check_branch
      %221 = sbr.rel (0) target = $region117
    $region116: #{tpu_custom_call.1} parent=1 // pred_region
      %222 = dma.done [#allocation20], 512
    $region117: #{tpu_custom_call.1} parent=1 // pred_fallthru
      _
    // Predicated region
    $region118: #{tpu_custom_call.1} parent=1 // pred_check
      _
    $region119: #{tpu_custom_call.1} parent=1 // pred_check_branch
      %224 = sbr.rel (0) target = $region121
    $region120: #{tpu_custom_call.1} parent=1 // pred_region
      %225 = dma.done [#allocation20], 16
    $region121: #{tpu_custom_call.1} parent=1 // pred_fallthru
      _
    // Predicated region
    $region122: #{tpu_custom_call.1} parent=1 // pred_check
      _
    $region123: #{tpu_custom_call.1} parent=1 // pred_check_branch
      %227 = sbr.rel (0) target = $region125
    $region124: #{tpu_custom_call.1} parent=1 // pred_region
      %228 = dma.done [#allocation23], 512
    $region125: #{tpu_custom_call.1} parent=1 // pred_fallthru
      _
    // Predicated region
    $region126: #{tpu_custom_call.1} parent=1 // pred_check
      _
    $region127: #{tpu_custom_call.1} parent=1 // pred_check_branch
      %230 = sbr.rel (0) target = $region129
    $region128: #{tpu_custom_call.1} parent=1 // pred_region
      %231 = dma.done [#allocation23], 1024
    $region129: #{tpu_custom_call.1} parent=1 // pred_fallthru
      _
    // Predicated region
    $region130: #{tpu_custom_call.1} parent=1 // pred_check
      _
    $region131: #{tpu_custom_call.1} parent=1 // pred_check_branch
      %233 = sbr.rel (0) target = $region133
    $region132: #{tpu_custom_call.1} parent=1 // pred_region
      %234 = dma.done [#allocation26], 32
    $region133: #{tpu_custom_call.1} parent=1 // pred_fallthru
      _
    // Predicated region
    $region134: #{tpu_custom_call.1} parent=1 // pred_check
      _
    $region135: #{tpu_custom_call.1} parent=1 // pred_check_branch
      %236 = sbr.rel (0) target = $region137
    $region136: #{tpu_custom_call.1} parent=1 // pred_region
      %237 = dma.done [#allocation26], 1024
    $region137: #{tpu_custom_call.1} parent=1 // pred_fallthru
      _
    %v238 = vld [vmem:[%s0] sm:$0xff]
    %v239 = vld [vmem:[%s0 + $0x8] sm:$0xff]
    %v240 = vld [vmem:[%s0 + $0x10] sm:$0xff]
    %v241 = vld [vmem:[%s0 + $0x18] sm:$0xff]
    %v242 = vld [vmem:[%s0 + $0x20] sm:$0xff]
    %v243 = vld [vmem:[%s0 + $0x28] sm:$0xff]
    %v244 = vld [vmem:[%s0 + $0x30] sm:$0xff]
    %v245 = vld [vmem:[%s0 + $0x38] sm:$0xff]
    %v246 = vld [vmem:[%s0 + $0x40] sm:$0xff]
    %v247 = vld [vmem:[%s0 + $0x48] sm:$0xff]
    %v248 = vld [vmem:[%s0 + $0x50] sm:$0xff]
    %v249 = vld [vmem:[%s0 + $0x58] sm:$0xff]
    %v250 = vld [vmem:[%s0 + $0x60] sm:$0xff]
    %v251 = vld [vmem:[%s0 + $0x68] sm:$0xff]
    %v252 = vld [vmem:[%s0 + $0x70] sm:$0xff]
    %v253 = vld [vmem:[%s0 + $0x78] sm:$0xff]
    %v254 = vld [vmem:[#allocation7] sm:$0xf]
    %v255 = vld [vmem:[#allocation10] sm:$0x1]
    %v257 = vlaneseq
    %v258 = vshrl.u32 %v257, 7
    %v259 = vsub.s32 0, %v258
    %v260 = vrot.slane %v255, %v259
    %vm262 = vcmask 31744
    %v264 = vsel %vm262, %v238, 0
    %v267 = vsel %vm262, %v239, 0
    %v270 = vsel %vm262, %v240, 0
    %v273 = vsel %vm262, %v241, 0
    %v276 = vsel %vm262, %v242, 0
    %v279 = vsel %vm262, %v243, 0
    %v282 = vsel %vm262, %v244, 0
    %v285 = vsel %vm262, %v245, 0
    %v288 = vsel %vm262, %v246, 0
    %v291 = vsel %vm262, %v247, 0
    %v294 = vsel %vm262, %v248, 0
    %v297 = vsel %vm262, %v249, 0
    %v300 = vsel %vm262, %v250, 0
    %v303 = vsel %vm262, %v251, 0
    %v306 = vsel %vm262, %v252, 0
    %v309 = vsel %vm262, %v253, 0
    %vm311 = vcmask 1043456
    %v313 = vsel %vm311, %v254, 0
    %315 = vmatprep.subr.mxu0 0.0
    %316 = vmatpush1.msra.mxu0 0.0
    %317 = vmatprep.subr.mxu0 0.0
    %318 = vmatpush1.msra.mxu0 0.0
    %319 = vmatprep.subr.mxu0 0.0
    %320 = vmatpush1.msra.mxu0 0.0
    %321 = vmatprep.subr.mxu0 0.0
    %322 = vmatpush1.msra.mxu0 0.0
    %323 = vmatprep.subr.mxu0 0.0
    %324 = vmatpush1.msra.mxu0 0.0
    %325 = vmatprep.subr.mxu0 0.0
    %326 = vmatpush1.msra.mxu0 0.0
    %327 = vmatprep.subr.mxu0 0.0
    %328 = vmatpush1.msra.mxu0 0.0
    %329 = vmatprep.subr.mxu0 0.0
    %330 = vmatpush1.msra.mxu0 0.0
    %331 = vmatprep.subr.mxu0 0.0
    %332 = vmatpush1.msra.mxu0 0.0
    %333 = vmatprep.subr.mxu0 0.0
    %334 = vmatpush1.msra.mxu0 0.0
    %335 = vmatprep.subr.mxu0 0.0
    %336 = vmatpush1.msra.mxu0 0.0
    %337 = vmatprep.subr.mxu0 0.0
    %338 = vmatpush1.msra.mxu0 0.0
    %339 = vmatprep.subr.mxu0 0.0
    %340 = vmatpush1.msra.mxu0 0.0
    %341 = vmatprep.subr.mxu0 0.0
    %342 = vmatpush1.msra.mxu0 0.0
    %343 = vmatprep.subr.mxu0 0.0
    %344 = vmatpush1.msra.mxu0 0.0
    %345 = vmatprep.subr.mxu0 0.0
    %346 = vmatpush1.msra.mxu0 %v313
    %347 = vmatprep.subr.mxu0 0.0
    %348 = vmatpush2.msra.mxu0 0.0
    %349 = vmatprep.subr.mxu0 0.0
    %350 = vmatpush2.msra.mxu0 0.0
    %351 = vmatprep.subr.mxu0 0.0
    %352 = vmatpush2.msra.mxu0 0.0
    %353 = vmatprep.subr.mxu0 0.0
    %354 = vmatpush2.msra.mxu0 0.0
    %355 = vmatprep.subr.mxu0 0.0
    %356 = vmatpush2.msra.mxu0 0.0
    %357 = vmatprep.subr.mxu0 0.0
    %358 = vmatpush2.msra.mxu0 0.0
    %359 = vmatprep.subr.mxu0 0.0
    %360 = vmatpush2.msra.mxu0 0.0
    %361 = vmatprep.subr.mxu0 0.0
    %362 = vmatpush2.msra.mxu0 0.0
    %363 = vmatprep.subr.mxu0 0.0
    %364 = vmatpush2.msra.mxu0 0.0
    %365 = vmatprep.subr.mxu0 0.0
    %366 = vmatpush2.msra.mxu0 0.0
    %367 = vmatprep.subr.mxu0 0.0
    %368 = vmatpush2.msra.mxu0 0.0
    %369 = vmatprep.subr.mxu0 0.0
    %370 = vmatpush2.msra.mxu0 0.0
    %371 = vmatprep.subr.mxu0 0.0
    %372 = vmatpush2.msra.mxu0 0.0
    %373 = vmatprep.subr.mxu0 0.0
    %374 = vmatpush2.msra.mxu0 0.0
    %375 = vmatprep.subr.mxu0 0.0
    %376 = vmatpush2.msra.mxu0 0.0
    %377 = vmatprep.subr.mxu0 0.0
    %378 = vmatpush2.msra.mxu0 0.0
    %379 = vmatprep.mubr.f32.mxu0 0.0
    %380 = vmatmul.mubr.f32.gmra.mxu0 %v264
    %v381 = vpop.f32.mrf.mxu0
    %v382 = vadd.f32 %v260, %v381
    %v383 = vpop.f32.mrf.mxu0
    %384 = vmatprep.mubr.f32.mxu0 0.0
    %385 = vmatmul.mubr.f32.gmra.mxu0 %v267
    %v386 = vpop.f32.mrf.mxu0
    %v387 = vadd.f32 %v260, %v386
    %v388 = vpop.f32.mrf.mxu0
    %389 = vmatprep.mubr.f32.mxu0 0.0
    %390 = vmatmul.mubr.f32.gmra.mxu0 %v270
    %v391 = vpop.f32.mrf.mxu0
    %v392 = vadd.f32 %v260, %v391
    %v393 = vpop.f32.mrf.mxu0
    %394 = vmatprep.mubr.f32.mxu0 0.0
    %395 = vmatmul.mubr.f32.gmra.mxu0 %v273
    %v396 = vpop.f32.mrf.mxu0
    %v397 = vadd.f32 %v260, %v396
    %v398 = vpop.f32.mrf.mxu0
    %399 = vmatprep.mubr.f32.mxu0 0.0
    %400 = vmatmul.mubr.f32.gmra.mxu0 %v276
    %v401 = vpop.f32.mrf.mxu0
    %v402 = vadd.f32 %v260, %v401
    %v403 = vpop.f32.mrf.mxu0
    %404 = vmatprep.mubr.f32.mxu0 0.0
    %405 = vmatmul.mubr.f32.gmra.mxu0 %v279
    %v406 = vpop.f32.mrf.mxu0
    %v407 = vadd.f32 %v260, %v406
    %v408 = vpop.f32.mrf.mxu0
    %409 = vmatprep.mubr.f32.mxu0 0.0
    %410 = vmatmul.mubr.f32.gmra.mxu0 %v282
    %v411 = vpop.f32.mrf.mxu0
    %v412 = vadd.f32 %v260, %v411
    %v413 = vpop.f32.mrf.mxu0
    %414 = vmatprep.mubr.f32.mxu0 0.0
    %415 = vmatmul.mubr.f32.gmra.mxu0 %v285
    %v416 = vpop.f32.mrf.mxu0
    %v417 = vadd.f32 %v260, %v416
    %v418 = vpop.f32.mrf.mxu0
    %419 = vmatprep.mubr.f32.mxu0 0.0
    %420 = vmatmul.mubr.f32.gmra.mxu0 %v288
    %v421 = vpop.f32.mrf.mxu0
    %v422 = vadd.f32 %v260, %v421
    %v423 = vpop.f32.mrf.mxu0
    %424 = vmatprep.mubr.f32.mxu0 0.0
    %425 = vmatmul.mubr.f32.gmra.mxu0 %v291
    %v426 = vpop.f32.mrf.mxu0
    %v427 = vadd.f32 %v260, %v426
    %v428 = vpop.f32.mrf.mxu0
    %429 = vmatprep.mubr.f32.mxu0 0.0
    %430 = vmatmul.mubr.f32.gmra.mxu0 %v294
    %v431 = vpop.f32.mrf.mxu0
    %v432 = vadd.f32 %v260, %v431
    %v433 = vpop.f32.mrf.mxu0
    %434 = vmatprep.mubr.f32.mxu0 0.0
    %435 = vmatmul.mubr.f32.gmra.mxu0 %v297
    %v436 = vpop.f32.mrf.mxu0
    %v437 = vadd.f32 %v260, %v436
    %v438 = vpop.f32.mrf.mxu0
    %439 = vmatprep.mubr.f32.mxu0 0.0
    %440 = vmatmul.mubr.f32.gmra.mxu0 %v300
    %v441 = vpop.f32.mrf.mxu0
    %v442 = vadd.f32 %v260, %v441
    %v443 = vpop.f32.mrf.mxu0
    %444 = vmatprep.mubr.f32.mxu0 0.0
    %445 = vmatmul.mubr.f32.gmra.mxu0 %v303
    %v446 = vpop.f32.mrf.mxu0
    %v447 = vadd.f32 %v260, %v446
    %v448 = vpop.f32.mrf.mxu0
    %449 = vmatprep.mubr.f32.mxu0 0.0
    %450 = vmatmul.mubr.f32.gmra.mxu0 %v306
    %v451 = vpop.f32.mrf.mxu0
    %v452 = vadd.f32 %v260, %v451
    %v453 = vpop.f32.mrf.mxu0
    %454 = vmatprep.mubr.f32.mxu0 0.0
    %455 = vmatmul.mubr.f32.gmra.mxu0 %v309
    %v456 = vpop.f32.mrf.mxu0
    %v457 = vadd.f32 %v260, %v456
    %v458 = vpop.f32.mrf.mxu0
    %459 = vdwg.mxu0
    %v460 = vtanh.pop %v382
    %v461 = vtanh.pop %v387
    %v462 = vtanh.pop %v392
    %v463 = vtanh.pop %v397
    %v464 = vtanh.pop %v402
    %v465 = vtanh.pop %v407
    %v466 = vtanh.pop %v412
    %v467 = vtanh.pop %v417
    %v468 = vtanh.pop %v422
    %v469 = vtanh.pop %v427
    %v470 = vtanh.pop %v432
    %v471 = vtanh.pop %v437
    %v472 = vtanh.pop %v442
    %v473 = vtanh.pop %v447
    %v474 = vtanh.pop %v452
    %v475 = vtanh.pop %v457
    %v476 = vld [vmem:[#allocation12] sm:$0xff]
    %v477 = vld [vmem:[#allocation12 + $0x8] sm:$0xff]
    %v478 = vld [vmem:[%s1] sm:$0xff]
    %v479 = vld [vmem:[%s1 + $0x8] sm:$0xff]
    %v480 = vld [vmem:[%s1 + $0x10] sm:$0xff]
    %v481 = vld [vmem:[%s1 + $0x18] sm:$0xff]
    %v482 = vld [vmem:[%s1 + $0x20] sm:$0xff]
    %v483 = vld [vmem:[%s1 + $0x28] sm:$0xff]
    %v484 = vld [vmem:[%s1 + $0x30] sm:$0xff]
    %v485 = vld [vmem:[%s1 + $0x38] sm:$0xff]
    %v486 = vld [vmem:[#allocation13] sm:$0x1]
    %488 = vset.pattern.permute.xlu0 0
    %489 = vperm.xlu0 %488, %v478
    %v490 = vpop.permute.xlu0 %489
    %493 = vset.pattern.permute.xlu0 0
    %494 = vperm.xlu0 %493, %v479
    %v495 = vpop.permute.xlu0 %494
    %498 = vset.pattern.permute.xlu0 0
    %499 = vperm.xlu0 %498, %v480
    %v500 = vpop.permute.xlu0 %499
    %503 = vset.pattern.permute.xlu0 0
    %504 = vperm.xlu0 %503, %v481
    %v505 = vpop.permute.xlu0 %504
    %508 = vset.pattern.permute.xlu0 0
    %509 = vperm.xlu0 %508, %v482
    %v510 = vpop.permute.xlu0 %509
    %513 = vset.pattern.permute.xlu0 0
    %514 = vperm.xlu0 %513, %v483
    %v515 = vpop.permute.xlu0 %514
    %518 = vset.pattern.permute.xlu0 0
    %519 = vperm.xlu0 %518, %v484
    %v520 = vpop.permute.xlu0 %519
    %523 = vset.pattern.permute.xlu0 0
    %524 = vperm.xlu0 %523, %v485
    %v525 = vpop.permute.xlu0 %524
    %v528 = vlaneseq
    %v529 = vshrl.u32 %v528, 7
    %v530 = vsub.s32 0, %v529
    %v531 = vrot.slane %v486, %v530
    %v533 = vmul.f32 %v490, %v531
    %v534 = vmul.f32 %v495, %v531
    %v535 = vmul.f32 %v500, %v531
    %v536 = vmul.f32 %v505, %v531
    %v537 = vmul.f32 %v510, %v531
    %v538 = vmul.f32 %v515, %v531
    %v539 = vmul.f32 %v520, %v531
    %v540 = vmul.f32 %v525, %v531
    %vm541 = vcmask 130048
    %v543 = vsel %vm541, %v460, 0
    %v546 = vsel %vm541, %v461, 0
    %v549 = vsel %vm541, %v462, 0
    %v552 = vsel %vm541, %v463, 0
    %v555 = vsel %vm541, %v464, 0
    %v558 = vsel %vm541, %v465, 0
    %v561 = vsel %vm541, %v466, 0
    %v564 = vsel %vm541, %v467, 0
    %566 = vmatprep.subr.mxu0 0.0
    %567 = vmatpush1.msra.mxu0 0.0
    %568 = vmatprep.subr.mxu0 0.0
    %569 = vmatpush1.msra.mxu0 0.0
    %570 = vmatprep.subr.mxu0 0.0
    %571 = vmatpush1.msra.mxu0 0.0
    %572 = vmatprep.subr.mxu0 0.0
    %573 = vmatpush1.msra.mxu0 0.0
    %574 = vmatprep.subr.mxu0 0.0
    %575 = vmatpush1.msra.mxu0 0.0
    %576 = vmatprep.subr.mxu0 0.0
    %577 = vmatpush1.msra.mxu0 0.0
    %578 = vmatprep.subr.mxu0 0.0
    %579 = vmatpush1.msra.mxu0 0.0
    %580 = vmatprep.subr.mxu0 0.0
    %581 = vmatpush1.msra.mxu0 0.0
    %582 = vmatprep.subr.mxu0 0.0
    %583 = vmatpush1.msra.mxu0 0.0
    %584 = vmatprep.subr.mxu0 0.0
    %585 = vmatpush1.msra.mxu0 0.0
    %586 = vmatprep.subr.mxu0 0.0
    %587 = vmatpush1.msra.mxu0 0.0
    %588 = vmatprep.subr.mxu0 0.0
    %589 = vmatpush1.msra.mxu0 0.0
    %590 = vmatprep.subr.mxu0 0.0
    %591 = vmatpush1.msra.mxu0 0.0
    %592 = vmatprep.subr.mxu0 0.0
    %593 = vmatpush1.msra.mxu0 0.0
    %594 = vmatprep.subr.mxu0 0.0
    %595 = vmatpush1.msra.mxu0 %v477
    %596 = vmatprep.subr.mxu0 0.0
    %597 = vmatpush1.msra.mxu0 %v476
    %598 = vmatprep.subr.mxu0 0.0
    %599 = vmatpush2.msra.mxu0 0.0
    %600 = vmatprep.subr.mxu0 0.0
    %601 = vmatpush2.msra.mxu0 0.0
    %602 = vmatprep.subr.mxu0 0.0
    %603 = vmatpush2.msra.mxu0 0.0
    %604 = vmatprep.subr.mxu0 0.0
    %605 = vmatpush2.msra.mxu0 0.0
    %606 = vmatprep.subr.mxu0 0.0
    %607 = vmatpush2.msra.mxu0 0.0
    %608 = vmatprep.subr.mxu0 0.0
    %609 = vmatpush2.msra.mxu0 0.0
    %610 = vmatprep.subr.mxu0 0.0
    %611 = vmatpush2.msra.mxu0 0.0
    %612 = vmatprep.subr.mxu0 0.0
    %613 = vmatpush2.msra.mxu0 0.0
    %614 = vmatprep.subr.mxu0 0.0
    %615 = vmatpush2.msra.mxu0 0.0
    %616 = vmatprep.subr.mxu0 0.0
    %617 = vmatpush2.msra.mxu0 0.0
    %618 = vmatprep.subr.mxu0 0.0
    %619 = vmatpush2.msra.mxu0 0.0
    %620 = vmatprep.subr.mxu0 0.0
    %621 = vmatpush2.msra.mxu0 0.0
    %622 = vmatprep.subr.mxu0 0.0
    %623 = vmatpush2.msra.mxu0 0.0
    %624 = vmatprep.subr.mxu0 0.0
    %625 = vmatpush2.msra.mxu0 0.0
    %626 = vmatprep.subr.mxu0 0.0
    %627 = vmatpush2.msra.mxu0 0.0
    %628 = vmatprep.subr.mxu0 0.0
    %629 = vmatpush2.msra.mxu0 0.0
    %630 = vmatprep.mubr.f32.mxu0 0.0
    %631 = vmatmul.mubr.f32.gmra.mxu0 %v543
    %v632 = vpop.f32.mrf.mxu0
    %v633 = vadd.f32 %v533, %v632
    %v634 = vpop.f32.mrf.mxu0
    %635 = vmatprep.mubr.f32.mxu0 0.0
    %636 = vmatmul.mubr.f32.gmra.mxu0 %v546
    %v637 = vpop.f32.mrf.mxu0
    %v638 = vadd.f32 %v534, %v637
    %v639 = vpop.f32.mrf.mxu0
    %640 = vmatprep.mubr.f32.mxu0 0.0
    %641 = vmatmul.mubr.f32.gmra.mxu0 %v549
    %v642 = vpop.f32.mrf.mxu0
    %v643 = vadd.f32 %v535, %v642
    %v644 = vpop.f32.mrf.mxu0
    %645 = vmatprep.mubr.f32.mxu0 0.0
    %646 = vmatmul.mubr.f32.gmra.mxu0 %v552
    %v647 = vpop.f32.mrf.mxu0
    %v648 = vadd.f32 %v536, %v647
    %v649 = vpop.f32.mrf.mxu0
    %650 = vmatprep.mubr.f32.mxu0 0.0
    %651 = vmatmul.mubr.f32.gmra.mxu0 %v555
    %v652 = vpop.f32.mrf.mxu0
    %v653 = vadd.f32 %v537, %v652
    %v654 = vpop.f32.mrf.mxu0
    %655 = vmatprep.mubr.f32.mxu0 0.0
    %656 = vmatmul.mubr.f32.gmra.mxu0 %v558
    %v657 = vpop.f32.mrf.mxu0
    %v658 = vadd.f32 %v538, %v657
    %v659 = vpop.f32.mrf.mxu0
    %660 = vmatprep.mubr.f32.mxu0 0.0
    %661 = vmatmul.mubr.f32.gmra.mxu0 %v561
    %v662 = vpop.f32.mrf.mxu0
    %v663 = vadd.f32 %v539, %v662
    %v664 = vpop.f32.mrf.mxu0
    %665 = vmatprep.mubr.f32.mxu0 0.0
    %666 = vmatmul.mubr.f32.gmra.mxu0 %v564
    %v667 = vpop.f32.mrf.mxu0
    %v668 = vadd.f32 %v540, %v667
    %v669 = vpop.f32.mrf.mxu0
    %670 = vdwg.mxu0
    %v671 = vld [vmem:[#allocation16] sm:$0x1]
    %v673 = vlaneseq
    %v674 = vshrl.u32 %v673, 7
    %v675 = vsub.s32 0, %v674
    %v676 = vrot.slane %v671, %v675
    %v678 = vadd.f32 %v633, %v676
    %v679 = vadd.f32 %v638, %v676
    %v680 = vadd.f32 %v643, %v676
    %v681 = vadd.f32 %v648, %v676
    %v682 = vadd.f32 %v653, %v676
    %v683 = vadd.f32 %v658, %v676
    %v684 = vadd.f32 %v663, %v676
    %v685 = vadd.f32 %v668, %v676
    %v686 = vld [vmem:[#allocation15] sm:$0xff]
    %v687 = vld [vmem:[#allocation15 + $0x8] sm:$0xff]
    %v688 = vld [vmem:[#allocation15 + $0x10] sm:$0xff]
    %v689 = vld [vmem:[#allocation15 + $0x18] sm:$0xff]
    %v690 = vld [vmem:[#allocation18] sm:$0xff]
    %v691 = vld [vmem:[#allocation18 + $0x8] sm:$0xff]
    %v692 = vld [vmem:[#allocation18 + $0x10] sm:$0xff]
    %v693 = vld [vmem:[#allocation18 + $0x18] sm:$0xff]
    %v694 = vld [vmem:[#allocation19] sm:$0xff]
    %v695 = vld [vmem:[#allocation19 + $0x8] sm:$0xff]
    %v696 = vld [vmem:[#allocation19 + $0x10] sm:$0xff]
    %v697 = vld [vmem:[#allocation19 + $0x18] sm:$0xff]
    %v698 = vld [vmem:[#allocation21] sm:$0x1]
    %vm699 = vcmask 261120
    %v701 = vsel %vm699, 0.0, 0
    %703 = vmatprep.subr.mxu0 0.0
    %704 = vmatpush1.msra.mxu0 0.0
    %705 = vmatprep.subr.mxu0 0.0
    %706 = vmatpush1.msra.mxu0 0.0
    %707 = vmatprep.subr.mxu0 0.0
    %708 = vmatpush1.msra.mxu0 0.0
    %709 = vmatprep.subr.mxu0 0.0
    %710 = vmatpush1.msra.mxu0 0.0
    %711 = vmatprep.subr.mxu0 0.0
    %712 = vmatpush1.msra.mxu0 0.0
    %713 = vmatprep.subr.mxu0 0.0
    %714 = vmatpush1.msra.mxu0 0.0
    %715 = vmatprep.subr.mxu0 0.0
    %716 = vmatpush1.msra.mxu0 0.0
    %717 = vmatprep.subr.mxu0 0.0
    %718 = vmatpush1.msra.mxu0 0.0
    %719 = vmatprep.subr.mxu0 0.0
    %720 = vmatpush1.msra.mxu0 0.0
    %721 = vmatprep.subr.mxu0 0.0
    %722 = vmatpush1.msra.mxu0 0.0
    %723 = vmatprep.subr.mxu0 0.0
    %724 = vmatpush1.msra.mxu0 0.0
    %725 = vmatprep.subr.mxu0 0.0
    %726 = vmatpush1.msra.mxu0 0.0
    %727 = vmatprep.subr.mxu0 0.0
    %728 = vmatpush1.msra.mxu0 %v689
    %729 = vmatprep.subr.mxu0 0.0
    %730 = vmatpush1.msra.mxu0 %v688
    %731 = vmatprep.subr.mxu0 0.0
    %732 = vmatpush1.msra.mxu0 %v687
    %733 = vmatprep.subr.mxu0 0.0
    %734 = vmatpush1.msra.mxu0 %v686
    %735 = vmatprep.subr.mxu0 0.0
    %736 = vmatpush2.msra.mxu0 0.0
    %737 = vmatprep.subr.mxu0 0.0
    %738 = vmatpush2.msra.mxu0 0.0
    %739 = vmatprep.subr.mxu0 0.0
    %740 = vmatpush2.msra.mxu0 0.0
    %741 = vmatprep.subr.mxu0 0.0
    %742 = vmatpush2.msra.mxu0 0.0
    %743 = vmatprep.subr.mxu0 0.0
    %744 = vmatpush2.msra.mxu0 0.0
    %745 = vmatprep.subr.mxu0 0.0
    %746 = vmatpush2.msra.mxu0 0.0
    %747 = vmatprep.subr.mxu0 0.0
    %748 = vmatpush2.msra.mxu0 0.0
    %749 = vmatprep.subr.mxu0 0.0
    %750 = vmatpush2.msra.mxu0 0.0
    %751 = vmatprep.subr.mxu0 0.0
    %752 = vmatpush2.msra.mxu0 0.0
    %753 = vmatprep.subr.mxu0 0.0
    %754 = vmatpush2.msra.mxu0 0.0
    %755 = vmatprep.subr.mxu0 0.0
    %756 = vmatpush2.msra.mxu0 0.0
    %757 = vmatprep.subr.mxu0 0.0
    %758 = vmatpush2.msra.mxu0 0.0
    %759 = vmatprep.subr.mxu0 0.0
    %760 = vmatpush2.msra.mxu0 0.0
    %761 = vmatprep.subr.mxu0 0.0
    %762 = vmatpush2.msra.mxu0 0.0
    %763 = vmatprep.subr.mxu0 0.0
    %764 = vmatpush2.msra.mxu0 0.0
    %765 = vmatprep.subr.mxu0 0.0
    %766 = vmatpush2.msra.mxu0 0.0
    %767 = vmatprep.mubr.f32.mxu0 0.0
    %768 = vmatmul.mubr.f32.gmra.mxu0 %v701
    %v769 = vpop.f32.mrf.mxu0
    %v770 = vadd.f32 0.0, %v769
    %v771 = vpop.f32.mrf.mxu0
    %772 = vdwg.mxu0
    %v773 = vadd.f32 %v678, %v770
    %v774 = vxor.u32 %v773, 2147483648
    %v775 = vmul.f32 %v774, 1.442695
    %v776 = vpow.pop %v775
    %v777 = vadd.f32 %v776, 1.0
    %v778 = vrcp.pop %v777
    %v779 = vmul.f32 1.0, %v778
    %v780 = vtanh.pop %v773
    %v781 = vmul.f32 %v779, 0.0
    %783 = vrot.lane.b32.xlu0 %v780, 32
    %v784 = vpop.permute.xlu0 %783
    %v786 = vmul.f32 %v779, %v784
    %788 = vrot.lane.b32.xlu0 %v786, 32
    %v789 = vpop.permute.xlu0 %788
    %v791 = vadd.f32 %v781, %v789
    %v792 = vtanh.pop %v791
    %794 = vrot.lane.b32.xlu0 %v792, 32
    %v795 = vpop.permute.xlu0 %794
    %v797 = vmul.f32 %v779, %v795
    %798 = vmatprep.subr.mxu0 0.0
    %799 = vmatpush1.msra.mxu0 0.0
    %800 = vmatprep.subr.mxu0 0.0
    %801 = vmatpush1.msra.mxu0 0.0
    %802 = vmatprep.subr.mxu0 0.0
    %803 = vmatpush1.msra.mxu0 0.0
    %804 = vmatprep.subr.mxu0 0.0
    %805 = vmatpush1.msra.mxu0 0.0
    %806 = vmatprep.subr.mxu0 0.0
    %807 = vmatpush1.msra.mxu0 0.0
    %808 = vmatprep.subr.mxu0 0.0
    %809 = vmatpush1.msra.mxu0 0.0
    %810 = vmatprep.subr.mxu0 0.0
    %811 = vmatpush1.msra.mxu0 0.0
    %812 = vmatprep.subr.mxu0 0.0
    %813 = vmatpush1.msra.mxu0 0.0
    %814 = vmatprep.subr.mxu0 0.0
    %815 = vmatpush1.msra.mxu0 0.0
    %816 = vmatprep.subr.mxu0 0.0
    %817 = vmatpush1.msra.mxu0 0.0
    %818 = vmatprep.subr.mxu0 0.0
    %819 = vmatpush1.msra.mxu0 0.0
    %820 = vmatprep.subr.mxu0 0.0
    %821 = vmatpush1.msra.mxu0 0.0
    %822 = vmatprep.subr.mxu0 0.0
    %823 = vmatpush1.msra.mxu0 %v697
    %824 = vmatprep.subr.mxu0 0.0
    %825 = vmatpush1.msra.mxu0 %v696
    %826 = vmatprep.subr.mxu0 0.0
    %827 = vmatpush1.msra.mxu0 %v695
    %828 = vmatprep.subr.mxu0 0.0
    %829 = vmatpush1.msra.mxu0 %v694
    %830 = vmatprep.subr.mxu0 0.0
    %831 = vmatpush2.msra.mxu0 0.0
    %832 = vmatprep.subr.mxu0 0.0
    %833 = vmatpush2.msra.mxu0 0.0
    %834 = vmatprep.subr.mxu0 0.0
    %835 = vmatpush2.msra.mxu0 0.0
    %836 = vmatprep.subr.mxu0 0.0
    %837 = vmatpush2.msra.mxu0 0.0
    %838 = vmatprep.subr.mxu0 0.0
    %839 = vmatpush2.msra.mxu0 0.0
    %840 = vmatprep.subr.mxu0 0.0
    %841 = vmatpush2.msra.mxu0 0.0
    %842 = vmatprep.subr.mxu0 0.0
    %843 = vmatpush2.msra.mxu0 0.0
    %844 = vmatprep.subr.mxu0 0.0
    %845 = vmatpush2.msra.mxu0 0.0
    %846 = vmatprep.subr.mxu0 0.0
    %847 = vmatpush2.msra.mxu0 0.0
    %848 = vmatprep.subr.mxu0 0.0
    %849 = vmatpush2.msra.mxu0 0.0
    %850 = vmatprep.subr.mxu0 0.0
    %851 = vmatpush2.msra.mxu0 0.0
    %852 = vmatprep.subr.mxu0 0.0
    %853 = vmatpush2.msra.mxu0 0.0
    %854 = vmatprep.subr.mxu0 0.0
    %855 = vmatpush2.msra.mxu0 0.0
    %856 = vmatprep.subr.mxu0 0.0
    %857 = vmatpush2.msra.mxu0 0.0
    %858 = vmatprep.subr.mxu0 0.0
    %859 = vmatpush2.msra.mxu0 0.0
    %860 = vmatprep.subr.mxu0 0.0
    %861 = vmatpush2.msra.mxu0 0.0
    %862 = vmatprep.mubr.f32.mxu0 0.0
    %863 = vmatmul.mubr.f32.gmra.mxu0 %v701
    %v864 = vpop.f32.mrf.mxu0
    %v865 = vadd.f32 0.0, %v864
    %v866 = vpop.f32.mrf.mxu0
    %867 = vdwg.mxu0
    %869 = vrot.lane.b32.xlu0 %v797, 64
    %v870 = vpop.permute.xlu0 %869
    %v871 = vsel %vm699, %v870, 0
    %873 = vmatprep.subr.mxu0 0.0
    %874 = vmatpush1.msra.mxu0 0.0
    %875 = vmatprep.subr.mxu0 0.0
    %876 = vmatpush1.msra.mxu0 0.0
    %877 = vmatprep.subr.mxu0 0.0
    %878 = vmatpush1.msra.mxu0 0.0
    %879 = vmatprep.subr.mxu0 0.0
    %880 = vmatpush1.msra.mxu0 0.0
    %881 = vmatprep.subr.mxu0 0.0
    %882 = vmatpush1.msra.mxu0 0.0
    %883 = vmatprep.subr.mxu0 0.0
    %884 = vmatpush1.msra.mxu0 0.0
    %885 = vmatprep.subr.mxu0 0.0
    %886 = vmatpush1.msra.mxu0 0.0
    %887 = vmatprep.subr.mxu0 0.0
    %888 = vmatpush1.msra.mxu0 0.0
    %889 = vmatprep.subr.mxu0 0.0
    %890 = vmatpush1.msra.mxu0 0.0
    %891 = vmatprep.subr.mxu0 0.0
    %892 = vmatpush1.msra.mxu0 0.0
    %893 = vmatprep.subr.mxu0 0.0
    %894 = vmatpush1.msra.mxu0 0.0
    %895 = vmatprep.subr.mxu0 0.0
    %896 = vmatpush1.msra.mxu0 0.0
    %897 = vmatprep.subr.mxu0 0.0
    %898 = vmatpush1.msra.mxu0 %v693
    %899 = vmatprep.subr.mxu0 0.0
    %900 = vmatpush1.msra.mxu0 %v692
    %901 = vmatprep.subr.mxu0 0.0
    %902 = vmatpush1.msra.mxu0 %v691
    %903 = vmatprep.subr.mxu0 0.0
    %904 = vmatpush1.msra.mxu0 %v690
    %905 = vmatprep.subr.mxu0 0.0
    %906 = vmatpush2.msra.mxu0 0.0
    %907 = vmatprep.subr.mxu0 0.0
    %908 = vmatpush2.msra.mxu0 0.0
    %909 = vmatprep.subr.mxu0 0.0
    %910 = vmatpush2.msra.mxu0 0.0
    %911 = vmatprep.subr.mxu0 0.0
    %912 = vmatpush2.msra.mxu0 0.0
    %913 = vmatprep.subr.mxu0 0.0
    %914 = vmatpush2.msra.mxu0 0.0
    %915 = vmatprep.subr.mxu0 0.0
    %916 = vmatpush2.msra.mxu0 0.0
    %917 = vmatprep.subr.mxu0 0.0
    %918 = vmatpush2.msra.mxu0 0.0
    %919 = vmatprep.subr.mxu0 0.0
    %920 = vmatpush2.msra.mxu0 0.0
    %921 = vmatprep.subr.mxu0 0.0
    %922 = vmatpush2.msra.mxu0 0.0
    %923 = vmatprep.subr.mxu0 0.0
    %924 = vmatpush2.msra.mxu0 0.0
    %925 = vmatprep.subr.mxu0 0.0
    %926 = vmatpush2.msra.mxu0 0.0
    %927 = vmatprep.subr.mxu0 0.0
    %928 = vmatpush2.msra.mxu0 0.0
    %929 = vmatprep.subr.mxu0 0.0
    %930 = vmatpush2.msra.mxu0 0.0
    %931 = vmatprep.subr.mxu0 0.0
    %932 = vmatpush2.msra.mxu0 0.0
    %933 = vmatprep.subr.mxu0 0.0
    %934 = vmatpush2.msra.mxu0 0.0
    %935 = vmatprep.subr.mxu0 0.0
    %936 = vmatpush2.msra.mxu0 0.0
    %937 = vmatprep.mubr.f32.mxu0 0.0
    %938 = vmatmul.mubr.f32.gmra.mxu0 %v871
    %v939 = vpop.f32.mrf.mxu0
    %v940 = vadd.f32 %v865, %v939
    %v941 = vpop.f32.mrf.mxu0
    %942 = vdwg.mxu0
    %v944 = vlaneseq
    %v945 = vshrl.u32 %v944, 7
    %v946 = vsub.s32 0, %v945
    %v947 = vrot.slane %v698, %v946
    %v949 = vadd.f32 %v940, %v947
    %v950 = vxor.u32 %v949, 2147483648
    %v951 = vmul.f32 %v950, 1.442695
    %v952 = vpow.pop %v951
    %v953 = vadd.f32 %v952, 1.0
    %v954 = vrcp.pop %v953
    %v955 = vmul.f32 1.0, %v954
    %v956 = vtanh.pop %v949
    %v957 = vmul.f32 %v955, 0.0
    %959 = vrot.lane.b32.xlu0 %v956, 32
    %v960 = vpop.permute.xlu0 %959
    %v962 = vmul.f32 %v955, %v960
    %964 = vrot.lane.b32.xlu0 %v962, 32
    %v965 = vpop.permute.xlu0 %964
    %v967 = vadd.f32 %v957, %v965
    %v968 = vtanh.pop %v967
    %970 = vrot.lane.b32.xlu0 %v968, 32
    %v971 = vpop.permute.xlu0 %970
    %v973 = vmul.f32 %v955, %v971
    %975 = vrot.lane.b32.xlu0 %v973, 64
    %v976 = vpop.permute.xlu0 %975
    %978 = vst.msk [vmem:[#allocation2] sm:$0xff] %vm699, %v976
    %979 = vmatprep.subr.mxu0 0.0
    %980 = vmatpush1.msra.mxu0 0.0
    %981 = vmatprep.subr.mxu0 0.0
    %982 = vmatpush1.msra.mxu0 0.0
    %983 = vmatprep.subr.mxu0 0.0
    %984 = vmatpush1.msra.mxu0 0.0
    %985 = vmatprep.subr.mxu0 0.0
    %986 = vmatpush1.msra.mxu0 0.0
    %987 = vmatprep.subr.mxu0 0.0
    %988 = vmatpush1.msra.mxu0 0.0
    %989 = vmatprep.subr.mxu0 0.0
    %990 = vmatpush1.msra.mxu0 0.0
    %991 = vmatprep.subr.mxu0 0.0
    %992 = vmatpush1.msra.mxu0 0.0
    %993 = vmatprep.subr.mxu0 0.0
    %994 = vmatpush1.msra.mxu0 0.0
    %995 = vmatprep.subr.mxu0 0.0
    %996 = vmatpush1.msra.mxu0 0.0
    %997 = vmatprep.subr.mxu0 0.0
    %998 = vmatpush1.msra.mxu0 0.0
    %999 = vmatprep.subr.mxu0 0.0
    %1000 = vmatpush1.msra.mxu0 0.0
    %1001 = vmatprep.subr.mxu0 0.0
    %1002 = vmatpush1.msra.mxu0 0.0
    %1003 = vmatprep.subr.mxu0 0.0
    %1004 = vmatpush1.msra.mxu0 %v689
    %1005 = vmatprep.subr.mxu0 0.0
    %1006 = vmatpush1.msra.mxu0 %v688
    %1007 = vmatprep.subr.mxu0 0.0
    %1008 = vmatpush1.msra.mxu0 %v687
    %1009 = vmatprep.subr.mxu0 0.0
    %1010 = vmatpush1.msra.mxu0 %v686
    %1011 = vmatprep.subr.mxu0 0.0
    %1012 = vmatpush2.msra.mxu0 0.0
    %1013 = vmatprep.subr.mxu0 0.0
    %1014 = vmatpush2.msra.mxu0 0.0
    %1015 = vmatprep.subr.mxu0 0.0
    %1016 = vmatpush2.msra.mxu0 0.0
    %1017 = vmatprep.subr.mxu0 0.0
    %1018 = vmatpush2.msra.mxu0 0.0
    %1019 = vmatprep.subr.mxu0 0.0
    %1020 = vmatpush2.msra.mxu0 0.0
    %1021 = vmatprep.subr.mxu0 0.0
    %1022 = vmatpush2.msra.mxu0 0.0
    %1023 = vmatprep.subr.mxu0 0.0
    %1024 = vmatpush2.msra.mxu0 0.0
    %1025 = vmatprep.subr.mxu0 0.0
    %1026 = vmatpush2.msra.mxu0 0.0
    %1027 = vmatprep.subr.mxu0 0.0
    %1028 = vmatpush2.msra.mxu0 0.0
    %1029 = vmatprep.subr.mxu0 0.0
    %1030 = vmatpush2.msra.mxu0 0.0
    %1031 = vmatprep.subr.mxu0 0.0
    %1032 = vmatpush2.msra.mxu0 0.0
    %1033 = vmatprep.subr.mxu0 0.0
    %1034 = vmatpush2.msra.mxu0 0.0
    %1035 = vmatprep.subr.mxu0 0.0
    %1036 = vmatpush2.msra.mxu0 0.0
    %1037 = vmatprep.subr.mxu0 0.0
    %1038 = vmatpush2.msra.mxu0 0.0
    %1039 = vmatprep.subr.mxu0 0.0
    %1040 = vmatpush2.msra.mxu0 0.0
    %1041 = vmatprep.subr.mxu0 0.0
    %1042 = vmatpush2.msra.mxu0 0.0
    %1043 = vmatprep.mubr.f32.mxu0 0.0
    %1044 = vmatmul.mubr.f32.gmra.mxu0 %v871
    %v1045 = vpop.f32.mrf.mxu0
    %v1046 = vadd.f32 0.0, %v1045
    %v1047 = vpop.f32.mrf.mxu0
    %1048 = vdwg.mxu0
    %v1049 = vadd.f32 %v679, %v1046
    %v1050 = vxor.u32 %v1049, 2147483648
    %v1051 = vmul.f32 %v1050, 1.442695
    %v1052 = vpow.pop %v1051
    %v1053 = vadd.f32 %v1052, 1.0
    %v1054 = vrcp.pop %v1053
    %v1055 = vmul.f32 1.0, %v1054
    %v1056 = vtanh.pop %v1049
    %v1057 = vmul.f32 %v1055, %v791
    %1059 = vrot.lane.b32.xlu0 %v1056, 32
    %v1060 = vpop.permute.xlu0 %1059
    %v1062 = vmul.f32 %v1055, %v1060
    %1064 = vrot.lane.b32.xlu0 %v1062, 32
    %v1065 = vpop.permute.xlu0 %1064
    %v1067 = vadd.f32 %v1057, %v1065
    %v1068 = vtanh.pop %v1067
    %1070 = vrot.lane.b32.xlu0 %v1068, 32
    %v1071 = vpop.permute.xlu0 %1070
    %v1073 = vmul.f32 %v1055, %v1071
    %v1074 = vsel %vm699, %v976, 0
    %1076 = vmatprep.subr.mxu0 0.0
    %1077 = vmatpush1.msra.mxu0 0.0
    %1078 = vmatprep.subr.mxu0 0.0
    %1079 = vmatpush1.msra.mxu0 0.0
    %1080 = vmatprep.subr.mxu0 0.0
    %1081 = vmatpush1.msra.mxu0 0.0
    %1082 = vmatprep.subr.mxu0 0.0
    %1083 = vmatpush1.msra.mxu0 0.0
    %1084 = vmatprep.subr.mxu0 0.0
    %1085 = vmatpush1.msra.mxu0 0.0
    %1086 = vmatprep.subr.mxu0 0.0
    %1087 = vmatpush1.msra.mxu0 0.0
    %1088 = vmatprep.subr.mxu0 0.0
    %1089 = vmatpush1.msra.mxu0 0.0
    %1090 = vmatprep.subr.mxu0 0.0
    %1091 = vmatpush1.msra.mxu0 0.0
    %1092 = vmatprep.subr.mxu0 0.0
    %1093 = vmatpush1.msra.mxu0 0.0
    %1094 = vmatprep.subr.mxu0 0.0
    %1095 = vmatpush1.msra.mxu0 0.0
    %1096 = vmatprep.subr.mxu0 0.0
    %1097 = vmatpush1.msra.mxu0 0.0
    %1098 = vmatprep.subr.mxu0 0.0
    %1099 = vmatpush1.msra.mxu0 0.0
    %1100 = vmatprep.subr.mxu0 0.0
    %1101 = vmatpush1.msra.mxu0 %v697
    %1102 = vmatprep.subr.mxu0 0.0
    %1103 = vmatpush1.msra.mxu0 %v696
    %1104 = vmatprep.subr.mxu0 0.0
    %1105 = vmatpush1.msra.mxu0 %v695
    %1106 = vmatprep.subr.mxu0 0.0
    %1107 = vmatpush1.msra.mxu0 %v694
    %1108 = vmatprep.subr.mxu0 0.0
    %1109 = vmatpush2.msra.mxu0 0.0
    %1110 = vmatprep.subr.mxu0 0.0
    %1111 = vmatpush2.msra.mxu0 0.0
    %1112 = vmatprep.subr.mxu0 0.0
    %1113 = vmatpush2.msra.mxu0 0.0
    %1114 = vmatprep.subr.mxu0 0.0
    %1115 = vmatpush2.msra.mxu0 0.0
    %1116 = vmatprep.subr.mxu0 0.0
    %1117 = vmatpush2.msra.mxu0 0.0
    %1118 = vmatprep.subr.mxu0 0.0
    %1119 = vmatpush2.msra.mxu0 0.0
    %1120 = vmatprep.subr.mxu0 0.0
    %1121 = vmatpush2.msra.mxu0 0.0
    %1122 = vmatprep.subr.mxu0 0.0
    %1123 = vmatpush2.msra.mxu0 0.0
    %1124 = vmatprep.subr.mxu0 0.0
    %1125 = vmatpush2.msra.mxu0 0.0
    %1126 = vmatprep.subr.mxu0 0.0
    %1127 = vmatpush2.msra.mxu0 0.0
    %1128 = vmatprep.subr.mxu0 0.0
    %1129 = vmatpush2.msra.mxu0 0.0
    %1130 = vmatprep.subr.mxu0 0.0
    %1131 = vmatpush2.msra.mxu0 0.0
    %1132 = vmatprep.subr.mxu0 0.0
    %1133 = vmatpush2.msra.mxu0 0.0
    %1134 = vmatprep.subr.mxu0 0.0
    %1135 = vmatpush2.msra.mxu0 0.0
    %1136 = vmatprep.subr.mxu0 0.0
    %1137 = vmatpush2.msra.mxu0 0.0
    %1138 = vmatprep.subr.mxu0 0.0
    %1139 = vmatpush2.msra.mxu0 0.0
    %1140 = vmatprep.mubr.f32.mxu0 0.0
    %1141 = vmatmul.mubr.f32.gmra.mxu0 %v1074
    %v1142 = vpop.f32.mrf.mxu0
    %v1143 = vadd.f32 0.0, %v1142
    %v1144 = vpop.f32.mrf.mxu0
    %1145 = vdwg.mxu0
    %1147 = vrot.lane.b32.xlu0 %v1073, 64
    %v1148 = vpop.permute.xlu0 %1147
    %v1149 = vsel %vm699, %v1148, 0
    %1151 = vmatprep.subr.mxu0 0.0
    %1152 = vmatpush1.msra.mxu0 0.0
    %1153 = vmatprep.subr.mxu0 0.0
    %1154 = vmatpush1.msra.mxu0 0.0
    %1155 = vmatprep.subr.mxu0 0.0
    %1156 = vmatpush1.msra.mxu0 0.0
    %1157 = vmatprep.subr.mxu0 0.0
    %1158 = vmatpush1.msra.mxu0 0.0
    %1159 = vmatprep.subr.mxu0 0.0
    %1160 = vmatpush1.msra.mxu0 0.0
    %1161 = vmatprep.subr.mxu0 0.0
    %1162 = vmatpush1.msra.mxu0 0.0
    %1163 = vmatprep.subr.mxu0 0.0
    %1164 = vmatpush1.msra.mxu0 0.0
    %1165 = vmatprep.subr.mxu0 0.0
    %1166 = vmatpush1.msra.mxu0 0.0
    %1167 = vmatprep.subr.mxu0 0.0
    %1168 = vmatpush1.msra.mxu0 0.0
    %1169 = vmatprep.subr.mxu0 0.0
    %1170 = vmatpush1.msra.mxu0 0.0
    %1171 = vmatprep.subr.mxu0 0.0
    %1172 = vmatpush1.msra.mxu0 0.0
    %1173 = vmatprep.subr.mxu0 0.0
    %1174 = vmatpush1.msra.mxu0 0.0
    %1175 = vmatprep.subr.mxu0 0.0
    %1176 = vmatpush1.msra.mxu0 %v693
    %1177 = vmatprep.subr.mxu0 0.0
    %1178 = vmatpush1.msra.mxu0 %v692
    %1179 = vmatprep.subr.mxu0 0.0
    %1180 = vmatpush1.msra.mxu0 %v691
    %1181 = vmatprep.subr.mxu0 0.0
    %1182 = vmatpush1.msra.mxu0 %v690
    %1183 = vmatprep.subr.mxu0 0.0
    %1184 = vmatpush2.msra.mxu0 0.0
    %1185 = vmatprep.subr.mxu0 0.0
    %1186 = vmatpush2.msra.mxu0 0.0
    %1187 = vmatprep.subr.mxu0 0.0
    %1188 = vmatpush2.msra.mxu0 0.0
    %1189 = vmatprep.subr.mxu0 0.0
    %1190 = vmatpush2.msra.mxu0 0.0
    %1191 = vmatprep.subr.mxu0 0.0
    %1192 = vmatpush2.msra.mxu0 0.0
    %1193 = vmatprep.subr.mxu0 0.0
    %1194 = vmatpush2.msra.mxu0 0.0
    %1195 = vmatprep.subr.mxu0 0.0
    %1196 = vmatpush2.msra.mxu0 0.0
    %1197 = vmatprep.subr.mxu0 0.0
    %1198 = vmatpush2.msra.mxu0 0.0
    %1199 = vmatprep.subr.mxu0 0.0
    %1200 = vmatpush2.msra.mxu0 0.0
    %1201 = vmatprep.subr.mxu0 0.0
    %1202 = vmatpush2.msra.mxu0 0.0
    %1203 = vmatprep.subr.mxu0 0.0
    %1204 = vmatpush2.msra.mxu0 0.0
    %1205 = vmatprep.subr.mxu0 0.0
    %1206 = vmatpush2.msra.mxu0 0.0
    %1207 = vmatprep.subr.mxu0 0.0
    %1208 = vmatpush2.msra.mxu0 0.0
    %1209 = vmatprep.subr.mxu0 0.0
    %1210 = vmatpush2.msra.mxu0 0.0
    %1211 = vmatprep.subr.mxu0 0.0
    %1212 = vmatpush2.msra.mxu0 0.0
    %1213 = vmatprep.subr.mxu0 0.0
    %1214 = vmatpush2.msra.mxu0 0.0
    %1215 = vmatprep.mubr.f32.mxu0 0.0
    %1216 = vmatmul.mubr.f32.gmra.mxu0 %v1149
    %v1217 = vpop.f32.mrf.mxu0
    %v1218 = vadd.f32 %v1143, %v1217
    %v1219 = vpop.f32.mrf.mxu0
    %1220 = vdwg.mxu0
    %v1221 = vadd.f32 %v1218, %v947
    %v1222 = vxor.u32 %v1221, 2147483648
    %v1223 = vmul.f32 %v1222, 1.442695
    %v1224 = vpow.pop %v1223
    %v1225 = vadd.f32 %v1224, 1.0
    %v1226 = vrcp.pop %v1225
    %v1227 = vmul.f32 1.0, %v1226
    %v1228 = vtanh.pop %v1221
    %v1229 = vmul.f32 %v1227, %v967
    %1231 = vrot.lane.b32.xlu0 %v1228, 32
    %v1232 = vpop.permute.xlu0 %1231
    %v1234 = vmul.f32 %v1227, %v1232
    %1236 = vrot.lane.b32.xlu0 %v1234, 32
    %v1237 = vpop.permute.xlu0 %1236
    %v1239 = vadd.f32 %v1229, %v1237
    %v1240 = vtanh.pop %v1239
    %1242 = vrot.lane.b32.xlu0 %v1240, 32
    %v1243 = vpop.permute.xlu0 %1242
    %v1245 = vmul.f32 %v1227, %v1243
    %1247 = vrot.lane.b32.xlu0 %v1245, 64
    %v1248 = vpop.permute.xlu0 %1247
    %1250 = vst.msk [vmem:[#allocation2 + $0x8] sm:$0xff] %vm699, %v1248
    %1251 = vmatprep.subr.mxu0 0.0
    %1252 = vmatpush1.msra.mxu0 0.0
    %1253 = vmatprep.subr.mxu0 0.0
    %1254 = vmatpush1.msra.mxu0 0.0
    %1255 = vmatprep.subr.mxu0 0.0
    %1256 = vmatpush1.msra.mxu0 0.0
    %1257 = vmatprep.subr.mxu0 0.0
    %1258 = vmatpush1.msra.mxu0 0.0
    %1259 = vmatprep.subr.mxu0 0.0
    %1260 = vmatpush1.msra.mxu0 0.0
    %1261 = vmatprep.subr.mxu0 0.0
    %1262 = vmatpush1.msra.mxu0 0.0
    %1263 = vmatprep.subr.mxu0 0.0
    %1264 = vmatpush1.msra.mxu0 0.0
    %1265 = vmatprep.subr.mxu0 0.0
    %1266 = vmatpush1.msra.mxu0 0.0
    %1267 = vmatprep.subr.mxu0 0.0
    %1268 = vmatpush1.msra.mxu0 0.0
    %1269 = vmatprep.subr.mxu0 0.0
    %1270 = vmatpush1.msra.mxu0 0.0
    %1271 = vmatprep.subr.mxu0 0.0
    %1272 = vmatpush1.msra.mxu0 0.0
    %1273 = vmatprep.subr.mxu0 0.0
    %1274 = vmatpush1.msra.mxu0 0.0
    %1275 = vmatprep.subr.mxu0 0.0
    %1276 = vmatpush1.msra.mxu0 %v689
    %1277 = vmatprep.subr.mxu0 0.0
    %1278 = vmatpush1.msra.mxu0 %v688
    %1279 = vmatprep.subr.mxu0 0.0
    %1280 = vmatpush1.msra.mxu0 %v687
    %1281 = vmatprep.subr.mxu0 0.0
    %1282 = vmatpush1.msra.mxu0 %v686
    %1283 = vmatprep.subr.mxu0 0.0
    %1284 = vmatpush2.msra.mxu0 0.0
    %1285 = vmatprep.subr.mxu0 0.0
    %1286 = vmatpush2.msra.mxu0 0.0
    %1287 = vmatprep.subr.mxu0 0.0
    %1288 = vmatpush2.msra.mxu0 0.0
    %1289 = vmatprep.subr.mxu0 0.0
    %1290 = vmatpush2.msra.mxu0 0.0
    %1291 = vmatprep.subr.mxu0 0.0
    %1292 = vmatpush2.msra.mxu0 0.0
    %1293 = vmatprep.subr.mxu0 0.0
    %1294 = vmatpush2.msra.mxu0 0.0
    %1295 = vmatprep.subr.mxu0 0.0
    %1296 = vmatpush2.msra.mxu0 0.0
    %1297 = vmatprep.subr.mxu0 0.0
    %1298 = vmatpush2.msra.mxu0 0.0
    %1299 = vmatprep.subr.mxu0 0.0
    %1300 = vmatpush2.msra.mxu0 0.0
    %1301 = vmatprep.subr.mxu0 0.0
    %1302 = vmatpush2.msra.mxu0 0.0
    %1303 = vmatprep.subr.mxu0 0.0
    %1304 = vmatpush2.msra.mxu0 0.0
    %1305 = vmatprep.subr.mxu0 0.0
    %1306 = vmatpush2.msra.mxu0 0.0
    %1307 = vmatprep.subr.mxu0 0.0
    %1308 = vmatpush2.msra.mxu0 0.0
    %1309 = vmatprep.subr.mxu0 0.0
    %1310 = vmatpush2.msra.mxu0 0.0
    %1311 = vmatprep.subr.mxu0 0.0
    %1312 = vmatpush2.msra.mxu0 0.0
    %1313 = vmatprep.subr.mxu0 0.0
    %1314 = vmatpush2.msra.mxu0 0.0
    %1315 = vmatprep.mubr.f32.mxu0 0.0
    %1316 = vmatmul.mubr.f32.gmra.mxu0 %v1149
    %v1317 = vpop.f32.mrf.mxu0
    %v1318 = vadd.f32 0.0, %v1317
    %v1319 = vpop.f32.mrf.mxu0
    %1320 = vdwg.mxu0
    %v1321 = vadd.f32 %v680, %v1318
    %v1322 = vxor.u32 %v1321, 2147483648
    %v1323 = vmul.f32 %v1322, 1.442695
    %v1324 = vpow.pop %v1323
    %v1325 = vadd.f32 %v1324, 1.0
    %v1326 = vrcp.pop %v1325
    %v1327 = vmul.f32 1.0, %v1326
    %v1328 = vtanh.pop %v1321
    %v1329 = vmul.f32 %v1327, %v1067
    %1331 = vrot.lane.b32.xlu0 %v1328, 32
    %v1332 = vpop.permute.xlu0 %1331
    %v1334 = vmul.f32 %v1327, %v1332
    %1336 = vrot.lane.b32.xlu0 %v1334, 32
    %v1337 = vpop.permute.xlu0 %1336
    %v1339 = vadd.f32 %v1329, %v1337
    %v1340 = vtanh.pop %v1339
    %1342 = vrot.lane.b32.xlu0 %v1340, 32
    %v1343 = vpop.permute.xlu0 %1342
    %v1345 = vmul.f32 %v1327, %v1343
    %v1346 = vsel %vm699, %v1248, 0
    %1348 = vmatprep.subr.mxu0 0.0
    %1349 = vmatpush1.msra.mxu0 0.0
    %1350 = vmatprep.subr.mxu0 0.0
    %1351 = vmatpush1.msra.mxu0 0.0
    %1352 = vmatprep.subr.mxu0 0.0
    %1353 = vmatpush1.msra.mxu0 0.0
    %1354 = vmatprep.subr.mxu0 0.0
    %1355 = vmatpush1.msra.mxu0 0.0
    %1356 = vmatprep.subr.mxu0 0.0
    %1357 = vmatpush1.msra.mxu0 0.0
    %1358 = vmatprep.subr.mxu0 0.0
    %1359 = vmatpush1.msra.mxu0 0.0
    %1360 = vmatprep.subr.mxu0 0.0
    %1361 = vmatpush1.msra.mxu0 0.0
    %1362 = vmatprep.subr.mxu0 0.0
    %1363 = vmatpush1.msra.mxu0 0.0
    %1364 = vmatprep.subr.mxu0 0.0
    %1365 = vmatpush1.msra.mxu0 0.0
    %1366 = vmatprep.subr.mxu0 0.0
    %1367 = vmatpush1.msra.mxu0 0.0
    %1368 = vmatprep.subr.mxu0 0.0
    %1369 = vmatpush1.msra.mxu0 0.0
    %1370 = vmatprep.subr.mxu0 0.0
    %1371 = vmatpush1.msra.mxu0 0.0
    %1372 = vmatprep.subr.mxu0 0.0
    %1373 = vmatpush1.msra.mxu0 %v697
    %1374 = vmatprep.subr.mxu0 0.0
    %1375 = vmatpush1.msra.mxu0 %v696
    %1376 = vmatprep.subr.mxu0 0.0
    %1377 = vmatpush1.msra.mxu0 %v695
    %1378 = vmatprep.subr.mxu0 0.0
    %1379 = vmatpush1.msra.mxu0 %v694
    %1380 = vmatprep.subr.mxu0 0.0
    %1381 = vmatpush2.msra.mxu0 0.0
    %1382 = vmatprep.subr.mxu0 0.0
    %1383 = vmatpush2.msra.mxu0 0.0
    %1384 = vmatprep.subr.mxu0 0.0
    %1385 = vmatpush2.msra.mxu0 0.0
    %1386 = vmatprep.subr.mxu0 0.0
    %1387 = vmatpush2.msra.mxu0 0.0
    %1388 = vmatprep.subr.mxu0 0.0
    %1389 = vmatpush2.msra.mxu0 0.0
    %1390 = vmatprep.subr.mxu0 0.0
    %1391 = vmatpush2.msra.mxu0 0.0
    %1392 = vmatprep.subr.mxu0 0.0
    %1393 = vmatpush2.msra.mxu0 0.0
    %1394 = vmatprep.subr.mxu0 0.0
    %1395 = vmatpush2.msra.mxu0 0.0
    %1396 = vmatprep.subr.mxu0 0.0
    %1397 = vmatpush2.msra.mxu0 0.0
    %1398 = vmatprep.subr.mxu0 0.0
    %1399 = vmatpush2.msra.mxu0 0.0
    %1400 = vmatprep.subr.mxu0 0.0
    %1401 = vmatpush2.msra.mxu0 0.0
    %1402 = vmatprep.subr.mxu0 0.0
    %1403 = vmatpush2.msra.mxu0 0.0
    %1404 = vmatprep.subr.mxu0 0.0
    %1405 = vmatpush2.msra.mxu0 0.0
    %1406 = vmatprep.subr.mxu0 0.0
    %1407 = vmatpush2.msra.mxu0 0.0
    %1408 = vmatprep.subr.mxu0 0.0
    %1409 = vmatpush2.msra.mxu0 0.0
    %1410 = vmatprep.subr.mxu0 0.0
    %1411 = vmatpush2.msra.mxu0 0.0
    %1412 = vmatprep.mubr.f32.mxu0 0.0
    %1413 = vmatmul.mubr.f32.gmra.mxu0 %v1346
    %v1414 = vpop.f32.mrf.mxu0
    %v1415 = vadd.f32 0.0, %v1414
    %v1416 = vpop.f32.mrf.mxu0
    %1417 = vdwg.mxu0
    %1419 = vrot.lane.b32.xlu0 %v1345, 64
    %v1420 = vpop.permute.xlu0 %1419
    %v1421 = vsel %vm699, %v1420, 0
    %1423 = vmatprep.subr.mxu0 0.0
    %1424 = vmatpush1.msra.mxu0 0.0
    %1425 = vmatprep.subr.mxu0 0.0
    %1426 = vmatpush1.msra.mxu0 0.0
    %1427 = vmatprep.subr.mxu0 0.0
    %1428 = vmatpush1.msra.mxu0 0.0
    %1429 = vmatprep.subr.mxu0 0.0
    %1430 = vmatpush1.msra.mxu0 0.0
    %1431 = vmatprep.subr.mxu0 0.0
    %1432 = vmatpush1.msra.mxu0 0.0
    %1433 = vmatprep.subr.mxu0 0.0
    %1434 = vmatpush1.msra.mxu0 0.0
    %1435 = vmatprep.subr.mxu0 0.0
    %1436 = vmatpush1.msra.mxu0 0.0
    %1437 = vmatprep.subr.mxu0 0.0
    %1438 = vmatpush1.msra.mxu0 0.0
    %1439 = vmatprep.subr.mxu0 0.0
    %1440 = vmatpush1.msra.mxu0 0.0
    %1441 = vmatprep.subr.mxu0 0.0
    %1442 = vmatpush1.msra.mxu0 0.0
    %1443 = vmatprep.subr.mxu0 0.0
    %1444 = vmatpush1.msra.mxu0 0.0
    %1445 = vmatprep.subr.mxu0 0.0
    %1446 = vmatpush1.msra.mxu0 0.0
    %1447 = vmatprep.subr.mxu0 0.0
    %1448 = vmatpush1.msra.mxu0 %v693
    %1449 = vmatprep.subr.mxu0 0.0
    %1450 = vmatpush1.msra.mxu0 %v692
    %1451 = vmatprep.subr.mxu0 0.0
    %1452 = vmatpush1.msra.mxu0 %v691
    %1453 = vmatprep.subr.mxu0 0.0
    %1454 = vmatpush1.msra.mxu0 %v690
    %1455 = vmatprep.subr.mxu0 0.0
    %1456 = vmatpush2.msra.mxu0 0.0
    %1457 = vmatprep.subr.mxu0 0.0
    %1458 = vmatpush2.msra.mxu0 0.0
    %1459 = vmatprep.subr.mxu0 0.0
    %1460 = vmatpush2.msra.mxu0 0.0
    %1461 = vmatprep.subr.mxu0 0.0
    %1462 = vmatpush2.msra.mxu0 0.0
    %1463 = vmatprep.subr.mxu0 0.0
    %1464 = vmatpush2.msra.mxu0 0.0
    %1465 = vmatprep.subr.mxu0 0.0
    %1466 = vmatpush2.msra.mxu0 0.0
    %1467 = vmatprep.subr.mxu0 0.0
    %1468 = vmatpush2.msra.mxu0 0.0
    %1469 = vmatprep.subr.mxu0 0.0
    %1470 = vmatpush2.msra.mxu0 0.0
    %1471 = vmatprep.subr.mxu0 0.0
    %1472 = vmatpush2.msra.mxu0 0.0
    %1473 = vmatprep.subr.mxu0 0.0
    %1474 = vmatpush2.msra.mxu0 0.0
    %1475 = vmatprep.subr.mxu0 0.0
    %1476 = vmatpush2.msra.mxu0 0.0
    %1477 = vmatprep.subr.mxu0 0.0
    %1478 = vmatpush2.msra.mxu0 0.0
    %1479 = vmatprep.subr.mxu0 0.0
    %1480 = vmatpush2.msra.mxu0 0.0
    %1481 = vmatprep.subr.mxu0 0.0
    %1482 = vmatpush2.msra.mxu0 0.0
    %1483 = vmatprep.subr.mxu0 0.0
    %1484 = vmatpush2.msra.mxu0 0.0
    %1485 = vmatprep.subr.mxu0 0.0
    %1486 = vmatpush2.msra.mxu0 0.0
    %1487 = vmatprep.mubr.f32.mxu0 0.0
    %1488 = vmatmul.mubr.f32.gmra.mxu0 %v1421
    %v1489 = vpop.f32.mrf.mxu0
    %v1490 = vadd.f32 %v1415, %v1489
    %v1491 = vpop.f32.mrf.mxu0
    %1492 = vdwg.mxu0
    %v1493 = vadd.f32 %v1490, %v947
    %v1494 = vxor.u32 %v1493, 2147483648
    %v1495 = vmul.f32 %v1494, 1.442695
    %v1496 = vpow.pop %v1495
    %v1497 = vadd.f32 %v1496, 1.0
    %v1498 = vrcp.pop %v1497
    %v1499 = vmul.f32 1.0, %v1498
    %v1500 = vtanh.pop %v1493
    %v1501 = vmul.f32 %v1499, %v1239
    %1503 = vrot.lane.b32.xlu0 %v1500, 32
    %v1504 = vpop.permute.xlu0 %1503
    %v1506 = vmul.f32 %v1499, %v1504
    %1508 = vrot.lane.b32.xlu0 %v1506, 32
    %v1509 = vpop.permute.xlu0 %1508
    %v1511 = vadd.f32 %v1501, %v1509
    %v1512 = vtanh.pop %v1511
    %1514 = vrot.lane.b32.xlu0 %v1512, 32
    %v1515 = vpop.permute.xlu0 %1514
    %v1517 = vmul.f32 %v1499, %v1515
    %1519 = vrot.lane.b32.xlu0 %v1517, 64
    %v1520 = vpop.permute.xlu0 %1519
    %1522 = vst.msk [vmem:[#allocation2 + $0x10] sm:$0xff] %vm699, %v1520
    %1523 = vmatprep.subr.mxu0 0.0
    %1524 = vmatpush1.msra.mxu0 0.0
    %1525 = vmatprep.subr.mxu0 0.0
    %1526 = vmatpush1.msra.mxu0 0.0
    %1527 = vmatprep.subr.mxu0 0.0
    %1528 = vmatpush1.msra.mxu0 0.0
    %1529 = vmatprep.subr.mxu0 0.0
    %1530 = vmatpush1.msra.mxu0 0.0
    %1531 = vmatprep.subr.mxu0 0.0
    %1532 = vmatpush1.msra.mxu0 0.0
    %1533 = vmatprep.subr.mxu0 0.0
    %1534 = vmatpush1.msra.mxu0 0.0
    %1535 = vmatprep.subr.mxu0 0.0
    %1536 = vmatpush1.msra.mxu0 0.0
    %1537 = vmatprep.subr.mxu0 0.0
    %1538 = vmatpush1.msra.mxu0 0.0
    %1539 = vmatprep.subr.mxu0 0.0
    %1540 = vmatpush1.msra.mxu0 0.0
    %1541 = vmatprep.subr.mxu0 0.0
    %1542 = vmatpush1.msra.mxu0 0.0
    %1543 = vmatprep.subr.mxu0 0.0
    %1544 = vmatpush1.msra.mxu0 0.0
    %1545 = vmatprep.subr.mxu0 0.0
    %1546 = vmatpush1.msra.mxu0 0.0
    %1547 = vmatprep.subr.mxu0 0.0
    %1548 = vmatpush1.msra.mxu0 %v689
    %1549 = vmatprep.subr.mxu0 0.0
    %1550 = vmatpush1.msra.mxu0 %v688
    %1551 = vmatprep.subr.mxu0 0.0
    %1552 = vmatpush1.msra.mxu0 %v687
    %1553 = vmatprep.subr.mxu0 0.0
    %1554 = vmatpush1.msra.mxu0 %v686
    %1555 = vmatprep.subr.mxu0 0.0
    %1556 = vmatpush2.msra.mxu0 0.0
    %1557 = vmatprep.subr.mxu0 0.0
    %1558 = vmatpush2.msra.mxu0 0.0
    %1559 = vmatprep.subr.mxu0 0.0
    %1560 = vmatpush2.msra.mxu0 0.0
    %1561 = vmatprep.subr.mxu0 0.0
    %1562 = vmatpush2.msra.mxu0 0.0
    %1563 = vmatprep.subr.mxu0 0.0
    %1564 = vmatpush2.msra.mxu0 0.0
    %1565 = vmatprep.subr.mxu0 0.0
    %1566 = vmatpush2.msra.mxu0 0.0
    %1567 = vmatprep.subr.mxu0 0.0
    %1568 = vmatpush2.msra.mxu0 0.0
    %1569 = vmatprep.subr.mxu0 0.0
    %1570 = vmatpush2.msra.mxu0 0.0
    %1571 = vmatprep.subr.mxu0 0.0
    %1572 = vmatpush2.msra.mxu0 0.0
    %1573 = vmatprep.subr.mxu0 0.0
    %1574 = vmatpush2.msra.mxu0 0.0
    %1575 = vmatprep.subr.mxu0 0.0
    %1576 = vmatpush2.msra.mxu0 0.0
    %1577 = vmatprep.subr.mxu0 0.0
    %1578 = vmatpush2.msra.mxu0 0.0
    %1579 = vmatprep.subr.mxu0 0.0
    %1580 = vmatpush2.msra.mxu0 0.0
    %1581 = vmatprep.subr.mxu0 0.0
    %1582 = vmatpush2.msra.mxu0 0.0
    %1583 = vmatprep.subr.mxu0 0.0
    %1584 = vmatpush2.msra.mxu0 0.0
    %1585 = vmatprep.subr.mxu0 0.0
    %1586 = vmatpush2.msra.mxu0 0.0
    %1587 = vmatprep.mubr.f32.mxu0 0.0
    %1588 = vmatmul.mubr.f32.gmra.mxu0 %v1421
    %v1589 = vpop.f32.mrf.mxu0
    %v1590 = vadd.f32 0.0, %v1589
    %v1591 = vpop.f32.mrf.mxu0
    %1592 = vdwg.mxu0
    %v1593 = vadd.f32 %v681, %v1590
    %v1594 = vxor.u32 %v1593, 2147483648
    %v1595 = vmul.f32 %v1594, 1.442695
    %v1596 = vpow.pop %v1595
    %v1597 = vadd.f32 %v1596, 1.0
    %v1598 = vrcp.pop %v1597
    %v1599 = vmul.f32 1.0, %v1598
    %v1600 = vtanh.pop %v1593
    %v1601 = vmul.f32 %v1599, %v1339
    %1603 = vrot.lane.b32.xlu0 %v1600, 32
    %v1604 = vpop.permute.xlu0 %1603
    %v1606 = vmul.f32 %v1599, %v1604
    %1608 = vrot.lane.b32.xlu0 %v1606, 32
    %v1609 = vpop.permute.xlu0 %1608
    %v1611 = vadd.f32 %v1601, %v1609
    %v1612 = vtanh.pop %v1611
    %1614 = vrot.lane.b32.xlu0 %v1612, 32
    %v1615 = vpop.permute.xlu0 %1614
    %v1617 = vmul.f32 %v1599, %v1615
    %v1618 = vsel %vm699, %v1520, 0
    %1620 = vmatprep.subr.mxu0 0.0
    %1621 = vmatpush1.msra.mxu0 0.0
    %1622 = vmatprep.subr.mxu0 0.0
    %1623 = vmatpush1.msra.mxu0 0.0
    %1624 = vmatprep.subr.mxu0 0.0
    %1625 = vmatpush1.msra.mxu0 0.0
    %1626 = vmatprep.subr.mxu0 0.0
    %1627 = vmatpush1.msra.mxu0 0.0
    %1628 = vmatprep.subr.mxu0 0.0
    %1629 = vmatpush1.msra.mxu0 0.0
    %1630 = vmatprep.subr.mxu0 0.0
    %1631 = vmatpush1.msra.mxu0 0.0
    %1632 = vmatprep.subr.mxu0 0.0
    %1633 = vmatpush1.msra.mxu0 0.0
    %1634 = vmatprep.subr.mxu0 0.0
    %1635 = vmatpush1.msra.mxu0 0.0
    %1636 = vmatprep.subr.mxu0 0.0
    %1637 = vmatpush1.msra.mxu0 0.0
    %1638 = vmatprep.subr.mxu0 0.0
    %1639 = vmatpush1.msra.mxu0 0.0
    %1640 = vmatprep.subr.mxu0 0.0
    %1641 = vmatpush1.msra.mxu0 0.0
    %1642 = vmatprep.subr.mxu0 0.0
    %1643 = vmatpush1.msra.mxu0 0.0
    %1644 = vmatprep.subr.mxu0 0.0
    %1645 = vmatpush1.msra.mxu0 %v697
    %1646 = vmatprep.subr.mxu0 0.0
    %1647 = vmatpush1.msra.mxu0 %v696
    %1648 = vmatprep.subr.mxu0 0.0
    %1649 = vmatpush1.msra.mxu0 %v695
    %1650 = vmatprep.subr.mxu0 0.0
    %1651 = vmatpush1.msra.mxu0 %v694
    %1652 = vmatprep.subr.mxu0 0.0
    %1653 = vmatpush2.msra.mxu0 0.0
    %1654 = vmatprep.subr.mxu0 0.0
    %1655 = vmatpush2.msra.mxu0 0.0
    %1656 = vmatprep.subr.mxu0 0.0
    %1657 = vmatpush2.msra.mxu0 0.0
    %1658 = vmatprep.subr.mxu0 0.0
    %1659 = vmatpush2.msra.mxu0 0.0
    %1660 = vmatprep.subr.mxu0 0.0
    %1661 = vmatpush2.msra.mxu0 0.0
    %1662 = vmatprep.subr.mxu0 0.0
    %1663 = vmatpush2.msra.mxu0 0.0
    %1664 = vmatprep.subr.mxu0 0.0
    %1665 = vmatpush2.msra.mxu0 0.0
    %1666 = vmatprep.subr.mxu0 0.0
    %1667 = vmatpush2.msra.mxu0 0.0
    %1668 = vmatprep.subr.mxu0 0.0
    %1669 = vmatpush2.msra.mxu0 0.0
    %1670 = vmatprep.subr.mxu0 0.0
    %1671 = vmatpush2.msra.mxu0 0.0
    %1672 = vmatprep.subr.mxu0 0.0
    %1673 = vmatpush2.msra.mxu0 0.0
    %1674 = vmatprep.subr.mxu0 0.0
    %1675 = vmatpush2.msra.mxu0 0.0
    %1676 = vmatprep.subr.mxu0 0.0
    %1677 = vmatpush2.msra.mxu0 0.0
    %1678 = vmatprep.subr.mxu0 0.0
    %1679 = vmatpush2.msra.mxu0 0.0
    %1680 = vmatprep.subr.mxu0 0.0
    %1681 = vmatpush2.msra.mxu0 0.0
    %1682 = vmatprep.subr.mxu0 0.0
    %1683 = vmatpush2.msra.mxu0 0.0
    %1684 = vmatprep.mubr.f32.mxu0 0.0
    %1685 = vmatmul.mubr.f32.gmra.mxu0 %v1618
    %v1686 = vpop.f32.mrf.mxu0
    %v1687 = vadd.f32 0.0, %v1686
    %v1688 = vpop.f32.mrf.mxu0
    %1689 = vdwg.mxu0
    %1691 = vrot.lane.b32.xlu0 %v1617, 64
    %v1692 = vpop.permute.xlu0 %1691
    %v1693 = vsel %vm699, %v1692, 0
    %1695 = vmatprep.subr.mxu0 0.0
    %1696 = vmatpush1.msra.mxu0 0.0
    %1697 = vmatprep.subr.mxu0 0.0
    %1698 = vmatpush1.msra.mxu0 0.0
    %1699 = vmatprep.subr.mxu0 0.0
    %1700 = vmatpush1.msra.mxu0 0.0
    %1701 = vmatprep.subr.mxu0 0.0
    %1702 = vmatpush1.msra.mxu0 0.0
    %1703 = vmatprep.subr.mxu0 0.0
    %1704 = vmatpush1.msra.mxu0 0.0
    %1705 = vmatprep.subr.mxu0 0.0
    %1706 = vmatpush1.msra.mxu0 0.0
    %1707 = vmatprep.subr.mxu0 0.0
    %1708 = vmatpush1.msra.mxu0 0.0
    %1709 = vmatprep.subr.mxu0 0.0
    %1710 = vmatpush1.msra.mxu0 0.0
    %1711 = vmatprep.subr.mxu0 0.0
    %1712 = vmatpush1.msra.mxu0 0.0
    %1713 = vmatprep.subr.mxu0 0.0
    %1714 = vmatpush1.msra.mxu0 0.0
    %1715 = vmatprep.subr.mxu0 0.0
    %1716 = vmatpush1.msra.mxu0 0.0
    %1717 = vmatprep.subr.mxu0 0.0
    %1718 = vmatpush1.msra.mxu0 0.0
    %1719 = vmatprep.subr.mxu0 0.0
    %1720 = vmatpush1.msra.mxu0 %v693
    %1721 = vmatprep.subr.mxu0 0.0
    %1722 = vmatpush1.msra.mxu0 %v692
    %1723 = vmatprep.subr.mxu0 0.0
    %1724 = vmatpush1.msra.mxu0 %v691
    %1725 = vmatprep.subr.mxu0 0.0
    %1726 = vmatpush1.msra.mxu0 %v690
    %1727 = vmatprep.subr.mxu0 0.0
    %1728 = vmatpush2.msra.mxu0 0.0
    %1729 = vmatprep.subr.mxu0 0.0
    %1730 = vmatpush2.msra.mxu0 0.0
    %1731 = vmatprep.subr.mxu0 0.0
    %1732 = vmatpush2.msra.mxu0 0.0
    %1733 = vmatprep.subr.mxu0 0.0
    %1734 = vmatpush2.msra.mxu0 0.0
    %1735 = vmatprep.subr.mxu0 0.0
    %1736 = vmatpush2.msra.mxu0 0.0
    %1737 = vmatprep.subr.mxu0 0.0
    %1738 = vmatpush2.msra.mxu0 0.0
    %1739 = vmatprep.subr.mxu0 0.0
    %1740 = vmatpush2.msra.mxu0 0.0
    %1741 = vmatprep.subr.mxu0 0.0
    %1742 = vmatpush2.msra.mxu0 0.0
    %1743 = vmatprep.subr.mxu0 0.0
    %1744 = vmatpush2.msra.mxu0 0.0
    %1745 = vmatprep.subr.mxu0 0.0
    %1746 = vmatpush2.msra.mxu0 0.0
    %1747 = vmatprep.subr.mxu0 0.0
    %1748 = vmatpush2.msra.mxu0 0.0
    %1749 = vmatprep.subr.mxu0 0.0
    %1750 = vmatpush2.msra.mxu0 0.0
    %1751 = vmatprep.subr.mxu0 0.0
    %1752 = vmatpush2.msra.mxu0 0.0
    %1753 = vmatprep.subr.mxu0 0.0
    %1754 = vmatpush2.msra.mxu0 0.0
    %1755 = vmatprep.subr.mxu0 0.0
    %1756 = vmatpush2.msra.mxu0 0.0
    %1757 = vmatprep.subr.mxu0 0.0
    %1758 = vmatpush2.msra.mxu0 0.0
    %1759 = vmatprep.mubr.f32.mxu0 0.0
    %1760 = vmatmul.mubr.f32.gmra.mxu0 %v1693
    %v1761 = vpop.f32.mrf.mxu0
    %v1762 = vadd.f32 %v1687, %v1761
    %v1763 = vpop.f32.mrf.mxu0
    %1764 = vdwg.mxu0
    %v1765 = vadd.f32 %v1762, %v947
    %v1766 = vxor.u32 %v1765, 2147483648
    %v1767 = vmul.f32 %v1766, 1.442695
    %v1768 = vpow.pop %v1767
    %v1769 = vadd.f32 %v1768, 1.0
    %v1770 = vrcp.pop %v1769
    %v1771 = vmul.f32 1.0, %v1770
    %v1772 = vtanh.pop %v1765
    %v1773 = vmul.f32 %v1771, %v1511
    %1775 = vrot.lane.b32.xlu0 %v1772, 32
    %v1776 = vpop.permute.xlu0 %1775
    %v1778 = vmul.f32 %v1771, %v1776
    %1780 = vrot.lane.b32.xlu0 %v1778, 32
    %v1781 = vpop.permute.xlu0 %1780
    %v1783 = vadd.f32 %v1773, %v1781
    %v1784 = vtanh.pop %v1783
    %1786 = vrot.lane.b32.xlu0 %v1784, 32
    %v1787 = vpop.permute.xlu0 %1786
    %v1789 = vmul.f32 %v1771, %v1787
    %1791 = vrot.lane.b32.xlu0 %v1789, 64
    %v1792 = vpop.permute.xlu0 %1791
    %1794 = vst.msk [vmem:[#allocation2 + $0x18] sm:$0xff] %vm699, %v1792
    %1795 = vmatprep.subr.mxu0 0.0
    %1796 = vmatpush1.msra.mxu0 0.0
    %1797 = vmatprep.subr.mxu0 0.0
    %1798 = vmatpush1.msra.mxu0 0.0
    %1799 = vmatprep.subr.mxu0 0.0
    %1800 = vmatpush1.msra.mxu0 0.0
    %1801 = vmatprep.subr.mxu0 0.0
    %1802 = vmatpush1.msra.mxu0 0.0
    %1803 = vmatprep.subr.mxu0 0.0
    %1804 = vmatpush1.msra.mxu0 0.0
    %1805 = vmatprep.subr.mxu0 0.0
    %1806 = vmatpush1.msra.mxu0 0.0
    %1807 = vmatprep.subr.mxu0 0.0
    %1808 = vmatpush1.msra.mxu0 0.0
    %1809 = vmatprep.subr.mxu0 0.0
    %1810 = vmatpush1.msra.mxu0 0.0
    %1811 = vmatprep.subr.mxu0 0.0
    %1812 = vmatpush1.msra.mxu0 0.0
    %1813 = vmatprep.subr.mxu0 0.0
    %1814 = vmatpush1.msra.mxu0 0.0
    %1815 = vmatprep.subr.mxu0 0.0
    %1816 = vmatpush1.msra.mxu0 0.0
    %1817 = vmatprep.subr.mxu0 0.0
    %1818 = vmatpush1.msra.mxu0 0.0
    %1819 = vmatprep.subr.mxu0 0.0
    %1820 = vmatpush1.msra.mxu0 %v689
    %1821 = vmatprep.subr.mxu0 0.0
    %1822 = vmatpush1.msra.mxu0 %v688
    %1823 = vmatprep.subr.mxu0 0.0
    %1824 = vmatpush1.msra.mxu0 %v687
    %1825 = vmatprep.subr.mxu0 0.0
    %1826 = vmatpush1.msra.mxu0 %v686
    %1827 = vmatprep.subr.mxu0 0.0
    %1828 = vmatpush2.msra.mxu0 0.0
    %1829 = vmatprep.subr.mxu0 0.0
    %1830 = vmatpush2.msra.mxu0 0.0
    %1831 = vmatprep.subr.mxu0 0.0
    %1832 = vmatpush2.msra.mxu0 0.0
    %1833 = vmatprep.subr.mxu0 0.0
    %1834 = vmatpush2.msra.mxu0 0.0
    %1835 = vmatprep.subr.mxu0 0.0
    %1836 = vmatpush2.msra.mxu0 0.0
    %1837 = vmatprep.subr.mxu0 0.0
    %1838 = vmatpush2.msra.mxu0 0.0
    %1839 = vmatprep.subr.mxu0 0.0
    %1840 = vmatpush2.msra.mxu0 0.0
    %1841 = vmatprep.subr.mxu0 0.0
    %1842 = vmatpush2.msra.mxu0 0.0
    %1843 = vmatprep.subr.mxu0 0.0
    %1844 = vmatpush2.msra.mxu0 0.0
    %1845 = vmatprep.subr.mxu0 0.0
    %1846 = vmatpush2.msra.mxu0 0.0
    %1847 = vmatprep.subr.mxu0 0.0
    %1848 = vmatpush2.msra.mxu0 0.0
    %1849 = vmatprep.subr.mxu0 0.0
    %1850 = vmatpush2.msra.mxu0 0.0
    %1851 = vmatprep.subr.mxu0 0.0
    %1852 = vmatpush2.msra.mxu0 0.0
    %1853 = vmatprep.subr.mxu0 0.0
    %1854 = vmatpush2.msra.mxu0 0.0
    %1855 = vmatprep.subr.mxu0 0.0
    %1856 = vmatpush2.msra.mxu0 0.0
    %1857 = vmatprep.subr.mxu0 0.0
    %1858 = vmatpush2.msra.mxu0 0.0
    %1859 = vmatprep.mubr.f32.mxu0 0.0
    %1860 = vmatmul.mubr.f32.gmra.mxu0 %v1693
    %v1861 = vpop.f32.mrf.mxu0
    %v1862 = vadd.f32 0.0, %v1861
    %v1863 = vpop.f32.mrf.mxu0
    %1864 = vdwg.mxu0
    %v1865 = vadd.f32 %v682, %v1862
    %v1866 = vxor.u32 %v1865, 2147483648
    %v1867 = vmul.f32 %v1866, 1.442695
    %v1868 = vpow.pop %v1867
    %v1869 = vadd.f32 %v1868, 1.0
    %v1870 = vrcp.pop %v1869
    %v1871 = vmul.f32 1.0, %v1870
    %v1872 = vtanh.pop %v1865
    %v1873 = vmul.f32 %v1871, %v1611
    %1875 = vrot.lane.b32.xlu0 %v1872, 32
    %v1876 = vpop.permute.xlu0 %1875
    %v1878 = vmul.f32 %v1871, %v1876
    %1880 = vrot.lane.b32.xlu0 %v1878, 32
    %v1881 = vpop.permute.xlu0 %1880
    %v1883 = vadd.f32 %v1873, %v1881
    %v1884 = vtanh.pop %v1883
    %1886 = vrot.lane.b32.xlu0 %v1884, 32
    %v1887 = vpop.permute.xlu0 %1886
    %v1889 = vmul.f32 %v1871, %v1887
    %v1890 = vsel %vm699, %v1792, 0
    %1892 = vmatprep.subr.mxu0 0.0
    %1893 = vmatpush1.msra.mxu0 0.0
    %1894 = vmatprep.subr.mxu0 0.0
    %1895 = vmatpush1.msra.mxu0 0.0
    %1896 = vmatprep.subr.mxu0 0.0
    %1897 = vmatpush1.msra.mxu0 0.0
    %1898 = vmatprep.subr.mxu0 0.0
    %1899 = vmatpush1.msra.mxu0 0.0
    %1900 = vmatprep.subr.mxu0 0.0
    %1901 = vmatpush1.msra.mxu0 0.0
    %1902 = vmatprep.subr.mxu0 0.0
    %1903 = vmatpush1.msra.mxu0 0.0
    %1904 = vmatprep.subr.mxu0 0.0
    %1905 = vmatpush1.msra.mxu0 0.0
    %1906 = vmatprep.subr.mxu0 0.0
    %1907 = vmatpush1.msra.mxu0 0.0
    %1908 = vmatprep.subr.mxu0 0.0
    %1909 = vmatpush1.msra.mxu0 0.0
    %1910 = vmatprep.subr.mxu0 0.0
    %1911 = vmatpush1.msra.mxu0 0.0
    %1912 = vmatprep.subr.mxu0 0.0
    %1913 = vmatpush1.msra.mxu0 0.0
    %1914 = vmatprep.subr.mxu0 0.0
    %1915 = vmatpush1.msra.mxu0 0.0
    %1916 = vmatprep.subr.mxu0 0.0
    %1917 = vmatpush1.msra.mxu0 %v697
    %1918 = vmatprep.subr.mxu0 0.0
    %1919 = vmatpush1.msra.mxu0 %v696
    %1920 = vmatprep.subr.mxu0 0.0
    %1921 = vmatpush1.msra.mxu0 %v695
    %1922 = vmatprep.subr.mxu0 0.0
    %1923 = vmatpush1.msra.mxu0 %v694
    %1924 = vmatprep.subr.mxu0 0.0
    %1925 = vmatpush2.msra.mxu0 0.0
    %1926 = vmatprep.subr.mxu0 0.0
    %1927 = vmatpush2.msra.mxu0 0.0
    %1928 = vmatprep.subr.mxu0 0.0
    %1929 = vmatpush2.msra.mxu0 0.0
    %1930 = vmatprep.subr.mxu0 0.0
    %1931 = vmatpush2.msra.mxu0 0.0
    %1932 = vmatprep.subr.mxu0 0.0
    %1933 = vmatpush2.msra.mxu0 0.0
    %1934 = vmatprep.subr.mxu0 0.0
    %1935 = vmatpush2.msra.mxu0 0.0
    %1936 = vmatprep.subr.mxu0 0.0
    %1937 = vmatpush2.msra.mxu0 0.0
    %1938 = vmatprep.subr.mxu0 0.0
    %1939 = vmatpush2.msra.mxu0 0.0
    %1940 = vmatprep.subr.mxu0 0.0
    %1941 = vmatpush2.msra.mxu0 0.0
    %1942 = vmatprep.subr.mxu0 0.0
    %1943 = vmatpush2.msra.mxu0 0.0
    %1944 = vmatprep.subr.mxu0 0.0
    %1945 = vmatpush2.msra.mxu0 0.0
    %1946 = vmatprep.subr.mxu0 0.0
    %1947 = vmatpush2.msra.mxu0 0.0
    %1948 = vmatprep.subr.mxu0 0.0
    %1949 = vmatpush2.msra.mxu0 0.0
    %1950 = vmatprep.subr.mxu0 0.0
    %1951 = vmatpush2.msra.mxu0 0.0
    %1952 = vmatprep.subr.mxu0 0.0
    %1953 = vmatpush2.msra.mxu0 0.0
    %1954 = vmatprep.subr.mxu0 0.0
    %1955 = vmatpush2.msra.mxu0 0.0
    %1956 = vmatprep.mubr.f32.mxu0 0.0
    %1957 = vmatmul.mubr.f32.gmra.mxu0 %v1890
    %v1958 = vpop.f32.mrf.mxu0
    %v1959 = vadd.f32 0.0, %v1958
    %v1960 = vpop.f32.mrf.mxu0
    %1961 = vdwg.mxu0
    %1963 = vrot.lane.b32.xlu0 %v1889, 64
    %v1964 = vpop.permute.xlu0 %1963
    %v1965 = vsel %vm699, %v1964, 0
    %1967 = vmatprep.subr.mxu0 0.0
    %1968 = vmatpush1.msra.mxu0 0.0
    %1969 = vmatprep.subr.mxu0 0.0
    %1970 = vmatpush1.msra.mxu0 0.0
    %1971 = vmatprep.subr.mxu0 0.0
    %1972 = vmatpush1.msra.mxu0 0.0
    %1973 = vmatprep.subr.mxu0 0.0
    %1974 = vmatpush1.msra.mxu0 0.0
    %1975 = vmatprep.subr.mxu0 0.0
    %1976 = vmatpush1.msra.mxu0 0.0
    %1977 = vmatprep.subr.mxu0 0.0
    %1978 = vmatpush1.msra.mxu0 0.0
    %1979 = vmatprep.subr.mxu0 0.0
    %1980 = vmatpush1.msra.mxu0 0.0
    %1981 = vmatprep.subr.mxu0 0.0
    %1982 = vmatpush1.msra.mxu0 0.0
    %1983 = vmatprep.subr.mxu0 0.0
    %1984 = vmatpush1.msra.mxu0 0.0
    %1985 = vmatprep.subr.mxu0 0.0
    %1986 = vmatpush1.msra.mxu0 0.0
    %1987 = vmatprep.subr.mxu0 0.0
    %1988 = vmatpush1.msra.mxu0 0.0
    %1989 = vmatprep.subr.mxu0 0.0
    %1990 = vmatpush1.msra.mxu0 0.0
    %1991 = vmatprep.subr.mxu0 0.0
    %1992 = vmatpush1.msra.mxu0 %v693
    %1993 = vmatprep.subr.mxu0 0.0
    %1994 = vmatpush1.msra.mxu0 %v692
    %1995 = vmatprep.subr.mxu0 0.0
    %1996 = vmatpush1.msra.mxu0 %v691
    %1997 = vmatprep.subr.mxu0 0.0
    %1998 = vmatpush1.msra.mxu0 %v690
    %1999 = vmatprep.subr.mxu0 0.0
    %2000 = vmatpush2.msra.mxu0 0.0
    %2001 = vmatprep.subr.mxu0 0.0
    %2002 = vmatpush2.msra.mxu0 0.0
    %2003 = vmatprep.subr.mxu0 0.0
    %2004 = vmatpush2.msra.mxu0 0.0
    %2005 = vmatprep.subr.mxu0 0.0
    %2006 = vmatpush2.msra.mxu0 0.0
    %2007 = vmatprep.subr.mxu0 0.0
    %2008 = vmatpush2.msra.mxu0 0.0
    %2009 = vmatprep.subr.mxu0 0.0
    %2010 = vmatpush2.msra.mxu0 0.0
    %2011 = vmatprep.subr.mxu0 0.0
    %2012 = vmatpush2.msra.mxu0 0.0
    %2013 = vmatprep.subr.mxu0 0.0
    %2014 = vmatpush2.msra.mxu0 0.0
    %2015 = vmatprep.subr.mxu0 0.0
    %2016 = vmatpush2.msra.mxu0 0.0
    %2017 = vmatprep.subr.mxu0 0.0
    %2018 = vmatpush2.msra.mxu0 0.0
    %2019 = vmatprep.subr.mxu0 0.0
    %2020 = vmatpush2.msra.mxu0 0.0
    %2021 = vmatprep.subr.mxu0 0.0
    %2022 = vmatpush2.msra.mxu0 0.0
    %2023 = vmatprep.subr.mxu0 0.0
    %2024 = vmatpush2.msra.mxu0 0.0
    %2025 = vmatprep.subr.mxu0 0.0
    %2026 = vmatpush2.msra.mxu0 0.0
    %2027 = vmatprep.subr.mxu0 0.0
    %2028 = vmatpush2.msra.mxu0 0.0
    %2029 = vmatprep.subr.mxu0 0.0
    %2030 = vmatpush2.msra.mxu0 0.0
    %2031 = vmatprep.mubr.f32.mxu0 0.0
    %2032 = vmatmul.mubr.f32.gmra.mxu0 %v1965
    %v2033 = vpop.f32.mrf.mxu0
    %v2034 = vadd.f32 %v1959, %v2033
    %v2035 = vpop.f32.mrf.mxu0
    %2036 = vdwg.mxu0
    %v2037 = vadd.f32 %v2034, %v947
    %v2038 = vxor.u32 %v2037, 2147483648
    %v2039 = vmul.f32 %v2038, 1.442695
    %v2040 = vpow.pop %v2039
    %v2041 = vadd.f32 %v2040, 1.0
    %v2042 = vrcp.pop %v2041
    %v2043 = vmul.f32 1.0, %v2042
    %v2044 = vtanh.pop %v2037
    %v2045 = vmul.f32 %v2043, %v1783
    %2047 = vrot.lane.b32.xlu0 %v2044, 32
    %v2048 = vpop.permute.xlu0 %2047
    %v2050 = vmul.f32 %v2043, %v2048
    %2052 = vrot.lane.b32.xlu0 %v2050, 32
    %v2053 = vpop.permute.xlu0 %2052
    %v2055 = vadd.f32 %v2045, %v2053
    %v2056 = vtanh.pop %v2055
    %2058 = vrot.lane.b32.xlu0 %v2056, 32
    %v2059 = vpop.permute.xlu0 %2058
    %v2061 = vmul.f32 %v2043, %v2059
    %2063 = vrot.lane.b32.xlu0 %v2061, 64
    %v2064 = vpop.permute.xlu0 %2063
    %2066 = vst.msk [vmem:[#allocation2 + $0x20] sm:$0xff] %vm699, %v2064
    %2067 = vmatprep.subr.mxu0 0.0
    %2068 = vmatpush1.msra.mxu0 0.0
    %2069 = vmatprep.subr.mxu0 0.0
    %2070 = vmatpush1.msra.mxu0 0.0
    %2071 = vmatprep.subr.mxu0 0.0
    %2072 = vmatpush1.msra.mxu0 0.0
    %2073 = vmatprep.subr.mxu0 0.0
    %2074 = vmatpush1.msra.mxu0 0.0
    %2075 = vmatprep.subr.mxu0 0.0
    %2076 = vmatpush1.msra.mxu0 0.0
    %2077 = vmatprep.subr.mxu0 0.0
    %2078 = vmatpush1.msra.mxu0 0.0
    %2079 = vmatprep.subr.mxu0 0.0
    %2080 = vmatpush1.msra.mxu0 0.0
    %2081 = vmatprep.subr.mxu0 0.0
    %2082 = vmatpush1.msra.mxu0 0.0
    %2083 = vmatprep.subr.mxu0 0.0
    %2084 = vmatpush1.msra.mxu0 0.0
    %2085 = vmatprep.subr.mxu0 0.0
    %2086 = vmatpush1.msra.mxu0 0.0
    %2087 = vmatprep.subr.mxu0 0.0
    %2088 = vmatpush1.msra.mxu0 0.0
    %2089 = vmatprep.subr.mxu0 0.0
    %2090 = vmatpush1.msra.mxu0 0.0
    %2091 = vmatprep.subr.mxu0 0.0
    %2092 = vmatpush1.msra.mxu0 %v689
    %2093 = vmatprep.subr.mxu0 0.0
    %2094 = vmatpush1.msra.mxu0 %v688
    %2095 = vmatprep.subr.mxu0 0.0
    %2096 = vmatpush1.msra.mxu0 %v687
    %2097 = vmatprep.subr.mxu0 0.0
    %2098 = vmatpush1.msra.mxu0 %v686
    %2099 = vmatprep.subr.mxu0 0.0
    %2100 = vmatpush2.msra.mxu0 0.0
    %2101 = vmatprep.subr.mxu0 0.0
    %2102 = vmatpush2.msra.mxu0 0.0
    %2103 = vmatprep.subr.mxu0 0.0
    %2104 = vmatpush2.msra.mxu0 0.0
    %2105 = vmatprep.subr.mxu0 0.0
    %2106 = vmatpush2.msra.mxu0 0.0
    %2107 = vmatprep.subr.mxu0 0.0
    %2108 = vmatpush2.msra.mxu0 0.0
    %2109 = vmatprep.subr.mxu0 0.0
    %2110 = vmatpush2.msra.mxu0 0.0
    %2111 = vmatprep.subr.mxu0 0.0
    %2112 = vmatpush2.msra.mxu0 0.0
    %2113 = vmatprep.subr.mxu0 0.0
    %2114 = vmatpush2.msra.mxu0 0.0
    %2115 = vmatprep.subr.mxu0 0.0
    %2116 = vmatpush2.msra.mxu0 0.0
    %2117 = vmatprep.subr.mxu0 0.0
    %2118 = vmatpush2.msra.mxu0 0.0
    %2119 = vmatprep.subr.mxu0 0.0
    %2120 = vmatpush2.msra.mxu0 0.0
    %2121 = vmatprep.subr.mxu0 0.0
    %2122 = vmatpush2.msra.mxu0 0.0
    %2123 = vmatprep.subr.mxu0 0.0
    %2124 = vmatpush2.msra.mxu0 0.0
    %2125 = vmatprep.subr.mxu0 0.0
    %2126 = vmatpush2.msra.mxu0 0.0
    %2127 = vmatprep.subr.mxu0 0.0
    %2128 = vmatpush2.msra.mxu0 0.0
    %2129 = vmatprep.subr.mxu0 0.0
    %2130 = vmatpush2.msra.mxu0 0.0
    %2131 = vmatprep.mubr.f32.mxu0 0.0
    %2132 = vmatmul.mubr.f32.gmra.mxu0 %v1965
    %v2133 = vpop.f32.mrf.mxu0
    %v2134 = vadd.f32 0.0, %v2133
    %v2135 = vpop.f32.mrf.mxu0
    %2136 = vdwg.mxu0
    %v2137 = vadd.f32 %v683, %v2134
    %v2138 = vxor.u32 %v2137, 2147483648
    %v2139 = vmul.f32 %v2138, 1.442695
    %v2140 = vpow.pop %v2139
    %v2141 = vadd.f32 %v2140, 1.0
    %v2142 = vrcp.pop %v2141
    %v2143 = vmul.f32 1.0, %v2142
    %v2144 = vtanh.pop %v2137
    %v2145 = vmul.f32 %v2143, %v1883
    %2147 = vrot.lane.b32.xlu0 %v2144, 32
    %v2148 = vpop.permute.xlu0 %2147
    %v2150 = vmul.f32 %v2143, %v2148
    %2152 = vrot.lane.b32.xlu0 %v2150, 32
    %v2153 = vpop.permute.xlu0 %2152
    %v2155 = vadd.f32 %v2145, %v2153
    %v2156 = vtanh.pop %v2155
    %2158 = vrot.lane.b32.xlu0 %v2156, 32
    %v2159 = vpop.permute.xlu0 %2158
    %v2161 = vmul.f32 %v2143, %v2159
    %v2162 = vsel %vm699, %v2064, 0
    %2164 = vmatprep.subr.mxu0 0.0
    %2165 = vmatpush1.msra.mxu0 0.0
    %2166 = vmatprep.subr.mxu0 0.0
    %2167 = vmatpush1.msra.mxu0 0.0
    %2168 = vmatprep.subr.mxu0 0.0
    %2169 = vmatpush1.msra.mxu0 0.0
    %2170 = vmatprep.subr.mxu0 0.0
    %2171 = vmatpush1.msra.mxu0 0.0
    %2172 = vmatprep.subr.mxu0 0.0
    %2173 = vmatpush1.msra.mxu0 0.0
    %2174 = vmatprep.subr.mxu0 0.0
    %2175 = vmatpush1.msra.mxu0 0.0
    %2176 = vmatprep.subr.mxu0 0.0
    %2177 = vmatpush1.msra.mxu0 0.0
    %2178 = vmatprep.subr.mxu0 0.0
    %2179 = vmatpush1.msra.mxu0 0.0
    %2180 = vmatprep.subr.mxu0 0.0
    %2181 = vmatpush1.msra.mxu0 0.0
    %2182 = vmatprep.subr.mxu0 0.0
    %2183 = vmatpush1.msra.mxu0 0.0
    %2184 = vmatprep.subr.mxu0 0.0
    %2185 = vmatpush1.msra.mxu0 0.0
    %2186 = vmatprep.subr.mxu0 0.0
    %2187 = vmatpush1.msra.mxu0 0.0
    %2188 = vmatprep.subr.mxu0 0.0
    %2189 = vmatpush1.msra.mxu0 %v697
    %2190 = vmatprep.subr.mxu0 0.0
    %2191 = vmatpush1.msra.mxu0 %v696
    %2192 = vmatprep.subr.mxu0 0.0
    %2193 = vmatpush1.msra.mxu0 %v695
    %2194 = vmatprep.subr.mxu0 0.0
    %2195 = vmatpush1.msra.mxu0 %v694
    %2196 = vmatprep.subr.mxu0 0.0
    %2197 = vmatpush2.msra.mxu0 0.0
    %2198 = vmatprep.subr.mxu0 0.0
    %2199 = vmatpush2.msra.mxu0 0.0
    %2200 = vmatprep.subr.mxu0 0.0
    %2201 = vmatpush2.msra.mxu0 0.0
    %2202 = vmatprep.subr.mxu0 0.0
    %2203 = vmatpush2.msra.mxu0 0.0
    %2204 = vmatprep.subr.mxu0 0.0
    %2205 = vmatpush2.msra.mxu0 0.0
    %2206 = vmatprep.subr.mxu0 0.0
    %2207 = vmatpush2.msra.mxu0 0.0
    %2208 = vmatprep.subr.mxu0 0.0
    %2209 = vmatpush2.msra.mxu0 0.0
    %2210 = vmatprep.subr.mxu0 0.0
    %2211 = vmatpush2.msra.mxu0 0.0
    %2212 = vmatprep.subr.mxu0 0.0
    %2213 = vmatpush2.msra.mxu0 0.0
    %2214 = vmatprep.subr.mxu0 0.0
    %2215 = vmatpush2.msra.mxu0 0.0
    %2216 = vmatprep.subr.mxu0 0.0
    %2217 = vmatpush2.msra.mxu0 0.0
    %2218 = vmatprep.subr.mxu0 0.0
    %2219 = vmatpush2.msra.mxu0 0.0
    %2220 = vmatprep.subr.mxu0 0.0
    %2221 = vmatpush2.msra.mxu0 0.0
    %2222 = vmatprep.subr.mxu0 0.0
    %2223 = vmatpush2.msra.mxu0 0.0
    %2224 = vmatprep.subr.mxu0 0.0
    %2225 = vmatpush2.msra.mxu0 0.0
    %2226 = vmatprep.subr.mxu0 0.0
    %2227 = vmatpush2.msra.mxu0 0.0
    %2228 = vmatprep.mubr.f32.mxu0 0.0
    %2229 = vmatmul.mubr.f32.gmra.mxu0 %v2162
    %v2230 = vpop.f32.mrf.mxu0
    %v2231 = vadd.f32 0.0, %v2230
    %v2232 = vpop.f32.mrf.mxu0
    %2233 = vdwg.mxu0
    %2235 = vrot.lane.b32.xlu0 %v2161, 64
    %v2236 = vpop.permute.xlu0 %2235
    %v2237 = vsel %vm699, %v2236, 0
    %2239 = vmatprep.subr.mxu0 0.0
    %2240 = vmatpush1.msra.mxu0 0.0
    %2241 = vmatprep.subr.mxu0 0.0
    %2242 = vmatpush1.msra.mxu0 0.0
    %2243 = vmatprep.subr.mxu0 0.0
    %2244 = vmatpush1.msra.mxu0 0.0
    %2245 = vmatprep.subr.mxu0 0.0
    %2246 = vmatpush1.msra.mxu0 0.0
    %2247 = vmatprep.subr.mxu0 0.0
    %2248 = vmatpush1.msra.mxu0 0.0
    %2249 = vmatprep.subr.mxu0 0.0
    %2250 = vmatpush1.msra.mxu0 0.0
    %2251 = vmatprep.subr.mxu0 0.0
    %2252 = vmatpush1.msra.mxu0 0.0
    %2253 = vmatprep.subr.mxu0 0.0
    %2254 = vmatpush1.msra.mxu0 0.0
    %2255 = vmatprep.subr.mxu0 0.0
    %2256 = vmatpush1.msra.mxu0 0.0
    %2257 = vmatprep.subr.mxu0 0.0
    %2258 = vmatpush1.msra.mxu0 0.0
    %2259 = vmatprep.subr.mxu0 0.0
    %2260 = vmatpush1.msra.mxu0 0.0
    %2261 = vmatprep.subr.mxu0 0.0
    %2262 = vmatpush1.msra.mxu0 0.0
    %2263 = vmatprep.subr.mxu0 0.0
    %2264 = vmatpush1.msra.mxu0 %v693
    %2265 = vmatprep.subr.mxu0 0.0
    %2266 = vmatpush1.msra.mxu0 %v692
    %2267 = vmatprep.subr.mxu0 0.0
    %2268 = vmatpush1.msra.mxu0 %v691
    %2269 = vmatprep.subr.mxu0 0.0
    %2270 = vmatpush1.msra.mxu0 %v690
    %2271 = vmatprep.subr.mxu0 0.0
    %2272 = vmatpush2.msra.mxu0 0.0
    %2273 = vmatprep.subr.mxu0 0.0
    %2274 = vmatpush2.msra.mxu0 0.0
    %2275 = vmatprep.subr.mxu0 0.0
    %2276 = vmatpush2.msra.mxu0 0.0
    %2277 = vmatprep.subr.mxu0 0.0
    %2278 = vmatpush2.msra.mxu0 0.0
    %2279 = vmatprep.subr.mxu0 0.0
    %2280 = vmatpush2.msra.mxu0 0.0
    %2281 = vmatprep.subr.mxu0 0.0
    %2282 = vmatpush2.msra.mxu0 0.0
    %2283 = vmatprep.subr.mxu0 0.0
    %2284 = vmatpush2.msra.mxu0 0.0
    %2285 = vmatprep.subr.mxu0 0.0
    %2286 = vmatpush2.msra.mxu0 0.0
    %2287 = vmatprep.subr.mxu0 0.0
    %2288 = vmatpush2.msra.mxu0 0.0
    %2289 = vmatprep.subr.mxu0 0.0
    %2290 = vmatpush2.msra.mxu0 0.0
    %2291 = vmatprep.subr.mxu0 0.0
    %2292 = vmatpush2.msra.mxu0 0.0
    %2293 = vmatprep.subr.mxu0 0.0
    %2294 = vmatpush2.msra.mxu0 0.0
    %2295 = vmatprep.subr.mxu0 0.0
    %2296 = vmatpush2.msra.mxu0 0.0
    %2297 = vmatprep.subr.mxu0 0.0
    %2298 = vmatpush2.msra.mxu0 0.0
    %2299 = vmatprep.subr.mxu0 0.0
    %2300 = vmatpush2.msra.mxu0 0.0
    %2301 = vmatprep.subr.mxu0 0.0
    %2302 = vmatpush2.msra.mxu0 0.0
    %2303 = vmatprep.mubr.f32.mxu0 0.0
    %2304 = vmatmul.mubr.f32.gmra.mxu0 %v2237
    %v2305 = vpop.f32.mrf.mxu0
    %v2306 = vadd.f32 %v2231, %v2305
    %v2307 = vpop.f32.mrf.mxu0
    %2308 = vdwg.mxu0
    %v2309 = vadd.f32 %v2306, %v947
    %v2310 = vxor.u32 %v2309, 2147483648
    %v2311 = vmul.f32 %v2310, 1.442695
    %v2312 = vpow.pop %v2311
    %v2313 = vadd.f32 %v2312, 1.0
    %v2314 = vrcp.pop %v2313
    %v2315 = vmul.f32 1.0, %v2314
    %v2316 = vtanh.pop %v2309
    %v2317 = vmul.f32 %v2315, %v2055
    %2319 = vrot.lane.b32.xlu0 %v2316, 32
    %v2320 = vpop.permute.xlu0 %2319
    %v2322 = vmul.f32 %v2315, %v2320
    %2324 = vrot.lane.b32.xlu0 %v2322, 32
    %v2325 = vpop.permute.xlu0 %2324
    %v2327 = vadd.f32 %v2317, %v2325
    %v2328 = vtanh.pop %v2327
    %2330 = vrot.lane.b32.xlu0 %v2328, 32
    %v2331 = vpop.permute.xlu0 %2330
    %v2333 = vmul.f32 %v2315, %v2331
    %2335 = vrot.lane.b32.xlu0 %v2333, 64
    %v2336 = vpop.permute.xlu0 %2335
    %2338 = vst.msk [vmem:[#allocation2 + $0x28] sm:$0xff] %vm699, %v2336
    %2339 = vmatprep.subr.mxu0 0.0
    %2340 = vmatpush1.msra.mxu0 0.0
    %2341 = vmatprep.subr.mxu0 0.0
    %2342 = vmatpush1.msra.mxu0 0.0
    %2343 = vmatprep.subr.mxu0 0.0
    %2344 = vmatpush1.msra.mxu0 0.0
    %2345 = vmatprep.subr.mxu0 0.0
    %2346 = vmatpush1.msra.mxu0 0.0
    %2347 = vmatprep.subr.mxu0 0.0
    %2348 = vmatpush1.msra.mxu0 0.0
    %2349 = vmatprep.subr.mxu0 0.0
    %2350 = vmatpush1.msra.mxu0 0.0
    %2351 = vmatprep.subr.mxu0 0.0
    %2352 = vmatpush1.msra.mxu0 0.0
    %2353 = vmatprep.subr.mxu0 0.0
    %2354 = vmatpush1.msra.mxu0 0.0
    %2355 = vmatprep.subr.mxu0 0.0
    %2356 = vmatpush1.msra.mxu0 0.0
    %2357 = vmatprep.subr.mxu0 0.0
    %2358 = vmatpush1.msra.mxu0 0.0
    %2359 = vmatprep.subr.mxu0 0.0
    %2360 = vmatpush1.msra.mxu0 0.0
    %2361 = vmatprep.subr.mxu0 0.0
    %2362 = vmatpush1.msra.mxu0 0.0
    %2363 = vmatprep.subr.mxu0 0.0
    %2364 = vmatpush1.msra.mxu0 %v689
    %2365 = vmatprep.subr.mxu0 0.0
    %2366 = vmatpush1.msra.mxu0 %v688
    %2367 = vmatprep.subr.mxu0 0.0
    %2368 = vmatpush1.msra.mxu0 %v687
    %2369 = vmatprep.subr.mxu0 0.0
    %2370 = vmatpush1.msra.mxu0 %v686
    %2371 = vmatprep.subr.mxu0 0.0
    %2372 = vmatpush2.msra.mxu0 0.0
    %2373 = vmatprep.subr.mxu0 0.0
    %2374 = vmatpush2.msra.mxu0 0.0
    %2375 = vmatprep.subr.mxu0 0.0
    %2376 = vmatpush2.msra.mxu0 0.0
    %2377 = vmatprep.subr.mxu0 0.0
    %2378 = vmatpush2.msra.mxu0 0.0
    %2379 = vmatprep.subr.mxu0 0.0
    %2380 = vmatpush2.msra.mxu0 0.0
    %2381 = vmatprep.subr.mxu0 0.0
    %2382 = vmatpush2.msra.mxu0 0.0
    %2383 = vmatprep.subr.mxu0 0.0
    %2384 = vmatpush2.msra.mxu0 0.0
    %2385 = vmatprep.subr.mxu0 0.0
    %2386 = vmatpush2.msra.mxu0 0.0
    %2387 = vmatprep.subr.mxu0 0.0
    %2388 = vmatpush2.msra.mxu0 0.0
    %2389 = vmatprep.subr.mxu0 0.0
    %2390 = vmatpush2.msra.mxu0 0.0
    %2391 = vmatprep.subr.mxu0 0.0
    %2392 = vmatpush2.msra.mxu0 0.0
    %2393 = vmatprep.subr.mxu0 0.0
    %2394 = vmatpush2.msra.mxu0 0.0
    %2395 = vmatprep.subr.mxu0 0.0
    %2396 = vmatpush2.msra.mxu0 0.0
    %2397 = vmatprep.subr.mxu0 0.0
    %2398 = vmatpush2.msra.mxu0 0.0
    %2399 = vmatprep.subr.mxu0 0.0
    %2400 = vmatpush2.msra.mxu0 0.0
    %2401 = vmatprep.subr.mxu0 0.0
    %2402 = vmatpush2.msra.mxu0 0.0
    %2403 = vmatprep.mubr.f32.mxu0 0.0
    %2404 = vmatmul.mubr.f32.gmra.mxu0 %v2237
    %v2405 = vpop.f32.mrf.mxu0
    %v2406 = vadd.f32 0.0, %v2405
    %v2407 = vpop.f32.mrf.mxu0
    %2408 = vdwg.mxu0
    %v2409 = vadd.f32 %v684, %v2406
    %v2410 = vxor.u32 %v2409, 2147483648
    %v2411 = vmul.f32 %v2410, 1.442695
    %v2412 = vpow.pop %v2411
    %v2413 = vadd.f32 %v2412, 1.0
    %v2414 = vrcp.pop %v2413
    %v2415 = vmul.f32 1.0, %v2414
    %v2416 = vtanh.pop %v2409
    %v2417 = vmul.f32 %v2415, %v2155
    %2419 = vrot.lane.b32.xlu0 %v2416, 32
    %v2420 = vpop.permute.xlu0 %2419
    %v2422 = vmul.f32 %v2415, %v2420
    %2424 = vrot.lane.b32.xlu0 %v2422, 32
    %v2425 = vpop.permute.xlu0 %2424
    %v2427 = vadd.f32 %v2417, %v2425
    %v2428 = vtanh.pop %v2427
    %2430 = vrot.lane.b32.xlu0 %v2428, 32
    %v2431 = vpop.permute.xlu0 %2430
    %v2433 = vmul.f32 %v2415, %v2431
    %v2434 = vsel %vm699, %v2336, 0
    %2436 = vmatprep.subr.mxu0 0.0
    %2437 = vmatpush1.msra.mxu0 0.0
    %2438 = vmatprep.subr.mxu0 0.0
    %2439 = vmatpush1.msra.mxu0 0.0
    %2440 = vmatprep.subr.mxu0 0.0
    %2441 = vmatpush1.msra.mxu0 0.0
    %2442 = vmatprep.subr.mxu0 0.0
    %2443 = vmatpush1.msra.mxu0 0.0
    %2444 = vmatprep.subr.mxu0 0.0
    %2445 = vmatpush1.msra.mxu0 0.0
    %2446 = vmatprep.subr.mxu0 0.0
    %2447 = vmatpush1.msra.mxu0 0.0
    %2448 = vmatprep.subr.mxu0 0.0
    %2449 = vmatpush1.msra.mxu0 0.0
    %2450 = vmatprep.subr.mxu0 0.0
    %2451 = vmatpush1.msra.mxu0 0.0
    %2452 = vmatprep.subr.mxu0 0.0
    %2453 = vmatpush1.msra.mxu0 0.0
    %2454 = vmatprep.subr.mxu0 0.0
    %2455 = vmatpush1.msra.mxu0 0.0
    %2456 = vmatprep.subr.mxu0 0.0
    %2457 = vmatpush1.msra.mxu0 0.0
    %2458 = vmatprep.subr.mxu0 0.0
    %2459 = vmatpush1.msra.mxu0 0.0
    %2460 = vmatprep.subr.mxu0 0.0
    %2461 = vmatpush1.msra.mxu0 %v697
    %2462 = vmatprep.subr.mxu0 0.0
    %2463 = vmatpush1.msra.mxu0 %v696
    %2464 = vmatprep.subr.mxu0 0.0
    %2465 = vmatpush1.msra.mxu0 %v695
    %2466 = vmatprep.subr.mxu0 0.0
    %2467 = vmatpush1.msra.mxu0 %v694
    %2468 = vmatprep.subr.mxu0 0.0
    %2469 = vmatpush2.msra.mxu0 0.0
    %2470 = vmatprep.subr.mxu0 0.0
    %2471 = vmatpush2.msra.mxu0 0.0
    %2472 = vmatprep.subr.mxu0 0.0
    %2473 = vmatpush2.msra.mxu0 0.0
    %2474 = vmatprep.subr.mxu0 0.0
    %2475 = vmatpush2.msra.mxu0 0.0
    %2476 = vmatprep.subr.mxu0 0.0
    %2477 = vmatpush2.msra.mxu0 0.0
    %2478 = vmatprep.subr.mxu0 0.0
    %2479 = vmatpush2.msra.mxu0 0.0
    %2480 = vmatprep.subr.mxu0 0.0
    %2481 = vmatpush2.msra.mxu0 0.0
    %2482 = vmatprep.subr.mxu0 0.0
    %2483 = vmatpush2.msra.mxu0 0.0
    %2484 = vmatprep.subr.mxu0 0.0
    %2485 = vmatpush2.msra.mxu0 0.0
    %2486 = vmatprep.subr.mxu0 0.0
    %2487 = vmatpush2.msra.mxu0 0.0
    %2488 = vmatprep.subr.mxu0 0.0
    %2489 = vmatpush2.msra.mxu0 0.0
    %2490 = vmatprep.subr.mxu0 0.0
    %2491 = vmatpush2.msra.mxu0 0.0
    %2492 = vmatprep.subr.mxu0 0.0
    %2493 = vmatpush2.msra.mxu0 0.0
    %2494 = vmatprep.subr.mxu0 0.0
    %2495 = vmatpush2.msra.mxu0 0.0
    %2496 = vmatprep.subr.mxu0 0.0
    %2497 = vmatpush2.msra.mxu0 0.0
    %2498 = vmatprep.subr.mxu0 0.0
    %2499 = vmatpush2.msra.mxu0 0.0
    %2500 = vmatprep.mubr.f32.mxu0 0.0
    %2501 = vmatmul.mubr.f32.gmra.mxu0 %v2434
    %v2502 = vpop.f32.mrf.mxu0
    %v2503 = vadd.f32 0.0, %v2502
    %v2504 = vpop.f32.mrf.mxu0
    %2505 = vdwg.mxu0
    %2507 = vrot.lane.b32.xlu0 %v2433, 64
    %v2508 = vpop.permute.xlu0 %2507
    %v2509 = vsel %vm699, %v2508, 0
    %2511 = vmatprep.subr.mxu0 0.0
    %2512 = vmatpush1.msra.mxu0 0.0
    %2513 = vmatprep.subr.mxu0 0.0
    %2514 = vmatpush1.msra.mxu0 0.0
    %2515 = vmatprep.subr.mxu0 0.0
    %2516 = vmatpush1.msra.mxu0 0.0
    %2517 = vmatprep.subr.mxu0 0.0
    %2518 = vmatpush1.msra.mxu0 0.0
    %2519 = vmatprep.subr.mxu0 0.0
    %2520 = vmatpush1.msra.mxu0 0.0
    %2521 = vmatprep.subr.mxu0 0.0
    %2522 = vmatpush1.msra.mxu0 0.0
    %2523 = vmatprep.subr.mxu0 0.0
    %2524 = vmatpush1.msra.mxu0 0.0
    %2525 = vmatprep.subr.mxu0 0.0
    %2526 = vmatpush1.msra.mxu0 0.0
    %2527 = vmatprep.subr.mxu0 0.0
    %2528 = vmatpush1.msra.mxu0 0.0
    %2529 = vmatprep.subr.mxu0 0.0
    %2530 = vmatpush1.msra.mxu0 0.0
    %2531 = vmatprep.subr.mxu0 0.0
    %2532 = vmatpush1.msra.mxu0 0.0
    %2533 = vmatprep.subr.mxu0 0.0
    %2534 = vmatpush1.msra.mxu0 0.0
    %2535 = vmatprep.subr.mxu0 0.0
    %2536 = vmatpush1.msra.mxu0 %v693
    %2537 = vmatprep.subr.mxu0 0.0
    %2538 = vmatpush1.msra.mxu0 %v692
    %2539 = vmatprep.subr.mxu0 0.0
    %2540 = vmatpush1.msra.mxu0 %v691
    %2541 = vmatprep.subr.mxu0 0.0
    %2542 = vmatpush1.msra.mxu0 %v690
    %2543 = vmatprep.subr.mxu0 0.0
    %2544 = vmatpush2.msra.mxu0 0.0
    %2545 = vmatprep.subr.mxu0 0.0
    %2546 = vmatpush2.msra.mxu0 0.0
    %2547 = vmatprep.subr.mxu0 0.0
    %2548 = vmatpush2.msra.mxu0 0.0
    %2549 = vmatprep.subr.mxu0 0.0
    %2550 = vmatpush2.msra.mxu0 0.0
    %2551 = vmatprep.subr.mxu0 0.0
    %2552 = vmatpush2.msra.mxu0 0.0
    %2553 = vmatprep.subr.mxu0 0.0
    %2554 = vmatpush2.msra.mxu0 0.0
    %2555 = vmatprep.subr.mxu0 0.0
    %2556 = vmatpush2.msra.mxu0 0.0
    %2557 = vmatprep.subr.mxu0 0.0
    %2558 = vmatpush2.msra.mxu0 0.0
    %2559 = vmatprep.subr.mxu0 0.0
    %2560 = vmatpush2.msra.mxu0 0.0
    %2561 = vmatprep.subr.mxu0 0.0
    %2562 = vmatpush2.msra.mxu0 0.0
    %2563 = vmatprep.subr.mxu0 0.0
    %2564 = vmatpush2.msra.mxu0 0.0
    %2565 = vmatprep.subr.mxu0 0.0
    %2566 = vmatpush2.msra.mxu0 0.0
    %2567 = vmatprep.subr.mxu0 0.0
    %2568 = vmatpush2.msra.mxu0 0.0
    %2569 = vmatprep.subr.mxu0 0.0
    %2570 = vmatpush2.msra.mxu0 0.0
    %2571 = vmatprep.subr.mxu0 0.0
    %2572 = vmatpush2.msra.mxu0 0.0
    %2573 = vmatprep.subr.mxu0 0.0
    %2574 = vmatpush2.msra.mxu0 0.0
    %2575 = vmatprep.mubr.f32.mxu0 0.0
    %2576 = vmatmul.mubr.f32.gmra.mxu0 %v2509
    %v2577 = vpop.f32.mrf.mxu0
    %v2578 = vadd.f32 %v2503, %v2577
    %v2579 = vpop.f32.mrf.mxu0
    %2580 = vdwg.mxu0
    %v2581 = vadd.f32 %v2578, %v947
    %v2582 = vxor.u32 %v2581, 2147483648
    %v2583 = vmul.f32 %v2582, 1.442695
    %v2584 = vpow.pop %v2583
    %v2585 = vadd.f32 %v2584, 1.0
    %v2586 = vrcp.pop %v2585
    %v2587 = vmul.f32 1.0, %v2586
    %v2588 = vtanh.pop %v2581
    %v2589 = vmul.f32 %v2587, %v2327
    %2591 = vrot.lane.b32.xlu0 %v2588, 32
    %v2592 = vpop.permute.xlu0 %2591
    %v2594 = vmul.f32 %v2587, %v2592
    %2596 = vrot.lane.b32.xlu0 %v2594, 32
    %v2597 = vpop.permute.xlu0 %2596
    %v2599 = vadd.f32 %v2589, %v2597
    %v2600 = vtanh.pop %v2599
    %2602 = vrot.lane.b32.xlu0 %v2600, 32
    %v2603 = vpop.permute.xlu0 %2602
    %v2605 = vmul.f32 %v2587, %v2603
    %2607 = vrot.lane.b32.xlu0 %v2605, 64
    %v2608 = vpop.permute.xlu0 %2607
    %2610 = vst.msk [vmem:[#allocation2 + $0x30] sm:$0xff] %vm699, %v2608
    %2611 = vmatprep.subr.mxu0 0.0
    %2612 = vmatpush1.msra.mxu0 0.0
    %2613 = vmatprep.subr.mxu0 0.0
    %2614 = vmatpush1.msra.mxu0 0.0
    %2615 = vmatprep.subr.mxu0 0.0
    %2616 = vmatpush1.msra.mxu0 0.0
    %2617 = vmatprep.subr.mxu0 0.0
    %2618 = vmatpush1.msra.mxu0 0.0
    %2619 = vmatprep.subr.mxu0 0.0
    %2620 = vmatpush1.msra.mxu0 0.0
    %2621 = vmatprep.subr.mxu0 0.0
    %2622 = vmatpush1.msra.mxu0 0.0
    %2623 = vmatprep.subr.mxu0 0.0
    %2624 = vmatpush1.msra.mxu0 0.0
    %2625 = vmatprep.subr.mxu0 0.0
    %2626 = vmatpush1.msra.mxu0 0.0
    %2627 = vmatprep.subr.mxu0 0.0
    %2628 = vmatpush1.msra.mxu0 0.0
    %2629 = vmatprep.subr.mxu0 0.0
    %2630 = vmatpush1.msra.mxu0 0.0
    %2631 = vmatprep.subr.mxu0 0.0
    %2632 = vmatpush1.msra.mxu0 0.0
    %2633 = vmatprep.subr.mxu0 0.0
    %2634 = vmatpush1.msra.mxu0 0.0
    %2635 = vmatprep.subr.mxu0 0.0
    %2636 = vmatpush1.msra.mxu0 %v689
    %2637 = vmatprep.subr.mxu0 0.0
    %2638 = vmatpush1.msra.mxu0 %v688
    %2639 = vmatprep.subr.mxu0 0.0
    %2640 = vmatpush1.msra.mxu0 %v687
    %2641 = vmatprep.subr.mxu0 0.0
    %2642 = vmatpush1.msra.mxu0 %v686
    %2643 = vmatprep.subr.mxu0 0.0
    %2644 = vmatpush2.msra.mxu0 0.0
    %2645 = vmatprep.subr.mxu0 0.0
    %2646 = vmatpush2.msra.mxu0 0.0
    %2647 = vmatprep.subr.mxu0 0.0
    %2648 = vmatpush2.msra.mxu0 0.0
    %2649 = vmatprep.subr.mxu0 0.0
    %2650 = vmatpush2.msra.mxu0 0.0
    %2651 = vmatprep.subr.mxu0 0.0
    %2652 = vmatpush2.msra.mxu0 0.0
    %2653 = vmatprep.subr.mxu0 0.0
    %2654 = vmatpush2.msra.mxu0 0.0
    %2655 = vmatprep.subr.mxu0 0.0
    %2656 = vmatpush2.msra.mxu0 0.0
    %2657 = vmatprep.subr.mxu0 0.0
    %2658 = vmatpush2.msra.mxu0 0.0
    %2659 = vmatprep.subr.mxu0 0.0
    %2660 = vmatpush2.msra.mxu0 0.0
    %2661 = vmatprep.subr.mxu0 0.0
    %2662 = vmatpush2.msra.mxu0 0.0
    %2663 = vmatprep.subr.mxu0 0.0
    %2664 = vmatpush2.msra.mxu0 0.0
    %2665 = vmatprep.subr.mxu0 0.0
    %2666 = vmatpush2.msra.mxu0 0.0
    %2667 = vmatprep.subr.mxu0 0.0
    %2668 = vmatpush2.msra.mxu0 0.0
    %2669 = vmatprep.subr.mxu0 0.0
    %2670 = vmatpush2.msra.mxu0 0.0
    %2671 = vmatprep.subr.mxu0 0.0
    %2672 = vmatpush2.msra.mxu0 0.0
    %2673 = vmatprep.subr.mxu0 0.0
    %2674 = vmatpush2.msra.mxu0 0.0
    %2675 = vmatprep.mubr.f32.mxu0 0.0
    %2676 = vmatmul.mubr.f32.gmra.mxu0 %v2509
    %v2677 = vpop.f32.mrf.mxu0
    %v2678 = vadd.f32 0.0, %v2677
    %v2679 = vpop.f32.mrf.mxu0
    %2680 = vdwg.mxu0
    %v2681 = vadd.f32 %v685, %v2678
    %v2682 = vxor.u32 %v2681, 2147483648
    %v2683 = vmul.f32 %v2682, 1.442695
    %v2684 = vpow.pop %v2683
    %v2685 = vadd.f32 %v2684, 1.0
    %v2686 = vrcp.pop %v2685
    %v2687 = vmul.f32 1.0, %v2686
    %v2688 = vtanh.pop %v2681
    %v2689 = vmul.f32 %v2687, %v2427
    %2691 = vrot.lane.b32.xlu0 %v2688, 32
    %v2692 = vpop.permute.xlu0 %2691
    %v2694 = vmul.f32 %v2687, %v2692
    %2696 = vrot.lane.b32.xlu0 %v2694, 32
    %v2697 = vpop.permute.xlu0 %2696
    %v2699 = vadd.f32 %v2689, %v2697
    %v2700 = vtanh.pop %v2699
    %2702 = vrot.lane.b32.xlu0 %v2700, 32
    %v2703 = vpop.permute.xlu0 %2702
    %v2705 = vmul.f32 %v2687, %v2703
    %v2706 = vsel %vm699, %v2608, 0
    %2708 = vmatprep.subr.mxu0 0.0
    %2709 = vmatpush1.msra.mxu0 0.0
    %2710 = vmatprep.subr.mxu0 0.0
    %2711 = vmatpush1.msra.mxu0 0.0
    %2712 = vmatprep.subr.mxu0 0.0
    %2713 = vmatpush1.msra.mxu0 0.0
    %2714 = vmatprep.subr.mxu0 0.0
    %2715 = vmatpush1.msra.mxu0 0.0
    %2716 = vmatprep.subr.mxu0 0.0
    %2717 = vmatpush1.msra.mxu0 0.0
    %2718 = vmatprep.subr.mxu0 0.0
    %2719 = vmatpush1.msra.mxu0 0.0
    %2720 = vmatprep.subr.mxu0 0.0
    %2721 = vmatpush1.msra.mxu0 0.0
    %2722 = vmatprep.subr.mxu0 0.0
    %2723 = vmatpush1.msra.mxu0 0.0
    %2724 = vmatprep.subr.mxu0 0.0
    %2725 = vmatpush1.msra.mxu0 0.0
    %2726 = vmatprep.subr.mxu0 0.0
    %2727 = vmatpush1.msra.mxu0 0.0
    %2728 = vmatprep.subr.mxu0 0.0
    %2729 = vmatpush1.msra.mxu0 0.0
    %2730 = vmatprep.subr.mxu0 0.0
    %2731 = vmatpush1.msra.mxu0 0.0
    %2732 = vmatprep.subr.mxu0 0.0
    %2733 = vmatpush1.msra.mxu0 %v697
    %2734 = vmatprep.subr.mxu0 0.0
    %2735 = vmatpush1.msra.mxu0 %v696
    %2736 = vmatprep.subr.mxu0 0.0
    %2737 = vmatpush1.msra.mxu0 %v695
    %2738 = vmatprep.subr.mxu0 0.0
    %2739 = vmatpush1.msra.mxu0 %v694
    %2740 = vmatprep.subr.mxu0 0.0
    %2741 = vmatpush2.msra.mxu0 0.0
    %2742 = vmatprep.subr.mxu0 0.0
    %2743 = vmatpush2.msra.mxu0 0.0
    %2744 = vmatprep.subr.mxu0 0.0
    %2745 = vmatpush2.msra.mxu0 0.0
    %2746 = vmatprep.subr.mxu0 0.0
    %2747 = vmatpush2.msra.mxu0 0.0
    %2748 = vmatprep.subr.mxu0 0.0
    %2749 = vmatpush2.msra.mxu0 0.0
    %2750 = vmatprep.subr.mxu0 0.0
    %2751 = vmatpush2.msra.mxu0 0.0
    %2752 = vmatprep.subr.mxu0 0.0
    %2753 = vmatpush2.msra.mxu0 0.0
    %2754 = vmatprep.subr.mxu0 0.0
    %2755 = vmatpush2.msra.mxu0 0.0
    %2756 = vmatprep.subr.mxu0 0.0
    %2757 = vmatpush2.msra.mxu0 0.0
    %2758 = vmatprep.subr.mxu0 0.0
    %2759 = vmatpush2.msra.mxu0 0.0
    %2760 = vmatprep.subr.mxu0 0.0
    %2761 = vmatpush2.msra.mxu0 0.0
    %2762 = vmatprep.subr.mxu0 0.0
    %2763 = vmatpush2.msra.mxu0 0.0
    %2764 = vmatprep.subr.mxu0 0.0
    %2765 = vmatpush2.msra.mxu0 0.0
    %2766 = vmatprep.subr.mxu0 0.0
    %2767 = vmatpush2.msra.mxu0 0.0
    %2768 = vmatprep.subr.mxu0 0.0
    %2769 = vmatpush2.msra.mxu0 0.0
    %2770 = vmatprep.subr.mxu0 0.0
    %2771 = vmatpush2.msra.mxu0 0.0
    %2772 = vmatprep.mubr.f32.mxu0 0.0
    %2773 = vmatmul.mubr.f32.gmra.mxu0 %v2706
    %v2774 = vpop.f32.mrf.mxu0
    %v2775 = vadd.f32 0.0, %v2774
    %v2776 = vpop.f32.mrf.mxu0
    %2777 = vdwg.mxu0
    %2779 = vrot.lane.b32.xlu0 %v2705, 64
    %v2780 = vpop.permute.xlu0 %2779
    %v2781 = vsel %vm699, %v2780, 0
    %2783 = vmatprep.subr.mxu0 0.0
    %2784 = vmatpush1.msra.mxu0 0.0
    %2785 = vmatprep.subr.mxu0 0.0
    %2786 = vmatpush1.msra.mxu0 0.0
    %2787 = vmatprep.subr.mxu0 0.0
    %2788 = vmatpush1.msra.mxu0 0.0
    %2789 = vmatprep.subr.mxu0 0.0
    %2790 = vmatpush1.msra.mxu0 0.0
    %2791 = vmatprep.subr.mxu0 0.0
    %2792 = vmatpush1.msra.mxu0 0.0
    %2793 = vmatprep.subr.mxu0 0.0
    %2794 = vmatpush1.msra.mxu0 0.0
    %2795 = vmatprep.subr.mxu0 0.0
    %2796 = vmatpush1.msra.mxu0 0.0
    %2797 = vmatprep.subr.mxu0 0.0
    %2798 = vmatpush1.msra.mxu0 0.0
    %2799 = vmatprep.subr.mxu0 0.0
    %2800 = vmatpush1.msra.mxu0 0.0
    %2801 = vmatprep.subr.mxu0 0.0
    %2802 = vmatpush1.msra.mxu0 0.0
    %2803 = vmatprep.subr.mxu0 0.0
    %2804 = vmatpush1.msra.mxu0 0.0
    %2805 = vmatprep.subr.mxu0 0.0
    %2806 = vmatpush1.msra.mxu0 0.0
    %2807 = vmatprep.subr.mxu0 0.0
    %2808 = vmatpush1.msra.mxu0 %v693
    %2809 = vmatprep.subr.mxu0 0.0
    %2810 = vmatpush1.msra.mxu0 %v692
    %2811 = vmatprep.subr.mxu0 0.0
    %2812 = vmatpush1.msra.mxu0 %v691
    %2813 = vmatprep.subr.mxu0 0.0
    %2814 = vmatpush1.msra.mxu0 %v690
    %2815 = vmatprep.subr.mxu0 0.0
    %2816 = vmatpush2.msra.mxu0 0.0
    %2817 = vmatprep.subr.mxu0 0.0
    %2818 = vmatpush2.msra.mxu0 0.0
    %2819 = vmatprep.subr.mxu0 0.0
    %2820 = vmatpush2.msra.mxu0 0.0
    %2821 = vmatprep.subr.mxu0 0.0
    %2822 = vmatpush2.msra.mxu0 0.0
    %2823 = vmatprep.subr.mxu0 0.0
    %2824 = vmatpush2.msra.mxu0 0.0
    %2825 = vmatprep.subr.mxu0 0.0
    %2826 = vmatpush2.msra.mxu0 0.0
    %2827 = vmatprep.subr.mxu0 0.0
    %2828 = vmatpush2.msra.mxu0 0.0
    %2829 = vmatprep.subr.mxu0 0.0
    %2830 = vmatpush2.msra.mxu0 0.0
    %2831 = vmatprep.subr.mxu0 0.0
    %2832 = vmatpush2.msra.mxu0 0.0
    %2833 = vmatprep.subr.mxu0 0.0
    %2834 = vmatpush2.msra.mxu0 0.0
    %2835 = vmatprep.subr.mxu0 0.0
    %2836 = vmatpush2.msra.mxu0 0.0
    %2837 = vmatprep.subr.mxu0 0.0
    %2838 = vmatpush2.msra.mxu0 0.0
    %2839 = vmatprep.subr.mxu0 0.0
    %2840 = vmatpush2.msra.mxu0 0.0
    %2841 = vmatprep.subr.mxu0 0.0
    %2842 = vmatpush2.msra.mxu0 0.0
    %2843 = vmatprep.subr.mxu0 0.0
    %2844 = vmatpush2.msra.mxu0 0.0
    %2845 = vmatprep.subr.mxu0 0.0
    %2846 = vmatpush2.msra.mxu0 0.0
    %2847 = vmatprep.mubr.f32.mxu0 0.0
    %2848 = vmatmul.mubr.f32.gmra.mxu0 %v2781
    %v2849 = vpop.f32.mrf.mxu0
    %v2850 = vadd.f32 %v2775, %v2849
    %v2851 = vpop.f32.mrf.mxu0
    %2852 = vdwg.mxu0
    %v2853 = vadd.f32 %v2850, %v947
    %v2854 = vxor.u32 %v2853, 2147483648
    %v2855 = vmul.f32 %v2854, 1.442695
    %v2856 = vpow.pop %v2855
    %v2857 = vadd.f32 %v2856, 1.0
    %v2858 = vrcp.pop %v2857
    %v2859 = vmul.f32 1.0, %v2858
    %v2860 = vtanh.pop %v2853
    %v2861 = vmul.f32 %v2859, %v2599
    %2863 = vrot.lane.b32.xlu0 %v2860, 32
    %v2864 = vpop.permute.xlu0 %2863
    %v2866 = vmul.f32 %v2859, %v2864
    %2868 = vrot.lane.b32.xlu0 %v2866, 32
    %v2869 = vpop.permute.xlu0 %2868
    %v2871 = vadd.f32 %v2861, %v2869
    %v2872 = vtanh.pop %v2871
    %2874 = vrot.lane.b32.xlu0 %v2872, 32
    %v2875 = vpop.permute.xlu0 %2874
    %v2877 = vmul.f32 %v2859, %v2875
    %v2878 = vld [vmem:[#allocation2] sm:$0xff]
    %v2879 = vld [vmem:[#allocation2 + $0x8] sm:$0xff]
    %v2880 = vld [vmem:[#allocation2 + $0x10] sm:$0xff]
    %v2881 = vld [vmem:[#allocation2 + $0x18] sm:$0xff]
    %v2882 = vld [vmem:[#allocation2 + $0x20] sm:$0xff]
    %v2883 = vld [vmem:[#allocation2 + $0x28] sm:$0xff]
    %v2884 = vld [vmem:[#allocation2 + $0x30] sm:$0xff]
    %v2885 = vld [vmem:[%s19] sm:$0xff]
    %v2886 = vld [vmem:[%s19 + $0x8] sm:$0xff]
    %v2887 = vld [vmem:[%s19 + $0x10] sm:$0xff]
    %v2888 = vld [vmem:[%s19 + $0x18] sm:$0xff]
    %v2889 = vld [vmem:[%s20] sm:$0x1]
    %v2891 = vlaneseq
    %v2892 = vshrl.u32 %v2891, 7
    %v2893 = vsub.s32 0, %v2892
    %v2894 = vrot.slane %v2889, %v2893
    %v2897 = vsel %vm699, %v2878, 0
    %v2900 = vsel %vm699, %v2879, 0
    %v2903 = vsel %vm699, %v2880, 0
    %v2906 = vsel %vm699, %v2881, 0
    %v2909 = vsel %vm699, %v2882, 0
    %v2912 = vsel %vm699, %v2883, 0
    %v2915 = vsel %vm699, %v2884, 0
    %2917 = vmatprep.subr.mxu0 0.0
    %2918 = vmatpush1.msra.mxu0 0.0
    %2919 = vmatprep.subr.mxu0 0.0
    %2920 = vmatpush1.msra.mxu0 0.0
    %2921 = vmatprep.subr.mxu0 0.0
    %2922 = vmatpush1.msra.mxu0 0.0
    %2923 = vmatprep.subr.mxu0 0.0
    %2924 = vmatpush1.msra.mxu0 0.0
    %2925 = vmatprep.subr.mxu0 0.0
    %2926 = vmatpush1.msra.mxu0 0.0
    %2927 = vmatprep.subr.mxu0 0.0
    %2928 = vmatpush1.msra.mxu0 0.0
    %2929 = vmatprep.subr.mxu0 0.0
    %2930 = vmatpush1.msra.mxu0 0.0
    %2931 = vmatprep.subr.mxu0 0.0
    %2932 = vmatpush1.msra.mxu0 0.0
    %2933 = vmatprep.subr.mxu0 0.0
    %2934 = vmatpush1.msra.mxu0 0.0
    %2935 = vmatprep.subr.mxu0 0.0
    %2936 = vmatpush1.msra.mxu0 0.0
    %2937 = vmatprep.subr.mxu0 0.0
    %2938 = vmatpush1.msra.mxu0 0.0
    %2939 = vmatprep.subr.mxu0 0.0
    %2940 = vmatpush1.msra.mxu0 0.0
    %2941 = vmatprep.subr.mxu0 0.0
    %2942 = vmatpush1.msra.mxu0 %v2888
    %2943 = vmatprep.subr.mxu0 0.0
    %2944 = vmatpush1.msra.mxu0 %v2887
    %2945 = vmatprep.subr.mxu0 0.0
    %2946 = vmatpush1.msra.mxu0 %v2886
    %2947 = vmatprep.subr.mxu0 0.0
    %2948 = vmatpush1.msra.mxu0 %v2885
    %2949 = vmatprep.subr.mxu0 0.0
    %2950 = vmatpush2.msra.mxu0 0.0
    %2951 = vmatprep.subr.mxu0 0.0
    %2952 = vmatpush2.msra.mxu0 0.0
    %2953 = vmatprep.subr.mxu0 0.0
    %2954 = vmatpush2.msra.mxu0 0.0
    %2955 = vmatprep.subr.mxu0 0.0
    %2956 = vmatpush2.msra.mxu0 0.0
    %2957 = vmatprep.subr.mxu0 0.0
    %2958 = vmatpush2.msra.mxu0 0.0
    %2959 = vmatprep.subr.mxu0 0.0
    %2960 = vmatpush2.msra.mxu0 0.0
    %2961 = vmatprep.subr.mxu0 0.0
    %2962 = vmatpush2.msra.mxu0 0.0
    %2963 = vmatprep.subr.mxu0 0.0
    %2964 = vmatpush2.msra.mxu0 0.0
    %2965 = vmatprep.subr.mxu0 0.0
    %2966 = vmatpush2.msra.mxu0 0.0
    %2967 = vmatprep.subr.mxu0 0.0
    %2968 = vmatpush2.msra.mxu0 0.0
    %2969 = vmatprep.subr.mxu0 0.0
    %2970 = vmatpush2.msra.mxu0 0.0
    %2971 = vmatprep.subr.mxu0 0.0
    %2972 = vmatpush2.msra.mxu0 0.0
    %2973 = vmatprep.subr.mxu0 0.0
    %2974 = vmatpush2.msra.mxu0 0.0
    %2975 = vmatprep.subr.mxu0 0.0
    %2976 = vmatpush2.msra.mxu0 0.0
    %2977 = vmatprep.subr.mxu0 0.0
    %2978 = vmatpush2.msra.mxu0 0.0
    %2979 = vmatprep.subr.mxu0 0.0
    %2980 = vmatpush2.msra.mxu0 0.0
    %2981 = vmatprep.mubr.f32.mxu0 0.0
    %2982 = vmatmul.mubr.f32.gmra.mxu0 %v2897
    %v2983 = vpop.f32.mrf.mxu0
    %v2984 = vadd.f32 %v2894, %v2983
    %v2985 = vpop.f32.mrf.mxu0
    %2986 = vmatprep.mubr.f32.mxu0 0.0
    %2987 = vmatmul.mubr.f32.gmra.mxu0 %v2900
    %v2988 = vpop.f32.mrf.mxu0
    %v2989 = vadd.f32 %v2894, %v2988
    %v2990 = vpop.f32.mrf.mxu0
    %2991 = vmatprep.mubr.f32.mxu0 0.0
    %2992 = vmatmul.mubr.f32.gmra.mxu0 %v2903
    %v2993 = vpop.f32.mrf.mxu0
    %v2994 = vadd.f32 %v2894, %v2993
    %v2995 = vpop.f32.mrf.mxu0
    %2996 = vmatprep.mubr.f32.mxu0 0.0
    %2997 = vmatmul.mubr.f32.gmra.mxu0 %v2906
    %v2998 = vpop.f32.mrf.mxu0
    %v2999 = vadd.f32 %v2894, %v2998
    %v3000 = vpop.f32.mrf.mxu0
    %3001 = vmatprep.mubr.f32.mxu0 0.0
    %3002 = vmatmul.mubr.f32.gmra.mxu0 %v2909
    %v3003 = vpop.f32.mrf.mxu0
    %v3004 = vadd.f32 %v2894, %v3003
    %v3005 = vpop.f32.mrf.mxu0
    %3006 = vmatprep.mubr.f32.mxu0 0.0
    %3007 = vmatmul.mubr.f32.gmra.mxu0 %v2912
    %v3008 = vpop.f32.mrf.mxu0
    %v3009 = vadd.f32 %v2894, %v3008
    %v3010 = vpop.f32.mrf.mxu0
    %3011 = vmatprep.mubr.f32.mxu0 0.0
    %3012 = vmatmul.mubr.f32.gmra.mxu0 %v2915
    %v3013 = vpop.f32.mrf.mxu0
    %v3014 = vadd.f32 %v2894, %v3013
    %v3015 = vpop.f32.mrf.mxu0
    %3016 = vdwg.mxu0
    %3017 = vst [vmem:[#allocation29] sm:$0xff] %v2984
    %3018 = vst [vmem:[#allocation29 + $0x8] sm:$0xff] %v2989
    %3019 = vst [vmem:[#allocation29 + $0x10] sm:$0xff] %v2994
    %3020 = vst [vmem:[#allocation29 + $0x18] sm:$0xff] %v2999
    %3021 = vst [vmem:[#allocation29 + $0x20] sm:$0xff] %v3004
    %3022 = vst [vmem:[#allocation29 + $0x28] sm:$0xff] %v3009
    %3023 = vst [vmem:[#allocation29 + $0x30] sm:$0xff] %v3014
    %v3024 = vld [vmem:[#allocation22] sm:$0xff]
    %v3025 = vld [vmem:[#allocation22 + $0x8] sm:$0xff]
    %v3026 = vld [vmem:[#allocation22 + $0x10] sm:$0xff]
    %v3027 = vld [vmem:[#allocation22 + $0x18] sm:$0xff]
    %v3028 = vld [vmem:[%s12] sm:$0xff]
    %v3029 = vld [vmem:[%s12 + $0x8] sm:$0xff]
    %v3030 = vld [vmem:[%s12 + $0x10] sm:$0xff]
    %v3031 = vld [vmem:[%s12 + $0x18] sm:$0xff]
    %v3032 = vld [vmem:[%s12 + $0x20] sm:$0xff]
    %v3033 = vld [vmem:[%s12 + $0x28] sm:$0xff]
    %v3034 = vld [vmem:[%s12 + $0x30] sm:$0xff]
    %v3035 = vld [vmem:[%s12 + $0x38] sm:$0xff]
    %v3036 = vld [vmem:[%s13] sm:$0x1]
    %v3037 = vld [vmem:[%s13 + $0x1] sm:$0x1]
    %v3038 = vld [vmem:[%s14] sm:$0xff]
    %v3039 = vld [vmem:[%s14 + $0x8] sm:$0xff]
    %v3040 = vld [vmem:[%s14 + $0x10] sm:$0xff]
    %v3041 = vld [vmem:[%s14 + $0x18] sm:$0xff]
    %v3042 = vld [vmem:[%s14 + $0x20] sm:$0xff]
    %v3043 = vld [vmem:[%s14 + $0x28] sm:$0xff]
    %v3044 = vld [vmem:[%s14 + $0x30] sm:$0xff]
    %v3045 = vld [vmem:[%s14 + $0x38] sm:$0xff]
    %v3046 = vld [vmem:[%s14 + $0x40] sm:$0xff]
    %v3047 = vld [vmem:[%s14 + $0x48] sm:$0xff]
    %v3048 = vld [vmem:[%s14 + $0x50] sm:$0xff]
    %v3049 = vld [vmem:[%s14 + $0x58] sm:$0xff]
    %v3050 = vld [vmem:[%s14 + $0x60] sm:$0xff]
    %v3051 = vld [vmem:[%s14 + $0x68] sm:$0xff]
    %v3052 = vld [vmem:[%s14 + $0x70] sm:$0xff]
    %v3053 = vld [vmem:[%s14 + $0x78] sm:$0xff]
    %v3054 = vld [vmem:[#allocation24] sm:$0xff]
    %v3055 = vld [vmem:[#allocation24 + $0x8] sm:$0xff]
    %v3056 = vld [vmem:[#allocation24 + $0x10] sm:$0xff]
    %v3057 = vld [vmem:[#allocation24 + $0x18] sm:$0xff]
    %v3058 = vld [vmem:[#allocation24 + $0x20] sm:$0xff]
    %v3059 = vld [vmem:[#allocation24 + $0x28] sm:$0xff]
    %v3060 = vld [vmem:[#allocation24 + $0x30] sm:$0xff]
    %v3061 = vld [vmem:[#allocation24 + $0x38] sm:$0xff]
    %v3062 = vld [vmem:[#allocation25] sm:$0x1]
    %v3063 = vld [vmem:[#allocation25 + $0x1] sm:$0x1]
    %v3065 = vlaneseq
    %v3066 = vshrl.u32 %v3065, 7
    %v3067 = vsub.s32 0, %v3066
    %v3068 = vrot.slane %v3036, %v3067
    %v3071 = vsel %vm541, %v468, 0
    %v3074 = vsel %vm541, %v469, 0
    %v3077 = vsel %vm541, %v470, 0
    %v3080 = vsel %vm541, %v471, 0
    %v3083 = vsel %vm541, %v472, 0
    %v3086 = vsel %vm541, %v473, 0
    %v3089 = vsel %vm541, %v474, 0
    %v3092 = vsel %vm541, %v475, 0
    %3094 = vmatprep.subr.mxu0 0.0
    %3095 = vmatpush1.msra.mxu0 0.0
    %3096 = vmatprep.subr.mxu0 0.0
    %3097 = vmatpush1.msra.mxu0 0.0
    %3098 = vmatprep.subr.mxu0 0.0
    %3099 = vmatpush1.msra.mxu0 0.0
    %3100 = vmatprep.subr.mxu0 0.0
    %3101 = vmatpush1.msra.mxu0 0.0
    %3102 = vmatprep.subr.mxu0 0.0
    %3103 = vmatpush1.msra.mxu0 0.0
    %3104 = vmatprep.subr.mxu0 0.0
    %3105 = vmatpush1.msra.mxu0 0.0
    %3106 = vmatprep.subr.mxu0 0.0
    %3107 = vmatpush1.msra.mxu0 0.0
    %3108 = vmatprep.subr.mxu0 0.0
    %3109 = vmatpush1.msra.mxu0 0.0
    %3110 = vmatprep.subr.mxu0 0.0
    %3111 = vmatpush1.msra.mxu0 0.0
    %3112 = vmatprep.subr.mxu0 0.0
    %3113 = vmatpush1.msra.mxu0 0.0
    %3114 = vmatprep.subr.mxu0 0.0
    %3115 = vmatpush1.msra.mxu0 0.0
    %3116 = vmatprep.subr.mxu0 0.0
    %3117 = vmatpush1.msra.mxu0 0.0
    %3118 = vmatprep.subr.mxu0 0.0
    %3119 = vmatpush1.msra.mxu0 0.0
    %3120 = vmatprep.subr.mxu0 0.0
    %3121 = vmatpush1.msra.mxu0 0.0
    %3122 = vmatprep.subr.mxu0 0.0
    %3123 = vmatpush1.msra.mxu0 %v3025
    %3124 = vmatprep.subr.mxu0 0.0
    %3125 = vmatpush1.msra.mxu0 %v3024
    %3126 = vmatprep.subr.mxu0 0.0
    %3127 = vmatpush2.msra.mxu0 0.0
    %3128 = vmatprep.subr.mxu0 0.0
    %3129 = vmatpush2.msra.mxu0 0.0
    %3130 = vmatprep.subr.mxu0 0.0
    %3131 = vmatpush2.msra.mxu0 0.0
    %3132 = vmatprep.subr.mxu0 0.0
    %3133 = vmatpush2.msra.mxu0 0.0
    %3134 = vmatprep.subr.mxu0 0.0
    %3135 = vmatpush2.msra.mxu0 0.0
    %3136 = vmatprep.subr.mxu0 0.0
    %3137 = vmatpush2.msra.mxu0 0.0
    %3138 = vmatprep.subr.mxu0 0.0
    %3139 = vmatpush2.msra.mxu0 0.0
    %3140 = vmatprep.subr.mxu0 0.0
    %3141 = vmatpush2.msra.mxu0 0.0
    %3142 = vmatprep.subr.mxu0 0.0
    %3143 = vmatpush2.msra.mxu0 0.0
    %3144 = vmatprep.subr.mxu0 0.0
    %3145 = vmatpush2.msra.mxu0 0.0
    %3146 = vmatprep.subr.mxu0 0.0
    %3147 = vmatpush2.msra.mxu0 0.0
    %3148 = vmatprep.subr.mxu0 0.0
    %3149 = vmatpush2.msra.mxu0 0.0
    %3150 = vmatprep.subr.mxu0 0.0
    %3151 = vmatpush2.msra.mxu0 0.0
    %3152 = vmatprep.subr.mxu0 0.0
    %3153 = vmatpush2.msra.mxu0 0.0
    %3154 = vmatprep.subr.mxu0 0.0
    %3155 = vmatpush2.msra.mxu0 0.0
    %3156 = vmatprep.subr.mxu0 0.0
    %3157 = vmatpush2.msra.mxu0 0.0
    %3158 = vmatprep.mubr.f32.mxu0 0.0
    %3159 = vmatmul.mubr.f32.gmra.mxu0 %v3071
    %v3160 = vpop.f32.mrf.mxu0
    %v3161 = vadd.f32 %v3068, %v3160
    %v3162 = vpop.f32.mrf.mxu0
    %3163 = vmatprep.mubr.f32.mxu0 0.0
    %3164 = vmatmul.mubr.f32.gmra.mxu0 %v3074
    %v3165 = vpop.f32.mrf.mxu0
    %v3166 = vadd.f32 %v3068, %v3165
    %v3167 = vpop.f32.mrf.mxu0
    %3168 = vmatprep.mubr.f32.mxu0 0.0
    %3169 = vmatmul.mubr.f32.gmra.mxu0 %v3077
    %v3170 = vpop.f32.mrf.mxu0
    %v3171 = vadd.f32 %v3068, %v3170
    %v3172 = vpop.f32.mrf.mxu0
    %3173 = vmatprep.mubr.f32.mxu0 0.0
    %3174 = vmatmul.mubr.f32.gmra.mxu0 %v3080
    %v3175 = vpop.f32.mrf.mxu0
    %v3176 = vadd.f32 %v3068, %v3175
    %v3177 = vpop.f32.mrf.mxu0
    %3178 = vmatprep.mubr.f32.mxu0 0.0
    %3179 = vmatmul.mubr.f32.gmra.mxu0 %v3083
    %v3180 = vpop.f32.mrf.mxu0
    %v3181 = vadd.f32 %v3068, %v3180
    %v3182 = vpop.f32.mrf.mxu0
    %3183 = vmatprep.mubr.f32.mxu0 0.0
    %3184 = vmatmul.mubr.f32.gmra.mxu0 %v3086
    %v3185 = vpop.f32.mrf.mxu0
    %v3186 = vadd.f32 %v3068, %v3185
    %v3187 = vpop.f32.mrf.mxu0
    %3188 = vmatprep.mubr.f32.mxu0 0.0
    %3189 = vmatmul.mubr.f32.gmra.mxu0 %v3089
    %v3190 = vpop.f32.mrf.mxu0
    %v3191 = vadd.f32 %v3068, %v3190
    %v3192 = vpop.f32.mrf.mxu0
    %3193 = vmatprep.mubr.f32.mxu0 0.0
    %3194 = vmatmul.mubr.f32.gmra.mxu0 %v3092
    %v3195 = vpop.f32.mrf.mxu0
    %v3196 = vadd.f32 %v3068, %v3195
    %v3197 = vpop.f32.mrf.mxu0
    %3198 = vdwg.mxu0
    %v3200 = vlaneseq
    %v3201 = vshrl.u32 %v3200, 7
    %v3202 = vsub.s32 0, %v3201
    %v3203 = vrot.slane %v3037, %v3202
    %3205 = vmatprep.subr.mxu0 0.0
    %3206 = vmatpush1.msra.mxu0 0.0
    %3207 = vmatprep.subr.mxu0 0.0
    %3208 = vmatpush1.msra.mxu0 0.0
    %3209 = vmatprep.subr.mxu0 0.0
    %3210 = vmatpush1.msra.mxu0 0.0
    %3211 = vmatprep.subr.mxu0 0.0
    %3212 = vmatpush1.msra.mxu0 0.0
    %3213 = vmatprep.subr.mxu0 0.0
    %3214 = vmatpush1.msra.mxu0 0.0
    %3215 = vmatprep.subr.mxu0 0.0
    %3216 = vmatpush1.msra.mxu0 0.0
    %3217 = vmatprep.subr.mxu0 0.0
    %3218 = vmatpush1.msra.mxu0 0.0
    %3219 = vmatprep.subr.mxu0 0.0
    %3220 = vmatpush1.msra.mxu0 0.0
    %3221 = vmatprep.subr.mxu0 0.0
    %3222 = vmatpush1.msra.mxu0 0.0
    %3223 = vmatprep.subr.mxu0 0.0
    %3224 = vmatpush1.msra.mxu0 0.0
    %3225 = vmatprep.subr.mxu0 0.0
    %3226 = vmatpush1.msra.mxu0 0.0
    %3227 = vmatprep.subr.mxu0 0.0
    %3228 = vmatpush1.msra.mxu0 0.0
    %3229 = vmatprep.subr.mxu0 0.0
    %3230 = vmatpush1.msra.mxu0 0.0
    %3231 = vmatprep.subr.mxu0 0.0
    %3232 = vmatpush1.msra.mxu0 0.0
    %3233 = vmatprep.subr.mxu0 0.0
    %3234 = vmatpush1.msra.mxu0 %v3027
    %3235 = vmatprep.subr.mxu0 0.0
    %3236 = vmatpush1.msra.mxu0 %v3026
    %3237 = vmatprep.subr.mxu0 0.0
    %3238 = vmatpush2.msra.mxu0 0.0
    %3239 = vmatprep.subr.mxu0 0.0
    %3240 = vmatpush2.msra.mxu0 0.0
    %3241 = vmatprep.subr.mxu0 0.0
    %3242 = vmatpush2.msra.mxu0 0.0
    %3243 = vmatprep.subr.mxu0 0.0
    %3244 = vmatpush2.msra.mxu0 0.0
    %3245 = vmatprep.subr.mxu0 0.0
    %3246 = vmatpush2.msra.mxu0 0.0
    %3247 = vmatprep.subr.mxu0 0.0
    %3248 = vmatpush2.msra.mxu0 0.0
    %3249 = vmatprep.subr.mxu0 0.0
    %3250 = vmatpush2.msra.mxu0 0.0
    %3251 = vmatprep.subr.mxu0 0.0
    %3252 = vmatpush2.msra.mxu0 0.0
    %3253 = vmatprep.subr.mxu0 0.0
    %3254 = vmatpush2.msra.mxu0 0.0
    %3255 = vmatprep.subr.mxu0 0.0
    %3256 = vmatpush2.msra.mxu0 0.0
    %3257 = vmatprep.subr.mxu0 0.0
    %3258 = vmatpush2.msra.mxu0 0.0
    %3259 = vmatprep.subr.mxu0 0.0
    %3260 = vmatpush2.msra.mxu0 0.0
    %3261 = vmatprep.subr.mxu0 0.0
    %3262 = vmatpush2.msra.mxu0 0.0
    %3263 = vmatprep.subr.mxu0 0.0
    %3264 = vmatpush2.msra.mxu0 0.0
    %3265 = vmatprep.subr.mxu0 0.0
    %3266 = vmatpush2.msra.mxu0 0.0
    %3267 = vmatprep.subr.mxu0 0.0
    %3268 = vmatpush2.msra.mxu0 0.0
    %3269 = vmatprep.mubr.f32.mxu0 0.0
    %3270 = vmatmul.mubr.f32.gmra.mxu0 %v3071
    %v3271 = vpop.f32.mrf.mxu0
    %v3272 = vadd.f32 %v3203, %v3271
    %v3273 = vpop.f32.mrf.mxu0
    %3274 = vmatprep.mubr.f32.mxu0 0.0
    %3275 = vmatmul.mubr.f32.gmra.mxu0 %v3074
    %v3276 = vpop.f32.mrf.mxu0
    %v3277 = vadd.f32 %v3203, %v3276
    %v3278 = vpop.f32.mrf.mxu0
    %3279 = vmatprep.mubr.f32.mxu0 0.0
    %3280 = vmatmul.mubr.f32.gmra.mxu0 %v3077
    %v3281 = vpop.f32.mrf.mxu0
    %v3282 = vadd.f32 %v3203, %v3281
    %v3283 = vpop.f32.mrf.mxu0
    %3284 = vmatprep.mubr.f32.mxu0 0.0
    %3285 = vmatmul.mubr.f32.gmra.mxu0 %v3080
    %v3286 = vpop.f32.mrf.mxu0
    %v3287 = vadd.f32 %v3203, %v3286
    %v3288 = vpop.f32.mrf.mxu0
    %3289 = vmatprep.mubr.f32.mxu0 0.0
    %3290 = vmatmul.mubr.f32.gmra.mxu0 %v3083
    %v3291 = vpop.f32.mrf.mxu0
    %v3292 = vadd.f32 %v3203, %v3291
    %v3293 = vpop.f32.mrf.mxu0
    %3294 = vmatprep.mubr.f32.mxu0 0.0
    %3295 = vmatmul.mubr.f32.gmra.mxu0 %v3086
    %v3296 = vpop.f32.mrf.mxu0
    %v3297 = vadd.f32 %v3203, %v3296
    %v3298 = vpop.f32.mrf.mxu0
    %3299 = vmatprep.mubr.f32.mxu0 0.0
    %3300 = vmatmul.mubr.f32.gmra.mxu0 %v3089
    %v3301 = vpop.f32.mrf.mxu0
    %v3302 = vadd.f32 %v3203, %v3301
    %v3303 = vpop.f32.mrf.mxu0
    %3304 = vmatprep.mubr.f32.mxu0 0.0
    %3305 = vmatmul.mubr.f32.gmra.mxu0 %v3092
    %v3306 = vpop.f32.mrf.mxu0
    %v3307 = vadd.f32 %v3203, %v3306
    %v3308 = vpop.f32.mrf.mxu0
    %3309 = vdwg.mxu0
    %3310 = vmatprep.subr.mxu0 0.0
    %3311 = vmatpush1.msra.mxu0 0.0
    %3312 = vmatprep.subr.mxu0 0.0
    %3313 = vmatpush1.msra.mxu0 0.0
    %3314 = vmatprep.subr.mxu0 0.0
    %3315 = vmatpush1.msra.mxu0 0.0
    %3316 = vmatprep.subr.mxu0 0.0
    %3317 = vmatpush1.msra.mxu0 0.0
    %3318 = vmatprep.subr.mxu0 0.0
    %3319 = vmatpush1.msra.mxu0 0.0
    %3320 = vmatprep.subr.mxu0 0.0
    %3321 = vmatpush1.msra.mxu0 0.0
    %3322 = vmatprep.subr.mxu0 0.0
    %3323 = vmatpush1.msra.mxu0 0.0
    %3324 = vmatprep.subr.mxu0 0.0
    %3325 = vmatpush1.msra.mxu0 0.0
    %3326 = vmatprep.subr.mxu0 0.0
    %3327 = vmatpush1.msra.mxu0 0.0
    %3328 = vmatprep.subr.mxu0 0.0
    %3329 = vmatpush1.msra.mxu0 0.0
    %3330 = vmatprep.subr.mxu0 0.0
    %3331 = vmatpush1.msra.mxu0 0.0
    %3332 = vmatprep.subr.mxu0 0.0
    %3333 = vmatpush1.msra.mxu0 0.0
    %3334 = vmatprep.subr.mxu0 0.0
    %3335 = vmatpush1.msra.mxu0 %v3031
    %3336 = vmatprep.subr.mxu0 0.0
    %3337 = vmatpush1.msra.mxu0 %v3030
    %3338 = vmatprep.subr.mxu0 0.0
    %3339 = vmatpush1.msra.mxu0 %v3029
    %3340 = vmatprep.subr.mxu0 0.0
    %3341 = vmatpush1.msra.mxu0 %v3028
    %3342 = vmatprep.subr.mxu0 0.0
    %3343 = vmatpush2.msra.mxu0 0.0
    %3344 = vmatprep.subr.mxu0 0.0
    %3345 = vmatpush2.msra.mxu0 0.0
    %3346 = vmatprep.subr.mxu0 0.0
    %3347 = vmatpush2.msra.mxu0 0.0
    %3348 = vmatprep.subr.mxu0 0.0
    %3349 = vmatpush2.msra.mxu0 0.0
    %3350 = vmatprep.subr.mxu0 0.0
    %3351 = vmatpush2.msra.mxu0 0.0
    %3352 = vmatprep.subr.mxu0 0.0
    %3353 = vmatpush2.msra.mxu0 0.0
    %3354 = vmatprep.subr.mxu0 0.0
    %3355 = vmatpush2.msra.mxu0 0.0
    %3356 = vmatprep.subr.mxu0 0.0
    %3357 = vmatpush2.msra.mxu0 0.0
    %3358 = vmatprep.subr.mxu0 0.0
    %3359 = vmatpush2.msra.mxu0 0.0
    %3360 = vmatprep.subr.mxu0 0.0
    %3361 = vmatpush2.msra.mxu0 0.0
    %3362 = vmatprep.subr.mxu0 0.0
    %3363 = vmatpush2.msra.mxu0 0.0
    %3364 = vmatprep.subr.mxu0 0.0
    %3365 = vmatpush2.msra.mxu0 0.0
    %3366 = vmatprep.subr.mxu0 0.0
    %3367 = vmatpush2.msra.mxu0 0.0
    %3368 = vmatprep.subr.mxu0 0.0
    %3369 = vmatpush2.msra.mxu0 0.0
    %3370 = vmatprep.subr.mxu0 0.0
    %3371 = vmatpush2.msra.mxu0 0.0
    %3372 = vmatprep.subr.mxu0 0.0
    %3373 = vmatpush2.msra.mxu0 0.0
    %3374 = vmatprep.mubr.f32.mxu0 0.0
    %3375 = vmatmul.mubr.f32.gmra.mxu0 %v2781
    %v3376 = vpop.f32.mrf.mxu0
    %v3377 = vadd.f32 0.0, %v3376
    %v3378 = vpop.f32.mrf.mxu0
    %3379 = vdwg.mxu0
    %v3380 = vadd.f32 %v3161, %v3377
    %3382 = vrot.lane.b32.xlu0 %v2877, 64
    %v3383 = vpop.permute.xlu0 %3382
    %v3384 = vsel %vm699, %v3383, 0
    %3386 = vmatprep.subr.mxu0 0.0
    %3387 = vmatpush1.msra.mxu0 0.0
    %3388 = vmatprep.subr.mxu0 0.0
    %3389 = vmatpush1.msra.mxu0 0.0
    %3390 = vmatprep.subr.mxu0 0.0
    %3391 = vmatpush1.msra.mxu0 0.0
    %3392 = vmatprep.subr.mxu0 0.0
    %3393 = vmatpush1.msra.mxu0 0.0
    %3394 = vmatprep.subr.mxu0 0.0
    %3395 = vmatpush1.msra.mxu0 0.0
    %3396 = vmatprep.subr.mxu0 0.0
    %3397 = vmatpush1.msra.mxu0 0.0
    %3398 = vmatprep.subr.mxu0 0.0
    %3399 = vmatpush1.msra.mxu0 0.0
    %3400 = vmatprep.subr.mxu0 0.0
    %3401 = vmatpush1.msra.mxu0 0.0
    %3402 = vmatprep.subr.mxu0 0.0
    %3403 = vmatpush1.msra.mxu0 0.0
    %3404 = vmatprep.subr.mxu0 0.0
    %3405 = vmatpush1.msra.mxu0 0.0
    %3406 = vmatprep.subr.mxu0 0.0
    %3407 = vmatpush1.msra.mxu0 0.0
    %3408 = vmatprep.subr.mxu0 0.0
    %3409 = vmatpush1.msra.mxu0 0.0
    %3410 = vmatprep.subr.mxu0 0.0
    %3411 = vmatpush1.msra.mxu0 %v3035
    %3412 = vmatprep.subr.mxu0 0.0
    %3413 = vmatpush1.msra.mxu0 %v3034
    %3414 = vmatprep.subr.mxu0 0.0
    %3415 = vmatpush1.msra.mxu0 %v3033
    %3416 = vmatprep.subr.mxu0 0.0
    %3417 = vmatpush1.msra.mxu0 %v3032
    %3418 = vmatprep.subr.mxu0 0.0
    %3419 = vmatpush2.msra.mxu0 0.0
    %3420 = vmatprep.subr.mxu0 0.0
    %3421 = vmatpush2.msra.mxu0 0.0
    %3422 = vmatprep.subr.mxu0 0.0
    %3423 = vmatpush2.msra.mxu0 0.0
    %3424 = vmatprep.subr.mxu0 0.0
    %3425 = vmatpush2.msra.mxu0 0.0
    %3426 = vmatprep.subr.mxu0 0.0
    %3427 = vmatpush2.msra.mxu0 0.0
    %3428 = vmatprep.subr.mxu0 0.0
    %3429 = vmatpush2.msra.mxu0 0.0
    %3430 = vmatprep.subr.mxu0 0.0
    %3431 = vmatpush2.msra.mxu0 0.0
    %3432 = vmatprep.subr.mxu0 0.0
    %3433 = vmatpush2.msra.mxu0 0.0
    %3434 = vmatprep.subr.mxu0 0.0
    %3435 = vmatpush2.msra.mxu0 0.0
    %3436 = vmatprep.subr.mxu0 0.0
    %3437 = vmatpush2.msra.mxu0 0.0
    %3438 = vmatprep.subr.mxu0 0.0
    %3439 = vmatpush2.msra.mxu0 0.0
    %3440 = vmatprep.subr.mxu0 0.0
    %3441 = vmatpush2.msra.mxu0 0.0
    %3442 = vmatprep.subr.mxu0 0.0
    %3443 = vmatpush2.msra.mxu0 0.0
    %3444 = vmatprep.subr.mxu0 0.0
    %3445 = vmatpush2.msra.mxu0 0.0
    %3446 = vmatprep.subr.mxu0 0.0
    %3447 = vmatpush2.msra.mxu0 0.0
    %3448 = vmatprep.subr.mxu0 0.0
    %3449 = vmatpush2.msra.mxu0 0.0
    %3450 = vmatprep.mubr.f32.mxu0 0.0
    %3451 = vmatmul.mubr.f32.gmra.mxu0 %v3384
    %v3452 = vpop.f32.mrf.mxu0
    %v3453 = vadd.f32 0.0, %v3452
    %v3454 = vpop.f32.mrf.mxu0
    %3455 = vdwg.mxu0
    %v3456 = vadd.f32 %v3307, %v3453
    %v3457 = vxor.u32 %v3380, 2147483648
    %v3458 = vmul.f32 %v3457, 1.442695
    %v3459 = vpow.pop %v3458
    %v3460 = vadd.f32 %v3459, 1.0
    %v3461 = vrcp.pop %v3460
    %v3462 = vmul.f32 1.0, %v3461
    %v3463 = vtanh.pop %v3380
    %v3464 = vmul.f32 %v3462, %v2699
    %3466 = vrot.lane.b32.xlu0 %v3463, 32
    %v3467 = vpop.permute.xlu0 %3466
    %v3469 = vmul.f32 %v3462, %v3467
    %3471 = vrot.lane.b32.xlu0 %v3469, 32
    %v3472 = vpop.permute.xlu0 %3471
    %v3474 = vadd.f32 %v3464, %v3472
    %v3475 = vtanh.pop %v3474
    %3477 = vrot.lane.b32.xlu0 %v3475, 32
    %v3478 = vpop.permute.xlu0 %3477
    %v3480 = vmul.f32 %v3462, %v3478
    %v3481 = vxor.u32 %v3456, 2147483648
    %v3482 = vmul.f32 %v3481, 1.442695
    %v3483 = vpow.pop %v3482
    %v3484 = vadd.f32 %v3483, 1.0
    %v3485 = vrcp.pop %v3484
    %v3486 = vmul.f32 1.0, %v3485
    %v3487 = vtanh.pop %v3456
    %v3488 = vmul.f32 %v3486, %v2871
    %3490 = vrot.lane.b32.xlu0 %v3487, 32
    %v3491 = vpop.permute.xlu0 %3490
    %v3493 = vmul.f32 %v3486, %v3491
    %3495 = vrot.lane.b32.xlu0 %v3493, 32
    %v3496 = vpop.permute.xlu0 %3495
    %v3498 = vadd.f32 %v3488, %v3496
    %v3499 = vtanh.pop %v3498
    %3501 = vrot.lane.b32.xlu0 %v3499, 32
    %v3502 = vpop.permute.xlu0 %3501
    %v3504 = vmul.f32 %v3486, %v3502
    %3506 = vrot.lane.b32.xlu0 %v3480, 64
    %v3507 = vpop.permute.xlu0 %3506
    %3509 = vst.msk [vmem:[#allocation3] sm:$0xff] %vm699, %v3507
    %3511 = vrot.lane.b32.xlu0 %v3504, 64
    %v3512 = vpop.permute.xlu0 %3511
    %3514 = vst.msk [vmem:[#allocation4 + $0x38] sm:$0xff] %vm699, %v3512
    %v3515 = vsel %vm699, %v3507, 0
    %3517 = vmatprep.subr.mxu0 0.0
    %3518 = vmatpush1.msra.mxu0 0.0
    %3519 = vmatprep.subr.mxu0 0.0
    %3520 = vmatpush1.msra.mxu0 0.0
    %3521 = vmatprep.subr.mxu0 0.0
    %3522 = vmatpush1.msra.mxu0 0.0
    %3523 = vmatprep.subr.mxu0 0.0
    %3524 = vmatpush1.msra.mxu0 0.0
    %3525 = vmatprep.subr.mxu0 0.0
    %3526 = vmatpush1.msra.mxu0 0.0
    %3527 = vmatprep.subr.mxu0 0.0
    %3528 = vmatpush1.msra.mxu0 0.0
    %3529 = vmatprep.subr.mxu0 0.0
    %3530 = vmatpush1.msra.mxu0 0.0
    %3531 = vmatprep.subr.mxu0 0.0
    %3532 = vmatpush1.msra.mxu0 0.0
    %3533 = vmatprep.subr.mxu0 0.0
    %3534 = vmatpush1.msra.mxu0 0.0
    %3535 = vmatprep.subr.mxu0 0.0
    %3536 = vmatpush1.msra.mxu0 0.0
    %3537 = vmatprep.subr.mxu0 0.0
    %3538 = vmatpush1.msra.mxu0 0.0
    %3539 = vmatprep.subr.mxu0 0.0
    %3540 = vmatpush1.msra.mxu0 0.0
    %3541 = vmatprep.subr.mxu0 0.0
    %3542 = vmatpush1.msra.mxu0 %v3031
    %3543 = vmatprep.subr.mxu0 0.0
    %3544 = vmatpush1.msra.mxu0 %v3030
    %3545 = vmatprep.subr.mxu0 0.0
    %3546 = vmatpush1.msra.mxu0 %v3029
    %3547 = vmatprep.subr.mxu0 0.0
    %3548 = vmatpush1.msra.mxu0 %v3028
    %3549 = vmatprep.subr.mxu0 0.0
    %3550 = vmatpush2.msra.mxu0 0.0
    %3551 = vmatprep.subr.mxu0 0.0
    %3552 = vmatpush2.msra.mxu0 0.0
    %3553 = vmatprep.subr.mxu0 0.0
    %3554 = vmatpush2.msra.mxu0 0.0
    %3555 = vmatprep.subr.mxu0 0.0
    %3556 = vmatpush2.msra.mxu0 0.0
    %3557 = vmatprep.subr.mxu0 0.0
    %3558 = vmatpush2.msra.mxu0 0.0
    %3559 = vmatprep.subr.mxu0 0.0
    %3560 = vmatpush2.msra.mxu0 0.0
    %3561 = vmatprep.subr.mxu0 0.0
    %3562 = vmatpush2.msra.mxu0 0.0
    %3563 = vmatprep.subr.mxu0 0.0
    %3564 = vmatpush2.msra.mxu0 0.0
    %3565 = vmatprep.subr.mxu0 0.0
    %3566 = vmatpush2.msra.mxu0 0.0
    %3567 = vmatprep.subr.mxu0 0.0
    %3568 = vmatpush2.msra.mxu0 0.0
    %3569 = vmatprep.subr.mxu0 0.0
    %3570 = vmatpush2.msra.mxu0 0.0
    %3571 = vmatprep.subr.mxu0 0.0
    %3572 = vmatpush2.msra.mxu0 0.0
    %3573 = vmatprep.subr.mxu0 0.0
    %3574 = vmatpush2.msra.mxu0 0.0
    %3575 = vmatprep.subr.mxu0 0.0
    %3576 = vmatpush2.msra.mxu0 0.0
    %3577 = vmatprep.subr.mxu0 0.0
    %3578 = vmatpush2.msra.mxu0 0.0
    %3579 = vmatprep.subr.mxu0 0.0
    %3580 = vmatpush2.msra.mxu0 0.0
    %3581 = vmatprep.mubr.f32.mxu0 0.0
    %3582 = vmatmul.mubr.f32.gmra.mxu0 %v3515
    %v3583 = vpop.f32.mrf.mxu0
    %v3584 = vadd.f32 0.0, %v3583
    %v3585 = vpop.f32.mrf.mxu0
    %3586 = vdwg.mxu0
    %v3587 = vadd.f32 %v3166, %v3584
    %v3588 = vsel %vm699, %v3512, 0
    %3590 = vmatprep.subr.mxu0 0.0
    %3591 = vmatpush1.msra.mxu0 0.0
    %3592 = vmatprep.subr.mxu0 0.0
    %3593 = vmatpush1.msra.mxu0 0.0
    %3594 = vmatprep.subr.mxu0 0.0
    %3595 = vmatpush1.msra.mxu0 0.0
    %3596 = vmatprep.subr.mxu0 0.0
    %3597 = vmatpush1.msra.mxu0 0.0
    %3598 = vmatprep.subr.mxu0 0.0
    %3599 = vmatpush1.msra.mxu0 0.0
    %3600 = vmatprep.subr.mxu0 0.0
    %3601 = vmatpush1.msra.mxu0 0.0
    %3602 = vmatprep.subr.mxu0 0.0
    %3603 = vmatpush1.msra.mxu0 0.0
    %3604 = vmatprep.subr.mxu0 0.0
    %3605 = vmatpush1.msra.mxu0 0.0
    %3606 = vmatprep.subr.mxu0 0.0
    %3607 = vmatpush1.msra.mxu0 0.0
    %3608 = vmatprep.subr.mxu0 0.0
    %3609 = vmatpush1.msra.mxu0 0.0
    %3610 = vmatprep.subr.mxu0 0.0
    %3611 = vmatpush1.msra.mxu0 0.0
    %3612 = vmatprep.subr.mxu0 0.0
    %3613 = vmatpush1.msra.mxu0 0.0
    %3614 = vmatprep.subr.mxu0 0.0
    %3615 = vmatpush1.msra.mxu0 %v3035
    %3616 = vmatprep.subr.mxu0 0.0
    %3617 = vmatpush1.msra.mxu0 %v3034
    %3618 = vmatprep.subr.mxu0 0.0
    %3619 = vmatpush1.msra.mxu0 %v3033
    %3620 = vmatprep.subr.mxu0 0.0
    %3621 = vmatpush1.msra.mxu0 %v3032
    %3622 = vmatprep.subr.mxu0 0.0
    %3623 = vmatpush2.msra.mxu0 0.0
    %3624 = vmatprep.subr.mxu0 0.0
    %3625 = vmatpush2.msra.mxu0 0.0
    %3626 = vmatprep.subr.mxu0 0.0
    %3627 = vmatpush2.msra.mxu0 0.0
    %3628 = vmatprep.subr.mxu0 0.0
    %3629 = vmatpush2.msra.mxu0 0.0
    %3630 = vmatprep.subr.mxu0 0.0
    %3631 = vmatpush2.msra.mxu0 0.0
    %3632 = vmatprep.subr.mxu0 0.0
    %3633 = vmatpush2.msra.mxu0 0.0
    %3634 = vmatprep.subr.mxu0 0.0
    %3635 = vmatpush2.msra.mxu0 0.0
    %3636 = vmatprep.subr.mxu0 0.0
    %3637 = vmatpush2.msra.mxu0 0.0
    %3638 = vmatprep.subr.mxu0 0.0
    %3639 = vmatpush2.msra.mxu0 0.0
    %3640 = vmatprep.subr.mxu0 0.0
    %3641 = vmatpush2.msra.mxu0 0.0
    %3642 = vmatprep.subr.mxu0 0.0
    %3643 = vmatpush2.msra.mxu0 0.0
    %3644 = vmatprep.subr.mxu0 0.0
    %3645 = vmatpush2.msra.mxu0 0.0
    %3646 = vmatprep.subr.mxu0 0.0
    %3647 = vmatpush2.msra.mxu0 0.0
    %3648 = vmatprep.subr.mxu0 0.0
    %3649 = vmatpush2.msra.mxu0 0.0
    %3650 = vmatprep.subr.mxu0 0.0
    %3651 = vmatpush2.msra.mxu0 0.0
    %3652 = vmatprep.subr.mxu0 0.0
    %3653 = vmatpush2.msra.mxu0 0.0
    %3654 = vmatprep.mubr.f32.mxu0 0.0
    %3655 = vmatmul.mubr.f32.gmra.mxu0 %v3588
    %v3656 = vpop.f32.mrf.mxu0
    %v3657 = vadd.f32 0.0, %v3656
    %v3658 = vpop.f32.mrf.mxu0
    %3659 = vdwg.mxu0
    %v3660 = vadd.f32 %v3302, %v3657
    %v3661 = vxor.u32 %v3587, 2147483648
    %v3662 = vmul.f32 %v3661, 1.442695
    %v3663 = vpow.pop %v3662
    %v3664 = vadd.f32 %v3663, 1.0
    %v3665 = vrcp.pop %v3664
    %v3666 = vmul.f32 1.0, %v3665
    %v3667 = vtanh.pop %v3587
    %v3668 = vmul.f32 %v3666, %v3474
    %3670 = vrot.lane.b32.xlu0 %v3667, 32
    %v3671 = vpop.permute.xlu0 %3670
    %v3673 = vmul.f32 %v3666, %v3671
    %3675 = vrot.lane.b32.xlu0 %v3673, 32
    %v3676 = vpop.permute.xlu0 %3675
    %v3678 = vadd.f32 %v3668, %v3676
    %v3679 = vtanh.pop %v3678
    %3681 = vrot.lane.b32.xlu0 %v3679, 32
    %v3682 = vpop.permute.xlu0 %3681
    %v3684 = vmul.f32 %v3666, %v3682
    %v3685 = vxor.u32 %v3660, 2147483648
    %v3686 = vmul.f32 %v3685, 1.442695
    %v3687 = vpow.pop %v3686
    %v3688 = vadd.f32 %v3687, 1.0
    %v3689 = vrcp.pop %v3688
    %v3690 = vmul.f32 1.0, %v3689
    %v3691 = vtanh.pop %v3660
    %v3692 = vmul.f32 %v3690, %v3498
    %3694 = vrot.lane.b32.xlu0 %v3691, 32
    %v3695 = vpop.permute.xlu0 %3694
    %v3697 = vmul.f32 %v3690, %v3695
    %3699 = vrot.lane.b32.xlu0 %v3697, 32
    %v3700 = vpop.permute.xlu0 %3699
    %v3702 = vadd.f32 %v3692, %v3700
    %v3703 = vtanh.pop %v3702
    %3705 = vrot.lane.b32.xlu0 %v3703, 32
    %v3706 = vpop.permute.xlu0 %3705
    %v3708 = vmul.f32 %v3690, %v3706
    %3710 = vrot.lane.b32.xlu0 %v3684, 64
    %v3711 = vpop.permute.xlu0 %3710
    %3713 = vst.msk [vmem:[#allocation3 + $0x8] sm:$0xff] %vm699, %v3711
    %3715 = vrot.lane.b32.xlu0 %v3708, 64
    %v3716 = vpop.permute.xlu0 %3715
    %3718 = vst.msk [vmem:[#allocation4 + $0x30] sm:$0xff] %vm699, %v3716
    %v3719 = vsel %vm699, %v3711, 0
    %3721 = vmatprep.subr.mxu0 0.0
    %3722 = vmatpush1.msra.mxu0 0.0
    %3723 = vmatprep.subr.mxu0 0.0
    %3724 = vmatpush1.msra.mxu0 0.0
    %3725 = vmatprep.subr.mxu0 0.0
    %3726 = vmatpush1.msra.mxu0 0.0
    %3727 = vmatprep.subr.mxu0 0.0
    %3728 = vmatpush1.msra.mxu0 0.0
    %3729 = vmatprep.subr.mxu0 0.0
    %3730 = vmatpush1.msra.mxu0 0.0
    %3731 = vmatprep.subr.mxu0 0.0
    %3732 = vmatpush1.msra.mxu0 0.0
    %3733 = vmatprep.subr.mxu0 0.0
    %3734 = vmatpush1.msra.mxu0 0.0
    %3735 = vmatprep.subr.mxu0 0.0
    %3736 = vmatpush1.msra.mxu0 0.0
    %3737 = vmatprep.subr.mxu0 0.0
    %3738 = vmatpush1.msra.mxu0 0.0
    %3739 = vmatprep.subr.mxu0 0.0
    %3740 = vmatpush1.msra.mxu0 0.0
    %3741 = vmatprep.subr.mxu0 0.0
    %3742 = vmatpush1.msra.mxu0 0.0
    %3743 = vmatprep.subr.mxu0 0.0
    %3744 = vmatpush1.msra.mxu0 0.0
    %3745 = vmatprep.subr.mxu0 0.0
    %3746 = vmatpush1.msra.mxu0 %v3031
    %3747 = vmatprep.subr.mxu0 0.0
    %3748 = vmatpush1.msra.mxu0 %v3030
    %3749 = vmatprep.subr.mxu0 0.0
    %3750 = vmatpush1.msra.mxu0 %v3029
    %3751 = vmatprep.subr.mxu0 0.0
    %3752 = vmatpush1.msra.mxu0 %v3028
    %3753 = vmatprep.subr.mxu0 0.0
    %3754 = vmatpush2.msra.mxu0 0.0
    %3755 = vmatprep.subr.mxu0 0.0
    %3756 = vmatpush2.msra.mxu0 0.0
    %3757 = vmatprep.subr.mxu0 0.0
    %3758 = vmatpush2.msra.mxu0 0.0
    %3759 = vmatprep.subr.mxu0 0.0
    %3760 = vmatpush2.msra.mxu0 0.0
    %3761 = vmatprep.subr.mxu0 0.0
    %3762 = vmatpush2.msra.mxu0 0.0
    %3763 = vmatprep.subr.mxu0 0.0
    %3764 = vmatpush2.msra.mxu0 0.0
    %3765 = vmatprep.subr.mxu0 0.0
    %3766 = vmatpush2.msra.mxu0 0.0
    %3767 = vmatprep.subr.mxu0 0.0
    %3768 = vmatpush2.msra.mxu0 0.0
    %3769 = vmatprep.subr.mxu0 0.0
    %3770 = vmatpush2.msra.mxu0 0.0
    %3771 = vmatprep.subr.mxu0 0.0
    %3772 = vmatpush2.msra.mxu0 0.0
    %3773 = vmatprep.subr.mxu0 0.0
    %3774 = vmatpush2.msra.mxu0 0.0
    %3775 = vmatprep.subr.mxu0 0.0
    %3776 = vmatpush2.msra.mxu0 0.0
    %3777 = vmatprep.subr.mxu0 0.0
    %3778 = vmatpush2.msra.mxu0 0.0
    %3779 = vmatprep.subr.mxu0 0.0
    %3780 = vmatpush2.msra.mxu0 0.0
    %3781 = vmatprep.subr.mxu0 0.0
    %3782 = vmatpush2.msra.mxu0 0.0
    %3783 = vmatprep.subr.mxu0 0.0
    %3784 = vmatpush2.msra.mxu0 0.0
    %3785 = vmatprep.mubr.f32.mxu0 0.0
    %3786 = vmatmul.mubr.f32.gmra.mxu0 %v3719
    %v3787 = vpop.f32.mrf.mxu0
    %v3788 = vadd.f32 0.0, %v3787
    %v3789 = vpop.f32.mrf.mxu0
    %3790 = vdwg.mxu0
    %v3791 = vadd.f32 %v3171, %v3788
    %v3792 = vsel %vm699, %v3716, 0
    %3794 = vmatprep.subr.mxu0 0.0
    %3795 = vmatpush1.msra.mxu0 0.0
    %3796 = vmatprep.subr.mxu0 0.0
    %3797 = vmatpush1.msra.mxu0 0.0
    %3798 = vmatprep.subr.mxu0 0.0
    %3799 = vmatpush1.msra.mxu0 0.0
    %3800 = vmatprep.subr.mxu0 0.0
    %3801 = vmatpush1.msra.mxu0 0.0
    %3802 = vmatprep.subr.mxu0 0.0
    %3803 = vmatpush1.msra.mxu0 0.0
    %3804 = vmatprep.subr.mxu0 0.0
    %3805 = vmatpush1.msra.mxu0 0.0
    %3806 = vmatprep.subr.mxu0 0.0
    %3807 = vmatpush1.msra.mxu0 0.0
    %3808 = vmatprep.subr.mxu0 0.0
    %3809 = vmatpush1.msra.mxu0 0.0
    %3810 = vmatprep.subr.mxu0 0.0
    %3811 = vmatpush1.msra.mxu0 0.0
    %3812 = vmatprep.subr.mxu0 0.0
    %3813 = vmatpush1.msra.mxu0 0.0
    %3814 = vmatprep.subr.mxu0 0.0
    %3815 = vmatpush1.msra.mxu0 0.0
    %3816 = vmatprep.subr.mxu0 0.0
    %3817 = vmatpush1.msra.mxu0 0.0
    %3818 = vmatprep.subr.mxu0 0.0
    %3819 = vmatpush1.msra.mxu0 %v3035
    %3820 = vmatprep.subr.mxu0 0.0
    %3821 = vmatpush1.msra.mxu0 %v3034
    %3822 = vmatprep.subr.mxu0 0.0
    %3823 = vmatpush1.msra.mxu0 %v3033
    %3824 = vmatprep.subr.mxu0 0.0
    %3825 = vmatpush1.msra.mxu0 %v3032
    %3826 = vmatprep.subr.mxu0 0.0
    %3827 = vmatpush2.msra.mxu0 0.0
    %3828 = vmatprep.subr.mxu0 0.0
    %3829 = vmatpush2.msra.mxu0 0.0
    %3830 = vmatprep.subr.mxu0 0.0
    %3831 = vmatpush2.msra.mxu0 0.0
    %3832 = vmatprep.subr.mxu0 0.0
    %3833 = vmatpush2.msra.mxu0 0.0
    %3834 = vmatprep.subr.mxu0 0.0
    %3835 = vmatpush2.msra.mxu0 0.0
    %3836 = vmatprep.subr.mxu0 0.0
    %3837 = vmatpush2.msra.mxu0 0.0
    %3838 = vmatprep.subr.mxu0 0.0
    %3839 = vmatpush2.msra.mxu0 0.0
    %3840 = vmatprep.subr.mxu0 0.0
    %3841 = vmatpush2.msra.mxu0 0.0
    %3842 = vmatprep.subr.mxu0 0.0
    %3843 = vmatpush2.msra.mxu0 0.0
    %3844 = vmatprep.subr.mxu0 0.0
    %3845 = vmatpush2.msra.mxu0 0.0
    %3846 = vmatprep.subr.mxu0 0.0
    %3847 = vmatpush2.msra.mxu0 0.0
    %3848 = vmatprep.subr.mxu0 0.0
    %3849 = vmatpush2.msra.mxu0 0.0
    %3850 = vmatprep.subr.mxu0 0.0
    %3851 = vmatpush2.msra.mxu0 0.0
    %3852 = vmatprep.subr.mxu0 0.0
    %3853 = vmatpush2.msra.mxu0 0.0
    %3854 = vmatprep.subr.mxu0 0.0
    %3855 = vmatpush2.msra.mxu0 0.0
    %3856 = vmatprep.subr.mxu0 0.0
    %3857 = vmatpush2.msra.mxu0 0.0
    %3858 = vmatprep.mubr.f32.mxu0 0.0
    %3859 = vmatmul.mubr.f32.gmra.mxu0 %v3792
    %v3860 = vpop.f32.mrf.mxu0
    %v3861 = vadd.f32 0.0, %v3860
    %v3862 = vpop.f32.mrf.mxu0
    %3863 = vdwg.mxu0
    %v3864 = vadd.f32 %v3297, %v3861
    %v3865 = vxor.u32 %v3791, 2147483648
    %v3866 = vmul.f32 %v3865, 1.442695
    %v3867 = vpow.pop %v3866
    %v3868 = vadd.f32 %v3867, 1.0
    %v3869 = vrcp.pop %v3868
    %v3870 = vmul.f32 1.0, %v3869
    %v3871 = vtanh.pop %v3791
    %v3872 = vmul.f32 %v3870, %v3678
    %3874 = vrot.lane.b32.xlu0 %v3871, 32
    %v3875 = vpop.permute.xlu0 %3874
    %v3877 = vmul.f32 %v3870, %v3875
    %3879 = vrot.lane.b32.xlu0 %v3877, 32
    %v3880 = vpop.permute.xlu0 %3879
    %v3882 = vadd.f32 %v3872, %v3880
    %v3883 = vtanh.pop %v3882
    %3885 = vrot.lane.b32.xlu0 %v3883, 32
    %v3886 = vpop.permute.xlu0 %3885
    %v3888 = vmul.f32 %v3870, %v3886
    %v3889 = vxor.u32 %v3864, 2147483648
    %v3890 = vmul.f32 %v3889, 1.442695
    %v3891 = vpow.pop %v3890
    %v3892 = vadd.f32 %v3891, 1.0
    %v3893 = vrcp.pop %v3892
    %v3894 = vmul.f32 1.0, %v3893
    %v3895 = vtanh.pop %v3864
    %v3896 = vmul.f32 %v3894, %v3702
    %3898 = vrot.lane.b32.xlu0 %v3895, 32
    %v3899 = vpop.permute.xlu0 %3898
    %v3901 = vmul.f32 %v3894, %v3899
    %3903 = vrot.lane.b32.xlu0 %v3901, 32
    %v3904 = vpop.permute.xlu0 %3903
    %v3906 = vadd.f32 %v3896, %v3904
    %v3907 = vtanh.pop %v3906
    %3909 = vrot.lane.b32.xlu0 %v3907, 32
    %v3910 = vpop.permute.xlu0 %3909
    %v3912 = vmul.f32 %v3894, %v3910
    %3914 = vrot.lane.b32.xlu0 %v3888, 64
    %v3915 = vpop.permute.xlu0 %3914
    %3917 = vst.msk [vmem:[#allocation3 + $0x10] sm:$0xff] %vm699, %v3915
    %3919 = vrot.lane.b32.xlu0 %v3912, 64
    %v3920 = vpop.permute.xlu0 %3919
    %3922 = vst.msk [vmem:[#allocation4 + $0x28] sm:$0xff] %vm699, %v3920
    %v3923 = vsel %vm699, %v3915, 0
    %3925 = vmatprep.subr.mxu0 0.0
    %3926 = vmatpush1.msra.mxu0 0.0
    %3927 = vmatprep.subr.mxu0 0.0
    %3928 = vmatpush1.msra.mxu0 0.0
    %3929 = vmatprep.subr.mxu0 0.0
    %3930 = vmatpush1.msra.mxu0 0.0
    %3931 = vmatprep.subr.mxu0 0.0
    %3932 = vmatpush1.msra.mxu0 0.0
    %3933 = vmatprep.subr.mxu0 0.0
    %3934 = vmatpush1.msra.mxu0 0.0
    %3935 = vmatprep.subr.mxu0 0.0
    %3936 = vmatpush1.msra.mxu0 0.0
    %3937 = vmatprep.subr.mxu0 0.0
    %3938 = vmatpush1.msra.mxu0 0.0
    %3939 = vmatprep.subr.mxu0 0.0
    %3940 = vmatpush1.msra.mxu0 0.0
    %3941 = vmatprep.subr.mxu0 0.0
    %3942 = vmatpush1.msra.mxu0 0.0
    %3943 = vmatprep.subr.mxu0 0.0
    %3944 = vmatpush1.msra.mxu0 0.0
    %3945 = vmatprep.subr.mxu0 0.0
    %3946 = vmatpush1.msra.mxu0 0.0
    %3947 = vmatprep.subr.mxu0 0.0
    %3948 = vmatpush1.msra.mxu0 0.0
    %3949 = vmatprep.subr.mxu0 0.0
    %3950 = vmatpush1.msra.mxu0 %v3031
    %3951 = vmatprep.subr.mxu0 0.0
    %3952 = vmatpush1.msra.mxu0 %v3030
    %3953 = vmatprep.subr.mxu0 0.0
    %3954 = vmatpush1.msra.mxu0 %v3029
    %3955 = vmatprep.subr.mxu0 0.0
    %3956 = vmatpush1.msra.mxu0 %v3028
    %3957 = vmatprep.subr.mxu0 0.0
    %3958 = vmatpush2.msra.mxu0 0.0
    %3959 = vmatprep.subr.mxu0 0.0
    %3960 = vmatpush2.msra.mxu0 0.0
    %3961 = vmatprep.subr.mxu0 0.0
    %3962 = vmatpush2.msra.mxu0 0.0
    %3963 = vmatprep.subr.mxu0 0.0
    %3964 = vmatpush2.msra.mxu0 0.0
    %3965 = vmatprep.subr.mxu0 0.0
    %3966 = vmatpush2.msra.mxu0 0.0
    %3967 = vmatprep.subr.mxu0 0.0
    %3968 = vmatpush2.msra.mxu0 0.0
    %3969 = vmatprep.subr.mxu0 0.0
    %3970 = vmatpush2.msra.mxu0 0.0
    %3971 = vmatprep.subr.mxu0 0.0
    %3972 = vmatpush2.msra.mxu0 0.0
    %3973 = vmatprep.subr.mxu0 0.0
    %3974 = vmatpush2.msra.mxu0 0.0
    %3975 = vmatprep.subr.mxu0 0.0
    %3976 = vmatpush2.msra.mxu0 0.0
    %3977 = vmatprep.subr.mxu0 0.0
    %3978 = vmatpush2.msra.mxu0 0.0
    %3979 = vmatprep.subr.mxu0 0.0
    %3980 = vmatpush2.msra.mxu0 0.0
    %3981 = vmatprep.subr.mxu0 0.0
    %3982 = vmatpush2.msra.mxu0 0.0
    %3983 = vmatprep.subr.mxu0 0.0
    %3984 = vmatpush2.msra.mxu0 0.0
    %3985 = vmatprep.subr.mxu0 0.0
    %3986 = vmatpush2.msra.mxu0 0.0
    %3987 = vmatprep.subr.mxu0 0.0
    %3988 = vmatpush2.msra.mxu0 0.0
    %3989 = vmatprep.mubr.f32.mxu0 0.0
    %3990 = vmatmul.mubr.f32.gmra.mxu0 %v3923
    %v3991 = vpop.f32.mrf.mxu0
    %v3992 = vadd.f32 0.0, %v3991
    %v3993 = vpop.f32.mrf.mxu0
    %3994 = vdwg.mxu0
    %v3995 = vadd.f32 %v3176, %v3992
    %v3996 = vsel %vm699, %v3920, 0
    %3998 = vmatprep.subr.mxu0 0.0
    %3999 = vmatpush1.msra.mxu0 0.0
    %4000 = vmatprep.subr.mxu0 0.0
    %4001 = vmatpush1.msra.mxu0 0.0
    %4002 = vmatprep.subr.mxu0 0.0
    %4003 = vmatpush1.msra.mxu0 0.0
    %4004 = vmatprep.subr.mxu0 0.0
    %4005 = vmatpush1.msra.mxu0 0.0
    %4006 = vmatprep.subr.mxu0 0.0
    %4007 = vmatpush1.msra.mxu0 0.0
    %4008 = vmatprep.subr.mxu0 0.0
    %4009 = vmatpush1.msra.mxu0 0.0
    %4010 = vmatprep.subr.mxu0 0.0
    %4011 = vmatpush1.msra.mxu0 0.0
    %4012 = vmatprep.subr.mxu0 0.0
    %4013 = vmatpush1.msra.mxu0 0.0
    %4014 = vmatprep.subr.mxu0 0.0
    %4015 = vmatpush1.msra.mxu0 0.0
    %4016 = vmatprep.subr.mxu0 0.0
    %4017 = vmatpush1.msra.mxu0 0.0
    %4018 = vmatprep.subr.mxu0 0.0
    %4019 = vmatpush1.msra.mxu0 0.0
    %4020 = vmatprep.subr.mxu0 0.0
    %4021 = vmatpush1.msra.mxu0 0.0
    %4022 = vmatprep.subr.mxu0 0.0
    %4023 = vmatpush1.msra.mxu0 %v3035
    %4024 = vmatprep.subr.mxu0 0.0
    %4025 = vmatpush1.msra.mxu0 %v3034
    %4026 = vmatprep.subr.mxu0 0.0
    %4027 = vmatpush1.msra.mxu0 %v3033
    %4028 = vmatprep.subr.mxu0 0.0
    %4029 = vmatpush1.msra.mxu0 %v3032
    %4030 = vmatprep.subr.mxu0 0.0
    %4031 = vmatpush2.msra.mxu0 0.0
    %4032 = vmatprep.subr.mxu0 0.0
    %4033 = vmatpush2.msra.mxu0 0.0
    %4034 = vmatprep.subr.mxu0 0.0
    %4035 = vmatpush2.msra.mxu0 0.0
    %4036 = vmatprep.subr.mxu0 0.0
    %4037 = vmatpush2.msra.mxu0 0.0
    %4038 = vmatprep.subr.mxu0 0.0
    %4039 = vmatpush2.msra.mxu0 0.0
    %4040 = vmatprep.subr.mxu0 0.0
    %4041 = vmatpush2.msra.mxu0 0.0
    %4042 = vmatprep.subr.mxu0 0.0
    %4043 = vmatpush2.msra.mxu0 0.0
    %4044 = vmatprep.subr.mxu0 0.0
    %4045 = vmatpush2.msra.mxu0 0.0
    %4046 = vmatprep.subr.mxu0 0.0
    %4047 = vmatpush2.msra.mxu0 0.0
    %4048 = vmatprep.subr.mxu0 0.0
    %4049 = vmatpush2.msra.mxu0 0.0
    %4050 = vmatprep.subr.mxu0 0.0
    %4051 = vmatpush2.msra.mxu0 0.0
    %4052 = vmatprep.subr.mxu0 0.0
    %4053 = vmatpush2.msra.mxu0 0.0
    %4054 = vmatprep.subr.mxu0 0.0
    %4055 = vmatpush2.msra.mxu0 0.0
    %4056 = vmatprep.subr.mxu0 0.0
    %4057 = vmatpush2.msra.mxu0 0.0
    %4058 = vmatprep.subr.mxu0 0.0
    %4059 = vmatpush2.msra.mxu0 0.0
    %4060 = vmatprep.subr.mxu0 0.0
    %4061 = vmatpush2.msra.mxu0 0.0
    %4062 = vmatprep.mubr.f32.mxu0 0.0
    %4063 = vmatmul.mubr.f32.gmra.mxu0 %v3996
    %v4064 = vpop.f32.mrf.mxu0
    %v4065 = vadd.f32 0.0, %v4064
    %v4066 = vpop.f32.mrf.mxu0
    %4067 = vdwg.mxu0
    %v4068 = vadd.f32 %v3292, %v4065
    %v4069 = vxor.u32 %v3995, 2147483648
    %v4070 = vmul.f32 %v4069, 1.442695
    %v4071 = vpow.pop %v4070
    %v4072 = vadd.f32 %v4071, 1.0
    %v4073 = vrcp.pop %v4072
    %v4074 = vmul.f32 1.0, %v4073
    %v4075 = vtanh.pop %v3995
    %v4076 = vmul.f32 %v4074, %v3882
    %4078 = vrot.lane.b32.xlu0 %v4075, 32
    %v4079 = vpop.permute.xlu0 %4078
    %v4081 = vmul.f32 %v4074, %v4079
    %4083 = vrot.lane.b32.xlu0 %v4081, 32
    %v4084 = vpop.permute.xlu0 %4083
    %v4086 = vadd.f32 %v4076, %v4084
    %v4087 = vtanh.pop %v4086
    %4089 = vrot.lane.b32.xlu0 %v4087, 32
    %v4090 = vpop.permute.xlu0 %4089
    %v4092 = vmul.f32 %v4074, %v4090
    %v4093 = vxor.u32 %v4068, 2147483648
    %v4094 = vmul.f32 %v4093, 1.442695
    %v4095 = vpow.pop %v4094
    %v4096 = vadd.f32 %v4095, 1.0
    %v4097 = vrcp.pop %v4096
    %v4098 = vmul.f32 1.0, %v4097
    %v4099 = vtanh.pop %v4068
    %v4100 = vmul.f32 %v4098, %v3906
    %4102 = vrot.lane.b32.xlu0 %v4099, 32
    %v4103 = vpop.permute.xlu0 %4102
    %v4105 = vmul.f32 %v4098, %v4103
    %4107 = vrot.lane.b32.xlu0 %v4105, 32
    %v4108 = vpop.permute.xlu0 %4107
    %v4110 = vadd.f32 %v4100, %v4108
    %v4111 = vtanh.pop %v4110
    %4113 = vrot.lane.b32.xlu0 %v4111, 32
    %v4114 = vpop.permute.xlu0 %4113
    %v4116 = vmul.f32 %v4098, %v4114
    %4118 = vrot.lane.b32.xlu0 %v4092, 64
    %v4119 = vpop.permute.xlu0 %4118
    %4121 = vst.msk [vmem:[#allocation3 + $0x18] sm:$0xff] %vm699, %v4119
    %4123 = vrot.lane.b32.xlu0 %v4116, 64
    %v4124 = vpop.permute.xlu0 %4123
    %4126 = vst.msk [vmem:[#allocation4 + $0x20] sm:$0xff] %vm699, %v4124
    %v4127 = vsel %vm699, %v4119, 0
    %4129 = vmatprep.subr.mxu0 0.0
    %4130 = vmatpush1.msra.mxu0 0.0
    %4131 = vmatprep.subr.mxu0 0.0
    %4132 = vmatpush1.msra.mxu0 0.0
    %4133 = vmatprep.subr.mxu0 0.0
    %4134 = vmatpush1.msra.mxu0 0.0
    %4135 = vmatprep.subr.mxu0 0.0
    %4136 = vmatpush1.msra.mxu0 0.0
    %4137 = vmatprep.subr.mxu0 0.0
    %4138 = vmatpush1.msra.mxu0 0.0
    %4139 = vmatprep.subr.mxu0 0.0
    %4140 = vmatpush1.msra.mxu0 0.0
    %4141 = vmatprep.subr.mxu0 0.0
    %4142 = vmatpush1.msra.mxu0 0.0
    %4143 = vmatprep.subr.mxu0 0.0
    %4144 = vmatpush1.msra.mxu0 0.0
    %4145 = vmatprep.subr.mxu0 0.0
    %4146 = vmatpush1.msra.mxu0 0.0
    %4147 = vmatprep.subr.mxu0 0.0
    %4148 = vmatpush1.msra.mxu0 0.0
    %4149 = vmatprep.subr.mxu0 0.0
    %4150 = vmatpush1.msra.mxu0 0.0
    %4151 = vmatprep.subr.mxu0 0.0
    %4152 = vmatpush1.msra.mxu0 0.0
    %4153 = vmatprep.subr.mxu0 0.0
    %4154 = vmatpush1.msra.mxu0 %v3031
    %4155 = vmatprep.subr.mxu0 0.0
    %4156 = vmatpush1.msra.mxu0 %v3030
    %4157 = vmatprep.subr.mxu0 0.0
    %4158 = vmatpush1.msra.mxu0 %v3029
    %4159 = vmatprep.subr.mxu0 0.0
    %4160 = vmatpush1.msra.mxu0 %v3028
    %4161 = vmatprep.subr.mxu0 0.0
    %4162 = vmatpush2.msra.mxu0 0.0
    %4163 = vmatprep.subr.mxu0 0.0
    %4164 = vmatpush2.msra.mxu0 0.0
    %4165 = vmatprep.subr.mxu0 0.0
    %4166 = vmatpush2.msra.mxu0 0.0
    %4167 = vmatprep.subr.mxu0 0.0
    %4168 = vmatpush2.msra.mxu0 0.0
    %4169 = vmatprep.subr.mxu0 0.0
    %4170 = vmatpush2.msra.mxu0 0.0
    %4171 = vmatprep.subr.mxu0 0.0
    %4172 = vmatpush2.msra.mxu0 0.0
    %4173 = vmatprep.subr.mxu0 0.0
    %4174 = vmatpush2.msra.mxu0 0.0
    %4175 = vmatprep.subr.mxu0 0.0
    %4176 = vmatpush2.msra.mxu0 0.0
    %4177 = vmatprep.subr.mxu0 0.0
    %4178 = vmatpush2.msra.mxu0 0.0
    %4179 = vmatprep.subr.mxu0 0.0
    %4180 = vmatpush2.msra.mxu0 0.0
    %4181 = vmatprep.subr.mxu0 0.0
    %4182 = vmatpush2.msra.mxu0 0.0
    %4183 = vmatprep.subr.mxu0 0.0
    %4184 = vmatpush2.msra.mxu0 0.0
    %4185 = vmatprep.subr.mxu0 0.0
    %4186 = vmatpush2.msra.mxu0 0.0
    %4187 = vmatprep.subr.mxu0 0.0
    %4188 = vmatpush2.msra.mxu0 0.0
    %4189 = vmatprep.subr.mxu0 0.0
    %4190 = vmatpush2.msra.mxu0 0.0
    %4191 = vmatprep.subr.mxu0 0.0
    %4192 = vmatpush2.msra.mxu0 0.0
    %4193 = vmatprep.mubr.f32.mxu0 0.0
    %4194 = vmatmul.mubr.f32.gmra.mxu0 %v4127
    %v4195 = vpop.f32.mrf.mxu0
    %v4196 = vadd.f32 0.0, %v4195
    %v4197 = vpop.f32.mrf.mxu0
    %4198 = vdwg.mxu0
    %v4199 = vadd.f32 %v3181, %v4196
    %v4200 = vsel %vm699, %v4124, 0
    %4202 = vmatprep.subr.mxu0 0.0
    %4203 = vmatpush1.msra.mxu0 0.0
    %4204 = vmatprep.subr.mxu0 0.0
    %4205 = vmatpush1.msra.mxu0 0.0
    %4206 = vmatprep.subr.mxu0 0.0
    %4207 = vmatpush1.msra.mxu0 0.0
    %4208 = vmatprep.subr.mxu0 0.0
    %4209 = vmatpush1.msra.mxu0 0.0
    %4210 = vmatprep.subr.mxu0 0.0
    %4211 = vmatpush1.msra.mxu0 0.0
    %4212 = vmatprep.subr.mxu0 0.0
    %4213 = vmatpush1.msra.mxu0 0.0
    %4214 = vmatprep.subr.mxu0 0.0
    %4215 = vmatpush1.msra.mxu0 0.0
    %4216 = vmatprep.subr.mxu0 0.0
    %4217 = vmatpush1.msra.mxu0 0.0
    %4218 = vmatprep.subr.mxu0 0.0
    %4219 = vmatpush1.msra.mxu0 0.0
    %4220 = vmatprep.subr.mxu0 0.0
    %4221 = vmatpush1.msra.mxu0 0.0
    %4222 = vmatprep.subr.mxu0 0.0
    %4223 = vmatpush1.msra.mxu0 0.0
    %4224 = vmatprep.subr.mxu0 0.0
    %4225 = vmatpush1.msra.mxu0 0.0
    %4226 = vmatprep.subr.mxu0 0.0
    %4227 = vmatpush1.msra.mxu0 %v3035
    %4228 = vmatprep.subr.mxu0 0.0
    %4229 = vmatpush1.msra.mxu0 %v3034
    %4230 = vmatprep.subr.mxu0 0.0
    %4231 = vmatpush1.msra.mxu0 %v3033
    %4232 = vmatprep.subr.mxu0 0.0
    %4233 = vmatpush1.msra.mxu0 %v3032
    %4234 = vmatprep.subr.mxu0 0.0
    %4235 = vmatpush2.msra.mxu0 0.0
    %4236 = vmatprep.subr.mxu0 0.0
    %4237 = vmatpush2.msra.mxu0 0.0
    %4238 = vmatprep.subr.mxu0 0.0
    %4239 = vmatpush2.msra.mxu0 0.0
    %4240 = vmatprep.subr.mxu0 0.0
    %4241 = vmatpush2.msra.mxu0 0.0
    %4242 = vmatprep.subr.mxu0 0.0
    %4243 = vmatpush2.msra.mxu0 0.0
    %4244 = vmatprep.subr.mxu0 0.0
    %4245 = vmatpush2.msra.mxu0 0.0
    %4246 = vmatprep.subr.mxu0 0.0
    %4247 = vmatpush2.msra.mxu0 0.0
    %4248 = vmatprep.subr.mxu0 0.0
    %4249 = vmatpush2.msra.mxu0 0.0
    %4250 = vmatprep.subr.mxu0 0.0
    %4251 = vmatpush2.msra.mxu0 0.0
    %4252 = vmatprep.subr.mxu0 0.0
    %4253 = vmatpush2.msra.mxu0 0.0
    %4254 = vmatprep.subr.mxu0 0.0
    %4255 = vmatpush2.msra.mxu0 0.0
    %4256 = vmatprep.subr.mxu0 0.0
    %4257 = vmatpush2.msra.mxu0 0.0
    %4258 = vmatprep.subr.mxu0 0.0
    %4259 = vmatpush2.msra.mxu0 0.0
    %4260 = vmatprep.subr.mxu0 0.0
    %4261 = vmatpush2.msra.mxu0 0.0
    %4262 = vmatprep.subr.mxu0 0.0
    %4263 = vmatpush2.msra.mxu0 0.0
    %4264 = vmatprep.subr.mxu0 0.0
    %4265 = vmatpush2.msra.mxu0 0.0
    %4266 = vmatprep.mubr.f32.mxu0 0.0
    %4267 = vmatmul.mubr.f32.gmra.mxu0 %v4200
    %v4268 = vpop.f32.mrf.mxu0
    %v4269 = vadd.f32 0.0, %v4268
    %v4270 = vpop.f32.mrf.mxu0
    %4271 = vdwg.mxu0
    %v4272 = vadd.f32 %v3287, %v4269
    %v4273 = vxor.u32 %v4199, 2147483648
    %v4274 = vmul.f32 %v4273, 1.442695
    %v4275 = vpow.pop %v4274
    %v4276 = vadd.f32 %v4275, 1.0
    %v4277 = vrcp.pop %v4276
    %v4278 = vmul.f32 1.0, %v4277
    %v4279 = vtanh.pop %v4199
    %v4280 = vmul.f32 %v4278, %v4086
    %4282 = vrot.lane.b32.xlu0 %v4279, 32
    %v4283 = vpop.permute.xlu0 %4282
    %v4285 = vmul.f32 %v4278, %v4283
    %4287 = vrot.lane.b32.xlu0 %v4285, 32
    %v4288 = vpop.permute.xlu0 %4287
    %v4290 = vadd.f32 %v4280, %v4288
    %v4291 = vtanh.pop %v4290
    %4293 = vrot.lane.b32.xlu0 %v4291, 32
    %v4294 = vpop.permute.xlu0 %4293
    %v4296 = vmul.f32 %v4278, %v4294
    %v4297 = vxor.u32 %v4272, 2147483648
    %v4298 = vmul.f32 %v4297, 1.442695
    %v4299 = vpow.pop %v4298
    %v4300 = vadd.f32 %v4299, 1.0
    %v4301 = vrcp.pop %v4300
    %v4302 = vmul.f32 1.0, %v4301
    %v4303 = vtanh.pop %v4272
    %v4304 = vmul.f32 %v4302, %v4110
    %4306 = vrot.lane.b32.xlu0 %v4303, 32
    %v4307 = vpop.permute.xlu0 %4306
    %v4309 = vmul.f32 %v4302, %v4307
    %4311 = vrot.lane.b32.xlu0 %v4309, 32
    %v4312 = vpop.permute.xlu0 %4311
    %v4314 = vadd.f32 %v4304, %v4312
    %v4315 = vtanh.pop %v4314
    %4317 = vrot.lane.b32.xlu0 %v4315, 32
    %v4318 = vpop.permute.xlu0 %4317
    %v4320 = vmul.f32 %v4302, %v4318
    %4322 = vrot.lane.b32.xlu0 %v4296, 64
    %v4323 = vpop.permute.xlu0 %4322
    %4325 = vst.msk [vmem:[#allocation3 + $0x20] sm:$0xff] %vm699, %v4323
    %4327 = vrot.lane.b32.xlu0 %v4320, 64
    %v4328 = vpop.permute.xlu0 %4327
    %4330 = vst.msk [vmem:[#allocation4 + $0x18] sm:$0xff] %vm699, %v4328
    %v4331 = vsel %vm699, %v4323, 0
    %4333 = vmatprep.subr.mxu0 0.0
    %4334 = vmatpush1.msra.mxu0 0.0
    %4335 = vmatprep.subr.mxu0 0.0
    %4336 = vmatpush1.msra.mxu0 0.0
    %4337 = vmatprep.subr.mxu0 0.0
    %4338 = vmatpush1.msra.mxu0 0.0
    %4339 = vmatprep.subr.mxu0 0.0
    %4340 = vmatpush1.msra.mxu0 0.0
    %4341 = vmatprep.subr.mxu0 0.0
    %4342 = vmatpush1.msra.mxu0 0.0
    %4343 = vmatprep.subr.mxu0 0.0
    %4344 = vmatpush1.msra.mxu0 0.0
    %4345 = vmatprep.subr.mxu0 0.0
    %4346 = vmatpush1.msra.mxu0 0.0
    %4347 = vmatprep.subr.mxu0 0.0
    %4348 = vmatpush1.msra.mxu0 0.0
    %4349 = vmatprep.subr.mxu0 0.0
    %4350 = vmatpush1.msra.mxu0 0.0
    %4351 = vmatprep.subr.mxu0 0.0
    %4352 = vmatpush1.msra.mxu0 0.0
    %4353 = vmatprep.subr.mxu0 0.0
    %4354 = vmatpush1.msra.mxu0 0.0
    %4355 = vmatprep.subr.mxu0 0.0
    %4356 = vmatpush1.msra.mxu0 0.0
    %4357 = vmatprep.subr.mxu0 0.0
    %4358 = vmatpush1.msra.mxu0 %v3031
    %4359 = vmatprep.subr.mxu0 0.0
    %4360 = vmatpush1.msra.mxu0 %v3030
    %4361 = vmatprep.subr.mxu0 0.0
    %4362 = vmatpush1.msra.mxu0 %v3029
    %4363 = vmatprep.subr.mxu0 0.0
    %4364 = vmatpush1.msra.mxu0 %v3028
    %4365 = vmatprep.subr.mxu0 0.0
    %4366 = vmatpush2.msra.mxu0 0.0
    %4367 = vmatprep.subr.mxu0 0.0
    %4368 = vmatpush2.msra.mxu0 0.0
    %4369 = vmatprep.subr.mxu0 0.0
    %4370 = vmatpush2.msra.mxu0 0.0
    %4371 = vmatprep.subr.mxu0 0.0
    %4372 = vmatpush2.msra.mxu0 0.0
    %4373 = vmatprep.subr.mxu0 0.0
    %4374 = vmatpush2.msra.mxu0 0.0
    %4375 = vmatprep.subr.mxu0 0.0
    %4376 = vmatpush2.msra.mxu0 0.0
    %4377 = vmatprep.subr.mxu0 0.0
    %4378 = vmatpush2.msra.mxu0 0.0
    %4379 = vmatprep.subr.mxu0 0.0
    %4380 = vmatpush2.msra.mxu0 0.0
    %4381 = vmatprep.subr.mxu0 0.0
    %4382 = vmatpush2.msra.mxu0 0.0
    %4383 = vmatprep.subr.mxu0 0.0
    %4384 = vmatpush2.msra.mxu0 0.0
    %4385 = vmatprep.subr.mxu0 0.0
    %4386 = vmatpush2.msra.mxu0 0.0
    %4387 = vmatprep.subr.mxu0 0.0
    %4388 = vmatpush2.msra.mxu0 0.0
    %4389 = vmatprep.subr.mxu0 0.0
    %4390 = vmatpush2.msra.mxu0 0.0
    %4391 = vmatprep.subr.mxu0 0.0
    %4392 = vmatpush2.msra.mxu0 0.0
    %4393 = vmatprep.subr.mxu0 0.0
    %4394 = vmatpush2.msra.mxu0 0.0
    %4395 = vmatprep.subr.mxu0 0.0
    %4396 = vmatpush2.msra.mxu0 0.0
    %4397 = vmatprep.mubr.f32.mxu0 0.0
    %4398 = vmatmul.mubr.f32.gmra.mxu0 %v4331
    %v4399 = vpop.f32.mrf.mxu0
    %v4400 = vadd.f32 0.0, %v4399
    %v4401 = vpop.f32.mrf.mxu0
    %4402 = vdwg.mxu0
    %v4403 = vadd.f32 %v3186, %v4400
    %v4404 = vsel %vm699, %v4328, 0
    %4406 = vmatprep.subr.mxu0 0.0
    %4407 = vmatpush1.msra.mxu0 0.0
    %4408 = vmatprep.subr.mxu0 0.0
    %4409 = vmatpush1.msra.mxu0 0.0
    %4410 = vmatprep.subr.mxu0 0.0
    %4411 = vmatpush1.msra.mxu0 0.0
    %4412 = vmatprep.subr.mxu0 0.0
    %4413 = vmatpush1.msra.mxu0 0.0
    %4414 = vmatprep.subr.mxu0 0.0
    %4415 = vmatpush1.msra.mxu0 0.0
    %4416 = vmatprep.subr.mxu0 0.0
    %4417 = vmatpush1.msra.mxu0 0.0
    %4418 = vmatprep.subr.mxu0 0.0
    %4419 = vmatpush1.msra.mxu0 0.0
    %4420 = vmatprep.subr.mxu0 0.0
    %4421 = vmatpush1.msra.mxu0 0.0
    %4422 = vmatprep.subr.mxu0 0.0
    %4423 = vmatpush1.msra.mxu0 0.0
    %4424 = vmatprep.subr.mxu0 0.0
    %4425 = vmatpush1.msra.mxu0 0.0
    %4426 = vmatprep.subr.mxu0 0.0
    %4427 = vmatpush1.msra.mxu0 0.0
    %4428 = vmatprep.subr.mxu0 0.0
    %4429 = vmatpush1.msra.mxu0 0.0
    %4430 = vmatprep.subr.mxu0 0.0
    %4431 = vmatpush1.msra.mxu0 %v3035
    %4432 = vmatprep.subr.mxu0 0.0
    %4433 = vmatpush1.msra.mxu0 %v3034
    %4434 = vmatprep.subr.mxu0 0.0
    %4435 = vmatpush1.msra.mxu0 %v3033
    %4436 = vmatprep.subr.mxu0 0.0
    %4437 = vmatpush1.msra.mxu0 %v3032
    %4438 = vmatprep.subr.mxu0 0.0
    %4439 = vmatpush2.msra.mxu0 0.0
    %4440 = vmatprep.subr.mxu0 0.0
    %4441 = vmatpush2.msra.mxu0 0.0
    %4442 = vmatprep.subr.mxu0 0.0
    %4443 = vmatpush2.msra.mxu0 0.0
    %4444 = vmatprep.subr.mxu0 0.0
    %4445 = vmatpush2.msra.mxu0 0.0
    %4446 = vmatprep.subr.mxu0 0.0
    %4447 = vmatpush2.msra.mxu0 0.0
    %4448 = vmatprep.subr.mxu0 0.0
    %4449 = vmatpush2.msra.mxu0 0.0
    %4450 = vmatprep.subr.mxu0 0.0
    %4451 = vmatpush2.msra.mxu0 0.0
    %4452 = vmatprep.subr.mxu0 0.0
    %4453 = vmatpush2.msra.mxu0 0.0
    %4454 = vmatprep.subr.mxu0 0.0
    %4455 = vmatpush2.msra.mxu0 0.0
    %4456 = vmatprep.subr.mxu0 0.0
    %4457 = vmatpush2.msra.mxu0 0.0
    %4458 = vmatprep.subr.mxu0 0.0
    %4459 = vmatpush2.msra.mxu0 0.0
    %4460 = vmatprep.subr.mxu0 0.0
    %4461 = vmatpush2.msra.mxu0 0.0
    %4462 = vmatprep.subr.mxu0 0.0
    %4463 = vmatpush2.msra.mxu0 0.0
    %4464 = vmatprep.subr.mxu0 0.0
    %4465 = vmatpush2.msra.mxu0 0.0
    %4466 = vmatprep.subr.mxu0 0.0
    %4467 = vmatpush2.msra.mxu0 0.0
    %4468 = vmatprep.subr.mxu0 0.0
    %4469 = vmatpush2.msra.mxu0 0.0
    %4470 = vmatprep.mubr.f32.mxu0 0.0
    %4471 = vmatmul.mubr.f32.gmra.mxu0 %v4404
    %v4472 = vpop.f32.mrf.mxu0
    %v4473 = vadd.f32 0.0, %v4472
    %v4474 = vpop.f32.mrf.mxu0
    %4475 = vdwg.mxu0
    %v4476 = vadd.f32 %v3282, %v4473
    %v4477 = vxor.u32 %v4403, 2147483648
    %v4478 = vmul.f32 %v4477, 1.442695
    %v4479 = vpow.pop %v4478
    %v4480 = vadd.f32 %v4479, 1.0
    %v4481 = vrcp.pop %v4480
    %v4482 = vmul.f32 1.0, %v4481
    %v4483 = vtanh.pop %v4403
    %v4484 = vmul.f32 %v4482, %v4290
    %4486 = vrot.lane.b32.xlu0 %v4483, 32
    %v4487 = vpop.permute.xlu0 %4486
    %v4489 = vmul.f32 %v4482, %v4487
    %4491 = vrot.lane.b32.xlu0 %v4489, 32
    %v4492 = vpop.permute.xlu0 %4491
    %v4494 = vadd.f32 %v4484, %v4492
    %v4495 = vtanh.pop %v4494
    %4497 = vrot.lane.b32.xlu0 %v4495, 32
    %v4498 = vpop.permute.xlu0 %4497
    %v4500 = vmul.f32 %v4482, %v4498
    %v4501 = vxor.u32 %v4476, 2147483648
    %v4502 = vmul.f32 %v4501, 1.442695
    %v4503 = vpow.pop %v4502
    %v4504 = vadd.f32 %v4503, 1.0
    %v4505 = vrcp.pop %v4504
    %v4506 = vmul.f32 1.0, %v4505
    %v4507 = vtanh.pop %v4476
    %v4508 = vmul.f32 %v4506, %v4314
    %4510 = vrot.lane.b32.xlu0 %v4507, 32
    %v4511 = vpop.permute.xlu0 %4510
    %v4513 = vmul.f32 %v4506, %v4511
    %4515 = vrot.lane.b32.xlu0 %v4513, 32
    %v4516 = vpop.permute.xlu0 %4515
    %v4518 = vadd.f32 %v4508, %v4516
    %v4519 = vtanh.pop %v4518
    %4521 = vrot.lane.b32.xlu0 %v4519, 32
    %v4522 = vpop.permute.xlu0 %4521
    %v4524 = vmul.f32 %v4506, %v4522
    %4526 = vrot.lane.b32.xlu0 %v4500, 64
    %v4527 = vpop.permute.xlu0 %4526
    %4529 = vst.msk [vmem:[#allocation3 + $0x28] sm:$0xff] %vm699, %v4527
    %4531 = vrot.lane.b32.xlu0 %v4524, 64
    %v4532 = vpop.permute.xlu0 %4531
    %4534 = vst.msk [vmem:[#allocation4 + $0x10] sm:$0xff] %vm699, %v4532
    %v4535 = vsel %vm699, %v4527, 0
    %4537 = vmatprep.subr.mxu0 0.0
    %4538 = vmatpush1.msra.mxu0 0.0
    %4539 = vmatprep.subr.mxu0 0.0
    %4540 = vmatpush1.msra.mxu0 0.0
    %4541 = vmatprep.subr.mxu0 0.0
    %4542 = vmatpush1.msra.mxu0 0.0
    %4543 = vmatprep.subr.mxu0 0.0
    %4544 = vmatpush1.msra.mxu0 0.0
    %4545 = vmatprep.subr.mxu0 0.0
    %4546 = vmatpush1.msra.mxu0 0.0
    %4547 = vmatprep.subr.mxu0 0.0
    %4548 = vmatpush1.msra.mxu0 0.0
    %4549 = vmatprep.subr.mxu0 0.0
    %4550 = vmatpush1.msra.mxu0 0.0
    %4551 = vmatprep.subr.mxu0 0.0
    %4552 = vmatpush1.msra.mxu0 0.0
    %4553 = vmatprep.subr.mxu0 0.0
    %4554 = vmatpush1.msra.mxu0 0.0
    %4555 = vmatprep.subr.mxu0 0.0
    %4556 = vmatpush1.msra.mxu0 0.0
    %4557 = vmatprep.subr.mxu0 0.0
    %4558 = vmatpush1.msra.mxu0 0.0
    %4559 = vmatprep.subr.mxu0 0.0
    %4560 = vmatpush1.msra.mxu0 0.0
    %4561 = vmatprep.subr.mxu0 0.0
    %4562 = vmatpush1.msra.mxu0 %v3031
    %4563 = vmatprep.subr.mxu0 0.0
    %4564 = vmatpush1.msra.mxu0 %v3030
    %4565 = vmatprep.subr.mxu0 0.0
    %4566 = vmatpush1.msra.mxu0 %v3029
    %4567 = vmatprep.subr.mxu0 0.0
    %4568 = vmatpush1.msra.mxu0 %v3028
    %4569 = vmatprep.subr.mxu0 0.0
    %4570 = vmatpush2.msra.mxu0 0.0
    %4571 = vmatprep.subr.mxu0 0.0
    %4572 = vmatpush2.msra.mxu0 0.0
    %4573 = vmatprep.subr.mxu0 0.0
    %4574 = vmatpush2.msra.mxu0 0.0
    %4575 = vmatprep.subr.mxu0 0.0
    %4576 = vmatpush2.msra.mxu0 0.0
    %4577 = vmatprep.subr.mxu0 0.0
    %4578 = vmatpush2.msra.mxu0 0.0
    %4579 = vmatprep.subr.mxu0 0.0
    %4580 = vmatpush2.msra.mxu0 0.0
    %4581 = vmatprep.subr.mxu0 0.0
    %4582 = vmatpush2.msra.mxu0 0.0
    %4583 = vmatprep.subr.mxu0 0.0
    %4584 = vmatpush2.msra.mxu0 0.0
    %4585 = vmatprep.subr.mxu0 0.0
    %4586 = vmatpush2.msra.mxu0 0.0
    %4587 = vmatprep.subr.mxu0 0.0
    %4588 = vmatpush2.msra.mxu0 0.0
    %4589 = vmatprep.subr.mxu0 0.0
    %4590 = vmatpush2.msra.mxu0 0.0
    %4591 = vmatprep.subr.mxu0 0.0
    %4592 = vmatpush2.msra.mxu0 0.0
    %4593 = vmatprep.subr.mxu0 0.0
    %4594 = vmatpush2.msra.mxu0 0.0
    %4595 = vmatprep.subr.mxu0 0.0
    %4596 = vmatpush2.msra.mxu0 0.0
    %4597 = vmatprep.subr.mxu0 0.0
    %4598 = vmatpush2.msra.mxu0 0.0
    %4599 = vmatprep.subr.mxu0 0.0
    %4600 = vmatpush2.msra.mxu0 0.0
    %4601 = vmatprep.mubr.f32.mxu0 0.0
    %4602 = vmatmul.mubr.f32.gmra.mxu0 %v4535
    %v4603 = vpop.f32.mrf.mxu0
    %v4604 = vadd.f32 0.0, %v4603
    %v4605 = vpop.f32.mrf.mxu0
    %4606 = vdwg.mxu0
    %v4607 = vadd.f32 %v3191, %v4604
    %v4608 = vsel %vm699, %v4532, 0
    %4610 = vmatprep.subr.mxu0 0.0
    %4611 = vmatpush1.msra.mxu0 0.0
    %4612 = vmatprep.subr.mxu0 0.0
    %4613 = vmatpush1.msra.mxu0 0.0
    %4614 = vmatprep.subr.mxu0 0.0
    %4615 = vmatpush1.msra.mxu0 0.0
    %4616 = vmatprep.subr.mxu0 0.0
    %4617 = vmatpush1.msra.mxu0 0.0
    %4618 = vmatprep.subr.mxu0 0.0
    %4619 = vmatpush1.msra.mxu0 0.0
    %4620 = vmatprep.subr.mxu0 0.0
    %4621 = vmatpush1.msra.mxu0 0.0
    %4622 = vmatprep.subr.mxu0 0.0
    %4623 = vmatpush1.msra.mxu0 0.0
    %4624 = vmatprep.subr.mxu0 0.0
    %4625 = vmatpush1.msra.mxu0 0.0
    %4626 = vmatprep.subr.mxu0 0.0
    %4627 = vmatpush1.msra.mxu0 0.0
    %4628 = vmatprep.subr.mxu0 0.0
    %4629 = vmatpush1.msra.mxu0 0.0
    %4630 = vmatprep.subr.mxu0 0.0
    %4631 = vmatpush1.msra.mxu0 0.0
    %4632 = vmatprep.subr.mxu0 0.0
    %4633 = vmatpush1.msra.mxu0 0.0
    %4634 = vmatprep.subr.mxu0 0.0
    %4635 = vmatpush1.msra.mxu0 %v3035
    %4636 = vmatprep.subr.mxu0 0.0
    %4637 = vmatpush1.msra.mxu0 %v3034
    %4638 = vmatprep.subr.mxu0 0.0
    %4639 = vmatpush1.msra.mxu0 %v3033
    %4640 = vmatprep.subr.mxu0 0.0
    %4641 = vmatpush1.msra.mxu0 %v3032
    %4642 = vmatprep.subr.mxu0 0.0
    %4643 = vmatpush2.msra.mxu0 0.0
    %4644 = vmatprep.subr.mxu0 0.0
    %4645 = vmatpush2.msra.mxu0 0.0
    %4646 = vmatprep.subr.mxu0 0.0
    %4647 = vmatpush2.msra.mxu0 0.0
    %4648 = vmatprep.subr.mxu0 0.0
    %4649 = vmatpush2.msra.mxu0 0.0
    %4650 = vmatprep.subr.mxu0 0.0
    %4651 = vmatpush2.msra.mxu0 0.0
    %4652 = vmatprep.subr.mxu0 0.0
    %4653 = vmatpush2.msra.mxu0 0.0
    %4654 = vmatprep.subr.mxu0 0.0
    %4655 = vmatpush2.msra.mxu0 0.0
    %4656 = vmatprep.subr.mxu0 0.0
    %4657 = vmatpush2.msra.mxu0 0.0
    %4658 = vmatprep.subr.mxu0 0.0
    %4659 = vmatpush2.msra.mxu0 0.0
    %4660 = vmatprep.subr.mxu0 0.0
    %4661 = vmatpush2.msra.mxu0 0.0
    %4662 = vmatprep.subr.mxu0 0.0
    %4663 = vmatpush2.msra.mxu0 0.0
    %4664 = vmatprep.subr.mxu0 0.0
    %4665 = vmatpush2.msra.mxu0 0.0
    %4666 = vmatprep.subr.mxu0 0.0
    %4667 = vmatpush2.msra.mxu0 0.0
    %4668 = vmatprep.subr.mxu0 0.0
    %4669 = vmatpush2.msra.mxu0 0.0
    %4670 = vmatprep.subr.mxu0 0.0
    %4671 = vmatpush2.msra.mxu0 0.0
    %4672 = vmatprep.subr.mxu0 0.0
    %4673 = vmatpush2.msra.mxu0 0.0
    %4674 = vmatprep.mubr.f32.mxu0 0.0
    %4675 = vmatmul.mubr.f32.gmra.mxu0 %v4608
    %v4676 = vpop.f32.mrf.mxu0
    %v4677 = vadd.f32 0.0, %v4676
    %v4678 = vpop.f32.mrf.mxu0
    %4679 = vdwg.mxu0
    %v4680 = vadd.f32 %v3277, %v4677
    %v4681 = vxor.u32 %v4607, 2147483648
    %v4682 = vmul.f32 %v4681, 1.442695
    %v4683 = vpow.pop %v4682
    %v4684 = vadd.f32 %v4683, 1.0
    %v4685 = vrcp.pop %v4684
    %v4686 = vmul.f32 1.0, %v4685
    %v4687 = vtanh.pop %v4607
    %v4688 = vmul.f32 %v4686, %v4494
    %4690 = vrot.lane.b32.xlu0 %v4687, 32
    %v4691 = vpop.permute.xlu0 %4690
    %v4693 = vmul.f32 %v4686, %v4691
    %4695 = vrot.lane.b32.xlu0 %v4693, 32
    %v4696 = vpop.permute.xlu0 %4695
    %v4698 = vadd.f32 %v4688, %v4696
    %v4699 = vtanh.pop %v4698
    %4701 = vrot.lane.b32.xlu0 %v4699, 32
    %v4702 = vpop.permute.xlu0 %4701
    %v4704 = vmul.f32 %v4686, %v4702
    %v4705 = vxor.u32 %v4680, 2147483648
    %v4706 = vmul.f32 %v4705, 1.442695
    %v4707 = vpow.pop %v4706
    %v4708 = vadd.f32 %v4707, 1.0
    %v4709 = vrcp.pop %v4708
    %v4710 = vmul.f32 1.0, %v4709
    %v4711 = vtanh.pop %v4680
    %v4712 = vmul.f32 %v4710, %v4518
    %4714 = vrot.lane.b32.xlu0 %v4711, 32
    %v4715 = vpop.permute.xlu0 %4714
    %v4717 = vmul.f32 %v4710, %v4715
    %4719 = vrot.lane.b32.xlu0 %v4717, 32
    %v4720 = vpop.permute.xlu0 %4719
    %v4722 = vadd.f32 %v4712, %v4720
    %v4723 = vtanh.pop %v4722
    %4725 = vrot.lane.b32.xlu0 %v4723, 32
    %v4726 = vpop.permute.xlu0 %4725
    %v4728 = vmul.f32 %v4710, %v4726
    %4730 = vrot.lane.b32.xlu0 %v4704, 64
    %v4731 = vpop.permute.xlu0 %4730
    %4733 = vst.msk [vmem:[#allocation3 + $0x30] sm:$0xff] %vm699, %v4731
    %4735 = vrot.lane.b32.xlu0 %v4728, 64
    %v4736 = vpop.permute.xlu0 %4735
    %4738 = vst.msk [vmem:[#allocation4 + $0x8] sm:$0xff] %vm699, %v4736
    %v4739 = vsel %vm699, %v4731, 0
    %4741 = vmatprep.subr.mxu0 0.0
    %4742 = vmatpush1.msra.mxu0 0.0
    %4743 = vmatprep.subr.mxu0 0.0
    %4744 = vmatpush1.msra.mxu0 0.0
    %4745 = vmatprep.subr.mxu0 0.0
    %4746 = vmatpush1.msra.mxu0 0.0
    %4747 = vmatprep.subr.mxu0 0.0
    %4748 = vmatpush1.msra.mxu0 0.0
    %4749 = vmatprep.subr.mxu0 0.0
    %4750 = vmatpush1.msra.mxu0 0.0
    %4751 = vmatprep.subr.mxu0 0.0
    %4752 = vmatpush1.msra.mxu0 0.0
    %4753 = vmatprep.subr.mxu0 0.0
    %4754 = vmatpush1.msra.mxu0 0.0
    %4755 = vmatprep.subr.mxu0 0.0
    %4756 = vmatpush1.msra.mxu0 0.0
    %4757 = vmatprep.subr.mxu0 0.0
    %4758 = vmatpush1.msra.mxu0 0.0
    %4759 = vmatprep.subr.mxu0 0.0
    %4760 = vmatpush1.msra.mxu0 0.0
    %4761 = vmatprep.subr.mxu0 0.0
    %4762 = vmatpush1.msra.mxu0 0.0
    %4763 = vmatprep.subr.mxu0 0.0
    %4764 = vmatpush1.msra.mxu0 0.0
    %4765 = vmatprep.subr.mxu0 0.0
    %4766 = vmatpush1.msra.mxu0 %v3031
    %4767 = vmatprep.subr.mxu0 0.0
    %4768 = vmatpush1.msra.mxu0 %v3030
    %4769 = vmatprep.subr.mxu0 0.0
    %4770 = vmatpush1.msra.mxu0 %v3029
    %4771 = vmatprep.subr.mxu0 0.0
    %4772 = vmatpush1.msra.mxu0 %v3028
    %4773 = vmatprep.subr.mxu0 0.0
    %4774 = vmatpush2.msra.mxu0 0.0
    %4775 = vmatprep.subr.mxu0 0.0
    %4776 = vmatpush2.msra.mxu0 0.0
    %4777 = vmatprep.subr.mxu0 0.0
    %4778 = vmatpush2.msra.mxu0 0.0
    %4779 = vmatprep.subr.mxu0 0.0
    %4780 = vmatpush2.msra.mxu0 0.0
    %4781 = vmatprep.subr.mxu0 0.0
    %4782 = vmatpush2.msra.mxu0 0.0
    %4783 = vmatprep.subr.mxu0 0.0
    %4784 = vmatpush2.msra.mxu0 0.0
    %4785 = vmatprep.subr.mxu0 0.0
    %4786 = vmatpush2.msra.mxu0 0.0
    %4787 = vmatprep.subr.mxu0 0.0
    %4788 = vmatpush2.msra.mxu0 0.0
    %4789 = vmatprep.subr.mxu0 0.0
    %4790 = vmatpush2.msra.mxu0 0.0
    %4791 = vmatprep.subr.mxu0 0.0
    %4792 = vmatpush2.msra.mxu0 0.0
    %4793 = vmatprep.subr.mxu0 0.0
    %4794 = vmatpush2.msra.mxu0 0.0
    %4795 = vmatprep.subr.mxu0 0.0
    %4796 = vmatpush2.msra.mxu0 0.0
    %4797 = vmatprep.subr.mxu0 0.0
    %4798 = vmatpush2.msra.mxu0 0.0
    %4799 = vmatprep.subr.mxu0 0.0
    %4800 = vmatpush2.msra.mxu0 0.0
    %4801 = vmatprep.subr.mxu0 0.0
    %4802 = vmatpush2.msra.mxu0 0.0
    %4803 = vmatprep.subr.mxu0 0.0
    %4804 = vmatpush2.msra.mxu0 0.0
    %4805 = vmatprep.mubr.f32.mxu0 0.0
    %4806 = vmatmul.mubr.f32.gmra.mxu0 %v4739
    %v4807 = vpop.f32.mrf.mxu0
    %v4808 = vadd.f32 0.0, %v4807
    %v4809 = vpop.f32.mrf.mxu0
    %4810 = vdwg.mxu0
    %v4811 = vadd.f32 %v3196, %v4808
    %v4812 = vsel %vm699, %v4736, 0
    %4814 = vmatprep.subr.mxu0 0.0
    %4815 = vmatpush1.msra.mxu0 0.0
    %4816 = vmatprep.subr.mxu0 0.0
    %4817 = vmatpush1.msra.mxu0 0.0
    %4818 = vmatprep.subr.mxu0 0.0
    %4819 = vmatpush1.msra.mxu0 0.0
    %4820 = vmatprep.subr.mxu0 0.0
    %4821 = vmatpush1.msra.mxu0 0.0
    %4822 = vmatprep.subr.mxu0 0.0
    %4823 = vmatpush1.msra.mxu0 0.0
    %4824 = vmatprep.subr.mxu0 0.0
    %4825 = vmatpush1.msra.mxu0 0.0
    %4826 = vmatprep.subr.mxu0 0.0
    %4827 = vmatpush1.msra.mxu0 0.0
    %4828 = vmatprep.subr.mxu0 0.0
    %4829 = vmatpush1.msra.mxu0 0.0
    %4830 = vmatprep.subr.mxu0 0.0
    %4831 = vmatpush1.msra.mxu0 0.0
    %4832 = vmatprep.subr.mxu0 0.0
    %4833 = vmatpush1.msra.mxu0 0.0
    %4834 = vmatprep.subr.mxu0 0.0
    %4835 = vmatpush1.msra.mxu0 0.0
    %4836 = vmatprep.subr.mxu0 0.0
    %4837 = vmatpush1.msra.mxu0 0.0
    %4838 = vmatprep.subr.mxu0 0.0
    %4839 = vmatpush1.msra.mxu0 %v3035
    %4840 = vmatprep.subr.mxu0 0.0
    %4841 = vmatpush1.msra.mxu0 %v3034
    %4842 = vmatprep.subr.mxu0 0.0
    %4843 = vmatpush1.msra.mxu0 %v3033
    %4844 = vmatprep.subr.mxu0 0.0
    %4845 = vmatpush1.msra.mxu0 %v3032
    %4846 = vmatprep.subr.mxu0 0.0
    %4847 = vmatpush2.msra.mxu0 0.0
    %4848 = vmatprep.subr.mxu0 0.0
    %4849 = vmatpush2.msra.mxu0 0.0
    %4850 = vmatprep.subr.mxu0 0.0
    %4851 = vmatpush2.msra.mxu0 0.0
    %4852 = vmatprep.subr.mxu0 0.0
    %4853 = vmatpush2.msra.mxu0 0.0
    %4854 = vmatprep.subr.mxu0 0.0
    %4855 = vmatpush2.msra.mxu0 0.0
    %4856 = vmatprep.subr.mxu0 0.0
    %4857 = vmatpush2.msra.mxu0 0.0
    %4858 = vmatprep.subr.mxu0 0.0
    %4859 = vmatpush2.msra.mxu0 0.0
    %4860 = vmatprep.subr.mxu0 0.0
    %4861 = vmatpush2.msra.mxu0 0.0
    %4862 = vmatprep.subr.mxu0 0.0
    %4863 = vmatpush2.msra.mxu0 0.0
    %4864 = vmatprep.subr.mxu0 0.0
    %4865 = vmatpush2.msra.mxu0 0.0
    %4866 = vmatprep.subr.mxu0 0.0
    %4867 = vmatpush2.msra.mxu0 0.0
    %4868 = vmatprep.subr.mxu0 0.0
    %4869 = vmatpush2.msra.mxu0 0.0
    %4870 = vmatprep.subr.mxu0 0.0
    %4871 = vmatpush2.msra.mxu0 0.0
    %4872 = vmatprep.subr.mxu0 0.0
    %4873 = vmatpush2.msra.mxu0 0.0
    %4874 = vmatprep.subr.mxu0 0.0
    %4875 = vmatpush2.msra.mxu0 0.0
    %4876 = vmatprep.subr.mxu0 0.0
    %4877 = vmatpush2.msra.mxu0 0.0
    %4878 = vmatprep.mubr.f32.mxu0 0.0
    %4879 = vmatmul.mubr.f32.gmra.mxu0 %v4812
    %v4880 = vpop.f32.mrf.mxu0
    %v4881 = vadd.f32 0.0, %v4880
    %v4882 = vpop.f32.mrf.mxu0
    %4883 = vdwg.mxu0
    %v4884 = vadd.f32 %v3272, %v4881
    %v4885 = vxor.u32 %v4811, 2147483648
    %v4886 = vmul.f32 %v4885, 1.442695
    %v4887 = vpow.pop %v4886
    %v4888 = vadd.f32 %v4887, 1.0
    %v4889 = vrcp.pop %v4888
    %v4890 = vmul.f32 1.0, %v4889
    %v4891 = vtanh.pop %v4811
    %v4892 = vmul.f32 %v4890, %v4698
    %4894 = vrot.lane.b32.xlu0 %v4891, 32
    %v4895 = vpop.permute.xlu0 %4894
    %v4897 = vmul.f32 %v4890, %v4895
    %4899 = vrot.lane.b32.xlu0 %v4897, 32
    %v4900 = vpop.permute.xlu0 %4899
    %v4902 = vadd.f32 %v4892, %v4900
    %v4903 = vtanh.pop %v4902
    %4905 = vrot.lane.b32.xlu0 %v4903, 32
    %v4906 = vpop.permute.xlu0 %4905
    %v4908 = vmul.f32 %v4890, %v4906
    %v4909 = vxor.u32 %v4884, 2147483648
    %v4910 = vmul.f32 %v4909, 1.442695
    %v4911 = vpow.pop %v4910
    %v4912 = vadd.f32 %v4911, 1.0
    %v4913 = vrcp.pop %v4912
    %v4914 = vmul.f32 1.0, %v4913
    %v4915 = vtanh.pop %v4884
    %v4916 = vmul.f32 %v4914, %v4722
    %4918 = vrot.lane.b32.xlu0 %v4915, 32
    %v4919 = vpop.permute.xlu0 %4918
    %v4921 = vmul.f32 %v4914, %v4919
    %4923 = vrot.lane.b32.xlu0 %v4921, 32
    %v4924 = vpop.permute.xlu0 %4923
    %v4926 = vadd.f32 %v4916, %v4924
    %v4927 = vtanh.pop %v4926
    %4929 = vrot.lane.b32.xlu0 %v4927, 32
    %v4930 = vpop.permute.xlu0 %4929
    %v4932 = vmul.f32 %v4914, %v4930
    %4934 = vrot.lane.b32.xlu0 %v4908, 64
    %v4935 = vpop.permute.xlu0 %4934
    %4937 = vst.msk [vmem:[#allocation3 + $0x38] sm:$0xff] %vm699, %v4935
    %4939 = vrot.lane.b32.xlu0 %v4932, 64
    %v4940 = vpop.permute.xlu0 %4939
    %4942 = vst.msk [vmem:[#allocation4] sm:$0xff] %vm699, %v4940
    %v4943 = vld [vmem:[#allocation3] sm:$0xff]
    %v4944 = vld [vmem:[#allocation3 + $0x8] sm:$0xff]
    %v4945 = vld [vmem:[#allocation3 + $0x10] sm:$0xff]
    %v4946 = vld [vmem:[#allocation3 + $0x18] sm:$0xff]
    %v4947 = vld [vmem:[#allocation3 + $0x20] sm:$0xff]
    %v4948 = vld [vmem:[#allocation3 + $0x28] sm:$0xff]
    %v4949 = vld [vmem:[#allocation3 + $0x30] sm:$0xff]
    %v4950 = vld [vmem:[#allocation3 + $0x38] sm:$0xff]
    %v4951 = vld [vmem:[#allocation4] sm:$0xff]
    %v4952 = vld [vmem:[#allocation4 + $0x8] sm:$0xff]
    %v4953 = vld [vmem:[#allocation4 + $0x10] sm:$0xff]
    %v4954 = vld [vmem:[#allocation4 + $0x18] sm:$0xff]
    %v4955 = vld [vmem:[#allocation4 + $0x20] sm:$0xff]
    %v4956 = vld [vmem:[#allocation4 + $0x28] sm:$0xff]
    %v4957 = vld [vmem:[#allocation4 + $0x30] sm:$0xff]
    %v4958 = vld [vmem:[#allocation4 + $0x38] sm:$0xff]
    %v4960 = vsel %vm699, %v4951, 0
    %v4963 = vsel %vm699, %v4952, 0
    %v4966 = vsel %vm699, %v4953, 0
    %v4969 = vsel %vm699, %v4954, 0
    %v4972 = vsel %vm699, %v4955, 0
    %v4975 = vsel %vm699, %v4956, 0
    %v4978 = vsel %vm699, %v4957, 0
    %v4981 = vsel %vm699, %v4958, 0
    %4983 = vmatprep.subr.mxu0 0.0
    %4984 = vmatpush1.msra.mxu0 0.0
    %4985 = vmatprep.subr.mxu0 0.0
    %4986 = vmatpush1.msra.mxu0 0.0
    %4987 = vmatprep.subr.mxu0 0.0
    %4988 = vmatpush1.msra.mxu0 0.0
    %4989 = vmatprep.subr.mxu0 0.0
    %4990 = vmatpush1.msra.mxu0 0.0
    %4991 = vmatprep.subr.mxu0 0.0
    %4992 = vmatpush1.msra.mxu0 0.0
    %4993 = vmatprep.subr.mxu0 0.0
    %4994 = vmatpush1.msra.mxu0 0.0
    %4995 = vmatprep.subr.mxu0 0.0
    %4996 = vmatpush1.msra.mxu0 0.0
    %4997 = vmatprep.subr.mxu0 0.0
    %4998 = vmatpush1.msra.mxu0 0.0
    %4999 = vmatprep.subr.mxu0 0.0
    %5000 = vmatpush1.msra.mxu0 0.0
    %5001 = vmatprep.subr.mxu0 0.0
    %5002 = vmatpush1.msra.mxu0 0.0
    %5003 = vmatprep.subr.mxu0 0.0
    %5004 = vmatpush1.msra.mxu0 0.0
    %5005 = vmatprep.subr.mxu0 0.0
    %5006 = vmatpush1.msra.mxu0 0.0
    %5007 = vmatprep.subr.mxu0 0.0
    %5008 = vmatpush1.msra.mxu0 %v3045
    %5009 = vmatprep.subr.mxu0 0.0
    %5010 = vmatpush1.msra.mxu0 %v3044
    %5011 = vmatprep.subr.mxu0 0.0
    %5012 = vmatpush1.msra.mxu0 %v3043
    %5013 = vmatprep.subr.mxu0 0.0
    %5014 = vmatpush1.msra.mxu0 %v3042
    %5015 = vmatprep.subr.mxu0 0.0
    %5016 = vmatpush2.msra.mxu0 0.0
    %5017 = vmatprep.subr.mxu0 0.0
    %5018 = vmatpush2.msra.mxu0 0.0
    %5019 = vmatprep.subr.mxu0 0.0
    %5020 = vmatpush2.msra.mxu0 0.0
    %5021 = vmatprep.subr.mxu0 0.0
    %5022 = vmatpush2.msra.mxu0 0.0
    %5023 = vmatprep.subr.mxu0 0.0
    %5024 = vmatpush2.msra.mxu0 0.0
    %5025 = vmatprep.subr.mxu0 0.0
    %5026 = vmatpush2.msra.mxu0 0.0
    %5027 = vmatprep.subr.mxu0 0.0
    %5028 = vmatpush2.msra.mxu0 0.0
    %5029 = vmatprep.subr.mxu0 0.0
    %5030 = vmatpush2.msra.mxu0 0.0
    %5031 = vmatprep.subr.mxu0 0.0
    %5032 = vmatpush2.msra.mxu0 0.0
    %5033 = vmatprep.subr.mxu0 0.0
    %5034 = vmatpush2.msra.mxu0 0.0
    %5035 = vmatprep.subr.mxu0 0.0
    %5036 = vmatpush2.msra.mxu0 0.0
    %5037 = vmatprep.subr.mxu0 0.0
    %5038 = vmatpush2.msra.mxu0 0.0
    %5039 = vmatprep.subr.mxu0 0.0
    %5040 = vmatpush2.msra.mxu0 0.0
    %5041 = vmatprep.subr.mxu0 0.0
    %5042 = vmatpush2.msra.mxu0 0.0
    %5043 = vmatprep.subr.mxu0 0.0
    %5044 = vmatpush2.msra.mxu0 0.0
    %5045 = vmatprep.subr.mxu0 0.0
    %5046 = vmatpush2.msra.mxu0 0.0
    %5047 = vmatprep.mubr.f32.mxu0 0.0
    %5048 = vmatmul.mubr.f32.gmra.mxu0 %v4960
    %v5049 = vpop.f32.mrf.mxu0
    %v5050 = vadd.f32 0.0, %v5049
    %v5051 = vpop.f32.mrf.mxu0
    %5052 = vmatprep.mubr.f32.mxu0 0.0
    %5053 = vmatmul.mubr.f32.gmra.mxu0 %v4963
    %v5054 = vpop.f32.mrf.mxu0
    %v5055 = vadd.f32 0.0, %v5054
    %v5056 = vpop.f32.mrf.mxu0
    %5057 = vmatprep.mubr.f32.mxu0 0.0
    %5058 = vmatmul.mubr.f32.gmra.mxu0 %v4966
    %v5059 = vpop.f32.mrf.mxu0
    %v5060 = vadd.f32 0.0, %v5059
    %v5061 = vpop.f32.mrf.mxu0
    %5062 = vmatprep.mubr.f32.mxu0 0.0
    %5063 = vmatmul.mubr.f32.gmra.mxu0 %v4969
    %v5064 = vpop.f32.mrf.mxu0
    %v5065 = vadd.f32 0.0, %v5064
    %v5066 = vpop.f32.mrf.mxu0
    %5067 = vmatprep.mubr.f32.mxu0 0.0
    %5068 = vmatmul.mubr.f32.gmra.mxu0 %v4972
    %v5069 = vpop.f32.mrf.mxu0
    %v5070 = vadd.f32 0.0, %v5069
    %v5071 = vpop.f32.mrf.mxu0
    %5072 = vmatprep.mubr.f32.mxu0 0.0
    %5073 = vmatmul.mubr.f32.gmra.mxu0 %v4975
    %v5074 = vpop.f32.mrf.mxu0
    %v5075 = vadd.f32 0.0, %v5074
    %v5076 = vpop.f32.mrf.mxu0
    %5077 = vmatprep.mubr.f32.mxu0 0.0
    %5078 = vmatmul.mubr.f32.gmra.mxu0 %v4978
    %v5079 = vpop.f32.mrf.mxu0
    %v5080 = vadd.f32 0.0, %v5079
    %v5081 = vpop.f32.mrf.mxu0
    %5082 = vmatprep.mubr.f32.mxu0 0.0
    %5083 = vmatmul.mubr.f32.gmra.mxu0 %v4981
    %v5084 = vpop.f32.mrf.mxu0
    %v5085 = vadd.f32 0.0, %v5084
    %v5086 = vpop.f32.mrf.mxu0
    %5087 = vdwg.mxu0
    %v5089 = vsel %vm699, %v4943, 0
    %v5092 = vsel %vm699, %v4944, 0
    %v5095 = vsel %vm699, %v4945, 0
    %v5098 = vsel %vm699, %v4946, 0
    %v5101 = vsel %vm699, %v4947, 0
    %v5104 = vsel %vm699, %v4948, 0
    %v5107 = vsel %vm699, %v4949, 0
    %v5110 = vsel %vm699, %v4950, 0
    %5112 = vmatprep.subr.mxu0 0.0
    %5113 = vmatpush1.msra.mxu0 0.0
    %5114 = vmatprep.subr.mxu0 0.0
    %5115 = vmatpush1.msra.mxu0 0.0
    %5116 = vmatprep.subr.mxu0 0.0
    %5117 = vmatpush1.msra.mxu0 0.0
    %5118 = vmatprep.subr.mxu0 0.0
    %5119 = vmatpush1.msra.mxu0 0.0
    %5120 = vmatprep.subr.mxu0 0.0
    %5121 = vmatpush1.msra.mxu0 0.0
    %5122 = vmatprep.subr.mxu0 0.0
    %5123 = vmatpush1.msra.mxu0 0.0
    %5124 = vmatprep.subr.mxu0 0.0
    %5125 = vmatpush1.msra.mxu0 0.0
    %5126 = vmatprep.subr.mxu0 0.0
    %5127 = vmatpush1.msra.mxu0 0.0
    %5128 = vmatprep.subr.mxu0 0.0
    %5129 = vmatpush1.msra.mxu0 0.0
    %5130 = vmatprep.subr.mxu0 0.0
    %5131 = vmatpush1.msra.mxu0 0.0
    %5132 = vmatprep.subr.mxu0 0.0
    %5133 = vmatpush1.msra.mxu0 0.0
    %5134 = vmatprep.subr.mxu0 0.0
    %5135 = vmatpush1.msra.mxu0 0.0
    %5136 = vmatprep.subr.mxu0 0.0
    %5137 = vmatpush1.msra.mxu0 %v3041
    %5138 = vmatprep.subr.mxu0 0.0
    %5139 = vmatpush1.msra.mxu0 %v3040
    %5140 = vmatprep.subr.mxu0 0.0
    %5141 = vmatpush1.msra.mxu0 %v3039
    %5142 = vmatprep.subr.mxu0 0.0
    %5143 = vmatpush1.msra.mxu0 %v3038
    %5144 = vmatprep.subr.mxu0 0.0
    %5145 = vmatpush2.msra.mxu0 0.0
    %5146 = vmatprep.subr.mxu0 0.0
    %5147 = vmatpush2.msra.mxu0 0.0
    %5148 = vmatprep.subr.mxu0 0.0
    %5149 = vmatpush2.msra.mxu0 0.0
    %5150 = vmatprep.subr.mxu0 0.0
    %5151 = vmatpush2.msra.mxu0 0.0
    %5152 = vmatprep.subr.mxu0 0.0
    %5153 = vmatpush2.msra.mxu0 0.0
    %5154 = vmatprep.subr.mxu0 0.0
    %5155 = vmatpush2.msra.mxu0 0.0
    %5156 = vmatprep.subr.mxu0 0.0
    %5157 = vmatpush2.msra.mxu0 0.0
    %5158 = vmatprep.subr.mxu0 0.0
    %5159 = vmatpush2.msra.mxu0 0.0
    %5160 = vmatprep.subr.mxu0 0.0
    %5161 = vmatpush2.msra.mxu0 0.0
    %5162 = vmatprep.subr.mxu0 0.0
    %5163 = vmatpush2.msra.mxu0 0.0
    %5164 = vmatprep.subr.mxu0 0.0
    %5165 = vmatpush2.msra.mxu0 0.0
    %5166 = vmatprep.subr.mxu0 0.0
    %5167 = vmatpush2.msra.mxu0 0.0
    %5168 = vmatprep.subr.mxu0 0.0
    %5169 = vmatpush2.msra.mxu0 0.0
    %5170 = vmatprep.subr.mxu0 0.0
    %5171 = vmatpush2.msra.mxu0 0.0
    %5172 = vmatprep.subr.mxu0 0.0
    %5173 = vmatpush2.msra.mxu0 0.0
    %5174 = vmatprep.subr.mxu0 0.0
    %5175 = vmatpush2.msra.mxu0 0.0
    %5176 = vmatprep.mubr.f32.mxu0 0.0
    %5177 = vmatmul.mubr.f32.gmra.mxu0 %v5089
    %v5178 = vpop.f32.mrf.mxu0
    %v5179 = vadd.f32 %v5050, %v5178
    %v5180 = vpop.f32.mrf.mxu0
    %5181 = vmatprep.mubr.f32.mxu0 0.0
    %5182 = vmatmul.mubr.f32.gmra.mxu0 %v5092
    %v5183 = vpop.f32.mrf.mxu0
    %v5184 = vadd.f32 %v5055, %v5183
    %v5185 = vpop.f32.mrf.mxu0
    %5186 = vmatprep.mubr.f32.mxu0 0.0
    %5187 = vmatmul.mubr.f32.gmra.mxu0 %v5095
    %v5188 = vpop.f32.mrf.mxu0
    %v5189 = vadd.f32 %v5060, %v5188
    %v5190 = vpop.f32.mrf.mxu0
    %5191 = vmatprep.mubr.f32.mxu0 0.0
    %5192 = vmatmul.mubr.f32.gmra.mxu0 %v5098
    %v5193 = vpop.f32.mrf.mxu0
    %v5194 = vadd.f32 %v5065, %v5193
    %v5195 = vpop.f32.mrf.mxu0
    %5196 = vmatprep.mubr.f32.mxu0 0.0
    %5197 = vmatmul.mubr.f32.gmra.mxu0 %v5101
    %v5198 = vpop.f32.mrf.mxu0
    %v5199 = vadd.f32 %v5070, %v5198
    %v5200 = vpop.f32.mrf.mxu0
    %5201 = vmatprep.mubr.f32.mxu0 0.0
    %5202 = vmatmul.mubr.f32.gmra.mxu0 %v5104
    %v5203 = vpop.f32.mrf.mxu0
    %v5204 = vadd.f32 %v5075, %v5203
    %v5205 = vpop.f32.mrf.mxu0
    %5206 = vmatprep.mubr.f32.mxu0 0.0
    %5207 = vmatmul.mubr.f32.gmra.mxu0 %v5107
    %v5208 = vpop.f32.mrf.mxu0
    %v5209 = vadd.f32 %v5080, %v5208
    %v5210 = vpop.f32.mrf.mxu0
    %5211 = vmatprep.mubr.f32.mxu0 0.0
    %5212 = vmatmul.mubr.f32.gmra.mxu0 %v5110
    %v5213 = vpop.f32.mrf.mxu0
    %v5214 = vadd.f32 %v5085, %v5213
    %v5215 = vpop.f32.mrf.mxu0
    %5216 = vdwg.mxu0
    %v5218 = vlaneseq
    %v5219 = vshrl.u32 %v5218, 7
    %v5220 = vsub.s32 0, %v5219
    %v5221 = vrot.slane %v3062, %v5220
    %v5223 = vadd.f32 %v5179, %v5221
    %v5224 = vadd.f32 %v5184, %v5221
    %v5225 = vadd.f32 %v5189, %v5221
    %v5226 = vadd.f32 %v5194, %v5221
    %v5227 = vadd.f32 %v5199, %v5221
    %v5228 = vadd.f32 %v5204, %v5221
    %v5229 = vadd.f32 %v5209, %v5221
    %v5230 = vadd.f32 %v5214, %v5221
    %5231 = vmatprep.subr.mxu0 0.0
    %5232 = vmatpush1.msra.mxu0 0.0
    %5233 = vmatprep.subr.mxu0 0.0
    %5234 = vmatpush1.msra.mxu0 0.0
    %5235 = vmatprep.subr.mxu0 0.0
    %5236 = vmatpush1.msra.mxu0 0.0
    %5237 = vmatprep.subr.mxu0 0.0
    %5238 = vmatpush1.msra.mxu0 0.0
    %5239 = vmatprep.subr.mxu0 0.0
    %5240 = vmatpush1.msra.mxu0 0.0
    %5241 = vmatprep.subr.mxu0 0.0
    %5242 = vmatpush1.msra.mxu0 0.0
    %5243 = vmatprep.subr.mxu0 0.0
    %5244 = vmatpush1.msra.mxu0 0.0
    %5245 = vmatprep.subr.mxu0 0.0
    %5246 = vmatpush1.msra.mxu0 0.0
    %5247 = vmatprep.subr.mxu0 0.0
    %5248 = vmatpush1.msra.mxu0 0.0
    %5249 = vmatprep.subr.mxu0 0.0
    %5250 = vmatpush1.msra.mxu0 0.0
    %5251 = vmatprep.subr.mxu0 0.0
    %5252 = vmatpush1.msra.mxu0 0.0
    %5253 = vmatprep.subr.mxu0 0.0
    %5254 = vmatpush1.msra.mxu0 0.0
    %5255 = vmatprep.subr.mxu0 0.0
    %5256 = vmatpush1.msra.mxu0 %v3053
    %5257 = vmatprep.subr.mxu0 0.0
    %5258 = vmatpush1.msra.mxu0 %v3052
    %5259 = vmatprep.subr.mxu0 0.0
    %5260 = vmatpush1.msra.mxu0 %v3051
    %5261 = vmatprep.subr.mxu0 0.0
    %5262 = vmatpush1.msra.mxu0 %v3050
    %5263 = vmatprep.subr.mxu0 0.0
    %5264 = vmatpush2.msra.mxu0 0.0
    %5265 = vmatprep.subr.mxu0 0.0
    %5266 = vmatpush2.msra.mxu0 0.0
    %5267 = vmatprep.subr.mxu0 0.0
    %5268 = vmatpush2.msra.mxu0 0.0
    %5269 = vmatprep.subr.mxu0 0.0
    %5270 = vmatpush2.msra.mxu0 0.0
    %5271 = vmatprep.subr.mxu0 0.0
    %5272 = vmatpush2.msra.mxu0 0.0
    %5273 = vmatprep.subr.mxu0 0.0
    %5274 = vmatpush2.msra.mxu0 0.0
    %5275 = vmatprep.subr.mxu0 0.0
    %5276 = vmatpush2.msra.mxu0 0.0
    %5277 = vmatprep.subr.mxu0 0.0
    %5278 = vmatpush2.msra.mxu0 0.0
    %5279 = vmatprep.subr.mxu0 0.0
    %5280 = vmatpush2.msra.mxu0 0.0
    %5281 = vmatprep.subr.mxu0 0.0
    %5282 = vmatpush2.msra.mxu0 0.0
    %5283 = vmatprep.subr.mxu0 0.0
    %5284 = vmatpush2.msra.mxu0 0.0
    %5285 = vmatprep.subr.mxu0 0.0
    %5286 = vmatpush2.msra.mxu0 0.0
    %5287 = vmatprep.subr.mxu0 0.0
    %5288 = vmatpush2.msra.mxu0 0.0
    %5289 = vmatprep.subr.mxu0 0.0
    %5290 = vmatpush2.msra.mxu0 0.0
    %5291 = vmatprep.subr.mxu0 0.0
    %5292 = vmatpush2.msra.mxu0 0.0
    %5293 = vmatprep.subr.mxu0 0.0
    %5294 = vmatpush2.msra.mxu0 0.0
    %5295 = vmatprep.mubr.f32.mxu0 0.0
    %5296 = vmatmul.mubr.f32.gmra.mxu0 %v4960
    %v5297 = vpop.f32.mrf.mxu0
    %v5298 = vadd.f32 0.0, %v5297
    %v5299 = vpop.f32.mrf.mxu0
    %5300 = vmatprep.mubr.f32.mxu0 0.0
    %5301 = vmatmul.mubr.f32.gmra.mxu0 %v4963
    %v5302 = vpop.f32.mrf.mxu0
    %v5303 = vadd.f32 0.0, %v5302
    %v5304 = vpop.f32.mrf.mxu0
    %5305 = vmatprep.mubr.f32.mxu0 0.0
    %5306 = vmatmul.mubr.f32.gmra.mxu0 %v4966
    %v5307 = vpop.f32.mrf.mxu0
    %v5308 = vadd.f32 0.0, %v5307
    %v5309 = vpop.f32.mrf.mxu0
    %5310 = vmatprep.mubr.f32.mxu0 0.0
    %5311 = vmatmul.mubr.f32.gmra.mxu0 %v4969
    %v5312 = vpop.f32.mrf.mxu0
    %v5313 = vadd.f32 0.0, %v5312
    %v5314 = vpop.f32.mrf.mxu0
    %5315 = vmatprep.mubr.f32.mxu0 0.0
    %5316 = vmatmul.mubr.f32.gmra.mxu0 %v4972
    %v5317 = vpop.f32.mrf.mxu0
    %v5318 = vadd.f32 0.0, %v5317
    %v5319 = vpop.f32.mrf.mxu0
    %5320 = vmatprep.mubr.f32.mxu0 0.0
    %5321 = vmatmul.mubr.f32.gmra.mxu0 %v4975
    %v5322 = vpop.f32.mrf.mxu0
    %v5323 = vadd.f32 0.0, %v5322
    %v5324 = vpop.f32.mrf.mxu0
    %5325 = vmatprep.mubr.f32.mxu0 0.0
    %5326 = vmatmul.mubr.f32.gmra.mxu0 %v4978
    %v5327 = vpop.f32.mrf.mxu0
    %v5328 = vadd.f32 0.0, %v5327
    %v5329 = vpop.f32.mrf.mxu0
    %5330 = vmatprep.mubr.f32.mxu0 0.0
    %5331 = vmatmul.mubr.f32.gmra.mxu0 %v4981
    %v5332 = vpop.f32.mrf.mxu0
    %v5333 = vadd.f32 0.0, %v5332
    %v5334 = vpop.f32.mrf.mxu0
    %5335 = vdwg.mxu0
    %5336 = vmatprep.subr.mxu0 0.0
    %5337 = vmatpush1.msra.mxu0 0.0
    %5338 = vmatprep.subr.mxu0 0.0
    %5339 = vmatpush1.msra.mxu0 0.0
    %5340 = vmatprep.subr.mxu0 0.0
    %5341 = vmatpush1.msra.mxu0 0.0
    %5342 = vmatprep.subr.mxu0 0.0
    %5343 = vmatpush1.msra.mxu0 0.0
    %5344 = vmatprep.subr.mxu0 0.0
    %5345 = vmatpush1.msra.mxu0 0.0
    %5346 = vmatprep.subr.mxu0 0.0
    %5347 = vmatpush1.msra.mxu0 0.0
    %5348 = vmatprep.subr.mxu0 0.0
    %5349 = vmatpush1.msra.mxu0 0.0
    %5350 = vmatprep.subr.mxu0 0.0
    %5351 = vmatpush1.msra.mxu0 0.0
    %5352 = vmatprep.subr.mxu0 0.0
    %5353 = vmatpush1.msra.mxu0 0.0
    %5354 = vmatprep.subr.mxu0 0.0
    %5355 = vmatpush1.msra.mxu0 0.0
    %5356 = vmatprep.subr.mxu0 0.0
    %5357 = vmatpush1.msra.mxu0 0.0
    %5358 = vmatprep.subr.mxu0 0.0
    %5359 = vmatpush1.msra.mxu0 0.0
    %5360 = vmatprep.subr.mxu0 0.0
    %5361 = vmatpush1.msra.mxu0 %v3049
    %5362 = vmatprep.subr.mxu0 0.0
    %5363 = vmatpush1.msra.mxu0 %v3048
    %5364 = vmatprep.subr.mxu0 0.0
    %5365 = vmatpush1.msra.mxu0 %v3047
    %5366 = vmatprep.subr.mxu0 0.0
    %5367 = vmatpush1.msra.mxu0 %v3046
    %5368 = vmatprep.subr.mxu0 0.0
    %5369 = vmatpush2.msra.mxu0 0.0
    %5370 = vmatprep.subr.mxu0 0.0
    %5371 = vmatpush2.msra.mxu0 0.0
    %5372 = vmatprep.subr.mxu0 0.0
    %5373 = vmatpush2.msra.mxu0 0.0
    %5374 = vmatprep.subr.mxu0 0.0
    %5375 = vmatpush2.msra.mxu0 0.0
    %5376 = vmatprep.subr.mxu0 0.0
    %5377 = vmatpush2.msra.mxu0 0.0
    %5378 = vmatprep.subr.mxu0 0.0
    %5379 = vmatpush2.msra.mxu0 0.0
    %5380 = vmatprep.subr.mxu0 0.0
    %5381 = vmatpush2.msra.mxu0 0.0
    %5382 = vmatprep.subr.mxu0 0.0
    %5383 = vmatpush2.msra.mxu0 0.0
    %5384 = vmatprep.subr.mxu0 0.0
    %5385 = vmatpush2.msra.mxu0 0.0
    %5386 = vmatprep.subr.mxu0 0.0
    %5387 = vmatpush2.msra.mxu0 0.0
    %5388 = vmatprep.subr.mxu0 0.0
    %5389 = vmatpush2.msra.mxu0 0.0
    %5390 = vmatprep.subr.mxu0 0.0
    %5391 = vmatpush2.msra.mxu0 0.0
    %5392 = vmatprep.subr.mxu0 0.0
    %5393 = vmatpush2.msra.mxu0 0.0
    %5394 = vmatprep.subr.mxu0 0.0
    %5395 = vmatpush2.msra.mxu0 0.0
    %5396 = vmatprep.subr.mxu0 0.0
    %5397 = vmatpush2.msra.mxu0 0.0
    %5398 = vmatprep.subr.mxu0 0.0
    %5399 = vmatpush2.msra.mxu0 0.0
    %5400 = vmatprep.mubr.f32.mxu0 0.0
    %5401 = vmatmul.mubr.f32.gmra.mxu0 %v5089
    %v5402 = vpop.f32.mrf.mxu0
    %v5403 = vadd.f32 %v5298, %v5402
    %v5404 = vpop.f32.mrf.mxu0
    %5405 = vmatprep.mubr.f32.mxu0 0.0
    %5406 = vmatmul.mubr.f32.gmra.mxu0 %v5092
    %v5407 = vpop.f32.mrf.mxu0
    %v5408 = vadd.f32 %v5303, %v5407
    %v5409 = vpop.f32.mrf.mxu0
    %5410 = vmatprep.mubr.f32.mxu0 0.0
    %5411 = vmatmul.mubr.f32.gmra.mxu0 %v5095
    %v5412 = vpop.f32.mrf.mxu0
    %v5413 = vadd.f32 %v5308, %v5412
    %v5414 = vpop.f32.mrf.mxu0
    %5415 = vmatprep.mubr.f32.mxu0 0.0
    %5416 = vmatmul.mubr.f32.gmra.mxu0 %v5098
    %v5417 = vpop.f32.mrf.mxu0
    %v5418 = vadd.f32 %v5313, %v5417
    %v5419 = vpop.f32.mrf.mxu0
    %5420 = vmatprep.mubr.f32.mxu0 0.0
    %5421 = vmatmul.mubr.f32.gmra.mxu0 %v5101
    %v5422 = vpop.f32.mrf.mxu0
    %v5423 = vadd.f32 %v5318, %v5422
    %v5424 = vpop.f32.mrf.mxu0
    %5425 = vmatprep.mubr.f32.mxu0 0.0
    %5426 = vmatmul.mubr.f32.gmra.mxu0 %v5104
    %v5427 = vpop.f32.mrf.mxu0
    %v5428 = vadd.f32 %v5323, %v5427
    %v5429 = vpop.f32.mrf.mxu0
    %5430 = vmatprep.mubr.f32.mxu0 0.0
    %5431 = vmatmul.mubr.f32.gmra.mxu0 %v5107
    %v5432 = vpop.f32.mrf.mxu0
    %v5433 = vadd.f32 %v5328, %v5432
    %v5434 = vpop.f32.mrf.mxu0
    %5435 = vmatprep.mubr.f32.mxu0 0.0
    %5436 = vmatmul.mubr.f32.gmra.mxu0 %v5110
    %v5437 = vpop.f32.mrf.mxu0
    %v5438 = vadd.f32 %v5333, %v5437
    %v5439 = vpop.f32.mrf.mxu0
    %5440 = vdwg.mxu0
    %v5442 = vlaneseq
    %v5443 = vshrl.u32 %v5442, 7
    %v5444 = vsub.s32 0, %v5443
    %v5445 = vrot.slane %v3063, %v5444
    %v5447 = vadd.f32 %v5403, %v5445
    %v5448 = vadd.f32 %v5408, %v5445
    %v5449 = vadd.f32 %v5413, %v5445
    %v5450 = vadd.f32 %v5418, %v5445
    %v5451 = vadd.f32 %v5423, %v5445
    %v5452 = vadd.f32 %v5428, %v5445
    %v5453 = vadd.f32 %v5433, %v5445
    %v5454 = vadd.f32 %v5438, %v5445
    %5455 = vmatprep.subr.mxu0 0.0
    %5456 = vmatpush1.msra.mxu0 0.0
    %5457 = vmatprep.subr.mxu0 0.0
    %5458 = vmatpush1.msra.mxu0 0.0
    %5459 = vmatprep.subr.mxu0 0.0
    %5460 = vmatpush1.msra.mxu0 0.0
    %5461 = vmatprep.subr.mxu0 0.0
    %5462 = vmatpush1.msra.mxu0 0.0
    %5463 = vmatprep.subr.mxu0 0.0
    %5464 = vmatpush1.msra.mxu0 0.0
    %5465 = vmatprep.subr.mxu0 0.0
    %5466 = vmatpush1.msra.mxu0 0.0
    %5467 = vmatprep.subr.mxu0 0.0
    %5468 = vmatpush1.msra.mxu0 0.0
    %5469 = vmatprep.subr.mxu0 0.0
    %5470 = vmatpush1.msra.mxu0 0.0
    %5471 = vmatprep.subr.mxu0 0.0
    %5472 = vmatpush1.msra.mxu0 0.0
    %5473 = vmatprep.subr.mxu0 0.0
    %5474 = vmatpush1.msra.mxu0 0.0
    %5475 = vmatprep.subr.mxu0 0.0
    %5476 = vmatpush1.msra.mxu0 0.0
    %5477 = vmatprep.subr.mxu0 0.0
    %5478 = vmatpush1.msra.mxu0 0.0
    %5479 = vmatprep.subr.mxu0 0.0
    %5480 = vmatpush1.msra.mxu0 %v3057
    %5481 = vmatprep.subr.mxu0 0.0
    %5482 = vmatpush1.msra.mxu0 %v3056
    %5483 = vmatprep.subr.mxu0 0.0
    %5484 = vmatpush1.msra.mxu0 %v3055
    %5485 = vmatprep.subr.mxu0 0.0
    %5486 = vmatpush1.msra.mxu0 %v3054
    %5487 = vmatprep.subr.mxu0 0.0
    %5488 = vmatpush2.msra.mxu0 0.0
    %5489 = vmatprep.subr.mxu0 0.0
    %5490 = vmatpush2.msra.mxu0 0.0
    %5491 = vmatprep.subr.mxu0 0.0
    %5492 = vmatpush2.msra.mxu0 0.0
    %5493 = vmatprep.subr.mxu0 0.0
    %5494 = vmatpush2.msra.mxu0 0.0
    %5495 = vmatprep.subr.mxu0 0.0
    %5496 = vmatpush2.msra.mxu0 0.0
    %5497 = vmatprep.subr.mxu0 0.0
    %5498 = vmatpush2.msra.mxu0 0.0
    %5499 = vmatprep.subr.mxu0 0.0
    %5500 = vmatpush2.msra.mxu0 0.0
    %5501 = vmatprep.subr.mxu0 0.0
    %5502 = vmatpush2.msra.mxu0 0.0
    %5503 = vmatprep.subr.mxu0 0.0
    %5504 = vmatpush2.msra.mxu0 0.0
    %5505 = vmatprep.subr.mxu0 0.0
    %5506 = vmatpush2.msra.mxu0 0.0
    %5507 = vmatprep.subr.mxu0 0.0
    %5508 = vmatpush2.msra.mxu0 0.0
    %5509 = vmatprep.subr.mxu0 0.0
    %5510 = vmatpush2.msra.mxu0 0.0
    %5511 = vmatprep.subr.mxu0 0.0
    %5512 = vmatpush2.msra.mxu0 0.0
    %5513 = vmatprep.subr.mxu0 0.0
    %5514 = vmatpush2.msra.mxu0 0.0
    %5515 = vmatprep.subr.mxu0 0.0
    %5516 = vmatpush2.msra.mxu0 0.0
    %5517 = vmatprep.subr.mxu0 0.0
    %5518 = vmatpush2.msra.mxu0 0.0
    %5519 = vmatprep.mubr.f32.mxu0 0.0
    %5520 = vmatmul.mubr.f32.gmra.mxu0 %v701
    %v5521 = vpop.f32.mrf.mxu0
    %v5522 = vadd.f32 0.0, %v5521
    %v5523 = vpop.f32.mrf.mxu0
    %5524 = vdwg.mxu0
    %v5525 = vadd.f32 %v5223, %v5522
    %5526 = vmatprep.subr.mxu0 0.0
    %5527 = vmatpush1.msra.mxu0 0.0
    %5528 = vmatprep.subr.mxu0 0.0
    %5529 = vmatpush1.msra.mxu0 0.0
    %5530 = vmatprep.subr.mxu0 0.0
    %5531 = vmatpush1.msra.mxu0 0.0
    %5532 = vmatprep.subr.mxu0 0.0
    %5533 = vmatpush1.msra.mxu0 0.0
    %5534 = vmatprep.subr.mxu0 0.0
    %5535 = vmatpush1.msra.mxu0 0.0
    %5536 = vmatprep.subr.mxu0 0.0
    %5537 = vmatpush1.msra.mxu0 0.0
    %5538 = vmatprep.subr.mxu0 0.0
    %5539 = vmatpush1.msra.mxu0 0.0
    %5540 = vmatprep.subr.mxu0 0.0
    %5541 = vmatpush1.msra.mxu0 0.0
    %5542 = vmatprep.subr.mxu0 0.0
    %5543 = vmatpush1.msra.mxu0 0.0
    %5544 = vmatprep.subr.mxu0 0.0
    %5545 = vmatpush1.msra.mxu0 0.0
    %5546 = vmatprep.subr.mxu0 0.0
    %5547 = vmatpush1.msra.mxu0 0.0
    %5548 = vmatprep.subr.mxu0 0.0
    %5549 = vmatpush1.msra.mxu0 0.0
    %5550 = vmatprep.subr.mxu0 0.0
    %5551 = vmatpush1.msra.mxu0 %v3061
    %5552 = vmatprep.subr.mxu0 0.0
    %5553 = vmatpush1.msra.mxu0 %v3060
    %5554 = vmatprep.subr.mxu0 0.0
    %5555 = vmatpush1.msra.mxu0 %v3059
    %5556 = vmatprep.subr.mxu0 0.0
    %5557 = vmatpush1.msra.mxu0 %v3058
    %5558 = vmatprep.subr.mxu0 0.0
    %5559 = vmatpush2.msra.mxu0 0.0
    %5560 = vmatprep.subr.mxu0 0.0
    %5561 = vmatpush2.msra.mxu0 0.0
    %5562 = vmatprep.subr.mxu0 0.0
    %5563 = vmatpush2.msra.mxu0 0.0
    %5564 = vmatprep.subr.mxu0 0.0
    %5565 = vmatpush2.msra.mxu0 0.0
    %5566 = vmatprep.subr.mxu0 0.0
    %5567 = vmatpush2.msra.mxu0 0.0
    %5568 = vmatprep.subr.mxu0 0.0
    %5569 = vmatpush2.msra.mxu0 0.0
    %5570 = vmatprep.subr.mxu0 0.0
    %5571 = vmatpush2.msra.mxu0 0.0
    %5572 = vmatprep.subr.mxu0 0.0
    %5573 = vmatpush2.msra.mxu0 0.0
    %5574 = vmatprep.subr.mxu0 0.0
    %5575 = vmatpush2.msra.mxu0 0.0
    %5576 = vmatprep.subr.mxu0 0.0
    %5577 = vmatpush2.msra.mxu0 0.0
    %5578 = vmatprep.subr.mxu0 0.0
    %5579 = vmatpush2.msra.mxu0 0.0
    %5580 = vmatprep.subr.mxu0 0.0
    %5581 = vmatpush2.msra.mxu0 0.0
    %5582 = vmatprep.subr.mxu0 0.0
    %5583 = vmatpush2.msra.mxu0 0.0
    %5584 = vmatprep.subr.mxu0 0.0
    %5585 = vmatpush2.msra.mxu0 0.0
    %5586 = vmatprep.subr.mxu0 0.0
    %5587 = vmatpush2.msra.mxu0 0.0
    %5588 = vmatprep.subr.mxu0 0.0
    %5589 = vmatpush2.msra.mxu0 0.0
    %5590 = vmatprep.mubr.f32.mxu0 0.0
    %5591 = vmatmul.mubr.f32.gmra.mxu0 %v701
    %v5592 = vpop.f32.mrf.mxu0
    %v5593 = vadd.f32 0.0, %v5592
    %v5594 = vpop.f32.mrf.mxu0
    %5595 = vdwg.mxu0
    %v5596 = vadd.f32 %v5454, %v5593
    %v5597 = vxor.u32 %v5525, 2147483648
    %v5598 = vmul.f32 %v5597, 1.442695
    %v5599 = vpow.pop %v5598
    %v5600 = vadd.f32 %v5599, 1.0
    %v5601 = vrcp.pop %v5600
    %v5602 = vmul.f32 1.0, %v5601
    %v5603 = vtanh.pop %v5525
    %v5604 = vmul.f32 %v5602, 0.0
    %5606 = vrot.lane.b32.xlu0 %v5603, 32
    %v5607 = vpop.permute.xlu0 %5606
    %v5609 = vmul.f32 %v5602, %v5607
    %5611 = vrot.lane.b32.xlu0 %v5609, 32
    %v5612 = vpop.permute.xlu0 %5611
    %v5614 = vadd.f32 %v5604, %v5612
    %v5615 = vtanh.pop %v5614
    %5617 = vrot.lane.b32.xlu0 %v5615, 32
    %v5618 = vpop.permute.xlu0 %5617
    %v5620 = vmul.f32 %v5602, %v5618
    %v5621 = vxor.u32 %v5596, 2147483648
    %v5622 = vmul.f32 %v5621, 1.442695
    %v5623 = vpow.pop %v5622
    %v5624 = vadd.f32 %v5623, 1.0
    %v5625 = vrcp.pop %v5624
    %v5626 = vmul.f32 1.0, %v5625
    %v5627 = vtanh.pop %v5596
    %v5628 = vmul.f32 %v5626, 0.0
    %5630 = vrot.lane.b32.xlu0 %v5627, 32
    %v5631 = vpop.permute.xlu0 %5630
    %v5633 = vmul.f32 %v5626, %v5631
    %5635 = vrot.lane.b32.xlu0 %v5633, 32
    %v5636 = vpop.permute.xlu0 %5635
    %v5638 = vadd.f32 %v5628, %v5636
    %v5639 = vtanh.pop %v5638
    %5641 = vrot.lane.b32.xlu0 %v5639, 32
    %v5642 = vpop.permute.xlu0 %5641
    %v5644 = vmul.f32 %v5626, %v5642
    %5646 = vrot.lane.b32.xlu0 %v5620, 64
    %v5647 = vpop.permute.xlu0 %5646
    %5649 = vst.msk [vmem:[#allocation5] sm:$0xff] %vm699, %v5647
    %5651 = vrot.lane.b32.xlu0 %v5644, 64
    %v5652 = vpop.permute.xlu0 %5651
    %5654 = vst.msk [vmem:[#allocation6 + $0x38] sm:$0xff] %vm699, %v5652
    %v5655 = vsel %vm699, %v5647, 0
    %5657 = vmatprep.subr.mxu0 0.0
    %5658 = vmatpush1.msra.mxu0 0.0
    %5659 = vmatprep.subr.mxu0 0.0
    %5660 = vmatpush1.msra.mxu0 0.0
    %5661 = vmatprep.subr.mxu0 0.0
    %5662 = vmatpush1.msra.mxu0 0.0
    %5663 = vmatprep.subr.mxu0 0.0
    %5664 = vmatpush1.msra.mxu0 0.0
    %5665 = vmatprep.subr.mxu0 0.0
    %5666 = vmatpush1.msra.mxu0 0.0
    %5667 = vmatprep.subr.mxu0 0.0
    %5668 = vmatpush1.msra.mxu0 0.0
    %5669 = vmatprep.subr.mxu0 0.0
    %5670 = vmatpush1.msra.mxu0 0.0
    %5671 = vmatprep.subr.mxu0 0.0
    %5672 = vmatpush1.msra.mxu0 0.0
    %5673 = vmatprep.subr.mxu0 0.0
    %5674 = vmatpush1.msra.mxu0 0.0
    %5675 = vmatprep.subr.mxu0 0.0
    %5676 = vmatpush1.msra.mxu0 0.0
    %5677 = vmatprep.subr.mxu0 0.0
    %5678 = vmatpush1.msra.mxu0 0.0
    %5679 = vmatprep.subr.mxu0 0.0
    %5680 = vmatpush1.msra.mxu0 0.0
    %5681 = vmatprep.subr.mxu0 0.0
    %5682 = vmatpush1.msra.mxu0 %v3057
    %5683 = vmatprep.subr.mxu0 0.0
    %5684 = vmatpush1.msra.mxu0 %v3056
    %5685 = vmatprep.subr.mxu0 0.0
    %5686 = vmatpush1.msra.mxu0 %v3055
    %5687 = vmatprep.subr.mxu0 0.0
    %5688 = vmatpush1.msra.mxu0 %v3054
    %5689 = vmatprep.subr.mxu0 0.0
    %5690 = vmatpush2.msra.mxu0 0.0
    %5691 = vmatprep.subr.mxu0 0.0
    %5692 = vmatpush2.msra.mxu0 0.0
    %5693 = vmatprep.subr.mxu0 0.0
    %5694 = vmatpush2.msra.mxu0 0.0
    %5695 = vmatprep.subr.mxu0 0.0
    %5696 = vmatpush2.msra.mxu0 0.0
    %5697 = vmatprep.subr.mxu0 0.0
    %5698 = vmatpush2.msra.mxu0 0.0
    %5699 = vmatprep.subr.mxu0 0.0
    %5700 = vmatpush2.msra.mxu0 0.0
    %5701 = vmatprep.subr.mxu0 0.0
    %5702 = vmatpush2.msra.mxu0 0.0
    %5703 = vmatprep.subr.mxu0 0.0
    %5704 = vmatpush2.msra.mxu0 0.0
    %5705 = vmatprep.subr.mxu0 0.0
    %5706 = vmatpush2.msra.mxu0 0.0
    %5707 = vmatprep.subr.mxu0 0.0
    %5708 = vmatpush2.msra.mxu0 0.0
    %5709 = vmatprep.subr.mxu0 0.0
    %5710 = vmatpush2.msra.mxu0 0.0
    %5711 = vmatprep.subr.mxu0 0.0
    %5712 = vmatpush2.msra.mxu0 0.0
    %5713 = vmatprep.subr.mxu0 0.0
    %5714 = vmatpush2.msra.mxu0 0.0
    %5715 = vmatprep.subr.mxu0 0.0
    %5716 = vmatpush2.msra.mxu0 0.0
    %5717 = vmatprep.subr.mxu0 0.0
    %5718 = vmatpush2.msra.mxu0 0.0
    %5719 = vmatprep.subr.mxu0 0.0
    %5720 = vmatpush2.msra.mxu0 0.0
    %5721 = vmatprep.mubr.f32.mxu0 0.0
    %5722 = vmatmul.mubr.f32.gmra.mxu0 %v5655
    %v5723 = vpop.f32.mrf.mxu0
    %v5724 = vadd.f32 0.0, %v5723
    %v5725 = vpop.f32.mrf.mxu0
    %5726 = vdwg.mxu0
    %v5727 = vadd.f32 %v5224, %v5724
    %v5728 = vsel %vm699, %v5652, 0
    %5730 = vmatprep.subr.mxu0 0.0
    %5731 = vmatpush1.msra.mxu0 0.0
    %5732 = vmatprep.subr.mxu0 0.0
    %5733 = vmatpush1.msra.mxu0 0.0
    %5734 = vmatprep.subr.mxu0 0.0
    %5735 = vmatpush1.msra.mxu0 0.0
    %5736 = vmatprep.subr.mxu0 0.0
    %5737 = vmatpush1.msra.mxu0 0.0
    %5738 = vmatprep.subr.mxu0 0.0
    %5739 = vmatpush1.msra.mxu0 0.0
    %5740 = vmatprep.subr.mxu0 0.0
    %5741 = vmatpush1.msra.mxu0 0.0
    %5742 = vmatprep.subr.mxu0 0.0
    %5743 = vmatpush1.msra.mxu0 0.0
    %5744 = vmatprep.subr.mxu0 0.0
    %5745 = vmatpush1.msra.mxu0 0.0
    %5746 = vmatprep.subr.mxu0 0.0
    %5747 = vmatpush1.msra.mxu0 0.0
    %5748 = vmatprep.subr.mxu0 0.0
    %5749 = vmatpush1.msra.mxu0 0.0
    %5750 = vmatprep.subr.mxu0 0.0
    %5751 = vmatpush1.msra.mxu0 0.0
    %5752 = vmatprep.subr.mxu0 0.0
    %5753 = vmatpush1.msra.mxu0 0.0
    %5754 = vmatprep.subr.mxu0 0.0
    %5755 = vmatpush1.msra.mxu0 %v3061
    %5756 = vmatprep.subr.mxu0 0.0
    %5757 = vmatpush1.msra.mxu0 %v3060
    %5758 = vmatprep.subr.mxu0 0.0
    %5759 = vmatpush1.msra.mxu0 %v3059
    %5760 = vmatprep.subr.mxu0 0.0
    %5761 = vmatpush1.msra.mxu0 %v3058
    %5762 = vmatprep.subr.mxu0 0.0
    %5763 = vmatpush2.msra.mxu0 0.0
    %5764 = vmatprep.subr.mxu0 0.0
    %5765 = vmatpush2.msra.mxu0 0.0
    %5766 = vmatprep.subr.mxu0 0.0
    %5767 = vmatpush2.msra.mxu0 0.0
    %5768 = vmatprep.subr.mxu0 0.0
    %5769 = vmatpush2.msra.mxu0 0.0
    %5770 = vmatprep.subr.mxu0 0.0
    %5771 = vmatpush2.msra.mxu0 0.0
    %5772 = vmatprep.subr.mxu0 0.0
    %5773 = vmatpush2.msra.mxu0 0.0
    %5774 = vmatprep.subr.mxu0 0.0
    %5775 = vmatpush2.msra.mxu0 0.0
    %5776 = vmatprep.subr.mxu0 0.0
    %5777 = vmatpush2.msra.mxu0 0.0
    %5778 = vmatprep.subr.mxu0 0.0
    %5779 = vmatpush2.msra.mxu0 0.0
    %5780 = vmatprep.subr.mxu0 0.0
    %5781 = vmatpush2.msra.mxu0 0.0
    %5782 = vmatprep.subr.mxu0 0.0
    %5783 = vmatpush2.msra.mxu0 0.0
    %5784 = vmatprep.subr.mxu0 0.0
    %5785 = vmatpush2.msra.mxu0 0.0
    %5786 = vmatprep.subr.mxu0 0.0
    %5787 = vmatpush2.msra.mxu0 0.0
    %5788 = vmatprep.subr.mxu0 0.0
    %5789 = vmatpush2.msra.mxu0 0.0
    %5790 = vmatprep.subr.mxu0 0.0
    %5791 = vmatpush2.msra.mxu0 0.0
    %5792 = vmatprep.subr.mxu0 0.0
    %5793 = vmatpush2.msra.mxu0 0.0
    %5794 = vmatprep.mubr.f32.mxu0 0.0
    %5795 = vmatmul.mubr.f32.gmra.mxu0 %v5728
    %v5796 = vpop.f32.mrf.mxu0
    %v5797 = vadd.f32 0.0, %v5796
    %v5798 = vpop.f32.mrf.mxu0
    %5799 = vdwg.mxu0
    %v5800 = vadd.f32 %v5453, %v5797
    %v5801 = vxor.u32 %v5727, 2147483648
    %v5802 = vmul.f32 %v5801, 1.442695
    %v5803 = vpow.pop %v5802
    %v5804 = vadd.f32 %v5803, 1.0
    %v5805 = vrcp.pop %v5804
    %v5806 = vmul.f32 1.0, %v5805
    %v5807 = vtanh.pop %v5727
    %v5808 = vmul.f32 %v5806, %v5614
    %5810 = vrot.lane.b32.xlu0 %v5807, 32
    %v5811 = vpop.permute.xlu0 %5810
    %v5813 = vmul.f32 %v5806, %v5811
    %5815 = vrot.lane.b32.xlu0 %v5813, 32
    %v5816 = vpop.permute.xlu0 %5815
    %v5818 = vadd.f32 %v5808, %v5816
    %v5819 = vtanh.pop %v5818
    %5821 = vrot.lane.b32.xlu0 %v5819, 32
    %v5822 = vpop.permute.xlu0 %5821
    %v5824 = vmul.f32 %v5806, %v5822
    %v5825 = vxor.u32 %v5800, 2147483648
    %v5826 = vmul.f32 %v5825, 1.442695
    %v5827 = vpow.pop %v5826
    %v5828 = vadd.f32 %v5827, 1.0
    %v5829 = vrcp.pop %v5828
    %v5830 = vmul.f32 1.0, %v5829
    %v5831 = vtanh.pop %v5800
    %v5832 = vmul.f32 %v5830, %v5638
    %5834 = vrot.lane.b32.xlu0 %v5831, 32
    %v5835 = vpop.permute.xlu0 %5834
    %v5837 = vmul.f32 %v5830, %v5835
    %5839 = vrot.lane.b32.xlu0 %v5837, 32
    %v5840 = vpop.permute.xlu0 %5839
    %v5842 = vadd.f32 %v5832, %v5840
    %v5843 = vtanh.pop %v5842
    %5845 = vrot.lane.b32.xlu0 %v5843, 32
    %v5846 = vpop.permute.xlu0 %5845
    %v5848 = vmul.f32 %v5830, %v5846
    %5850 = vrot.lane.b32.xlu0 %v5824, 64
    %v5851 = vpop.permute.xlu0 %5850
    %5853 = vst.msk [vmem:[#allocation5 + $0x8] sm:$0xff] %vm699, %v5851
    %5855 = vrot.lane.b32.xlu0 %v5848, 64
    %v5856 = vpop.permute.xlu0 %5855
    %5858 = vst.msk [vmem:[#allocation6 + $0x30] sm:$0xff] %vm699, %v5856
    %v5859 = vsel %vm699, %v5851, 0
    %5861 = vmatprep.subr.mxu0 0.0
    %5862 = vmatpush1.msra.mxu0 0.0
    %5863 = vmatprep.subr.mxu0 0.0
    %5864 = vmatpush1.msra.mxu0 0.0
    %5865 = vmatprep.subr.mxu0 0.0
    %5866 = vmatpush1.msra.mxu0 0.0
    %5867 = vmatprep.subr.mxu0 0.0
    %5868 = vmatpush1.msra.mxu0 0.0
    %5869 = vmatprep.subr.mxu0 0.0
    %5870 = vmatpush1.msra.mxu0 0.0
    %5871 = vmatprep.subr.mxu0 0.0
    %5872 = vmatpush1.msra.mxu0 0.0
    %5873 = vmatprep.subr.mxu0 0.0
    %5874 = vmatpush1.msra.mxu0 0.0
    %5875 = vmatprep.subr.mxu0 0.0
    %5876 = vmatpush1.msra.mxu0 0.0
    %5877 = vmatprep.subr.mxu0 0.0
    %5878 = vmatpush1.msra.mxu0 0.0
    %5879 = vmatprep.subr.mxu0 0.0
    %5880 = vmatpush1.msra.mxu0 0.0
    %5881 = vmatprep.subr.mxu0 0.0
    %5882 = vmatpush1.msra.mxu0 0.0
    %5883 = vmatprep.subr.mxu0 0.0
    %5884 = vmatpush1.msra.mxu0 0.0
    %5885 = vmatprep.subr.mxu0 0.0
    %5886 = vmatpush1.msra.mxu0 %v3057
    %5887 = vmatprep.subr.mxu0 0.0
    %5888 = vmatpush1.msra.mxu0 %v3056
    %5889 = vmatprep.subr.mxu0 0.0
    %5890 = vmatpush1.msra.mxu0 %v3055
    %5891 = vmatprep.subr.mxu0 0.0
    %5892 = vmatpush1.msra.mxu0 %v3054
    %5893 = vmatprep.subr.mxu0 0.0
    %5894 = vmatpush2.msra.mxu0 0.0
    %5895 = vmatprep.subr.mxu0 0.0
    %5896 = vmatpush2.msra.mxu0 0.0
    %5897 = vmatprep.subr.mxu0 0.0
    %5898 = vmatpush2.msra.mxu0 0.0
    %5899 = vmatprep.subr.mxu0 0.0
    %5900 = vmatpush2.msra.mxu0 0.0
    %5901 = vmatprep.subr.mxu0 0.0
    %5902 = vmatpush2.msra.mxu0 0.0
    %5903 = vmatprep.subr.mxu0 0.0
    %5904 = vmatpush2.msra.mxu0 0.0
    %5905 = vmatprep.subr.mxu0 0.0
    %5906 = vmatpush2.msra.mxu0 0.0
    %5907 = vmatprep.subr.mxu0 0.0
    %5908 = vmatpush2.msra.mxu0 0.0
    %5909 = vmatprep.subr.mxu0 0.0
    %5910 = vmatpush2.msra.mxu0 0.0
    %5911 = vmatprep.subr.mxu0 0.0
    %5912 = vmatpush2.msra.mxu0 0.0
    %5913 = vmatprep.subr.mxu0 0.0
    %5914 = vmatpush2.msra.mxu0 0.0
    %5915 = vmatprep.subr.mxu0 0.0
    %5916 = vmatpush2.msra.mxu0 0.0
    %5917 = vmatprep.subr.mxu0 0.0
    %5918 = vmatpush2.msra.mxu0 0.0
    %5919 = vmatprep.subr.mxu0 0.0
    %5920 = vmatpush2.msra.mxu0 0.0
    %5921 = vmatprep.subr.mxu0 0.0
    %5922 = vmatpush2.msra.mxu0 0.0
    %5923 = vmatprep.subr.mxu0 0.0
    %5924 = vmatpush2.msra.mxu0 0.0
    %5925 = vmatprep.mubr.f32.mxu0 0.0
    %5926 = vmatmul.mubr.f32.gmra.mxu0 %v5859
    %v5927 = vpop.f32.mrf.mxu0
    %v5928 = vadd.f32 0.0, %v5927
    %v5929 = vpop.f32.mrf.mxu0
    %5930 = vdwg.mxu0
    %v5931 = vadd.f32 %v5225, %v5928
    %v5932 = vsel %vm699, %v5856, 0
    %5934 = vmatprep.subr.mxu0 0.0
    %5935 = vmatpush1.msra.mxu0 0.0
    %5936 = vmatprep.subr.mxu0 0.0
    %5937 = vmatpush1.msra.mxu0 0.0
    %5938 = vmatprep.subr.mxu0 0.0
    %5939 = vmatpush1.msra.mxu0 0.0
    %5940 = vmatprep.subr.mxu0 0.0
    %5941 = vmatpush1.msra.mxu0 0.0
    %5942 = vmatprep.subr.mxu0 0.0
    %5943 = vmatpush1.msra.mxu0 0.0
    %5944 = vmatprep.subr.mxu0 0.0
    %5945 = vmatpush1.msra.mxu0 0.0
    %5946 = vmatprep.subr.mxu0 0.0
    %5947 = vmatpush1.msra.mxu0 0.0
    %5948 = vmatprep.subr.mxu0 0.0
    %5949 = vmatpush1.msra.mxu0 0.0
    %5950 = vmatprep.subr.mxu0 0.0
    %5951 = vmatpush1.msra.mxu0 0.0
    %5952 = vmatprep.subr.mxu0 0.0
    %5953 = vmatpush1.msra.mxu0 0.0
    %5954 = vmatprep.subr.mxu0 0.0
    %5955 = vmatpush1.msra.mxu0 0.0
    %5956 = vmatprep.subr.mxu0 0.0
    %5957 = vmatpush1.msra.mxu0 0.0
    %5958 = vmatprep.subr.mxu0 0.0
    %5959 = vmatpush1.msra.mxu0 %v3061
    %5960 = vmatprep.subr.mxu0 0.0
    %5961 = vmatpush1.msra.mxu0 %v3060
    %5962 = vmatprep.subr.mxu0 0.0
    %5963 = vmatpush1.msra.mxu0 %v3059
    %5964 = vmatprep.subr.mxu0 0.0
    %5965 = vmatpush1.msra.mxu0 %v3058
    %5966 = vmatprep.subr.mxu0 0.0
    %5967 = vmatpush2.msra.mxu0 0.0
    %5968 = vmatprep.subr.mxu0 0.0
    %5969 = vmatpush2.msra.mxu0 0.0
    %5970 = vmatprep.subr.mxu0 0.0
    %5971 = vmatpush2.msra.mxu0 0.0
    %5972 = vmatprep.subr.mxu0 0.0
    %5973 = vmatpush2.msra.mxu0 0.0
    %5974 = vmatprep.subr.mxu0 0.0
    %5975 = vmatpush2.msra.mxu0 0.0
    %5976 = vmatprep.subr.mxu0 0.0
    %5977 = vmatpush2.msra.mxu0 0.0
    %5978 = vmatprep.subr.mxu0 0.0
    %5979 = vmatpush2.msra.mxu0 0.0
    %5980 = vmatprep.subr.mxu0 0.0
    %5981 = vmatpush2.msra.mxu0 0.0
    %5982 = vmatprep.subr.mxu0 0.0
    %5983 = vmatpush2.msra.mxu0 0.0
    %5984 = vmatprep.subr.mxu0 0.0
    %5985 = vmatpush2.msra.mxu0 0.0
    %5986 = vmatprep.subr.mxu0 0.0
    %5987 = vmatpush2.msra.mxu0 0.0
    %5988 = vmatprep.subr.mxu0 0.0
    %5989 = vmatpush2.msra.mxu0 0.0
    %5990 = vmatprep.subr.mxu0 0.0
    %5991 = vmatpush2.msra.mxu0 0.0
    %5992 = vmatprep.subr.mxu0 0.0
    %5993 = vmatpush2.msra.mxu0 0.0
    %5994 = vmatprep.subr.mxu0 0.0
    %5995 = vmatpush2.msra.mxu0 0.0
    %5996 = vmatprep.subr.mxu0 0.0
    %5997 = vmatpush2.msra.mxu0 0.0
    %5998 = vmatprep.mubr.f32.mxu0 0.0
    %5999 = vmatmul.mubr.f32.gmra.mxu0 %v5932
    %v6000 = vpop.f32.mrf.mxu0
    %v6001 = vadd.f32 0.0, %v6000
    %v6002 = vpop.f32.mrf.mxu0
    %6003 = vdwg.mxu0
    %v6004 = vadd.f32 %v5452, %v6001
    %v6005 = vxor.u32 %v5931, 2147483648
    %v6006 = vmul.f32 %v6005, 1.442695
    %v6007 = vpow.pop %v6006
    %v6008 = vadd.f32 %v6007, 1.0
    %v6009 = vrcp.pop %v6008
    %v6010 = vmul.f32 1.0, %v6009
    %v6011 = vtanh.pop %v5931
    %v6012 = vmul.f32 %v6010, %v5818
    %6014 = vrot.lane.b32.xlu0 %v6011, 32
    %v6015 = vpop.permute.xlu0 %6014
    %v6017 = vmul.f32 %v6010, %v6015
    %6019 = vrot.lane.b32.xlu0 %v6017, 32
    %v6020 = vpop.permute.xlu0 %6019
    %v6022 = vadd.f32 %v6012, %v6020
    %v6023 = vtanh.pop %v6022
    %6025 = vrot.lane.b32.xlu0 %v6023, 32
    %v6026 = vpop.permute.xlu0 %6025
    %v6028 = vmul.f32 %v6010, %v6026
    %v6029 = vxor.u32 %v6004, 2147483648
    %v6030 = vmul.f32 %v6029, 1.442695
    %v6031 = vpow.pop %v6030
    %v6032 = vadd.f32 %v6031, 1.0
    %v6033 = vrcp.pop %v6032
    %v6034 = vmul.f32 1.0, %v6033
    %v6035 = vtanh.pop %v6004
    %v6036 = vmul.f32 %v6034, %v5842
    %6038 = vrot.lane.b32.xlu0 %v6035, 32
    %v6039 = vpop.permute.xlu0 %6038
    %v6041 = vmul.f32 %v6034, %v6039
    %6043 = vrot.lane.b32.xlu0 %v6041, 32
    %v6044 = vpop.permute.xlu0 %6043
    %v6046 = vadd.f32 %v6036, %v6044
    %v6047 = vtanh.pop %v6046
    %6049 = vrot.lane.b32.xlu0 %v6047, 32
    %v6050 = vpop.permute.xlu0 %6049
    %v6052 = vmul.f32 %v6034, %v6050
    %6054 = vrot.lane.b32.xlu0 %v6028, 64
    %v6055 = vpop.permute.xlu0 %6054
    %6057 = vst.msk [vmem:[#allocation5 + $0x10] sm:$0xff] %vm699, %v6055
    %6059 = vrot.lane.b32.xlu0 %v6052, 64
    %v6060 = vpop.permute.xlu0 %6059
    %6062 = vst.msk [vmem:[#allocation6 + $0x28] sm:$0xff] %vm699, %v6060
    %v6063 = vsel %vm699, %v6055, 0
    %6065 = vmatprep.subr.mxu0 0.0
    %6066 = vmatpush1.msra.mxu0 0.0
    %6067 = vmatprep.subr.mxu0 0.0
    %6068 = vmatpush1.msra.mxu0 0.0
    %6069 = vmatprep.subr.mxu0 0.0
    %6070 = vmatpush1.msra.mxu0 0.0
    %6071 = vmatprep.subr.mxu0 0.0
    %6072 = vmatpush1.msra.mxu0 0.0
    %6073 = vmatprep.subr.mxu0 0.0
    %6074 = vmatpush1.msra.mxu0 0.0
    %6075 = vmatprep.subr.mxu0 0.0
    %6076 = vmatpush1.msra.mxu0 0.0
    %6077 = vmatprep.subr.mxu0 0.0
    %6078 = vmatpush1.msra.mxu0 0.0
    %6079 = vmatprep.subr.mxu0 0.0
    %6080 = vmatpush1.msra.mxu0 0.0
    %6081 = vmatprep.subr.mxu0 0.0
    %6082 = vmatpush1.msra.mxu0 0.0
    %6083 = vmatprep.subr.mxu0 0.0
    %6084 = vmatpush1.msra.mxu0 0.0
    %6085 = vmatprep.subr.mxu0 0.0
    %6086 = vmatpush1.msra.mxu0 0.0
    %6087 = vmatprep.subr.mxu0 0.0
    %6088 = vmatpush1.msra.mxu0 0.0
    %6089 = vmatprep.subr.mxu0 0.0
    %6090 = vmatpush1.msra.mxu0 %v3057
    %6091 = vmatprep.subr.mxu0 0.0
    %6092 = vmatpush1.msra.mxu0 %v3056
    %6093 = vmatprep.subr.mxu0 0.0
    %6094 = vmatpush1.msra.mxu0 %v3055
    %6095 = vmatprep.subr.mxu0 0.0
    %6096 = vmatpush1.msra.mxu0 %v3054
    %6097 = vmatprep.subr.mxu0 0.0
    %6098 = vmatpush2.msra.mxu0 0.0
    %6099 = vmatprep.subr.mxu0 0.0
    %6100 = vmatpush2.msra.mxu0 0.0
    %6101 = vmatprep.subr.mxu0 0.0
    %6102 = vmatpush2.msra.mxu0 0.0
    %6103 = vmatprep.subr.mxu0 0.0
    %6104 = vmatpush2.msra.mxu0 0.0
    %6105 = vmatprep.subr.mxu0 0.0
    %6106 = vmatpush2.msra.mxu0 0.0
    %6107 = vmatprep.subr.mxu0 0.0
    %6108 = vmatpush2.msra.mxu0 0.0
    %6109 = vmatprep.subr.mxu0 0.0
    %6110 = vmatpush2.msra.mxu0 0.0
    %6111 = vmatprep.subr.mxu0 0.0
    %6112 = vmatpush2.msra.mxu0 0.0
    %6113 = vmatprep.subr.mxu0 0.0
    %6114 = vmatpush2.msra.mxu0 0.0
    %6115 = vmatprep.subr.mxu0 0.0
    %6116 = vmatpush2.msra.mxu0 0.0
    %6117 = vmatprep.subr.mxu0 0.0
    %6118 = vmatpush2.msra.mxu0 0.0
    %6119 = vmatprep.subr.mxu0 0.0
    %6120 = vmatpush2.msra.mxu0 0.0
    %6121 = vmatprep.subr.mxu0 0.0
    %6122 = vmatpush2.msra.mxu0 0.0
    %6123 = vmatprep.subr.mxu0 0.0
    %6124 = vmatpush2.msra.mxu0 0.0
    %6125 = vmatprep.subr.mxu0 0.0
    %6126 = vmatpush2.msra.mxu0 0.0
    %6127 = vmatprep.subr.mxu0 0.0
    %6128 = vmatpush2.msra.mxu0 0.0
    %6129 = vmatprep.mubr.f32.mxu0 0.0
    %6130 = vmatmul.mubr.f32.gmra.mxu0 %v6063
    %v6131 = vpop.f32.mrf.mxu0
    %v6132 = vadd.f32 0.0, %v6131
    %v6133 = vpop.f32.mrf.mxu0
    %6134 = vdwg.mxu0
    %v6135 = vadd.f32 %v5226, %v6132
    %v6136 = vsel %vm699, %v6060, 0
    %6138 = vmatprep.subr.mxu0 0.0
    %6139 = vmatpush1.msra.mxu0 0.0
    %6140 = vmatprep.subr.mxu0 0.0
    %6141 = vmatpush1.msra.mxu0 0.0
    %6142 = vmatprep.subr.mxu0 0.0
    %6143 = vmatpush1.msra.mxu0 0.0
    %6144 = vmatprep.subr.mxu0 0.0
    %6145 = vmatpush1.msra.mxu0 0.0
    %6146 = vmatprep.subr.mxu0 0.0
    %6147 = vmatpush1.msra.mxu0 0.0
    %6148 = vmatprep.subr.mxu0 0.0
    %6149 = vmatpush1.msra.mxu0 0.0
    %6150 = vmatprep.subr.mxu0 0.0
    %6151 = vmatpush1.msra.mxu0 0.0
    %6152 = vmatprep.subr.mxu0 0.0
    %6153 = vmatpush1.msra.mxu0 0.0
    %6154 = vmatprep.subr.mxu0 0.0
    %6155 = vmatpush1.msra.mxu0 0.0
    %6156 = vmatprep.subr.mxu0 0.0
    %6157 = vmatpush1.msra.mxu0 0.0
    %6158 = vmatprep.subr.mxu0 0.0
    %6159 = vmatpush1.msra.mxu0 0.0
    %6160 = vmatprep.subr.mxu0 0.0
    %6161 = vmatpush1.msra.mxu0 0.0
    %6162 = vmatprep.subr.mxu0 0.0
    %6163 = vmatpush1.msra.mxu0 %v3061
    %6164 = vmatprep.subr.mxu0 0.0
    %6165 = vmatpush1.msra.mxu0 %v3060
    %6166 = vmatprep.subr.mxu0 0.0
    %6167 = vmatpush1.msra.mxu0 %v3059
    %6168 = vmatprep.subr.mxu0 0.0
    %6169 = vmatpush1.msra.mxu0 %v3058
    %6170 = vmatprep.subr.mxu0 0.0
    %6171 = vmatpush2.msra.mxu0 0.0
    %6172 = vmatprep.subr.mxu0 0.0
    %6173 = vmatpush2.msra.mxu0 0.0
    %6174 = vmatprep.subr.mxu0 0.0
    %6175 = vmatpush2.msra.mxu0 0.0
    %6176 = vmatprep.subr.mxu0 0.0
    %6177 = vmatpush2.msra.mxu0 0.0
    %6178 = vmatprep.subr.mxu0 0.0
    %6179 = vmatpush2.msra.mxu0 0.0
    %6180 = vmatprep.subr.mxu0 0.0
    %6181 = vmatpush2.msra.mxu0 0.0
    %6182 = vmatprep.subr.mxu0 0.0
    %6183 = vmatpush2.msra.mxu0 0.0
    %6184 = vmatprep.subr.mxu0 0.0
    %6185 = vmatpush2.msra.mxu0 0.0
    %6186 = vmatprep.subr.mxu0 0.0
    %6187 = vmatpush2.msra.mxu0 0.0
    %6188 = vmatprep.subr.mxu0 0.0
    %6189 = vmatpush2.msra.mxu0 0.0
    %6190 = vmatprep.subr.mxu0 0.0
    %6191 = vmatpush2.msra.mxu0 0.0
    %6192 = vmatprep.subr.mxu0 0.0
    %6193 = vmatpush2.msra.mxu0 0.0
    %6194 = vmatprep.subr.mxu0 0.0
    %6195 = vmatpush2.msra.mxu0 0.0
    %6196 = vmatprep.subr.mxu0 0.0
    %6197 = vmatpush2.msra.mxu0 0.0
    %6198 = vmatprep.subr.mxu0 0.0
    %6199 = vmatpush2.msra.mxu0 0.0
    %6200 = vmatprep.subr.mxu0 0.0
    %6201 = vmatpush2.msra.mxu0 0.0
    %6202 = vmatprep.mubr.f32.mxu0 0.0
    %6203 = vmatmul.mubr.f32.gmra.mxu0 %v6136
    %v6204 = vpop.f32.mrf.mxu0
    %v6205 = vadd.f32 0.0, %v6204
    %v6206 = vpop.f32.mrf.mxu0
    %6207 = vdwg.mxu0
    %v6208 = vadd.f32 %v5451, %v6205
    %v6209 = vxor.u32 %v6135, 2147483648
    %v6210 = vmul.f32 %v6209, 1.442695
    %v6211 = vpow.pop %v6210
    %v6212 = vadd.f32 %v6211, 1.0
    %v6213 = vrcp.pop %v6212
    %v6214 = vmul.f32 1.0, %v6213
    %v6215 = vtanh.pop %v6135
    %v6216 = vmul.f32 %v6214, %v6022
    %6218 = vrot.lane.b32.xlu0 %v6215, 32
    %v6219 = vpop.permute.xlu0 %6218
    %v6221 = vmul.f32 %v6214, %v6219
    %6223 = vrot.lane.b32.xlu0 %v6221, 32
    %v6224 = vpop.permute.xlu0 %6223
    %v6226 = vadd.f32 %v6216, %v6224
    %v6227 = vtanh.pop %v6226
    %6229 = vrot.lane.b32.xlu0 %v6227, 32
    %v6230 = vpop.permute.xlu0 %6229
    %v6232 = vmul.f32 %v6214, %v6230
    %v6233 = vxor.u32 %v6208, 2147483648
    %v6234 = vmul.f32 %v6233, 1.442695
    %v6235 = vpow.pop %v6234
    %v6236 = vadd.f32 %v6235, 1.0
    %v6237 = vrcp.pop %v6236
    %v6238 = vmul.f32 1.0, %v6237
    %v6239 = vtanh.pop %v6208
    %v6240 = vmul.f32 %v6238, %v6046
    %6242 = vrot.lane.b32.xlu0 %v6239, 32
    %v6243 = vpop.permute.xlu0 %6242
    %v6245 = vmul.f32 %v6238, %v6243
    %6247 = vrot.lane.b32.xlu0 %v6245, 32
    %v6248 = vpop.permute.xlu0 %6247
    %v6250 = vadd.f32 %v6240, %v6248
    %v6251 = vtanh.pop %v6250
    %6253 = vrot.lane.b32.xlu0 %v6251, 32
    %v6254 = vpop.permute.xlu0 %6253
    %v6256 = vmul.f32 %v6238, %v6254
    %6258 = vrot.lane.b32.xlu0 %v6232, 64
    %v6259 = vpop.permute.xlu0 %6258
    %6261 = vst.msk [vmem:[#allocation5 + $0x18] sm:$0xff] %vm699, %v6259
    %6263 = vrot.lane.b32.xlu0 %v6256, 64
    %v6264 = vpop.permute.xlu0 %6263
    %6266 = vst.msk [vmem:[#allocation6 + $0x20] sm:$0xff] %vm699, %v6264
    %v6267 = vsel %vm699, %v6259, 0
    %6269 = vmatprep.subr.mxu0 0.0
    %6270 = vmatpush1.msra.mxu0 0.0
    %6271 = vmatprep.subr.mxu0 0.0
    %6272 = vmatpush1.msra.mxu0 0.0
    %6273 = vmatprep.subr.mxu0 0.0
    %6274 = vmatpush1.msra.mxu0 0.0
    %6275 = vmatprep.subr.mxu0 0.0
    %6276 = vmatpush1.msra.mxu0 0.0
    %6277 = vmatprep.subr.mxu0 0.0
    %6278 = vmatpush1.msra.mxu0 0.0
    %6279 = vmatprep.subr.mxu0 0.0
    %6280 = vmatpush1.msra.mxu0 0.0
    %6281 = vmatprep.subr.mxu0 0.0
    %6282 = vmatpush1.msra.mxu0 0.0
    %6283 = vmatprep.subr.mxu0 0.0
    %6284 = vmatpush1.msra.mxu0 0.0
    %6285 = vmatprep.subr.mxu0 0.0
    %6286 = vmatpush1.msra.mxu0 0.0
    %6287 = vmatprep.subr.mxu0 0.0
    %6288 = vmatpush1.msra.mxu0 0.0
    %6289 = vmatprep.subr.mxu0 0.0
    %6290 = vmatpush1.msra.mxu0 0.0
    %6291 = vmatprep.subr.mxu0 0.0
    %6292 = vmatpush1.msra.mxu0 0.0
    %6293 = vmatprep.subr.mxu0 0.0
    %6294 = vmatpush1.msra.mxu0 %v3057
    %6295 = vmatprep.subr.mxu0 0.0
    %6296 = vmatpush1.msra.mxu0 %v3056
    %6297 = vmatprep.subr.mxu0 0.0
    %6298 = vmatpush1.msra.mxu0 %v3055
    %6299 = vmatprep.subr.mxu0 0.0
    %6300 = vmatpush1.msra.mxu0 %v3054
    %6301 = vmatprep.subr.mxu0 0.0
    %6302 = vmatpush2.msra.mxu0 0.0
    %6303 = vmatprep.subr.mxu0 0.0
    %6304 = vmatpush2.msra.mxu0 0.0
    %6305 = vmatprep.subr.mxu0 0.0
    %6306 = vmatpush2.msra.mxu0 0.0
    %6307 = vmatprep.subr.mxu0 0.0
    %6308 = vmatpush2.msra.mxu0 0.0
    %6309 = vmatprep.subr.mxu0 0.0
    %6310 = vmatpush2.msra.mxu0 0.0
    %6311 = vmatprep.subr.mxu0 0.0
    %6312 = vmatpush2.msra.mxu0 0.0
    %6313 = vmatprep.subr.mxu0 0.0
    %6314 = vmatpush2.msra.mxu0 0.0
    %6315 = vmatprep.subr.mxu0 0.0
    %6316 = vmatpush2.msra.mxu0 0.0
    %6317 = vmatprep.subr.mxu0 0.0
    %6318 = vmatpush2.msra.mxu0 0.0
    %6319 = vmatprep.subr.mxu0 0.0
    %6320 = vmatpush2.msra.mxu0 0.0
    %6321 = vmatprep.subr.mxu0 0.0
    %6322 = vmatpush2.msra.mxu0 0.0
    %6323 = vmatprep.subr.mxu0 0.0
    %6324 = vmatpush2.msra.mxu0 0.0
    %6325 = vmatprep.subr.mxu0 0.0
    %6326 = vmatpush2.msra.mxu0 0.0
    %6327 = vmatprep.subr.mxu0 0.0
    %6328 = vmatpush2.msra.mxu0 0.0
    %6329 = vmatprep.subr.mxu0 0.0
    %6330 = vmatpush2.msra.mxu0 0.0
    %6331 = vmatprep.subr.mxu0 0.0
    %6332 = vmatpush2.msra.mxu0 0.0
    %6333 = vmatprep.mubr.f32.mxu0 0.0
    %6334 = vmatmul.mubr.f32.gmra.mxu0 %v6267
    %v6335 = vpop.f32.mrf.mxu0
    %v6336 = vadd.f32 0.0, %v6335
    %v6337 = vpop.f32.mrf.mxu0
    %6338 = vdwg.mxu0
    %v6339 = vadd.f32 %v5227, %v6336
    %v6340 = vsel %vm699, %v6264, 0
    %6342 = vmatprep.subr.mxu0 0.0
    %6343 = vmatpush1.msra.mxu0 0.0
    %6344 = vmatprep.subr.mxu0 0.0
    %6345 = vmatpush1.msra.mxu0 0.0
    %6346 = vmatprep.subr.mxu0 0.0
    %6347 = vmatpush1.msra.mxu0 0.0
    %6348 = vmatprep.subr.mxu0 0.0
    %6349 = vmatpush1.msra.mxu0 0.0
    %6350 = vmatprep.subr.mxu0 0.0
    %6351 = vmatpush1.msra.mxu0 0.0
    %6352 = vmatprep.subr.mxu0 0.0
    %6353 = vmatpush1.msra.mxu0 0.0
    %6354 = vmatprep.subr.mxu0 0.0
    %6355 = vmatpush1.msra.mxu0 0.0
    %6356 = vmatprep.subr.mxu0 0.0
    %6357 = vmatpush1.msra.mxu0 0.0
    %6358 = vmatprep.subr.mxu0 0.0
    %6359 = vmatpush1.msra.mxu0 0.0
    %6360 = vmatprep.subr.mxu0 0.0
    %6361 = vmatpush1.msra.mxu0 0.0
    %6362 = vmatprep.subr.mxu0 0.0
    %6363 = vmatpush1.msra.mxu0 0.0
    %6364 = vmatprep.subr.mxu0 0.0
    %6365 = vmatpush1.msra.mxu0 0.0
    %6366 = vmatprep.subr.mxu0 0.0
    %6367 = vmatpush1.msra.mxu0 %v3061
    %6368 = vmatprep.subr.mxu0 0.0
    %6369 = vmatpush1.msra.mxu0 %v3060
    %6370 = vmatprep.subr.mxu0 0.0
    %6371 = vmatpush1.msra.mxu0 %v3059
    %6372 = vmatprep.subr.mxu0 0.0
    %6373 = vmatpush1.msra.mxu0 %v3058
    %6374 = vmatprep.subr.mxu0 0.0
    %6375 = vmatpush2.msra.mxu0 0.0
    %6376 = vmatprep.subr.mxu0 0.0
    %6377 = vmatpush2.msra.mxu0 0.0
    %6378 = vmatprep.subr.mxu0 0.0
    %6379 = vmatpush2.msra.mxu0 0.0
    %6380 = vmatprep.subr.mxu0 0.0
    %6381 = vmatpush2.msra.mxu0 0.0
    %6382 = vmatprep.subr.mxu0 0.0
    %6383 = vmatpush2.msra.mxu0 0.0
    %6384 = vmatprep.subr.mxu0 0.0
    %6385 = vmatpush2.msra.mxu0 0.0
    %6386 = vmatprep.subr.mxu0 0.0
    %6387 = vmatpush2.msra.mxu0 0.0
    %6388 = vmatprep.subr.mxu0 0.0
    %6389 = vmatpush2.msra.mxu0 0.0
    %6390 = vmatprep.subr.mxu0 0.0
    %6391 = vmatpush2.msra.mxu0 0.0
    %6392 = vmatprep.subr.mxu0 0.0
    %6393 = vmatpush2.msra.mxu0 0.0
    %6394 = vmatprep.subr.mxu0 0.0
    %6395 = vmatpush2.msra.mxu0 0.0
    %6396 = vmatprep.subr.mxu0 0.0
    %6397 = vmatpush2.msra.mxu0 0.0
    %6398 = vmatprep.subr.mxu0 0.0
    %6399 = vmatpush2.msra.mxu0 0.0
    %6400 = vmatprep.subr.mxu0 0.0
    %6401 = vmatpush2.msra.mxu0 0.0
    %6402 = vmatprep.subr.mxu0 0.0
    %6403 = vmatpush2.msra.mxu0 0.0
    %6404 = vmatprep.subr.mxu0 0.0
    %6405 = vmatpush2.msra.mxu0 0.0
    %6406 = vmatprep.mubr.f32.mxu0 0.0
    %6407 = vmatmul.mubr.f32.gmra.mxu0 %v6340
    %v6408 = vpop.f32.mrf.mxu0
    %v6409 = vadd.f32 0.0, %v6408
    %v6410 = vpop.f32.mrf.mxu0
    %6411 = vdwg.mxu0
    %v6412 = vadd.f32 %v5450, %v6409
    %v6413 = vxor.u32 %v6339, 2147483648
    %v6414 = vmul.f32 %v6413, 1.442695
    %v6415 = vpow.pop %v6414
    %v6416 = vadd.f32 %v6415, 1.0
    %v6417 = vrcp.pop %v6416
    %v6418 = vmul.f32 1.0, %v6417
    %v6419 = vtanh.pop %v6339
    %v6420 = vmul.f32 %v6418, %v6226
    %6422 = vrot.lane.b32.xlu0 %v6419, 32
    %v6423 = vpop.permute.xlu0 %6422
    %v6425 = vmul.f32 %v6418, %v6423
    %6427 = vrot.lane.b32.xlu0 %v6425, 32
    %v6428 = vpop.permute.xlu0 %6427
    %v6430 = vadd.f32 %v6420, %v6428
    %v6431 = vtanh.pop %v6430
    %6433 = vrot.lane.b32.xlu0 %v6431, 32
    %v6434 = vpop.permute.xlu0 %6433
    %v6436 = vmul.f32 %v6418, %v6434
    %v6437 = vxor.u32 %v6412, 2147483648
    %v6438 = vmul.f32 %v6437, 1.442695
    %v6439 = vpow.pop %v6438
    %v6440 = vadd.f32 %v6439, 1.0
    %v6441 = vrcp.pop %v6440
    %v6442 = vmul.f32 1.0, %v6441
    %v6443 = vtanh.pop %v6412
    %v6444 = vmul.f32 %v6442, %v6250
    %6446 = vrot.lane.b32.xlu0 %v6443, 32
    %v6447 = vpop.permute.xlu0 %6446
    %v6449 = vmul.f32 %v6442, %v6447
    %6451 = vrot.lane.b32.xlu0 %v6449, 32
    %v6452 = vpop.permute.xlu0 %6451
    %v6454 = vadd.f32 %v6444, %v6452
    %v6455 = vtanh.pop %v6454
    %6457 = vrot.lane.b32.xlu0 %v6455, 32
    %v6458 = vpop.permute.xlu0 %6457
    %v6460 = vmul.f32 %v6442, %v6458
    %6462 = vrot.lane.b32.xlu0 %v6436, 64
    %v6463 = vpop.permute.xlu0 %6462
    %6465 = vst.msk [vmem:[#allocation5 + $0x20] sm:$0xff] %vm699, %v6463
    %6467 = vrot.lane.b32.xlu0 %v6460, 64
    %v6468 = vpop.permute.xlu0 %6467
    %6470 = vst.msk [vmem:[#allocation6 + $0x18] sm:$0xff] %vm699, %v6468
    %v6471 = vsel %vm699, %v6463, 0
    %6473 = vmatprep.subr.mxu0 0.0
    %6474 = vmatpush1.msra.mxu0 0.0
    %6475 = vmatprep.subr.mxu0 0.0
    %6476 = vmatpush1.msra.mxu0 0.0
    %6477 = vmatprep.subr.mxu0 0.0
    %6478 = vmatpush1.msra.mxu0 0.0
    %6479 = vmatprep.subr.mxu0 0.0
    %6480 = vmatpush1.msra.mxu0 0.0
    %6481 = vmatprep.subr.mxu0 0.0
    %6482 = vmatpush1.msra.mxu0 0.0
    %6483 = vmatprep.subr.mxu0 0.0
    %6484 = vmatpush1.msra.mxu0 0.0
    %6485 = vmatprep.subr.mxu0 0.0
    %6486 = vmatpush1.msra.mxu0 0.0
    %6487 = vmatprep.subr.mxu0 0.0
    %6488 = vmatpush1.msra.mxu0 0.0
    %6489 = vmatprep.subr.mxu0 0.0
    %6490 = vmatpush1.msra.mxu0 0.0
    %6491 = vmatprep.subr.mxu0 0.0
    %6492 = vmatpush1.msra.mxu0 0.0
    %6493 = vmatprep.subr.mxu0 0.0
    %6494 = vmatpush1.msra.mxu0 0.0
    %6495 = vmatprep.subr.mxu0 0.0
    %6496 = vmatpush1.msra.mxu0 0.0
    %6497 = vmatprep.subr.mxu0 0.0
    %6498 = vmatpush1.msra.mxu0 %v3057
    %6499 = vmatprep.subr.mxu0 0.0
    %6500 = vmatpush1.msra.mxu0 %v3056
    %6501 = vmatprep.subr.mxu0 0.0
    %6502 = vmatpush1.msra.mxu0 %v3055
    %6503 = vmatprep.subr.mxu0 0.0
    %6504 = vmatpush1.msra.mxu0 %v3054
    %6505 = vmatprep.subr.mxu0 0.0
    %6506 = vmatpush2.msra.mxu0 0.0
    %6507 = vmatprep.subr.mxu0 0.0
    %6508 = vmatpush2.msra.mxu0 0.0
    %6509 = vmatprep.subr.mxu0 0.0
    %6510 = vmatpush2.msra.mxu0 0.0
    %6511 = vmatprep.subr.mxu0 0.0
    %6512 = vmatpush2.msra.mxu0 0.0
    %6513 = vmatprep.subr.mxu0 0.0
    %6514 = vmatpush2.msra.mxu0 0.0
    %6515 = vmatprep.subr.mxu0 0.0
    %6516 = vmatpush2.msra.mxu0 0.0
    %6517 = vmatprep.subr.mxu0 0.0
    %6518 = vmatpush2.msra.mxu0 0.0
    %6519 = vmatprep.subr.mxu0 0.0
    %6520 = vmatpush2.msra.mxu0 0.0
    %6521 = vmatprep.subr.mxu0 0.0
    %6522 = vmatpush2.msra.mxu0 0.0
    %6523 = vmatprep.subr.mxu0 0.0
    %6524 = vmatpush2.msra.mxu0 0.0
    %6525 = vmatprep.subr.mxu0 0.0
    %6526 = vmatpush2.msra.mxu0 0.0
    %6527 = vmatprep.subr.mxu0 0.0
    %6528 = vmatpush2.msra.mxu0 0.0
    %6529 = vmatprep.subr.mxu0 0.0
    %6530 = vmatpush2.msra.mxu0 0.0
    %6531 = vmatprep.subr.mxu0 0.0
    %6532 = vmatpush2.msra.mxu0 0.0
    %6533 = vmatprep.subr.mxu0 0.0
    %6534 = vmatpush2.msra.mxu0 0.0
    %6535 = vmatprep.subr.mxu0 0.0
    %6536 = vmatpush2.msra.mxu0 0.0
    %6537 = vmatprep.mubr.f32.mxu0 0.0
    %6538 = vmatmul.mubr.f32.gmra.mxu0 %v6471
    %v6539 = vpop.f32.mrf.mxu0
    %v6540 = vadd.f32 0.0, %v6539
    %v6541 = vpop.f32.mrf.mxu0
    %6542 = vdwg.mxu0
    %v6543 = vadd.f32 %v5228, %v6540
    %v6544 = vsel %vm699, %v6468, 0
    %6546 = vmatprep.subr.mxu0 0.0
    %6547 = vmatpush1.msra.mxu0 0.0
    %6548 = vmatprep.subr.mxu0 0.0
    %6549 = vmatpush1.msra.mxu0 0.0
    %6550 = vmatprep.subr.mxu0 0.0
    %6551 = vmatpush1.msra.mxu0 0.0
    %6552 = vmatprep.subr.mxu0 0.0
    %6553 = vmatpush1.msra.mxu0 0.0
    %6554 = vmatprep.subr.mxu0 0.0
    %6555 = vmatpush1.msra.mxu0 0.0
    %6556 = vmatprep.subr.mxu0 0.0
    %6557 = vmatpush1.msra.mxu0 0.0
    %6558 = vmatprep.subr.mxu0 0.0
    %6559 = vmatpush1.msra.mxu0 0.0
    %6560 = vmatprep.subr.mxu0 0.0
    %6561 = vmatpush1.msra.mxu0 0.0
    %6562 = vmatprep.subr.mxu0 0.0
    %6563 = vmatpush1.msra.mxu0 0.0
    %6564 = vmatprep.subr.mxu0 0.0
    %6565 = vmatpush1.msra.mxu0 0.0
    %6566 = vmatprep.subr.mxu0 0.0
    %6567 = vmatpush1.msra.mxu0 0.0
    %6568 = vmatprep.subr.mxu0 0.0
    %6569 = vmatpush1.msra.mxu0 0.0
    %6570 = vmatprep.subr.mxu0 0.0
    %6571 = vmatpush1.msra.mxu0 %v3061
    %6572 = vmatprep.subr.mxu0 0.0
    %6573 = vmatpush1.msra.mxu0 %v3060
    %6574 = vmatprep.subr.mxu0 0.0
    %6575 = vmatpush1.msra.mxu0 %v3059
    %6576 = vmatprep.subr.mxu0 0.0
    %6577 = vmatpush1.msra.mxu0 %v3058
    %6578 = vmatprep.subr.mxu0 0.0
    %6579 = vmatpush2.msra.mxu0 0.0
    %6580 = vmatprep.subr.mxu0 0.0
    %6581 = vmatpush2.msra.mxu0 0.0
    %6582 = vmatprep.subr.mxu0 0.0
    %6583 = vmatpush2.msra.mxu0 0.0
    %6584 = vmatprep.subr.mxu0 0.0
    %6585 = vmatpush2.msra.mxu0 0.0
    %6586 = vmatprep.subr.mxu0 0.0
    %6587 = vmatpush2.msra.mxu0 0.0
    %6588 = vmatprep.subr.mxu0 0.0
    %6589 = vmatpush2.msra.mxu0 0.0
    %6590 = vmatprep.subr.mxu0 0.0
    %6591 = vmatpush2.msra.mxu0 0.0
    %6592 = vmatprep.subr.mxu0 0.0
    %6593 = vmatpush2.msra.mxu0 0.0
    %6594 = vmatprep.subr.mxu0 0.0
    %6595 = vmatpush2.msra.mxu0 0.0
    %6596 = vmatprep.subr.mxu0 0.0
    %6597 = vmatpush2.msra.mxu0 0.0
    %6598 = vmatprep.subr.mxu0 0.0
    %6599 = vmatpush2.msra.mxu0 0.0
    %6600 = vmatprep.subr.mxu0 0.0
    %6601 = vmatpush2.msra.mxu0 0.0
    %6602 = vmatprep.subr.mxu0 0.0
    %6603 = vmatpush2.msra.mxu0 0.0
    %6604 = vmatprep.subr.mxu0 0.0
    %6605 = vmatpush2.msra.mxu0 0.0
    %6606 = vmatprep.subr.mxu0 0.0
    %6607 = vmatpush2.msra.mxu0 0.0
    %6608 = vmatprep.subr.mxu0 0.0
    %6609 = vmatpush2.msra.mxu0 0.0
    %6610 = vmatprep.mubr.f32.mxu0 0.0
    %6611 = vmatmul.mubr.f32.gmra.mxu0 %v6544
    %v6612 = vpop.f32.mrf.mxu0
    %v6613 = vadd.f32 0.0, %v6612
    %v6614 = vpop.f32.mrf.mxu0
    %6615 = vdwg.mxu0
    %v6616 = vadd.f32 %v5449, %v6613
    %v6617 = vxor.u32 %v6543, 2147483648
    %v6618 = vmul.f32 %v6617, 1.442695
    %v6619 = vpow.pop %v6618
    %v6620 = vadd.f32 %v6619, 1.0
    %v6621 = vrcp.pop %v6620
    %v6622 = vmul.f32 1.0, %v6621
    %v6623 = vtanh.pop %v6543
    %v6624 = vmul.f32 %v6622, %v6430
    %6626 = vrot.lane.b32.xlu0 %v6623, 32
    %v6627 = vpop.permute.xlu0 %6626
    %v6629 = vmul.f32 %v6622, %v6627
    %6631 = vrot.lane.b32.xlu0 %v6629, 32
    %v6632 = vpop.permute.xlu0 %6631
    %v6634 = vadd.f32 %v6624, %v6632
    %v6635 = vtanh.pop %v6634
    %6637 = vrot.lane.b32.xlu0 %v6635, 32
    %v6638 = vpop.permute.xlu0 %6637
    %v6640 = vmul.f32 %v6622, %v6638
    %v6641 = vxor.u32 %v6616, 2147483648
    %v6642 = vmul.f32 %v6641, 1.442695
    %v6643 = vpow.pop %v6642
    %v6644 = vadd.f32 %v6643, 1.0
    %v6645 = vrcp.pop %v6644
    %v6646 = vmul.f32 1.0, %v6645
    %v6647 = vtanh.pop %v6616
    %v6648 = vmul.f32 %v6646, %v6454
    %6650 = vrot.lane.b32.xlu0 %v6647, 32
    %v6651 = vpop.permute.xlu0 %6650
    %v6653 = vmul.f32 %v6646, %v6651
    %6655 = vrot.lane.b32.xlu0 %v6653, 32
    %v6656 = vpop.permute.xlu0 %6655
    %v6658 = vadd.f32 %v6648, %v6656
    %v6659 = vtanh.pop %v6658
    %6661 = vrot.lane.b32.xlu0 %v6659, 32
    %v6662 = vpop.permute.xlu0 %6661
    %v6664 = vmul.f32 %v6646, %v6662
    %6666 = vrot.lane.b32.xlu0 %v6640, 64
    %v6667 = vpop.permute.xlu0 %6666
    %6669 = vst.msk [vmem:[#allocation5 + $0x28] sm:$0xff] %vm699, %v6667
    %6671 = vrot.lane.b32.xlu0 %v6664, 64
    %v6672 = vpop.permute.xlu0 %6671
    %6674 = vst.msk [vmem:[#allocation6 + $0x10] sm:$0xff] %vm699, %v6672
    %v6675 = vsel %vm699, %v6667, 0
    %6677 = vmatprep.subr.mxu0 0.0
    %6678 = vmatpush1.msra.mxu0 0.0
    %6679 = vmatprep.subr.mxu0 0.0
    %6680 = vmatpush1.msra.mxu0 0.0
    %6681 = vmatprep.subr.mxu0 0.0
    %6682 = vmatpush1.msra.mxu0 0.0
    %6683 = vmatprep.subr.mxu0 0.0
    %6684 = vmatpush1.msra.mxu0 0.0
    %6685 = vmatprep.subr.mxu0 0.0
    %6686 = vmatpush1.msra.mxu0 0.0
    %6687 = vmatprep.subr.mxu0 0.0
    %6688 = vmatpush1.msra.mxu0 0.0
    %6689 = vmatprep.subr.mxu0 0.0
    %6690 = vmatpush1.msra.mxu0 0.0
    %6691 = vmatprep.subr.mxu0 0.0
    %6692 = vmatpush1.msra.mxu0 0.0
    %6693 = vmatprep.subr.mxu0 0.0
    %6694 = vmatpush1.msra.mxu0 0.0
    %6695 = vmatprep.subr.mxu0 0.0
    %6696 = vmatpush1.msra.mxu0 0.0
    %6697 = vmatprep.subr.mxu0 0.0
    %6698 = vmatpush1.msra.mxu0 0.0
    %6699 = vmatprep.subr.mxu0 0.0
    %6700 = vmatpush1.msra.mxu0 0.0
    %6701 = vmatprep.subr.mxu0 0.0
    %6702 = vmatpush1.msra.mxu0 %v3057
    %6703 = vmatprep.subr.mxu0 0.0
    %6704 = vmatpush1.msra.mxu0 %v3056
    %6705 = vmatprep.subr.mxu0 0.0
    %6706 = vmatpush1.msra.mxu0 %v3055
    %6707 = vmatprep.subr.mxu0 0.0
    %6708 = vmatpush1.msra.mxu0 %v3054
    %6709 = vmatprep.subr.mxu0 0.0
    %6710 = vmatpush2.msra.mxu0 0.0
    %6711 = vmatprep.subr.mxu0 0.0
    %6712 = vmatpush2.msra.mxu0 0.0
    %6713 = vmatprep.subr.mxu0 0.0
    %6714 = vmatpush2.msra.mxu0 0.0
    %6715 = vmatprep.subr.mxu0 0.0
    %6716 = vmatpush2.msra.mxu0 0.0
    %6717 = vmatprep.subr.mxu0 0.0
    %6718 = vmatpush2.msra.mxu0 0.0
    %6719 = vmatprep.subr.mxu0 0.0
    %6720 = vmatpush2.msra.mxu0 0.0
    %6721 = vmatprep.subr.mxu0 0.0
    %6722 = vmatpush2.msra.mxu0 0.0
    %6723 = vmatprep.subr.mxu0 0.0
    %6724 = vmatpush2.msra.mxu0 0.0
    %6725 = vmatprep.subr.mxu0 0.0
    %6726 = vmatpush2.msra.mxu0 0.0
    %6727 = vmatprep.subr.mxu0 0.0
    %6728 = vmatpush2.msra.mxu0 0.0
    %6729 = vmatprep.subr.mxu0 0.0
    %6730 = vmatpush2.msra.mxu0 0.0
    %6731 = vmatprep.subr.mxu0 0.0
    %6732 = vmatpush2.msra.mxu0 0.0
    %6733 = vmatprep.subr.mxu0 0.0
    %6734 = vmatpush2.msra.mxu0 0.0
    %6735 = vmatprep.subr.mxu0 0.0
    %6736 = vmatpush2.msra.mxu0 0.0
    %6737 = vmatprep.subr.mxu0 0.0
    %6738 = vmatpush2.msra.mxu0 0.0
    %6739 = vmatprep.subr.mxu0 0.0
    %6740 = vmatpush2.msra.mxu0 0.0
    %6741 = vmatprep.mubr.f32.mxu0 0.0
    %6742 = vmatmul.mubr.f32.gmra.mxu0 %v6675
    %v6743 = vpop.f32.mrf.mxu0
    %v6744 = vadd.f32 0.0, %v6743
    %v6745 = vpop.f32.mrf.mxu0
    %6746 = vdwg.mxu0
    %v6747 = vadd.f32 %v5229, %v6744
    %v6748 = vsel %vm699, %v6672, 0
    %6750 = vmatprep.subr.mxu0 0.0
    %6751 = vmatpush1.msra.mxu0 0.0
    %6752 = vmatprep.subr.mxu0 0.0
    %6753 = vmatpush1.msra.mxu0 0.0
    %6754 = vmatprep.subr.mxu0 0.0
    %6755 = vmatpush1.msra.mxu0 0.0
    %6756 = vmatprep.subr.mxu0 0.0
    %6757 = vmatpush1.msra.mxu0 0.0
    %6758 = vmatprep.subr.mxu0 0.0
    %6759 = vmatpush1.msra.mxu0 0.0
    %6760 = vmatprep.subr.mxu0 0.0
    %6761 = vmatpush1.msra.mxu0 0.0
    %6762 = vmatprep.subr.mxu0 0.0
    %6763 = vmatpush1.msra.mxu0 0.0
    %6764 = vmatprep.subr.mxu0 0.0
    %6765 = vmatpush1.msra.mxu0 0.0
    %6766 = vmatprep.subr.mxu0 0.0
    %6767 = vmatpush1.msra.mxu0 0.0
    %6768 = vmatprep.subr.mxu0 0.0
    %6769 = vmatpush1.msra.mxu0 0.0
    %6770 = vmatprep.subr.mxu0 0.0
    %6771 = vmatpush1.msra.mxu0 0.0
    %6772 = vmatprep.subr.mxu0 0.0
    %6773 = vmatpush1.msra.mxu0 0.0
    %6774 = vmatprep.subr.mxu0 0.0
    %6775 = vmatpush1.msra.mxu0 %v3061
    %6776 = vmatprep.subr.mxu0 0.0
    %6777 = vmatpush1.msra.mxu0 %v3060
    %6778 = vmatprep.subr.mxu0 0.0
    %6779 = vmatpush1.msra.mxu0 %v3059
    %6780 = vmatprep.subr.mxu0 0.0
    %6781 = vmatpush1.msra.mxu0 %v3058
    %6782 = vmatprep.subr.mxu0 0.0
    %6783 = vmatpush2.msra.mxu0 0.0
    %6784 = vmatprep.subr.mxu0 0.0
    %6785 = vmatpush2.msra.mxu0 0.0
    %6786 = vmatprep.subr.mxu0 0.0
    %6787 = vmatpush2.msra.mxu0 0.0
    %6788 = vmatprep.subr.mxu0 0.0
    %6789 = vmatpush2.msra.mxu0 0.0
    %6790 = vmatprep.subr.mxu0 0.0
    %6791 = vmatpush2.msra.mxu0 0.0
    %6792 = vmatprep.subr.mxu0 0.0
    %6793 = vmatpush2.msra.mxu0 0.0
    %6794 = vmatprep.subr.mxu0 0.0
    %6795 = vmatpush2.msra.mxu0 0.0
    %6796 = vmatprep.subr.mxu0 0.0
    %6797 = vmatpush2.msra.mxu0 0.0
    %6798 = vmatprep.subr.mxu0 0.0
    %6799 = vmatpush2.msra.mxu0 0.0
    %6800 = vmatprep.subr.mxu0 0.0
    %6801 = vmatpush2.msra.mxu0 0.0
    %6802 = vmatprep.subr.mxu0 0.0
    %6803 = vmatpush2.msra.mxu0 0.0
    %6804 = vmatprep.subr.mxu0 0.0
    %6805 = vmatpush2.msra.mxu0 0.0
    %6806 = vmatprep.subr.mxu0 0.0
    %6807 = vmatpush2.msra.mxu0 0.0
    %6808 = vmatprep.subr.mxu0 0.0
    %6809 = vmatpush2.msra.mxu0 0.0
    %6810 = vmatprep.subr.mxu0 0.0
    %6811 = vmatpush2.msra.mxu0 0.0
    %6812 = vmatprep.subr.mxu0 0.0
    %6813 = vmatpush2.msra.mxu0 0.0
    %6814 = vmatprep.mubr.f32.mxu0 0.0
    %6815 = vmatmul.mubr.f32.gmra.mxu0 %v6748
    %v6816 = vpop.f32.mrf.mxu0
    %v6817 = vadd.f32 0.0, %v6816
    %v6818 = vpop.f32.mrf.mxu0
    %6819 = vdwg.mxu0
    %v6820 = vadd.f32 %v5448, %v6817
    %v6821 = vxor.u32 %v6747, 2147483648
    %v6822 = vmul.f32 %v6821, 1.442695
    %v6823 = vpow.pop %v6822
    %v6824 = vadd.f32 %v6823, 1.0
    %v6825 = vrcp.pop %v6824
    %v6826 = vmul.f32 1.0, %v6825
    %v6827 = vtanh.pop %v6747
    %v6828 = vmul.f32 %v6826, %v6634
    %6830 = vrot.lane.b32.xlu0 %v6827, 32
    %v6831 = vpop.permute.xlu0 %6830
    %v6833 = vmul.f32 %v6826, %v6831
    %6835 = vrot.lane.b32.xlu0 %v6833, 32
    %v6836 = vpop.permute.xlu0 %6835
    %v6838 = vadd.f32 %v6828, %v6836
    %v6839 = vtanh.pop %v6838
    %6841 = vrot.lane.b32.xlu0 %v6839, 32
    %v6842 = vpop.permute.xlu0 %6841
    %v6844 = vmul.f32 %v6826, %v6842
    %v6845 = vxor.u32 %v6820, 2147483648
    %v6846 = vmul.f32 %v6845, 1.442695
    %v6847 = vpow.pop %v6846
    %v6848 = vadd.f32 %v6847, 1.0
    %v6849 = vrcp.pop %v6848
    %v6850 = vmul.f32 1.0, %v6849
    %v6851 = vtanh.pop %v6820
    %v6852 = vmul.f32 %v6850, %v6658
    %6854 = vrot.lane.b32.xlu0 %v6851, 32
    %v6855 = vpop.permute.xlu0 %6854
    %v6857 = vmul.f32 %v6850, %v6855
    %6859 = vrot.lane.b32.xlu0 %v6857, 32
    %v6860 = vpop.permute.xlu0 %6859
    %v6862 = vadd.f32 %v6852, %v6860
    %v6863 = vtanh.pop %v6862
    %6865 = vrot.lane.b32.xlu0 %v6863, 32
    %v6866 = vpop.permute.xlu0 %6865
    %v6868 = vmul.f32 %v6850, %v6866
    %6870 = vrot.lane.b32.xlu0 %v6844, 64
    %v6871 = vpop.permute.xlu0 %6870
    %6873 = vst.msk [vmem:[#allocation5 + $0x30] sm:$0xff] %vm699, %v6871
    %6875 = vrot.lane.b32.xlu0 %v6868, 64
    %v6876 = vpop.permute.xlu0 %6875
    %6878 = vst.msk [vmem:[#allocation6 + $0x8] sm:$0xff] %vm699, %v6876
    %v6879 = vsel %vm699, %v6871, 0
    %6881 = vmatprep.subr.mxu0 0.0
    %6882 = vmatpush1.msra.mxu0 0.0
    %6883 = vmatprep.subr.mxu0 0.0
    %6884 = vmatpush1.msra.mxu0 0.0
    %6885 = vmatprep.subr.mxu0 0.0
    %6886 = vmatpush1.msra.mxu0 0.0
    %6887 = vmatprep.subr.mxu0 0.0
    %6888 = vmatpush1.msra.mxu0 0.0
    %6889 = vmatprep.subr.mxu0 0.0
    %6890 = vmatpush1.msra.mxu0 0.0
    %6891 = vmatprep.subr.mxu0 0.0
    %6892 = vmatpush1.msra.mxu0 0.0
    %6893 = vmatprep.subr.mxu0 0.0
    %6894 = vmatpush1.msra.mxu0 0.0
    %6895 = vmatprep.subr.mxu0 0.0
    %6896 = vmatpush1.msra.mxu0 0.0
    %6897 = vmatprep.subr.mxu0 0.0
    %6898 = vmatpush1.msra.mxu0 0.0
    %6899 = vmatprep.subr.mxu0 0.0
    %6900 = vmatpush1.msra.mxu0 0.0
    %6901 = vmatprep.subr.mxu0 0.0
    %6902 = vmatpush1.msra.mxu0 0.0
    %6903 = vmatprep.subr.mxu0 0.0
    %6904 = vmatpush1.msra.mxu0 0.0
    %6905 = vmatprep.subr.mxu0 0.0
    %6906 = vmatpush1.msra.mxu0 %v3057
    %6907 = vmatprep.subr.mxu0 0.0
    %6908 = vmatpush1.msra.mxu0 %v3056
    %6909 = vmatprep.subr.mxu0 0.0
    %6910 = vmatpush1.msra.mxu0 %v3055
    %6911 = vmatprep.subr.mxu0 0.0
    %6912 = vmatpush1.msra.mxu0 %v3054
    %6913 = vmatprep.subr.mxu0 0.0
    %6914 = vmatpush2.msra.mxu0 0.0
    %6915 = vmatprep.subr.mxu0 0.0
    %6916 = vmatpush2.msra.mxu0 0.0
    %6917 = vmatprep.subr.mxu0 0.0
    %6918 = vmatpush2.msra.mxu0 0.0
    %6919 = vmatprep.subr.mxu0 0.0
    %6920 = vmatpush2.msra.mxu0 0.0
    %6921 = vmatprep.subr.mxu0 0.0
    %6922 = vmatpush2.msra.mxu0 0.0
    %6923 = vmatprep.subr.mxu0 0.0
    %6924 = vmatpush2.msra.mxu0 0.0
    %6925 = vmatprep.subr.mxu0 0.0
    %6926 = vmatpush2.msra.mxu0 0.0
    %6927 = vmatprep.subr.mxu0 0.0
    %6928 = vmatpush2.msra.mxu0 0.0
    %6929 = vmatprep.subr.mxu0 0.0
    %6930 = vmatpush2.msra.mxu0 0.0
    %6931 = vmatprep.subr.mxu0 0.0
    %6932 = vmatpush2.msra.mxu0 0.0
    %6933 = vmatprep.subr.mxu0 0.0
    %6934 = vmatpush2.msra.mxu0 0.0
    %6935 = vmatprep.subr.mxu0 0.0
    %6936 = vmatpush2.msra.mxu0 0.0
    %6937 = vmatprep.subr.mxu0 0.0
    %6938 = vmatpush2.msra.mxu0 0.0
    %6939 = vmatprep.subr.mxu0 0.0
    %6940 = vmatpush2.msra.mxu0 0.0
    %6941 = vmatprep.subr.mxu0 0.0
    %6942 = vmatpush2.msra.mxu0 0.0
    %6943 = vmatprep.subr.mxu0 0.0
    %6944 = vmatpush2.msra.mxu0 0.0
    %6945 = vmatprep.mubr.f32.mxu0 0.0
    %6946 = vmatmul.mubr.f32.gmra.mxu0 %v6879
    %v6947 = vpop.f32.mrf.mxu0
    %v6948 = vadd.f32 0.0, %v6947
    %v6949 = vpop.f32.mrf.mxu0
    %6950 = vdwg.mxu0
    %v6951 = vadd.f32 %v5230, %v6948
    %v6952 = vsel %vm699, %v6876, 0
    %6954 = vmatprep.subr.mxu0 0.0
    %6955 = vmatpush1.msra.mxu0 0.0
    %6956 = vmatprep.subr.mxu0 0.0
    %6957 = vmatpush1.msra.mxu0 0.0
    %6958 = vmatprep.subr.mxu0 0.0
    %6959 = vmatpush1.msra.mxu0 0.0
    %6960 = vmatprep.subr.mxu0 0.0
    %6961 = vmatpush1.msra.mxu0 0.0
    %6962 = vmatprep.subr.mxu0 0.0
    %6963 = vmatpush1.msra.mxu0 0.0
    %6964 = vmatprep.subr.mxu0 0.0
    %6965 = vmatpush1.msra.mxu0 0.0
    %6966 = vmatprep.subr.mxu0 0.0
    %6967 = vmatpush1.msra.mxu0 0.0
    %6968 = vmatprep.subr.mxu0 0.0
    %6969 = vmatpush1.msra.mxu0 0.0
    %6970 = vmatprep.subr.mxu0 0.0
    %6971 = vmatpush1.msra.mxu0 0.0
    %6972 = vmatprep.subr.mxu0 0.0
    %6973 = vmatpush1.msra.mxu0 0.0
    %6974 = vmatprep.subr.mxu0 0.0
    %6975 = vmatpush1.msra.mxu0 0.0
    %6976 = vmatprep.subr.mxu0 0.0
    %6977 = vmatpush1.msra.mxu0 0.0
    %6978 = vmatprep.subr.mxu0 0.0
    %6979 = vmatpush1.msra.mxu0 %v3061
    %6980 = vmatprep.subr.mxu0 0.0
    %6981 = vmatpush1.msra.mxu0 %v3060
    %6982 = vmatprep.subr.mxu0 0.0
    %6983 = vmatpush1.msra.mxu0 %v3059
    %6984 = vmatprep.subr.mxu0 0.0
    %6985 = vmatpush1.msra.mxu0 %v3058
    %6986 = vmatprep.subr.mxu0 0.0
    %6987 = vmatpush2.msra.mxu0 0.0
    %6988 = vmatprep.subr.mxu0 0.0
    %6989 = vmatpush2.msra.mxu0 0.0
    %6990 = vmatprep.subr.mxu0 0.0
    %6991 = vmatpush2.msra.mxu0 0.0
    %6992 = vmatprep.subr.mxu0 0.0
    %6993 = vmatpush2.msra.mxu0 0.0
    %6994 = vmatprep.subr.mxu0 0.0
    %6995 = vmatpush2.msra.mxu0 0.0
    %6996 = vmatprep.subr.mxu0 0.0
    %6997 = vmatpush2.msra.mxu0 0.0
    %6998 = vmatprep.subr.mxu0 0.0
    %6999 = vmatpush2.msra.mxu0 0.0
    %7000 = vmatprep.subr.mxu0 0.0
    %7001 = vmatpush2.msra.mxu0 0.0
    %7002 = vmatprep.subr.mxu0 0.0
    %7003 = vmatpush2.msra.mxu0 0.0
    %7004 = vmatprep.subr.mxu0 0.0
    %7005 = vmatpush2.msra.mxu0 0.0
    %7006 = vmatprep.subr.mxu0 0.0
    %7007 = vmatpush2.msra.mxu0 0.0
    %7008 = vmatprep.subr.mxu0 0.0
    %7009 = vmatpush2.msra.mxu0 0.0
    %7010 = vmatprep.subr.mxu0 0.0
    %7011 = vmatpush2.msra.mxu0 0.0
    %7012 = vmatprep.subr.mxu0 0.0
    %7013 = vmatpush2.msra.mxu0 0.0
    %7014 = vmatprep.subr.mxu0 0.0
    %7015 = vmatpush2.msra.mxu0 0.0
    %7016 = vmatprep.subr.mxu0 0.0
    %7017 = vmatpush2.msra.mxu0 0.0
    %7018 = vmatprep.mubr.f32.mxu0 0.0
    %7019 = vmatmul.mubr.f32.gmra.mxu0 %v6952
    %v7020 = vpop.f32.mrf.mxu0
    %v7021 = vadd.f32 0.0, %v7020
    %v7022 = vpop.f32.mrf.mxu0
    %7023 = vdwg.mxu0
    %v7024 = vadd.f32 %v5447, %v7021
    %v7025 = vxor.u32 %v6951, 2147483648
    %v7026 = vmul.f32 %v7025, 1.442695
    %v7027 = vpow.pop %v7026
    %v7028 = vadd.f32 %v7027, 1.0
    %v7029 = vrcp.pop %v7028
    %v7030 = vmul.f32 1.0, %v7029
    %v7031 = vtanh.pop %v6951
    %v7032 = vmul.f32 %v7030, %v6838
    %7034 = vrot.lane.b32.xlu0 %v7031, 32
    %v7035 = vpop.permute.xlu0 %7034
    %v7037 = vmul.f32 %v7030, %v7035
    %7039 = vrot.lane.b32.xlu0 %v7037, 32
    %v7040 = vpop.permute.xlu0 %7039
    %v7042 = vadd.f32 %v7032, %v7040
    %v7043 = vtanh.pop %v7042
    %7045 = vrot.lane.b32.xlu0 %v7043, 32
    %v7046 = vpop.permute.xlu0 %7045
    %v7048 = vmul.f32 %v7030, %v7046
    %v7049 = vxor.u32 %v7024, 2147483648
    %v7050 = vmul.f32 %v7049, 1.442695
    %v7051 = vpow.pop %v7050
    %v7052 = vadd.f32 %v7051, 1.0
    %v7053 = vrcp.pop %v7052
    %v7054 = vmul.f32 1.0, %v7053
    %v7055 = vtanh.pop %v7024
    %v7056 = vmul.f32 %v7054, %v6862
    %7058 = vrot.lane.b32.xlu0 %v7055, 32
    %v7059 = vpop.permute.xlu0 %7058
    %v7061 = vmul.f32 %v7054, %v7059
    %7063 = vrot.lane.b32.xlu0 %v7061, 32
    %v7064 = vpop.permute.xlu0 %7063
    %v7066 = vadd.f32 %v7056, %v7064
    %v7067 = vtanh.pop %v7066
    %7069 = vrot.lane.b32.xlu0 %v7067, 32
    %v7070 = vpop.permute.xlu0 %7069
    %v7072 = vmul.f32 %v7054, %v7070
    %7074 = vrot.lane.b32.xlu0 %v7048, 64
    %v7075 = vpop.permute.xlu0 %7074
    %7077 = vst.msk [vmem:[#allocation5 + $0x38] sm:$0xff] %vm699, %v7075
    %7079 = vrot.lane.b32.xlu0 %v7072, 64
    %v7080 = vpop.permute.xlu0 %7079
    %7082 = vst.msk [vmem:[#allocation6] sm:$0xff] %vm699, %v7080
    %v7083 = vld [vmem:[#allocation27] sm:$0xff]
    %v7084 = vld [vmem:[#allocation27 + $0x8] sm:$0xff]
    %v7085 = vld [vmem:[#allocation27 + $0x10] sm:$0xff]
    %v7086 = vld [vmem:[#allocation27 + $0x18] sm:$0xff]
    %v7087 = vld [vmem:[#allocation27 + $0x20] sm:$0xff]
    %v7088 = vld [vmem:[#allocation27 + $0x28] sm:$0xff]
    %v7089 = vld [vmem:[#allocation27 + $0x30] sm:$0xff]
    %v7090 = vld [vmem:[#allocation27 + $0x38] sm:$0xff]
    %v7091 = vld [vmem:[#allocation5] sm:$0xff]
    %v7092 = vld [vmem:[#allocation5 + $0x8] sm:$0xff]
    %v7093 = vld [vmem:[#allocation5 + $0x10] sm:$0xff]
    %v7094 = vld [vmem:[#allocation5 + $0x18] sm:$0xff]
    %v7095 = vld [vmem:[#allocation5 + $0x20] sm:$0xff]
    %v7096 = vld [vmem:[#allocation5 + $0x28] sm:$0xff]
    %v7097 = vld [vmem:[#allocation5 + $0x30] sm:$0xff]
    %v7098 = vld [vmem:[#allocation5 + $0x38] sm:$0xff]
    %v7099 = vld [vmem:[#allocation6] sm:$0xff]
    %v7100 = vld [vmem:[#allocation6 + $0x8] sm:$0xff]
    %v7101 = vld [vmem:[#allocation6 + $0x10] sm:$0xff]
    %v7102 = vld [vmem:[#allocation6 + $0x18] sm:$0xff]
    %v7103 = vld [vmem:[#allocation6 + $0x20] sm:$0xff]
    %v7104 = vld [vmem:[#allocation6 + $0x28] sm:$0xff]
    %v7105 = vld [vmem:[#allocation6 + $0x30] sm:$0xff]
    %v7106 = vld [vmem:[#allocation6 + $0x38] sm:$0xff]
    %v7108 = vsel %vm699, %v7099, 0
    %v7111 = vsel %vm699, %v7100, 0
    %v7114 = vsel %vm699, %v7101, 0
    %v7117 = vsel %vm699, %v7102, 0
    %v7120 = vsel %vm699, %v7103, 0
    %v7123 = vsel %vm699, %v7104, 0
    %v7126 = vsel %vm699, %v7105, 0
    %v7129 = vsel %vm699, %v7106, 0
    %7131 = vmatprep.subr.mxu0 0.0
    %7132 = vmatpush1.msra.mxu0 0.0
    %7133 = vmatprep.subr.mxu0 0.0
    %7134 = vmatpush1.msra.mxu0 0.0
    %7135 = vmatprep.subr.mxu0 0.0
    %7136 = vmatpush1.msra.mxu0 0.0
    %7137 = vmatprep.subr.mxu0 0.0
    %7138 = vmatpush1.msra.mxu0 0.0
    %7139 = vmatprep.subr.mxu0 0.0
    %7140 = vmatpush1.msra.mxu0 0.0
    %7141 = vmatprep.subr.mxu0 0.0
    %7142 = vmatpush1.msra.mxu0 0.0
    %7143 = vmatprep.subr.mxu0 0.0
    %7144 = vmatpush1.msra.mxu0 0.0
    %7145 = vmatprep.subr.mxu0 0.0
    %7146 = vmatpush1.msra.mxu0 0.0
    %7147 = vmatprep.subr.mxu0 0.0
    %7148 = vmatpush1.msra.mxu0 0.0
    %7149 = vmatprep.subr.mxu0 0.0
    %7150 = vmatpush1.msra.mxu0 0.0
    %7151 = vmatprep.subr.mxu0 0.0
    %7152 = vmatpush1.msra.mxu0 0.0
    %7153 = vmatprep.subr.mxu0 0.0
    %7154 = vmatpush1.msra.mxu0 0.0
    %7155 = vmatprep.subr.mxu0 0.0
    %7156 = vmatpush1.msra.mxu0 %v7090
    %7157 = vmatprep.subr.mxu0 0.0
    %7158 = vmatpush1.msra.mxu0 %v7089
    %7159 = vmatprep.subr.mxu0 0.0
    %7160 = vmatpush1.msra.mxu0 %v7088
    %7161 = vmatprep.subr.mxu0 0.0
    %7162 = vmatpush1.msra.mxu0 %v7087
    %7163 = vmatprep.subr.mxu0 0.0
    %7164 = vmatpush2.msra.mxu0 0.0
    %7165 = vmatprep.subr.mxu0 0.0
    %7166 = vmatpush2.msra.mxu0 0.0
    %7167 = vmatprep.subr.mxu0 0.0
    %7168 = vmatpush2.msra.mxu0 0.0
    %7169 = vmatprep.subr.mxu0 0.0
    %7170 = vmatpush2.msra.mxu0 0.0
    %7171 = vmatprep.subr.mxu0 0.0
    %7172 = vmatpush2.msra.mxu0 0.0
    %7173 = vmatprep.subr.mxu0 0.0
    %7174 = vmatpush2.msra.mxu0 0.0
    %7175 = vmatprep.subr.mxu0 0.0
    %7176 = vmatpush2.msra.mxu0 0.0
    %7177 = vmatprep.subr.mxu0 0.0
    %7178 = vmatpush2.msra.mxu0 0.0
    %7179 = vmatprep.subr.mxu0 0.0
    %7180 = vmatpush2.msra.mxu0 0.0
    %7181 = vmatprep.subr.mxu0 0.0
    %7182 = vmatpush2.msra.mxu0 0.0
    %7183 = vmatprep.subr.mxu0 0.0
    %7184 = vmatpush2.msra.mxu0 0.0
    %7185 = vmatprep.subr.mxu0 0.0
    %7186 = vmatpush2.msra.mxu0 0.0
    %7187 = vmatprep.subr.mxu0 0.0
    %7188 = vmatpush2.msra.mxu0 0.0
    %7189 = vmatprep.subr.mxu0 0.0
    %7190 = vmatpush2.msra.mxu0 0.0
    %7191 = vmatprep.subr.mxu0 0.0
    %7192 = vmatpush2.msra.mxu0 0.0
    %7193 = vmatprep.subr.mxu0 0.0
    %7194 = vmatpush2.msra.mxu0 0.0
    %7195 = vmatprep.mubr.f32.mxu0 0.0
    %7196 = vmatmul.mubr.f32.gmra.mxu0 %v7108
    %v7197 = vpop.f32.mrf.mxu0
    %v7198 = vadd.f32 0.0, %v7197
    %v7199 = vpop.f32.mrf.mxu0
    %7200 = vmatprep.mubr.f32.mxu0 0.0
    %7201 = vmatmul.mubr.f32.gmra.mxu0 %v7111
    %v7202 = vpop.f32.mrf.mxu0
    %v7203 = vadd.f32 0.0, %v7202
    %v7204 = vpop.f32.mrf.mxu0
    %7205 = vmatprep.mubr.f32.mxu0 0.0
    %7206 = vmatmul.mubr.f32.gmra.mxu0 %v7114
    %v7207 = vpop.f32.mrf.mxu0
    %v7208 = vadd.f32 0.0, %v7207
    %v7209 = vpop.f32.mrf.mxu0
    %7210 = vmatprep.mubr.f32.mxu0 0.0
    %7211 = vmatmul.mubr.f32.gmra.mxu0 %v7117
    %v7212 = vpop.f32.mrf.mxu0
    %v7213 = vadd.f32 0.0, %v7212
    %v7214 = vpop.f32.mrf.mxu0
    %7215 = vmatprep.mubr.f32.mxu0 0.0
    %7216 = vmatmul.mubr.f32.gmra.mxu0 %v7120
    %v7217 = vpop.f32.mrf.mxu0
    %v7218 = vadd.f32 0.0, %v7217
    %v7219 = vpop.f32.mrf.mxu0
    %7220 = vmatprep.mubr.f32.mxu0 0.0
    %7221 = vmatmul.mubr.f32.gmra.mxu0 %v7123
    %v7222 = vpop.f32.mrf.mxu0
    %v7223 = vadd.f32 0.0, %v7222
    %v7224 = vpop.f32.mrf.mxu0
    %7225 = vmatprep.mubr.f32.mxu0 0.0
    %7226 = vmatmul.mubr.f32.gmra.mxu0 %v7126
    %v7227 = vpop.f32.mrf.mxu0
    %v7228 = vadd.f32 0.0, %v7227
    %v7229 = vpop.f32.mrf.mxu0
    %7230 = vmatprep.mubr.f32.mxu0 0.0
    %7231 = vmatmul.mubr.f32.gmra.mxu0 %v7129
    %v7232 = vpop.f32.mrf.mxu0
    %v7233 = vadd.f32 0.0, %v7232
    %v7234 = vpop.f32.mrf.mxu0
    %7235 = vdwg.mxu0
    %v7237 = vsel %vm699, %v7091, 0
    %v7240 = vsel %vm699, %v7092, 0
    %v7243 = vsel %vm699, %v7093, 0
    %v7246 = vsel %vm699, %v7094, 0
    %v7249 = vsel %vm699, %v7095, 0
    %v7252 = vsel %vm699, %v7096, 0
    %v7255 = vsel %vm699, %v7097, 0
    %v7258 = vsel %vm699, %v7098, 0
    %7260 = vmatprep.subr.mxu0 0.0
    %7261 = vmatpush1.msra.mxu0 0.0
    %7262 = vmatprep.subr.mxu0 0.0
    %7263 = vmatpush1.msra.mxu0 0.0
    %7264 = vmatprep.subr.mxu0 0.0
    %7265 = vmatpush1.msra.mxu0 0.0
    %7266 = vmatprep.subr.mxu0 0.0
    %7267 = vmatpush1.msra.mxu0 0.0
    %7268 = vmatprep.subr.mxu0 0.0
    %7269 = vmatpush1.msra.mxu0 0.0
    %7270 = vmatprep.subr.mxu0 0.0
    %7271 = vmatpush1.msra.mxu0 0.0
    %7272 = vmatprep.subr.mxu0 0.0
    %7273 = vmatpush1.msra.mxu0 0.0
    %7274 = vmatprep.subr.mxu0 0.0
    %7275 = vmatpush1.msra.mxu0 0.0
    %7276 = vmatprep.subr.mxu0 0.0
    %7277 = vmatpush1.msra.mxu0 0.0
    %7278 = vmatprep.subr.mxu0 0.0
    %7279 = vmatpush1.msra.mxu0 0.0
    %7280 = vmatprep.subr.mxu0 0.0
    %7281 = vmatpush1.msra.mxu0 0.0
    %7282 = vmatprep.subr.mxu0 0.0
    %7283 = vmatpush1.msra.mxu0 0.0
    %7284 = vmatprep.subr.mxu0 0.0
    %7285 = vmatpush1.msra.mxu0 %v7086
    %7286 = vmatprep.subr.mxu0 0.0
    %7287 = vmatpush1.msra.mxu0 %v7085
    %7288 = vmatprep.subr.mxu0 0.0
    %7289 = vmatpush1.msra.mxu0 %v7084
    %7290 = vmatprep.subr.mxu0 0.0
    %7291 = vmatpush1.msra.mxu0 %v7083
    %7292 = vmatprep.subr.mxu0 0.0
    %7293 = vmatpush2.msra.mxu0 0.0
    %7294 = vmatprep.subr.mxu0 0.0
    %7295 = vmatpush2.msra.mxu0 0.0
    %7296 = vmatprep.subr.mxu0 0.0
    %7297 = vmatpush2.msra.mxu0 0.0
    %7298 = vmatprep.subr.mxu0 0.0
    %7299 = vmatpush2.msra.mxu0 0.0
    %7300 = vmatprep.subr.mxu0 0.0
    %7301 = vmatpush2.msra.mxu0 0.0
    %7302 = vmatprep.subr.mxu0 0.0
    %7303 = vmatpush2.msra.mxu0 0.0
    %7304 = vmatprep.subr.mxu0 0.0
    %7305 = vmatpush2.msra.mxu0 0.0
    %7306 = vmatprep.subr.mxu0 0.0
    %7307 = vmatpush2.msra.mxu0 0.0
    %7308 = vmatprep.subr.mxu0 0.0
    %7309 = vmatpush2.msra.mxu0 0.0
    %7310 = vmatprep.subr.mxu0 0.0
    %7311 = vmatpush2.msra.mxu0 0.0
    %7312 = vmatprep.subr.mxu0 0.0
    %7313 = vmatpush2.msra.mxu0 0.0
    %7314 = vmatprep.subr.mxu0 0.0
    %7315 = vmatpush2.msra.mxu0 0.0
    %7316 = vmatprep.subr.mxu0 0.0
    %7317 = vmatpush2.msra.mxu0 0.0
    %7318 = vmatprep.subr.mxu0 0.0
    %7319 = vmatpush2.msra.mxu0 0.0
    %7320 = vmatprep.subr.mxu0 0.0
    %7321 = vmatpush2.msra.mxu0 0.0
    %7322 = vmatprep.subr.mxu0 0.0
    %7323 = vmatpush2.msra.mxu0 0.0
    %7324 = vmatprep.mubr.f32.mxu0 0.0
    %7325 = vmatmul.mubr.f32.gmra.mxu0 %v7237
    %v7326 = vpop.f32.mrf.mxu0
    %v7327 = vadd.f32 %v7198, %v7326
    %v7328 = vpop.f32.mrf.mxu0
    %7329 = vmatprep.mubr.f32.mxu0 0.0
    %7330 = vmatmul.mubr.f32.gmra.mxu0 %v7240
    %v7331 = vpop.f32.mrf.mxu0
    %v7332 = vadd.f32 %v7203, %v7331
    %v7333 = vpop.f32.mrf.mxu0
    %7334 = vmatprep.mubr.f32.mxu0 0.0
    %7335 = vmatmul.mubr.f32.gmra.mxu0 %v7243
    %v7336 = vpop.f32.mrf.mxu0
    %v7337 = vadd.f32 %v7208, %v7336
    %v7338 = vpop.f32.mrf.mxu0
    %7339 = vmatprep.mubr.f32.mxu0 0.0
    %7340 = vmatmul.mubr.f32.gmra.mxu0 %v7246
    %v7341 = vpop.f32.mrf.mxu0
    %v7342 = vadd.f32 %v7213, %v7341
    %v7343 = vpop.f32.mrf.mxu0
    %7344 = vmatprep.mubr.f32.mxu0 0.0
    %7345 = vmatmul.mubr.f32.gmra.mxu0 %v7249
    %v7346 = vpop.f32.mrf.mxu0
    %v7347 = vadd.f32 %v7218, %v7346
    %v7348 = vpop.f32.mrf.mxu0
    %7349 = vmatprep.mubr.f32.mxu0 0.0
    %7350 = vmatmul.mubr.f32.gmra.mxu0 %v7252
    %v7351 = vpop.f32.mrf.mxu0
    %v7352 = vadd.f32 %v7223, %v7351
    %v7353 = vpop.f32.mrf.mxu0
    %7354 = vmatprep.mubr.f32.mxu0 0.0
    %7355 = vmatmul.mubr.f32.gmra.mxu0 %v7255
    %v7356 = vpop.f32.mrf.mxu0
    %v7357 = vadd.f32 %v7228, %v7356
    %v7358 = vpop.f32.mrf.mxu0
    %7359 = vmatprep.mubr.f32.mxu0 0.0
    %7360 = vmatmul.mubr.f32.gmra.mxu0 %v7258
    %v7361 = vpop.f32.mrf.mxu0
    %v7362 = vadd.f32 %v7233, %v7361
    %v7363 = vpop.f32.mrf.mxu0
    %7364 = vdwg.mxu0
    %v7365 = vld [vmem:[%s18] sm:$0x1]
    %v7367 = vlaneseq
    %v7368 = vshrl.u32 %v7367, 7
    %v7369 = vsub.s32 0, %v7368
    %v7370 = vrot.slane %v7365, %v7369
    %v7372 = vadd.f32 %v7327, %v7370
    %v7373 = vadd.f32 %v7332, %v7370
    %v7374 = vadd.f32 %v7337, %v7370
    %v7375 = vadd.f32 %v7342, %v7370
    %v7376 = vadd.f32 %v7347, %v7370
    %v7377 = vadd.f32 %v7352, %v7370
    %v7378 = vadd.f32 %v7357, %v7370
    %v7379 = vadd.f32 %v7362, %v7370
    %7380 = vst [vmem:[#allocation28] sm:$0xff] %v7372
    %7381 = vst [vmem:[#allocation28 + $0x8] sm:$0xff] %v7373
    %7382 = vst [vmem:[#allocation28 + $0x10] sm:$0xff] %v7374
    %7383 = vst [vmem:[#allocation28 + $0x18] sm:$0xff] %v7375
    %7384 = vst [vmem:[#allocation28 + $0x20] sm:$0xff] %v7376
    %7385 = vst [vmem:[#allocation28 + $0x28] sm:$0xff] %v7377
    %7386 = vst [vmem:[#allocation28 + $0x30] sm:$0xff] %v7378
    %7387 = vst [vmem:[#allocation28 + $0x38] sm:$0xff] %v7379
    // Predicated region
    $region138: #{tpu_custom_call.1} parent=1 // pred_check
      _
    $region139: #{tpu_custom_call.1} parent=1 // pred_check_branch
      %7389 = sbr.rel (0) target = $region141
    $region140: #{tpu_custom_call.1} parent=1 // pred_region
      %s7391 = ssub.s32 1024, 1024
      %7392 = vsyncadd [#allocation9], %s7391
      %s7393 = sshll.u32 [#allocation28], 4
      %s7394 = int_to_ptr.vmem [resolvable:$true] %s7393
      %7399 = dma.vmem_to_hbm [thread:$0]  %s7394, 1024, %s21, [#allocation9], 128, 128, 8
    $region141: #{tpu_custom_call.1} parent=1 // pred_fallthru
      _
    // Predicated region
    $region142: #{tpu_custom_call.1} parent=1 // pred_check
      _
    $region143: #{tpu_custom_call.1} parent=1 // pred_check_branch
      %7401 = sbr.rel (0) target = $region145
    $region144: #{tpu_custom_call.1} parent=1 // pred_region
      %s7403 = ssub.s32 896, 896
      %7404 = vsyncadd [#allocation30], %s7403
      %s7405 = sshll.u32 [#allocation29], 4
      %s7406 = int_to_ptr.vmem [resolvable:$true] %s7405
      %7411 = dma.vmem_to_hbm [thread:$0]  %s7406, 896, %s22, [#allocation30], 128, 128, 8
    $region145: #{tpu_custom_call.1} parent=1 // pred_fallthru
      _
    // Predicated region
    $region146: #{tpu_custom_call.1} parent=1 // pred_check
      _
    $region147: #{tpu_custom_call.1} parent=1 // pred_check_branch
      %7413 = sbr.rel (0) target = $region149
    $region148: #{tpu_custom_call.1} parent=1 // pred_region
      %7414 = dma.done [#allocation9], 1024
    $region149: #{tpu_custom_call.1} parent=1 // pred_fallthru
      _
    // Predicated region
    $region150: #{tpu_custom_call.1} parent=1 // pred_check
      _
    $region151: #{tpu_custom_call.1} parent=1 // pred_check_branch
      %7416 = sbr.rel (0) target = $region153
    $region152: #{tpu_custom_call.1} parent=1 // pred_region
      %7417 = dma.done [#allocation30], 896
    $region153: #{tpu_custom_call.1} parent=1 // pred_fallthru
      _
    %7418 = vsyncpa [#allocation8], 1
    %7419 = vsyncpa [#allocation11], 1
    %7420 = vsyncpa [#allocation14], 1
    %7421 = vsyncpa [#allocation17], 1
    %7422 = vsyncpa [#allocation20], 1
    %7423 = vsyncpa [#allocation23], 1
    %7424 = vsyncpa [#allocation26], 1
    %7425 = vsyncpa [#allocation9], 1
    %7426 = vsyncpa [#allocation30], 1

</llo_original>
